<compile_context>
chip_gen: v6e
topology: v6e:2x2x1
jax: 0.10.0
libtpu: 0.0.40
codegen_flags: <defaults>
</compile_context>

<pallas_src>
import math
import numpy as np
import jax
import jax.numpy as jnp
from jax.experimental import pallas as pl
from jax.experimental.pallas import tpu as pltpu  # noqa: F401  (kept for TPU-specific tuning hooks)


# --------------------------------------------------------------------------- #
# Fused forward kernel (whole batch in one invocation, batch folded into rows)
# --------------------------------------------------------------------------- #
def make_fused_kernel(*, B, S, dv, patch, Tp, T, E, H, F, n_layers):
    BS, Rp = B * S, B * Tp            # folded input rows / token rows
    PBS, PDV = patch * BS, patch * dv # replicated-src dims
    hd = E // H
    o_L = dv                          # row offsets inside the pe128 slab
    o_blk = dv + Rp
    o_M = dv + Rp + PBS

    def _ln(y, g, b, eps=1e-5):
        mu = jnp.mean(y, axis=-1, keepdims=True)
        d = y - mu
        var = jnp.mean(d * d, axis=-1, keepdims=True)
        return d * jax.lax.rsqrt(var + eps) * g + b

    def kernel(x_ref, pe128_ref, pe64_ref, abias_ref, wlyr_ref, bias_ref, o_ref):
        # ---- encoder_input_layer: Linear(1, dv) -> tanh -> Linear(dv, dv)
        # (the second Linear's bias is folded into `base`; its weight is
        # lane-replicated x patch at pack time so src comes out already "wide")
        x = x_ref[...]                                   # (BS, 1)
        in_w1 = bias_ref[0:1, :dv]                       # (1, dv)
        in_b1 = bias_ref[1:2, :dv]
        h1 = jnp.tanh(x * in_w1 + in_b1)                 # (BS, dv)  VPU + EUP
        w2w = pe128_ref[0:dv, :PDV]                      # (dv, PDV)
        src_w = jnp.dot(h1, w2w,
                        preferred_element_type=jnp.float32)   # (BS, PDV)

        # ---- PatchEmbeded (Conv2d k=stride=patch) + cls + pos, as 2 matmuls:
        #   tokens = base + ((Lcat @ blockdiag(src)) * Mcat) @ Wrcat
        Lcat = pe128_ref[o_L:o_L + Rp, :PBS]             # (Rp, PBS) row selection
        blk = pe128_ref[o_blk:o_blk + PBS, :PDV]         # (PBS, PDV) block-diag mask
        Mcat = pe128_ref[o_M:o_M + Rp, :PDV]             # (Rp, PDV) within-patch mask
        src_bd = jnp.concatenate([src_w] * patch, axis=0) * blk   # (PBS, PDV)
        z = jnp.dot(Lcat, src_bd,
                    preferred_element_type=jnp.float32) * Mcat    # (Rp, PDV)
        Wrcat = pe64_ref[0:PDV, :]                       # (PDV, E)
        base = pe64_ref[PDV:PDV + Rp, :]                 # (Rp, E) cls+pos+biases
        tokens = base + jnp.dot(z, Wrcat,
                                preferred_element_type=jnp.float32)  # (Rp, E)

        # block-diagonal (per-batch) attention bias, also masks padded key rows
        abias = abias_ref[...]                           # (Rp, Rp)

        # ---- n_layers x TransformerEncoderLayer (post-norm, relu, dropout=0)
        for l in range(n_layers):
            xl = tokens
            r0 = 2 + 8 * l
            wqkv = wlyr_ref[l, 0:E, :]                   # (E, 3E), scale folded in Q
            bqkv = bias_ref[r0:r0 + 1, :]                # (1, 3E)
            qkv = jnp.dot(xl, wqkv,
                          preferred_element_type=jnp.float32) + bqkv   # (Rp, 3E)
            wo_l = wlyr_ref[l, E:2 * E, 0:E]             # (E, E)

            attn = jnp.zeros((Rp, E), jnp.float32)
            for h in range(H):
                qh = qkv[:, h * hd:(h + 1) * hd]                    # (Rp, hd)
                kh = qkv[:, E + h * hd:E + (h + 1) * hd]            # (Rp, hd)
                vh = qkv[:, 2 * E + h * hd:2 * E + (h + 1) * hd]    # (Rp, hd)
                s = jax.lax.dot_general(
                    qh, kh, (((1,), (1,)), ((), ())),
                    preferred_element_type=jnp.float32) + abias     # (Rp, Rp)
                s = s - jnp.max(s, axis=-1, keepdims=True)
                es = jnp.exp(s)
                pr = es * pl.reciprocal(jnp.sum(es, axis=-1, keepdims=True),
                                        approx=True)
                head = jnp.dot(pr, vh,
                               preferred_element_type=jnp.float32)  # (Rp, hd)
                # per-head out-projection accumulation (no lane concat)
                attn = attn + jnp.dot(head, wo_l[h * hd:(h + 1) * hd, :],
                                      preferred_element_type=jnp.float32)
            attn = attn + bias_ref[r0 + 1:r0 + 2, :E]

            y = _ln(xl + attn,
                    bias_ref[r0 + 2:r0 + 3, :E], bias_ref[r0 + 3:r0 + 4, :E])
            w1 = wlyr_ref[l, 2 * E:3 * E, :F]            # (E, F)
            w2 = wlyr_ref[l, 3 * E:3 * E + F, :E]        # (F, E)
            ff = jnp.maximum(
                jnp.dot(y, w1, preferred_element_type=jnp.float32)
                + bias_ref[r0 + 4:r0 + 5, :F], 0.0)
            ff = jnp.dot(ff, w2, preferred_element_type=jnp.float32) \
                + bias_ref[r0 + 5:r0 + 6, :E]
            tokens = _ln(y + ff,
                         bias_ref[r0 + 6:r0 + 7, :E], bias_ref[r0 + 7:r0 + 8, :E])

        o_ref[...] = tokens                              # full padded (Rp, E) store

    return kernel


def vit_bottleneck_forward(x, packed, *, B, S, dv, patch, Tp, T, E, H, F, n_layers):
    kernel = make_fused_kernel(B=B, S=S, dv=dv, patch=patch, Tp=Tp, T=T,
                               E=E, H=H, F=F, n_layers=n_layers)
    x2d = x.reshape(B * S, 1).astype(jnp.float32)
    out = pl.pallas_call(
        kernel,
        out_shape=jax.ShapeDtypeStruct((B * Tp, E), jnp.float32),
    )(x2d, packed["pe128"], packed["pe64"], packed["abias"],
      packed["wlyr"], packed["bias"])
    # drop padded token rows outside the kernel (free / cheap slice)
    return out.reshape(B, Tp, E)[:, :T, :]


# --------------------------------------------------------------------------- #
# Synthetic parameters (x @ W convention) + packing into kernel-friendly slabs
# --------------------------------------------------------------------------- #
def init_raw_params(key, *, input_size, dim_val, patch, embed_dim, num_patches,
                    n_heads, dim_ff, n_layers):
    keys = iter(jax.random.split(key, 128))
    nrm = lambda shape, s=0.05: (s * jax.random.normal(next(keys), shape)).astype(jnp.float32)
    E, F = embed_dim, dim_ff
    raw = {
        "in_w1": nrm((input_size, dim_val)), "in_b1": nrm((1, dim_val)),
        "in_w2": nrm((dim_val, dim_val)),    "in_b2": nrm((1, dim_val)),
        # conv weight flattened to (p*p, E) with row index kh*patch + kw; bias (1, E)
        "wp": nrm((patch * patch, E)), "bp": nrm((1, E)),
        # cls / pos are zero-initialized Parameters in the module's __init__
        "cls": jnp.zeros((1, 1, E), jnp.float32),
        "pos": jnp.zeros((1, num_patches + 1, E), jnp.float32),
        "layers": [],
    }
    for _ in range(n_layers):
        raw["layers"].append({
            "wq": nrm((E, E)), "bq": nrm((1, E)),
            "wk": nrm((E, E)), "bk": nrm((1, E)),
            "wv": nrm((E, E)), "bv": nrm((1, E)),
            "wo": nrm((E, E)), "bo": nrm((1, E)),
            "g1": jnp.ones((1, E), jnp.float32), "be1": jnp.zeros((1, E), jnp.float32),
            "w1": nrm((E, F)), "bb1": nrm((1, F)),
            "w2": nrm((F, E)), "bb2": nrm((1, E)),
            "g2": jnp.ones((1, E), jnp.float32), "be2": jnp.zeros((1, E), jnp.float32),
        })
    return raw


def pack_params(raw, *, B, S, dim_val, patch, Tp, T, E, H, F, n_layers):
    BS, Rp = B * S, B * Tp
    PBS, PDV = patch * BS, patch * dim_val
    n_w = dim_val // patch
    N = T - 1
    hd = E // H
    scale = 1.0 / math.sqrt(hd)

    # ---- per-batch-element selection / mask (token row t = n + 1) ----------
    L = np.zeros((patch, Tp, S), np.float32)
    M = np.zeros((Tp, dim_val), np.float32)
    for n in range(N):
        t = n + 1
        oh, ow = n // n_w, n % n_w
        for kh in range(patch):
            L[kh, t, oh * patch + kh] = 1.0
        M[t, ow * patch:(ow + 1) * patch] = 1.0

    # ---- batch-folded Lcat / Mcat -------------------------------------------
    Lcat = np.zeros((Rp, PBS), np.float32)
    Mcat = np.zeros((Rp, PDV), np.float32)
    for b in range(B):
        for kh in range(patch):
            Lcat[b * Tp:(b + 1) * Tp, kh * BS + b * S: kh * BS + (b + 1) * S] = L[kh]
        Mcat[b * Tp:(b + 1) * Tp, :] = np.tile(M, (1, patch))

    # block-diagonal mask applied to the sublane-replicated src
    blk = np.zeros((PBS, PDV), np.float32)
    for kh in range(patch):
        blk[kh * BS:(kh + 1) * BS, kh * dim_val:(kh + 1) * dim_val] = 1.0

    # replicated conv projection (PDV, E):  Wrcat[kh*dv + w] = wp[kh*patch + w%patch]
    wp = np.asarray(raw["wp"])
    Wrcat = np.zeros((PDV, E), np.float32)
    for kh in range(patch):
        for w in range(dim_val):
            Wrcat[kh * dim_val + w, :] = wp[kh * patch + (w % patch), :]

    # base = pos + cls + conv bias (per batch) + folded Linear(dv,dv) bias
    base1 = np.zeros((Tp, E), np.float32)
    base1[:T] = np.asarray(raw["pos"])[0]
    base1[0] += np.asarray(raw["cls"])[0, 0]
    base1[1:T] += np.asarray(raw["bp"])[0]
    base = np.tile(base1, (B, 1))                                  # (Rp, E)
    in_b2 = np.asarray(raw["in_b2"])                               # (1, dv)
    src_b = np.tile(np.broadcast_to(in_b2, (BS, dim_val)), (1, patch))  # (BS, PDV)
    Abd_b = np.tile(src_b, (patch, 1)) * blk                       # (PBS, PDV)
    base = base + ((Lcat @ Abd_b) * Mcat) @ Wrcat                  # fold in_b2

    # attention bias: block-diagonal over batch + mask of padded key rows
    abias = np.full((Rp, Rp), -1e30, np.float32)
    for b in range(B):
        abias[b * Tp:(b + 1) * Tp, b * Tp: b * Tp + T] = 0.0

    # ---- slabs ---------------------------------------------------------------
    in_w2_wide = np.tile(np.asarray(raw["in_w2"]), (1, patch))     # (dv, PDV)
    W1 = max(PDV, PBS)

    def pad_lanes(a, w):
        out = np.zeros((a.shape[0], w), np.float32)
        out[:, :a.shape[1]] = a
        return out

    pe128 = np.concatenate([pad_lanes(in_w2_wide, W1), pad_lanes(Lcat, W1),
                            pad_lanes(blk, W1), pad_lanes(Mcat, W1)], axis=0)
    pe64 = np.concatenate([Wrcat, base], axis=0)                   # (PDV+Rp, E)

    LW = 3 * E
    wlyr = np.zeros((n_layers, 3 * E + F, LW), np.float32)
    bias_rows = np.zeros((2 + 8 * n_layers, LW), np.float32)
    bias_rows[0, :dim_val] = np.asarray(raw["in_w1"])[0]
    bias_rows[1, :dim_val] = np.asarray(raw["in_b1"])[0]
    for l, lyr in enumerate(raw["layers"]):
        wqkv = np.concatenate([np.asarray(lyr["wq"]) * scale,
                               np.asarray(lyr["wk"]),
                               np.asarray(lyr["wv"])], axis=1)     # (E, 3E)
        wlyr[l, 0:E, :3 * E] = wqkv
        wlyr[l, E:2 * E, :E] = np.asarray(lyr["wo"])
        wlyr[l, 2 * E:3 * E, :F] = np.asarray(lyr["w1"])
        wlyr[l, 3 * E:3 * E + F, :E] = np.asarray(lyr["w2"])
        r = 2 + 8 * l
        bias_rows[r + 0, :3 * E] = np.concatenate(
            [np.asarray(lyr["bq"])[0] * scale,
             np.asarray(lyr["bk"])[0], np.asarray(lyr["bv"])[0]])
        bias_rows[r + 1, :E] = np.asarray(lyr["bo"])[0]
        bias_rows[r + 2, :E] = np.asarray(lyr["g1"])[0]
        bias_rows[r + 3, :E] = np.asarray(lyr["be1"])[0]
        bias_rows[r + 4, :F] = np.asarray(lyr["bb1"])[0]
        bias_rows[r + 5, :E] = np.asarray(lyr["bb2"])[0]
        bias_rows[r + 6, :E] = np.asarray(lyr["g2"])[0]
        bias_rows[r + 7, :E] = np.asarray(lyr["be2"])[0]

    return {
        "pe128": jnp.asarray(pe128),
        "pe64": jnp.asarray(pe64),
        "abias": jnp.asarray(abias),
        "wlyr": jnp.asarray(wlyr),
        "bias": jnp.asarray(bias_rows),
    }


# --------------------------------------------------------------------------- #
# Pure-JAX reference (independent formulation) for correctness checking
# --------------------------------------------------------------------------- #
def reference_forward(x, raw, *, dim_val, patch, E, H):
    B, S, _ = x.shape
    hd = E // H
    src = jnp.tanh(x @ raw["in_w1"] + raw["in_b1"]) @ raw["in_w2"] + raw["in_b2"]
    n_h, n_w = S // patch, dim_val // patch
    N = n_h * n_w
    T = N + 1
    patches = src.reshape(B, n_h, patch, n_w, patch).transpose(0, 1, 3, 2, 4)
    patches = patches.reshape(B, N, patch * patch)
    proj = patches @ raw["wp"] + raw["bp"]
    cls = jnp.broadcast_to(raw["cls"], (B, 1, E))
    tok = jnp.concatenate([cls, proj], axis=1) + raw["pos"]

    def ln(y, g, b, eps=1e-5):
        mu = y.mean(-1, keepdims=True)
        var = ((y - mu) ** 2).mean(-1, keepdims=True)
        return (y - mu) / jnp.sqrt(var + eps) * g + b

    for lyr in raw["layers"]:
        q = tok @ lyr["wq"] + lyr["bq"]
        k = tok @ lyr["wk"] + lyr["bk"]
        v = tok @ lyr["wv"] + lyr["bv"]
        split = lambda a: a.reshape(B, T, H, hd).transpose(0, 2, 1, 3)
        qh, kh, vh = split(q), split(k), split(v)
        s = jnp.einsum("bhtd,bhsd->bhts", qh, kh) / math.sqrt(hd)
        p_ = jax.nn.softmax(s, axis=-1)
        o = jnp.einsum("bhts,bhsd->bhtd", p_, vh).transpose(0, 2, 1, 3).reshape(B, T, E)
        attn = o @ lyr["wo"] + lyr["bo"]
        y = ln(tok + attn, lyr["g1"], lyr["be1"])
        ff = jax.nn.relu(y @ lyr["w1"] + lyr["bb1"]) @ lyr["w2"] + lyr["bb2"]
        tok = ln(y + ff, lyr["g2"], lyr["be2"])
    return tok


# --------------------------------------------------------------------------- #
if __name__ == "__main__":
    # small shapes consistent with the module's structure
    B = 2            # batch
    S = 16           # input sequence length
    input_size = 1
    dim_val = 32
    patch = 4
    E = 64           # embed_dim
    H = 4            # n_heads
    F = 128          # dim_feedforward
    n_layers = 2
    N = (S * dim_val) // (patch * patch)     # 32 patches
    T = N + 1                                # 33 tokens (cls + patches)
    Tp = ((T + 7) // 8) * 8                  # 40 padded token rows (per batch)

    # TODO(synk): the module's pos_encoder (PositionalEncoder) is constructed but
    # never used in forward(); all Dropout layers are p=0.0 -> both omitted.

    key = jax.random.PRNGKey(0)
    kx, kp = jax.random.split(key)
    x = jax.random.normal(kx, (B, S, input_size), jnp.float32)

    raw = init_raw_params(kp, input_size=input_size, dim_val=dim_val, patch=patch,
                          embed_dim=E, num_patches=N, n_heads=H, dim_ff=F,
                          n_layers=n_layers)
    packed = pack_params(raw, B=B, S=S, dim_val=dim_val, patch=patch, Tp=Tp, T=T,
                         E=E, H=H, F=F, n_layers=n_layers)

    out = vit_bottleneck_forward(x, packed, B=B, S=S, dv=dim_val, patch=patch,
                                 Tp=Tp, T=T, E=E, H=H, F=F, n_layers=n_layers)
    out = jax.block_until_ready(out)

    assert out.shape == (B, T, E), out.shape
    assert bool(jnp.all(jnp.isfinite(out)))

    ref = reference_forward(x, raw, dim_val=dim_val, patch=patch, E=E, H=H)
    max_err = float(jnp.max(jnp.abs(out - ref)))
    assert bool(jnp.allclose(out, ref, atol=3e-2, rtol=3e-2)), max_err

    print("KERNEL_OK")
</pallas_src>

<mosaic_0001>
module attributes {stable_mosaic.version = 11 : i64} {
  func.func @kernel(%arg0: memref<32x1xf32, #tpu.memory_space<vmem>>, %arg1: memref<320x128xf32, #tpu.memory_space<vmem>>, %arg2: memref<208x64xf32, #tpu.memory_space<vmem>>, %arg3: memref<80x80xf32, #tpu.memory_space<vmem>>, %arg4: memref<2x320x192xf32, #tpu.memory_space<vmem>>, %arg5: memref<18x192xf32, #tpu.memory_space<vmem>>, %arg6: memref<80x64xf32, #tpu.memory_space<vmem>>) attributes {dimension_semantics = [], scalar_prefetch = 0 : i64, scratch_operands = 0 : i64, tpu.core_type = #tpu.core_type<tc>} {
    %c0 = arith.constant 0 : index
    %c0_0 = arith.constant 0 : index
    %0 = vector.load %arg0[%c0, %c0_0] : memref<32x1xf32, #tpu.memory_space<vmem>>, vector<32x1xf32>
    %c0_1 = arith.constant 0 : index
    %c0_2 = arith.constant 0 : index
    %1 = vector.load %arg5[%c0_1, %c0_2] : memref<18x192xf32, #tpu.memory_space<vmem>>, vector<1x32xf32>
    %c1 = arith.constant 1 : index
    %c0_3 = arith.constant 0 : index
    %2 = vector.load %arg5[%c1, %c0_3] : memref<18x192xf32, #tpu.memory_space<vmem>>, vector<1x32xf32>
    %3 = vector.broadcast %0 : vector<32x1xf32> to vector<32x32xf32>
    %4 = vector.broadcast %1 : vector<1x32xf32> to vector<32x32xf32>
    %5 = arith.mulf %3, %4 : vector<32x32xf32>
    %6 = vector.broadcast %2 : vector<1x32xf32> to vector<32x32xf32>
    %7 = arith.addf %5, %6 : vector<32x32xf32>
    %8 = math.tanh %7 : vector<32x32xf32>
    %c0_4 = arith.constant 0 : index
    %c0_5 = arith.constant 0 : index
    %9 = vector.load %arg1[%c0_4, %c0_5] : memref<320x128xf32, #tpu.memory_space<vmem>>, vector<32x128xf32>
    %cst = arith.constant dense<0.000000e+00> : vector<32x128xf32>
    %10 = tpu.matmul %8, %9, %cst {dimension_numbers = #tpu.dot_dimension_numbers<[1], [0], [0], [1], [0, 0, 1, 1], [], []>} : vector<32x32xf32>, vector<32x128xf32>, vector<32x128xf32> -> vector<32x128xf32>
    %c32 = arith.constant 32 : index
    %c0_6 = arith.constant 0 : index
    %11 = vector.load %arg1[%c32, %c0_6] : memref<320x128xf32, #tpu.memory_space<vmem>>, vector<80x128xf32>
    %c112 = arith.constant 112 : index
    %c0_7 = arith.constant 0 : index
    %12 = vector.load %arg1[%c112, %c0_7] : memref<320x128xf32, #tpu.memory_space<vmem>>, vector<128x128xf32>
    %c240 = arith.constant 240 : index
    %c0_8 = arith.constant 0 : index
    %13 = vector.load %arg1[%c240, %c0_8] : memref<320x128xf32, #tpu.memory_space<vmem>>, vector<80x128xf32>
    %14 = tpu.concatenate %10, %10, %10, %10 in 0 : vector<32x128xf32>, vector<32x128xf32>, vector<32x128xf32>, vector<32x128xf32> -> vector<128x128xf32>
    %15 = arith.mulf %14, %12 : vector<128x128xf32>
    %cst_9 = arith.constant dense<0.000000e+00> : vector<80x128xf32>
    %16 = tpu.matmul %11, %15, %cst_9 {dimension_numbers = #tpu.dot_dimension_numbers<[1], [0], [0], [1], [0, 0, 1, 1], [], []>} : vector<80x128xf32>, vector<128x128xf32>, vector<80x128xf32> -> vector<80x128xf32>
    %17 = arith.mulf %16, %13 : vector<80x128xf32>
    %c0_10 = arith.constant 0 : index
    %c0_11 = arith.constant 0 : index
    %18 = vector.load %arg2[%c0_10, %c0_11] : memref<208x64xf32, #tpu.memory_space<vmem>>, vector<128x64xf32>
    %c128 = arith.constant 128 : index
    %c0_12 = arith.constant 0 : index
    %19 = vector.load %arg2[%c128, %c0_12] : memref<208x64xf32, #tpu.memory_space<vmem>>, vector<80x64xf32>
    %cst_13 = arith.constant dense<0.000000e+00> : vector<80x64xf32>
    %20 = tpu.matmul %17, %18, %cst_13 {dimension_numbers = #tpu.dot_dimension_numbers<[1], [0], [0], [1], [0, 0, 1, 1], [], []>} : vector<80x128xf32>, vector<128x64xf32>, vector<80x64xf32> -> vector<80x64xf32>
    %21 = arith.addf %19, %20 : vector<80x64xf32>
    %c0_14 = arith.constant 0 : index
    %c0_15 = arith.constant 0 : index
    %22 = vector.load %arg3[%c0_14, %c0_15] : memref<80x80xf32, #tpu.memory_space<vmem>>, vector<80x80xf32>
    %c0_16 = arith.constant 0 : index
    %c0_17 = arith.constant 0 : index
    %c0_18 = arith.constant 0 : index
    %23 = vector.load %arg4[%c0_16, %c0_17, %c0_18] : memref<2x320x192xf32, #tpu.memory_space<vmem>>, vector<1x64x192xf32>
    %24 = vector.shape_cast %23 : vector<1x64x192xf32> to vector<64x192xf32>
    %c2 = arith.constant 2 : index
    %c0_19 = arith.constant 0 : index
    %25 = vector.load %arg5[%c2, %c0_19] : memref<18x192xf32, #tpu.memory_space<vmem>>, vector<1x192xf32>
    %cst_20 = arith.constant dense<0.000000e+00> : vector<80x192xf32>
    %26 = tpu.matmul %21, %24, %cst_20 {dimension_numbers = #tpu.dot_dimension_numbers<[1], [0], [0], [1], [0, 0, 1, 1], [], []>} : vector<80x64xf32>, vector<64x192xf32>, vector<80x192xf32> -> vector<80x192xf32>
    %27 = vector.broadcast %25 : vector<1x192xf32> to vector<80x192xf32>
    %28 = arith.addf %26, %27 : vector<80x192xf32>
    %c0_21 = arith.constant 0 : index
    %c64 = arith.constant 64 : index
    %c0_22 = arith.constant 0 : index
    %29 = vector.load %arg4[%c0_21, %c64, %c0_22] : memref<2x320x192xf32, #tpu.memory_space<vmem>>, vector<1x64x64xf32>
    %30 = vector.shape_cast %29 : vector<1x64x64xf32> to vector<64x64xf32>
    %cst_23 = arith.constant 0.000000e+00 : f32
    %31 = vector.broadcast %cst_23 : f32 to vector<80x64xf32>
    %32 = vector.extract_strided_slice %28 {offsets = [0, 0], sizes = [80, 16], strides = [1, 1]} : vector<80x192xf32> to vector<80x16xf32>
    %33 = vector.extract_strided_slice %28 {offsets = [0, 64], sizes = [80, 16], strides = [1, 1]} : vector<80x192xf32> to vector<80x16xf32>
    %34 = vector.extract_strided_slice %28 {offsets = [0, 128], sizes = [80, 16], strides = [1, 1]} : vector<80x192xf32> to vector<80x16xf32>
    %cst_24 = arith.constant dense<0.000000e+00> : vector<80x80xf32>
    %35 = tpu.matmul %32, %33, %cst_24 {dimension_numbers = #tpu.dot_dimension_numbers<[1], [1], [0], [0], [0, 0, 1, 0], [], []>} : vector<80x16xf32>, vector<80x16xf32>, vector<80x80xf32> -> vector<80x80xf32>
    %36 = arith.addf %35, %22 : vector<80x80xf32>
    %cst_25 = arith.constant dense<0xFF800000> : vector<80xf32>
    %37 = vector.multi_reduction <maximumf>, %36, %cst_25 [1] : vector<80x80xf32> to vector<80xf32>
    %38 = vector.shape_cast %37 : vector<80xf32> to vector<80x1xf32>
    %39 = vector.broadcast %38 : vector<80x1xf32> to vector<80x80xf32>
    %40 = arith.subf %36, %39 : vector<80x80xf32>
    %41 = math.exp %40 : vector<80x80xf32>
    %cst_26 = arith.constant dense<0.000000e+00> : vector<80xf32>
    %42 = vector.multi_reduction <add>, %41, %cst_26 [1] : vector<80x80xf32> to vector<80xf32>
    %43 = vector.shape_cast %42 : vector<80xf32> to vector<80x1xf32>
    %44 = tpu.reciprocal %43 {approx = true} : vector<80x1xf32> -> vector<80x1xf32>
    %45 = vector.broadcast %44 : vector<80x1xf32> to vector<80x80xf32>
    %46 = arith.mulf %41, %45 : vector<80x80xf32>
    %cst_27 = arith.constant dense<0.000000e+00> : vector<80x16xf32>
    %47 = tpu.matmul %46, %34, %cst_27 {dimension_numbers = #tpu.dot_dimension_numbers<[1], [0], [0], [1], [0, 0, 1, 1], [], []>} : vector<80x80xf32>, vector<80x16xf32>, vector<80x16xf32> -> vector<80x16xf32>
    %48 = vector.extract_strided_slice %30 {offsets = [0, 0], sizes = [16, 64], strides = [1, 1]} : vector<64x64xf32> to vector<16x64xf32>
    %cst_28 = arith.constant dense<0.000000e+00> : vector<80x64xf32>
    %49 = tpu.matmul %47, %48, %cst_28 {dimension_numbers = #tpu.dot_dimension_numbers<[1], [0], [0], [1], [0, 0, 1, 1], [], []>} : vector<80x16xf32>, vector<16x64xf32>, vector<80x64xf32> -> vector<80x64xf32>
    %50 = arith.addf %31, %49 : vector<80x64xf32>
    %51 = vector.extract_strided_slice %28 {offsets = [0, 16], sizes = [80, 16], strides = [1, 1]} : vector<80x192xf32> to vector<80x16xf32>
    %52 = vector.extract_strided_slice %28 {offsets = [0, 80], sizes = [80, 16], strides = [1, 1]} : vector<80x192xf32> to vector<80x16xf32>
    %53 = vector.extract_strided_slice %28 {offsets = [0, 144], sizes = [80, 16], strides = [1, 1]} : vector<80x192xf32> to vector<80x16xf32>
    %cst_29 = arith.constant dense<0.000000e+00> : vector<80x80xf32>
    %54 = tpu.matmul %51, %52, %cst_29 {dimension_numbers = #tpu.dot_dimension_numbers<[1], [1], [0], [0], [0, 0, 1, 0], [], []>} : vector<80x16xf32>, vector<80x16xf32>, vector<80x80xf32> -> vector<80x80xf32>
    %55 = arith.addf %54, %22 : vector<80x80xf32>
    %cst_30 = arith.constant dense<0xFF800000> : vector<80xf32>
    %56 = vector.multi_reduction <maximumf>, %55, %cst_30 [1] : vector<80x80xf32> to vector<80xf32>
    %57 = vector.shape_cast %56 : vector<80xf32> to vector<80x1xf32>
    %58 = vector.broadcast %57 : vector<80x1xf32> to vector<80x80xf32>
    %59 = arith.subf %55, %58 : vector<80x80xf32>
    %60 = math.exp %59 : vector<80x80xf32>
    %cst_31 = arith.constant dense<0.000000e+00> : vector<80xf32>
    %61 = vector.multi_reduction <add>, %60, %cst_31 [1] : vector<80x80xf32> to vector<80xf32>
    %62 = vector.shape_cast %61 : vector<80xf32> to vector<80x1xf32>
    %63 = tpu.reciprocal %62 {approx = true} : vector<80x1xf32> -> vector<80x1xf32>
    %64 = vector.broadcast %63 : vector<80x1xf32> to vector<80x80xf32>
    %65 = arith.mulf %60, %64 : vector<80x80xf32>
    %cst_32 = arith.constant dense<0.000000e+00> : vector<80x16xf32>
    %66 = tpu.matmul %65, %53, %cst_32 {dimension_numbers = #tpu.dot_dimension_numbers<[1], [0], [0], [1], [0, 0, 1, 1], [], []>} : vector<80x80xf32>, vector<80x16xf32>, vector<80x16xf32> -> vector<80x16xf32>
    %67 = vector.extract_strided_slice %30 {offsets = [16, 0], sizes = [16, 64], strides = [1, 1]} : vector<64x64xf32> to vector<16x64xf32>
    %cst_33 = arith.constant dense<0.000000e+00> : vector<80x64xf32>
    %68 = tpu.matmul %66, %67, %cst_33 {dimension_numbers = #tpu.dot_dimension_numbers<[1], [0], [0], [1], [0, 0, 1, 1], [], []>} : vector<80x16xf32>, vector<16x64xf32>, vector<80x64xf32> -> vector<80x64xf32>
    %69 = arith.addf %50, %68 : vector<80x64xf32>
    %70 = vector.extract_strided_slice %28 {offsets = [0, 32], sizes = [80, 16], strides = [1, 1]} : vector<80x192xf32> to vector<80x16xf32>
    %71 = vector.extract_strided_slice %28 {offsets = [0, 96], sizes = [80, 16], strides = [1, 1]} : vector<80x192xf32> to vector<80x16xf32>
    %72 = vector.extract_strided_slice %28 {offsets = [0, 160], sizes = [80, 16], strides = [1, 1]} : vector<80x192xf32> to vector<80x16xf32>
    %cst_34 = arith.constant dense<0.000000e+00> : vector<80x80xf32>
    %73 = tpu.matmul %70, %71, %cst_34 {dimension_numbers = #tpu.dot_dimension_numbers<[1], [1], [0], [0], [0, 0, 1, 0], [], []>} : vector<80x16xf32>, vector<80x16xf32>, vector<80x80xf32> -> vector<80x80xf32>
    %74 = arith.addf %73, %22 : vector<80x80xf32>
    %cst_35 = arith.constant dense<0xFF800000> : vector<80xf32>
    %75 = vector.multi_reduction <maximumf>, %74, %cst_35 [1] : vector<80x80xf32> to vector<80xf32>
    %76 = vector.shape_cast %75 : vector<80xf32> to vector<80x1xf32>
    %77 = vector.broadcast %76 : vector<80x1xf32> to vector<80x80xf32>
    %78 = arith.subf %74, %77 : vector<80x80xf32>
    %79 = math.exp %78 : vector<80x80xf32>
    %cst_36 = arith.constant dense<0.000000e+00> : vector<80xf32>
    %80 = vector.multi_reduction <add>, %79, %cst_36 [1] : vector<80x80xf32> to vector<80xf32>
    %81 = vector.shape_cast %80 : vector<80xf32> to vector<80x1xf32>
    %82 = tpu.reciprocal %81 {approx = true} : vector<80x1xf32> -> vector<80x1xf32>
    %83 = vector.broadcast %82 : vector<80x1xf32> to vector<80x80xf32>
    %84 = arith.mulf %79, %83 : vector<80x80xf32>
    %cst_37 = arith.constant dense<0.000000e+00> : vector<80x16xf32>
    %85 = tpu.matmul %84, %72, %cst_37 {dimension_numbers = #tpu.dot_dimension_numbers<[1], [0], [0], [1], [0, 0, 1, 1], [], []>} : vector<80x80xf32>, vector<80x16xf32>, vector<80x16xf32> -> vector<80x16xf32>
    %86 = vector.extract_strided_slice %30 {offsets = [32, 0], sizes = [16, 64], strides = [1, 1]} : vector<64x64xf32> to vector<16x64xf32>
    %cst_38 = arith.constant dense<0.000000e+00> : vector<80x64xf32>
    %87 = tpu.matmul %85, %86, %cst_38 {dimension_numbers = #tpu.dot_dimension_numbers<[1], [0], [0], [1], [0, 0, 1, 1], [], []>} : vector<80x16xf32>, vector<16x64xf32>, vector<80x64xf32> -> vector<80x64xf32>
    %88 = arith.addf %69, %87 : vector<80x64xf32>
    %89 = vector.extract_strided_slice %28 {offsets = [0, 48], sizes = [80, 16], strides = [1, 1]} : vector<80x192xf32> to vector<80x16xf32>
    %90 = vector.extract_strided_slice %28 {offsets = [0, 112], sizes = [80, 16], strides = [1, 1]} : vector<80x192xf32> to vector<80x16xf32>
    %91 = vector.extract_strided_slice %28 {offsets = [0, 176], sizes = [80, 16], strides = [1, 1]} : vector<80x192xf32> to vector<80x16xf32>
    %cst_39 = arith.constant dense<0.000000e+00> : vector<80x80xf32>
    %92 = tpu.matmul %89, %90, %cst_39 {dimension_numbers = #tpu.dot_dimension_numbers<[1], [1], [0], [0], [0, 0, 1, 0], [], []>} : vector<80x16xf32>, vector<80x16xf32>, vector<80x80xf32> -> vector<80x80xf32>
    %93 = arith.addf %92, %22 : vector<80x80xf32>
    %cst_40 = arith.constant dense<0xFF800000> : vector<80xf32>
    %94 = vector.multi_reduction <maximumf>, %93, %cst_40 [1] : vector<80x80xf32> to vector<80xf32>
    %95 = vector.shape_cast %94 : vector<80xf32> to vector<80x1xf32>
    %96 = vector.broadcast %95 : vector<80x1xf32> to vector<80x80xf32>
    %97 = arith.subf %93, %96 : vector<80x80xf32>
    %98 = math.exp %97 : vector<80x80xf32>
    %cst_41 = arith.constant dense<0.000000e+00> : vector<80xf32>
    %99 = vector.multi_reduction <add>, %98, %cst_41 [1] : vector<80x80xf32> to vector<80xf32>
    %100 = vector.shape_cast %99 : vector<80xf32> to vector<80x1xf32>
    %101 = tpu.reciprocal %100 {approx = true} : vector<80x1xf32> -> vector<80x1xf32>
    %102 = vector.broadcast %101 : vector<80x1xf32> to vector<80x80xf32>
    %103 = arith.mulf %98, %102 : vector<80x80xf32>
    %cst_42 = arith.constant dense<0.000000e+00> : vector<80x16xf32>
    %104 = tpu.matmul %103, %91, %cst_42 {dimension_numbers = #tpu.dot_dimension_numbers<[1], [0], [0], [1], [0, 0, 1, 1], [], []>} : vector<80x80xf32>, vector<80x16xf32>, vector<80x16xf32> -> vector<80x16xf32>
    %105 = vector.extract_strided_slice %30 {offsets = [48, 0], sizes = [16, 64], strides = [1, 1]} : vector<64x64xf32> to vector<16x64xf32>
    %cst_43 = arith.constant dense<0.000000e+00> : vector<80x64xf32>
    %106 = tpu.matmul %104, %105, %cst_43 {dimension_numbers = #tpu.dot_dimension_numbers<[1], [0], [0], [1], [0, 0, 1, 1], [], []>} : vector<80x16xf32>, vector<16x64xf32>, vector<80x64xf32> -> vector<80x64xf32>
    %107 = arith.addf %88, %106 : vector<80x64xf32>
    %c3 = arith.constant 3 : index
    %c0_44 = arith.constant 0 : index
    %108 = vector.load %arg5[%c3, %c0_44] : memref<18x192xf32, #tpu.memory_space<vmem>>, vector<1x64xf32>
    %109 = vector.broadcast %108 : vector<1x64xf32> to vector<80x64xf32>
    %110 = arith.addf %107, %109 : vector<80x64xf32>
    %111 = arith.addf %21, %110 : vector<80x64xf32>
    %c4 = arith.constant 4 : index
    %c0_45 = arith.constant 0 : index
    %112 = vector.load %arg5[%c4, %c0_45] : memref<18x192xf32, #tpu.memory_space<vmem>>, vector<1x64xf32>
    %c5 = arith.constant 5 : index
    %c0_46 = arith.constant 0 : index
    %113 = vector.load %arg5[%c5, %c0_46] : memref<18x192xf32, #tpu.memory_space<vmem>>, vector<1x64xf32>
    %cst_47 = arith.constant dense<0.000000e+00> : vector<80xf32>
    %114 = vector.multi_reduction <add>, %111, %cst_47 [1] : vector<80x64xf32> to vector<80xf32>
    %115 = vector.shape_cast %114 : vector<80xf32> to vector<80x1xf32>
    %cst_48 = arith.constant 6.400000e+01 : f32
    %116 = vector.broadcast %cst_48 : f32 to vector<80x1xf32>
    %117 = arith.divf %115, %116 : vector<80x1xf32>
    %118 = vector.broadcast %117 : vector<80x1xf32> to vector<80x64xf32>
    %119 = arith.subf %111, %118 : vector<80x64xf32>
    %120 = arith.mulf %119, %119 : vector<80x64xf32>
    %cst_49 = arith.constant dense<0.000000e+00> : vector<80xf32>
    %121 = vector.multi_reduction <add>, %120, %cst_49 [1] : vector<80x64xf32> to vector<80xf32>
    %122 = vector.shape_cast %121 : vector<80xf32> to vector<80x1xf32>
    %cst_50 = arith.constant 6.400000e+01 : f32
    %123 = vector.broadcast %cst_50 : f32 to vector<80x1xf32>
    %124 = arith.divf %122, %123 : vector<80x1xf32>
    %cst_51 = arith.constant 9.99999974E-6 : f32
    %125 = vector.broadcast %cst_51 : f32 to vector<80x1xf32>
    %126 = arith.addf %124, %125 : vector<80x1xf32>
    %127 = math.rsqrt %126 : vector<80x1xf32>
    %128 = vector.broadcast %127 : vector<80x1xf32> to vector<80x64xf32>
    %129 = arith.mulf %119, %128 : vector<80x64xf32>
    %130 = vector.broadcast %112 : vector<1x64xf32> to vector<80x64xf32>
    %131 = arith.mulf %129, %130 : vector<80x64xf32>
    %132 = vector.broadcast %113 : vector<1x64xf32> to vector<80x64xf32>
    %133 = arith.addf %131, %132 : vector<80x64xf32>
    %c0_52 = arith.constant 0 : index
    %c128_53 = arith.constant 128 : index
    %c0_54 = arith.constant 0 : index
    %134 = vector.load %arg4[%c0_52, %c128_53, %c0_54] : memref<2x320x192xf32, #tpu.memory_space<vmem>>, vector<1x64x128xf32>
    %135 = vector.shape_cast %134 : vector<1x64x128xf32> to vector<64x128xf32>
    %c0_55 = arith.constant 0 : index
    %c192 = arith.constant 192 : index
    %c0_56 = arith.constant 0 : index
    %136 = vector.load %arg4[%c0_55, %c192, %c0_56] : memref<2x320x192xf32, #tpu.memory_space<vmem>>, vector<1x128x64xf32>
    %137 = vector.shape_cast %136 : vector<1x128x64xf32> to vector<128x64xf32>
    %cst_57 = arith.constant dense<0.000000e+00> : vector<80x128xf32>
    %138 = tpu.matmul %133, %135, %cst_57 {dimension_numbers = #tpu.dot_dimension_numbers<[1], [0], [0], [1], [0, 0, 1, 1], [], []>} : vector<80x64xf32>, vector<64x128xf32>, vector<80x128xf32> -> vector<80x128xf32>
    %c6 = arith.constant 6 : index
    %c0_58 = arith.constant 0 : index
    %139 = vector.load %arg5[%c6, %c0_58] : memref<18x192xf32, #tpu.memory_space<vmem>>, vector<1x128xf32>
    %140 = vector.broadcast %139 : vector<1x128xf32> to vector<80x128xf32>
    %141 = arith.addf %138, %140 : vector<80x128xf32>
    %cst_59 = arith.constant 0.000000e+00 : f32
    %142 = vector.broadcast %cst_59 : f32 to vector<80x128xf32>
    %143 = arith.maximumf %141, %142 : vector<80x128xf32>
    %cst_60 = arith.constant dense<0.000000e+00> : vector<80x64xf32>
    %144 = tpu.matmul %143, %137, %cst_60 {dimension_numbers = #tpu.dot_dimension_numbers<[1], [0], [0], [1], [0, 0, 1, 1], [], []>} : vector<80x128xf32>, vector<128x64xf32>, vector<80x64xf32> -> vector<80x64xf32>
    %c7 = arith.constant 7 : index
    %c0_61 = arith.constant 0 : index
    %145 = vector.load %arg5[%c7, %c0_61] : memref<18x192xf32, #tpu.memory_space<vmem>>, vector<1x64xf32>
    %146 = vector.broadcast %145 : vector<1x64xf32> to vector<80x64xf32>
    %147 = arith.addf %144, %146 : vector<80x64xf32>
    %148 = arith.addf %133, %147 : vector<80x64xf32>
    %c8 = arith.constant 8 : index
    %c0_62 = arith.constant 0 : index
    %149 = vector.load %arg5[%c8, %c0_62] : memref<18x192xf32, #tpu.memory_space<vmem>>, vector<1x64xf32>
    %c9 = arith.constant 9 : index
    %c0_63 = arith.constant 0 : index
    %150 = vector.load %arg5[%c9, %c0_63] : memref<18x192xf32, #tpu.memory_space<vmem>>, vector<1x64xf32>
    %cst_64 = arith.constant dense<0.000000e+00> : vector<80xf32>
    %151 = vector.multi_reduction <add>, %148, %cst_64 [1] : vector<80x64xf32> to vector<80xf32>
    %152 = vector.shape_cast %151 : vector<80xf32> to vector<80x1xf32>
    %cst_65 = arith.constant 6.400000e+01 : f32
    %153 = vector.broadcast %cst_65 : f32 to vector<80x1xf32>
    %154 = arith.divf %152, %153 : vector<80x1xf32>
    %155 = vector.broadcast %154 : vector<80x1xf32> to vector<80x64xf32>
    %156 = arith.subf %148, %155 : vector<80x64xf32>
    %157 = arith.mulf %156, %156 : vector<80x64xf32>
    %cst_66 = arith.constant dense<0.000000e+00> : vector<80xf32>
    %158 = vector.multi_reduction <add>, %157, %cst_66 [1] : vector<80x64xf32> to vector<80xf32>
    %159 = vector.shape_cast %158 : vector<80xf32> to vector<80x1xf32>
    %cst_67 = arith.constant 6.400000e+01 : f32
    %160 = vector.broadcast %cst_67 : f32 to vector<80x1xf32>
    %161 = arith.divf %159, %160 : vector<80x1xf32>
    %cst_68 = arith.constant 9.99999974E-6 : f32
    %162 = vector.broadcast %cst_68 : f32 to vector<80x1xf32>
    %163 = arith.addf %161, %162 : vector<80x1xf32>
    %164 = math.rsqrt %163 : vector<80x1xf32>
    %165 = vector.broadcast %164 : vector<80x1xf32> to vector<80x64xf32>
    %166 = arith.mulf %156, %165 : vector<80x64xf32>
    %167 = vector.broadcast %149 : vector<1x64xf32> to vector<80x64xf32>
    %168 = arith.mulf %166, %167 : vector<80x64xf32>
    %169 = vector.broadcast %150 : vector<1x64xf32> to vector<80x64xf32>
    %170 = arith.addf %168, %169 : vector<80x64xf32>
    %c1_69 = arith.constant 1 : index
    %c0_70 = arith.constant 0 : index
    %c0_71 = arith.constant 0 : index
    %171 = vector.load %arg4[%c1_69, %c0_70, %c0_71] : memref<2x320x192xf32, #tpu.memory_space<vmem>>, vector<1x64x192xf32>
    %172 = vector.shape_cast %171 : vector<1x64x192xf32> to vector<64x192xf32>
    %c10 = arith.constant 10 : index
    %c0_72 = arith.constant 0 : index
    %173 = vector.load %arg5[%c10, %c0_72] : memref<18x192xf32, #tpu.memory_space<vmem>>, vector<1x192xf32>
    %cst_73 = arith.constant dense<0.000000e+00> : vector<80x192xf32>
    %174 = tpu.matmul %170, %172, %cst_73 {dimension_numbers = #tpu.dot_dimension_numbers<[1], [0], [0], [1], [0, 0, 1, 1], [], []>} : vector<80x64xf32>, vector<64x192xf32>, vector<80x192xf32> -> vector<80x192xf32>
    %175 = vector.broadcast %173 : vector<1x192xf32> to vector<80x192xf32>
    %176 = arith.addf %174, %175 : vector<80x192xf32>
    %c1_74 = arith.constant 1 : index
    %c64_75 = arith.constant 64 : index
    %c0_76 = arith.constant 0 : index
    %177 = vector.load %arg4[%c1_74, %c64_75, %c0_76] : memref<2x320x192xf32, #tpu.memory_space<vmem>>, vector<1x64x64xf32>
    %178 = vector.shape_cast %177 : vector<1x64x64xf32> to vector<64x64xf32>
    %cst_77 = arith.constant 0.000000e+00 : f32
    %179 = vector.broadcast %cst_77 : f32 to vector<80x64xf32>
    %180 = vector.extract_strided_slice %176 {offsets = [0, 0], sizes = [80, 16], strides = [1, 1]} : vector<80x192xf32> to vector<80x16xf32>
    %181 = vector.extract_strided_slice %176 {offsets = [0, 64], sizes = [80, 16], strides = [1, 1]} : vector<80x192xf32> to vector<80x16xf32>
    %182 = vector.extract_strided_slice %176 {offsets = [0, 128], sizes = [80, 16], strides = [1, 1]} : vector<80x192xf32> to vector<80x16xf32>
    %cst_78 = arith.constant dense<0.000000e+00> : vector<80x80xf32>
    %183 = tpu.matmul %180, %181, %cst_78 {dimension_numbers = #tpu.dot_dimension_numbers<[1], [1], [0], [0], [0, 0, 1, 0], [], []>} : vector<80x16xf32>, vector<80x16xf32>, vector<80x80xf32> -> vector<80x80xf32>
    %184 = arith.addf %183, %22 : vector<80x80xf32>
    %cst_79 = arith.constant dense<0xFF800000> : vector<80xf32>
    %185 = vector.multi_reduction <maximumf>, %184, %cst_79 [1] : vector<80x80xf32> to vector<80xf32>
    %186 = vector.shape_cast %185 : vector<80xf32> to vector<80x1xf32>
    %187 = vector.broadcast %186 : vector<80x1xf32> to vector<80x80xf32>
    %188 = arith.subf %184, %187 : vector<80x80xf32>
    %189 = math.exp %188 : vector<80x80xf32>
    %cst_80 = arith.constant dense<0.000000e+00> : vector<80xf32>
    %190 = vector.multi_reduction <add>, %189, %cst_80 [1] : vector<80x80xf32> to vector<80xf32>
    %191 = vector.shape_cast %190 : vector<80xf32> to vector<80x1xf32>
    %192 = tpu.reciprocal %191 {approx = true} : vector<80x1xf32> -> vector<80x1xf32>
    %193 = vector.broadcast %192 : vector<80x1xf32> to vector<80x80xf32>
    %194 = arith.mulf %189, %193 : vector<80x80xf32>
    %cst_81 = arith.constant dense<0.000000e+00> : vector<80x16xf32>
    %195 = tpu.matmul %194, %182, %cst_81 {dimension_numbers = #tpu.dot_dimension_numbers<[1], [0], [0], [1], [0, 0, 1, 1], [], []>} : vector<80x80xf32>, vector<80x16xf32>, vector<80x16xf32> -> vector<80x16xf32>
    %196 = vector.extract_strided_slice %178 {offsets = [0, 0], sizes = [16, 64], strides = [1, 1]} : vector<64x64xf32> to vector<16x64xf32>
    %cst_82 = arith.constant dense<0.000000e+00> : vector<80x64xf32>
    %197 = tpu.matmul %195, %196, %cst_82 {dimension_numbers = #tpu.dot_dimension_numbers<[1], [0], [0], [1], [0, 0, 1, 1], [], []>} : vector<80x16xf32>, vector<16x64xf32>, vector<80x64xf32> -> vector<80x64xf32>
    %198 = arith.addf %179, %197 : vector<80x64xf32>
    %199 = vector.extract_strided_slice %176 {offsets = [0, 16], sizes = [80, 16], strides = [1, 1]} : vector<80x192xf32> to vector<80x16xf32>
    %200 = vector.extract_strided_slice %176 {offsets = [0, 80], sizes = [80, 16], strides = [1, 1]} : vector<80x192xf32> to vector<80x16xf32>
    %201 = vector.extract_strided_slice %176 {offsets = [0, 144], sizes = [80, 16], strides = [1, 1]} : vector<80x192xf32> to vector<80x16xf32>
    %cst_83 = arith.constant dense<0.000000e+00> : vector<80x80xf32>
    %202 = tpu.matmul %199, %200, %cst_83 {dimension_numbers = #tpu.dot_dimension_numbers<[1], [1], [0], [0], [0, 0, 1, 0], [], []>} : vector<80x16xf32>, vector<80x16xf32>, vector<80x80xf32> -> vector<80x80xf32>
    %203 = arith.addf %202, %22 : vector<80x80xf32>
    %cst_84 = arith.constant dense<0xFF800000> : vector<80xf32>
    %204 = vector.multi_reduction <maximumf>, %203, %cst_84 [1] : vector<80x80xf32> to vector<80xf32>
    %205 = vector.shape_cast %204 : vector<80xf32> to vector<80x1xf32>
    %206 = vector.broadcast %205 : vector<80x1xf32> to vector<80x80xf32>
    %207 = arith.subf %203, %206 : vector<80x80xf32>
    %208 = math.exp %207 : vector<80x80xf32>
    %cst_85 = arith.constant dense<0.000000e+00> : vector<80xf32>
    %209 = vector.multi_reduction <add>, %208, %cst_85 [1] : vector<80x80xf32> to vector<80xf32>
    %210 = vector.shape_cast %209 : vector<80xf32> to vector<80x1xf32>
    %211 = tpu.reciprocal %210 {approx = true} : vector<80x1xf32> -> vector<80x1xf32>
    %212 = vector.broadcast %211 : vector<80x1xf32> to vector<80x80xf32>
    %213 = arith.mulf %208, %212 : vector<80x80xf32>
    %cst_86 = arith.constant dense<0.000000e+00> : vector<80x16xf32>
    %214 = tpu.matmul %213, %201, %cst_86 {dimension_numbers = #tpu.dot_dimension_numbers<[1], [0], [0], [1], [0, 0, 1, 1], [], []>} : vector<80x80xf32>, vector<80x16xf32>, vector<80x16xf32> -> vector<80x16xf32>
    %215 = vector.extract_strided_slice %178 {offsets = [16, 0], sizes = [16, 64], strides = [1, 1]} : vector<64x64xf32> to vector<16x64xf32>
    %cst_87 = arith.constant dense<0.000000e+00> : vector<80x64xf32>
    %216 = tpu.matmul %214, %215, %cst_87 {dimension_numbers = #tpu.dot_dimension_numbers<[1], [0], [0], [1], [0, 0, 1, 1], [], []>} : vector<80x16xf32>, vector<16x64xf32>, vector<80x64xf32> -> vector<80x64xf32>
    %217 = arith.addf %198, %216 : vector<80x64xf32>
    %218 = vector.extract_strided_slice %176 {offsets = [0, 32], sizes = [80, 16], strides = [1, 1]} : vector<80x192xf32> to vector<80x16xf32>
    %219 = vector.extract_strided_slice %176 {offsets = [0, 96], sizes = [80, 16], strides = [1, 1]} : vector<80x192xf32> to vector<80x16xf32>
    %220 = vector.extract_strided_slice %176 {offsets = [0, 160], sizes = [80, 16], strides = [1, 1]} : vector<80x192xf32> to vector<80x16xf32>
    %cst_88 = arith.constant dense<0.000000e+00> : vector<80x80xf32>
    %221 = tpu.matmul %218, %219, %cst_88 {dimension_numbers = #tpu.dot_dimension_numbers<[1], [1], [0], [0], [0, 0, 1, 0], [], []>} : vector<80x16xf32>, vector<80x16xf32>, vector<80x80xf32> -> vector<80x80xf32>
    %222 = arith.addf %221, %22 : vector<80x80xf32>
    %cst_89 = arith.constant dense<0xFF800000> : vector<80xf32>
    %223 = vector.multi_reduction <maximumf>, %222, %cst_89 [1] : vector<80x80xf32> to vector<80xf32>
    %224 = vector.shape_cast %223 : vector<80xf32> to vector<80x1xf32>
    %225 = vector.broadcast %224 : vector<80x1xf32> to vector<80x80xf32>
    %226 = arith.subf %222, %225 : vector<80x80xf32>
    %227 = math.exp %226 : vector<80x80xf32>
    %cst_90 = arith.constant dense<0.000000e+00> : vector<80xf32>
    %228 = vector.multi_reduction <add>, %227, %cst_90 [1] : vector<80x80xf32> to vector<80xf32>
    %229 = vector.shape_cast %228 : vector<80xf32> to vector<80x1xf32>
    %230 = tpu.reciprocal %229 {approx = true} : vector<80x1xf32> -> vector<80x1xf32>
    %231 = vector.broadcast %230 : vector<80x1xf32> to vector<80x80xf32>
    %232 = arith.mulf %227, %231 : vector<80x80xf32>
    %cst_91 = arith.constant dense<0.000000e+00> : vector<80x16xf32>
    %233 = tpu.matmul %232, %220, %cst_91 {dimension_numbers = #tpu.dot_dimension_numbers<[1], [0], [0], [1], [0, 0, 1, 1], [], []>} : vector<80x80xf32>, vector<80x16xf32>, vector<80x16xf32> -> vector<80x16xf32>
    %234 = vector.extract_strided_slice %178 {offsets = [32, 0], sizes = [16, 64], strides = [1, 1]} : vector<64x64xf32> to vector<16x64xf32>
    %cst_92 = arith.constant dense<0.000000e+00> : vector<80x64xf32>
    %235 = tpu.matmul %233, %234, %cst_92 {dimension_numbers = #tpu.dot_dimension_numbers<[1], [0], [0], [1], [0, 0, 1, 1], [], []>} : vector<80x16xf32>, vector<16x64xf32>, vector<80x64xf32> -> vector<80x64xf32>
    %236 = arith.addf %217, %235 : vector<80x64xf32>
    %237 = vector.extract_strided_slice %176 {offsets = [0, 48], sizes = [80, 16], strides = [1, 1]} : vector<80x192xf32> to vector<80x16xf32>
    %238 = vector.extract_strided_slice %176 {offsets = [0, 112], sizes = [80, 16], strides = [1, 1]} : vector<80x192xf32> to vector<80x16xf32>
    %239 = vector.extract_strided_slice %176 {offsets = [0, 176], sizes = [80, 16], strides = [1, 1]} : vector<80x192xf32> to vector<80x16xf32>
    %cst_93 = arith.constant dense<0.000000e+00> : vector<80x80xf32>
    %240 = tpu.matmul %237, %238, %cst_93 {dimension_numbers = #tpu.dot_dimension_numbers<[1], [1], [0], [0], [0, 0, 1, 0], [], []>} : vector<80x16xf32>, vector<80x16xf32>, vector<80x80xf32> -> vector<80x80xf32>
    %241 = arith.addf %240, %22 : vector<80x80xf32>
    %cst_94 = arith.constant dense<0xFF800000> : vector<80xf32>
    %242 = vector.multi_reduction <maximumf>, %241, %cst_94 [1] : vector<80x80xf32> to vector<80xf32>
    %243 = vector.shape_cast %242 : vector<80xf32> to vector<80x1xf32>
    %244 = vector.broadcast %243 : vector<80x1xf32> to vector<80x80xf32>
    %245 = arith.subf %241, %244 : vector<80x80xf32>
    %246 = math.exp %245 : vector<80x80xf32>
    %cst_95 = arith.constant dense<0.000000e+00> : vector<80xf32>
    %247 = vector.multi_reduction <add>, %246, %cst_95 [1] : vector<80x80xf32> to vector<80xf32>
    %248 = vector.shape_cast %247 : vector<80xf32> to vector<80x1xf32>
    %249 = tpu.reciprocal %248 {approx = true} : vector<80x1xf32> -> vector<80x1xf32>
    %250 = vector.broadcast %249 : vector<80x1xf32> to vector<80x80xf32>
    %251 = arith.mulf %246, %250 : vector<80x80xf32>
    %cst_96 = arith.constant dense<0.000000e+00> : vector<80x16xf32>
    %252 = tpu.matmul %251, %239, %cst_96 {dimension_numbers = #tpu.dot_dimension_numbers<[1], [0], [0], [1], [0, 0, 1, 1], [], []>} : vector<80x80xf32>, vector<80x16xf32>, vector<80x16xf32> -> vector<80x16xf32>
    %253 = vector.extract_strided_slice %178 {offsets = [48, 0], sizes = [16, 64], strides = [1, 1]} : vector<64x64xf32> to vector<16x64xf32>
    %cst_97 = arith.constant dense<0.000000e+00> : vector<80x64xf32>
    %254 = tpu.matmul %252, %253, %cst_97 {dimension_numbers = #tpu.dot_dimension_numbers<[1], [0], [0], [1], [0, 0, 1, 1], [], []>} : vector<80x16xf32>, vector<16x64xf32>, vector<80x64xf32> -> vector<80x64xf32>
    %255 = arith.addf %236, %254 : vector<80x64xf32>
    %c11 = arith.constant 11 : index
    %c0_98 = arith.constant 0 : index
    %256 = vector.load %arg5[%c11, %c0_98] : memref<18x192xf32, #tpu.memory_space<vmem>>, vector<1x64xf32>
    %257 = vector.broadcast %256 : vector<1x64xf32> to vector<80x64xf32>
    %258 = arith.addf %255, %257 : vector<80x64xf32>
    %259 = arith.addf %170, %258 : vector<80x64xf32>
    %c12 = arith.constant 12 : index
    %c0_99 = arith.constant 0 : index
    %260 = vector.load %arg5[%c12, %c0_99] : memref<18x192xf32, #tpu.memory_space<vmem>>, vector<1x64xf32>
    %c13 = arith.constant 13 : index
    %c0_100 = arith.constant 0 : index
    %261 = vector.load %arg5[%c13, %c0_100] : memref<18x192xf32, #tpu.memory_space<vmem>>, vector<1x64xf32>
    %cst_101 = arith.constant dense<0.000000e+00> : vector<80xf32>
    %262 = vector.multi_reduction <add>, %259, %cst_101 [1] : vector<80x64xf32> to vector<80xf32>
    %263 = vector.shape_cast %262 : vector<80xf32> to vector<80x1xf32>
    %cst_102 = arith.constant 6.400000e+01 : f32
    %264 = vector.broadcast %cst_102 : f32 to vector<80x1xf32>
    %265 = arith.divf %263, %264 : vector<80x1xf32>
    %266 = vector.broadcast %265 : vector<80x1xf32> to vector<80x64xf32>
    %267 = arith.subf %259, %266 : vector<80x64xf32>
    %268 = arith.mulf %267, %267 : vector<80x64xf32>
    %cst_103 = arith.constant dense<0.000000e+00> : vector<80xf32>
    %269 = vector.multi_reduction <add>, %268, %cst_103 [1] : vector<80x64xf32> to vector<80xf32>
    %270 = vector.shape_cast %269 : vector<80xf32> to vector<80x1xf32>
    %cst_104 = arith.constant 6.400000e+01 : f32
    %271 = vector.broadcast %cst_104 : f32 to vector<80x1xf32>
    %272 = arith.divf %270, %271 : vector<80x1xf32>
    %cst_105 = arith.constant 9.99999974E-6 : f32
    %273 = vector.broadcast %cst_105 : f32 to vector<80x1xf32>
    %274 = arith.addf %272, %273 : vector<80x1xf32>
    %275 = math.rsqrt %274 : vector<80x1xf32>
    %276 = vector.broadcast %275 : vector<80x1xf32> to vector<80x64xf32>
    %277 = arith.mulf %267, %276 : vector<80x64xf32>
    %278 = vector.broadcast %260 : vector<1x64xf32> to vector<80x64xf32>
    %279 = arith.mulf %277, %278 : vector<80x64xf32>
    %280 = vector.broadcast %261 : vector<1x64xf32> to vector<80x64xf32>
    %281 = arith.addf %279, %280 : vector<80x64xf32>
    %c1_106 = arith.constant 1 : index
    %c128_107 = arith.constant 128 : index
    %c0_108 = arith.constant 0 : index
    %282 = vector.load %arg4[%c1_106, %c128_107, %c0_108] : memref<2x320x192xf32, #tpu.memory_space<vmem>>, vector<1x64x128xf32>
    %283 = vector.shape_cast %282 : vector<1x64x128xf32> to vector<64x128xf32>
    %c1_109 = arith.constant 1 : index
    %c192_110 = arith.constant 192 : index
    %c0_111 = arith.constant 0 : index
    %284 = vector.load %arg4[%c1_109, %c192_110, %c0_111] : memref<2x320x192xf32, #tpu.memory_space<vmem>>, vector<1x128x64xf32>
    %285 = vector.shape_cast %284 : vector<1x128x64xf32> to vector<128x64xf32>
    %cst_112 = arith.constant dense<0.000000e+00> : vector<80x128xf32>
    %286 = tpu.matmul %281, %283, %cst_112 {dimension_numbers = #tpu.dot_dimension_numbers<[1], [0], [0], [1], [0, 0, 1, 1], [], []>} : vector<80x64xf32>, vector<64x128xf32>, vector<80x128xf32> -> vector<80x128xf32>
    %c14 = arith.constant 14 : index
    %c0_113 = arith.constant 0 : index
    %287 = vector.load %arg5[%c14, %c0_113] : memref<18x192xf32, #tpu.memory_space<vmem>>, vector<1x128xf32>
    %288 = vector.broadcast %287 : vector<1x128xf32> to vector<80x128xf32>
    %289 = arith.addf %286, %288 : vector<80x128xf32>
    %cst_114 = arith.constant 0.000000e+00 : f32
    %290 = vector.broadcast %cst_114 : f32 to vector<80x128xf32>
    %291 = arith.maximumf %289, %290 : vector<80x128xf32>
    %cst_115 = arith.constant dense<0.000000e+00> : vector<80x64xf32>
    %292 = tpu.matmul %291, %285, %cst_115 {dimension_numbers = #tpu.dot_dimension_numbers<[1], [0], [0], [1], [0, 0, 1, 1], [], []>} : vector<80x128xf32>, vector<128x64xf32>, vector<80x64xf32> -> vector<80x64xf32>
    %c15 = arith.constant 15 : index
    %c0_116 = arith.constant 0 : index
    %293 = vector.load %arg5[%c15, %c0_116] : memref<18x192xf32, #tpu.memory_space<vmem>>, vector<1x64xf32>
    %294 = vector.broadcast %293 : vector<1x64xf32> to vector<80x64xf32>
    %295 = arith.addf %292, %294 : vector<80x64xf32>
    %296 = arith.addf %281, %295 : vector<80x64xf32>
    %c16 = arith.constant 16 : index
    %c0_117 = arith.constant 0 : index
    %297 = vector.load %arg5[%c16, %c0_117] : memref<18x192xf32, #tpu.memory_space<vmem>>, vector<1x64xf32>
    %c17 = arith.constant 17 : index
    %c0_118 = arith.constant 0 : index
    %298 = vector.load %arg5[%c17, %c0_118] : memref<18x192xf32, #tpu.memory_space<vmem>>, vector<1x64xf32>
    %cst_119 = arith.constant dense<0.000000e+00> : vector<80xf32>
    %299 = vector.multi_reduction <add>, %296, %cst_119 [1] : vector<80x64xf32> to vector<80xf32>
    %300 = vector.shape_cast %299 : vector<80xf32> to vector<80x1xf32>
    %cst_120 = arith.constant 6.400000e+01 : f32
    %301 = vector.broadcast %cst_120 : f32 to vector<80x1xf32>
    %302 = arith.divf %300, %301 : vector<80x1xf32>
    %303 = vector.broadcast %302 : vector<80x1xf32> to vector<80x64xf32>
    %304 = arith.subf %296, %303 : vector<80x64xf32>
    %305 = arith.mulf %304, %304 : vector<80x64xf32>
    %cst_121 = arith.constant dense<0.000000e+00> : vector<80xf32>
    %306 = vector.multi_reduction <add>, %305, %cst_121 [1] : vector<80x64xf32> to vector<80xf32>
    %307 = vector.shape_cast %306 : vector<80xf32> to vector<80x1xf32>
    %cst_122 = arith.constant 6.400000e+01 : f32
    %308 = vector.broadcast %cst_122 : f32 to vector<80x1xf32>
    %309 = arith.divf %307, %308 : vector<80x1xf32>
    %cst_123 = arith.constant 9.99999974E-6 : f32
    %310 = vector.broadcast %cst_123 : f32 to vector<80x1xf32>
    %311 = arith.addf %309, %310 : vector<80x1xf32>
    %312 = math.rsqrt %311 : vector<80x1xf32>
    %313 = vector.broadcast %312 : vector<80x1xf32> to vector<80x64xf32>
    %314 = arith.mulf %304, %313 : vector<80x64xf32>
    %315 = vector.broadcast %297 : vector<1x64xf32> to vector<80x64xf32>
    %316 = arith.mulf %314, %315 : vector<80x64xf32>
    %317 = vector.broadcast %298 : vector<1x64xf32> to vector<80x64xf32>
    %318 = arith.addf %316, %317 : vector<80x64xf32>
    %c0_124 = arith.constant 0 : index
    %c0_125 = arith.constant 0 : index
    %319 = vector.load %arg6[%c0_124, %c0_125] : memref<80x64xf32, #tpu.memory_space<vmem>>, vector<80x64xf32>
    tpu.vector_store %arg6[%c0_124, %c0_125], %318 {strides = array<i32>} : memref<80x64xf32, #tpu.memory_space<vmem>>, vector<80x64xf32>,
    return
  }
}

</mosaic_0001>

<llo_original>
// kernel: tpu_custom_call.1
$region0: #{tpu_custom_call.1}
  #allocation0 [shape = 'u32[]', space=smem, size = 0x4, offset = 0x4, fixed_abs, tag = 'smem constant byte address 0x4 - core index']
  #allocation1 [shape = 'u32[144,128]{1,0:T(1,128)}', space=vmem, size = 0x12000, scoped, tag = 'internal scratch']
  %s0 = inlined_call_operand.vmem [shape: f32[32,1], index: 0, kind: input, shape index: {}]
  %s1 = inlined_call_operand.vmem [shape: f32[320,128], index: 1, kind: input, shape index: {}]
  %s2 = inlined_call_operand.vmem [shape: f32[208,64], index: 2, kind: input, shape index: {}]
  %s3 = inlined_call_operand.vmem [shape: f32[80,80], index: 3, kind: input, shape index: {}]
  %s4 = inlined_call_operand.vmem [shape: f32[2,320,192], index: 4, kind: input, shape index: {}]
  %s5 = inlined_call_operand.vmem [shape: f32[18,192], index: 5, kind: input, shape index: {}]
  %s6 = inlined_call_operand.vmem [shape: f32[80,64], index: 6, kind: output, shape index: {}]
  %s7 = sld [smem:[#allocation0]]
  $region34: #{tpu_custom_call.1} parent=0
    _
  %s9 = ssub.s32 1, %s7
  %s10 = scalar_select 0, %s9, %s7
  // Predicated region
  $region2: #{tpu_custom_call.1} parent=0 // pred_check
    _
  $region3: #{tpu_custom_call.1} parent=0 // pred_check_branch
    %12 = sbr.rel (0) target = $region5
  $region4: #{tpu_custom_call.1} parent=0 // pred_region
    _
  $region5: #{tpu_custom_call.1} parent=0 // pred_fallthru
    _
  // Predicated region
  $region6: #{tpu_custom_call.1} parent=0 // pred_check
    _
  $region7: #{tpu_custom_call.1} parent=0 // pred_check_branch
    %14 = sbr.rel (0) target = $region9
  $region8: #{tpu_custom_call.1} parent=0 // pred_region
    _
  $region9: #{tpu_custom_call.1} parent=0 // pred_fallthru
    _
  // Predicated region
  $region10: #{tpu_custom_call.1} parent=0 // pred_check
    _
  $region11: #{tpu_custom_call.1} parent=0 // pred_check_branch
    %16 = sbr.rel (0) target = $region13
  $region12: #{tpu_custom_call.1} parent=0 // pred_region
    _
  $region13: #{tpu_custom_call.1} parent=0 // pred_fallthru
    _
  // Predicated region
  $region14: #{tpu_custom_call.1} parent=0 // pred_check
    _
  $region15: #{tpu_custom_call.1} parent=0 // pred_check_branch
    %18 = sbr.rel (0) target = $region17
  $region16: #{tpu_custom_call.1} parent=0 // pred_region
    _
  $region17: #{tpu_custom_call.1} parent=0 // pred_fallthru
    _
  // Predicated region
  $region18: #{tpu_custom_call.1} parent=0 // pred_check
    _
  $region19: #{tpu_custom_call.1} parent=0 // pred_check_branch
    %20 = sbr.rel (0) target = $region21
  $region20: #{tpu_custom_call.1} parent=0 // pred_region
    _
  $region21: #{tpu_custom_call.1} parent=0 // pred_fallthru
    _
  // Predicated region
  $region22: #{tpu_custom_call.1} parent=0 // pred_check
    _
  $region23: #{tpu_custom_call.1} parent=0 // pred_check_branch
    %22 = sbr.rel (0) target = $region25
  $region24: #{tpu_custom_call.1} parent=0 // pred_region
    _
  $region25: #{tpu_custom_call.1} parent=0 // pred_fallthru
    _
  %v23 = vld [vmem:[%s0] sm:$0xff]
  %v24 = vld [vmem:[%s0 + $0x8] sm:$0xff]
  %v25 = vld [vmem:[%s0 + $0x10] sm:$0xff]
  %v26 = vld [vmem:[%s0 + $0x18] sm:$0xff]
  %v27 = vld [vmem:[%s5] ss:$0 sm:$0xff]
  %v28 = vld [vmem:[%s5 + $0x1] ss:$0 sm:$0xff]
  %30 = vset.pattern.permute.xlu0 0
  %31 = vperm.xlu0 %30, %v23
  %v32 = vpop.permute.xlu0 %31
  %35 = vset.pattern.permute.xlu0 0
  %36 = vperm.xlu0 %35, %v24
  %v37 = vpop.permute.xlu0 %36
  %40 = vset.pattern.permute.xlu0 0
  %41 = vperm.xlu0 %40, %v25
  %v42 = vpop.permute.xlu0 %41
  %45 = vset.pattern.permute.xlu0 0
  %46 = vperm.xlu0 %45, %v26
  %v47 = vpop.permute.xlu0 %46
  %v49 = vmul.f32 %v32, %v27
  %v50 = vmul.f32 %v37, %v27
  %v51 = vmul.f32 %v42, %v27
  %v52 = vmul.f32 %v47, %v27
  %v53 = vadd.f32 %v49, %v28
  %v54 = vadd.f32 %v50, %v28
  %v55 = vadd.f32 %v51, %v28
  %v56 = vadd.f32 %v52, %v28
  %v57 = vtanh.pop %v53
  %v58 = vtanh.pop %v54
  %v59 = vtanh.pop %v55
  %v60 = vtanh.pop %v56
  %v61 = vld [vmem:[%s1] sm:$0xff]
  %v62 = vld [vmem:[%s1 + $0x8] sm:$0xff]
  %v63 = vld [vmem:[%s1 + $0x10] sm:$0xff]
  %v64 = vld [vmem:[%s1 + $0x18] sm:$0xff]
  %vm65 = vcmask 261120
  %v67 = vsel %vm65, %v57, 0
  %v70 = vsel %vm65, %v58, 0
  %v73 = vsel %vm65, %v59, 0
  %v76 = vsel %vm65, %v60, 0
  %78 = vmatprep.subr.mxu0 0.0
  %79 = vmatpush1.msra.mxu0 0.0
  %80 = vmatprep.subr.mxu0 0.0
  %81 = vmatpush1.msra.mxu0 0.0
  %82 = vmatprep.subr.mxu0 0.0
  %83 = vmatpush1.msra.mxu0 0.0
  %84 = vmatprep.subr.mxu0 0.0
  %85 = vmatpush1.msra.mxu0 0.0
  %86 = vmatprep.subr.mxu0 0.0
  %87 = vmatpush1.msra.mxu0 0.0
  %88 = vmatprep.subr.mxu0 0.0
  %89 = vmatpush1.msra.mxu0 0.0
  %90 = vmatprep.subr.mxu0 0.0
  %91 = vmatpush1.msra.mxu0 0.0
  %92 = vmatprep.subr.mxu0 0.0
  %93 = vmatpush1.msra.mxu0 0.0
  %94 = vmatprep.subr.mxu0 0.0
  %95 = vmatpush1.msra.mxu0 0.0
  %96 = vmatprep.subr.mxu0 0.0
  %97 = vmatpush1.msra.mxu0 0.0
  %98 = vmatprep.subr.mxu0 0.0
  %99 = vmatpush1.msra.mxu0 0.0
  %100 = vmatprep.subr.mxu0 0.0
  %101 = vmatpush1.msra.mxu0 0.0
  %102 = vmatprep.subr.mxu0 0.0
  %103 = vmatpush1.msra.mxu0 %v64
  %104 = vmatprep.subr.mxu0 0.0
  %105 = vmatpush1.msra.mxu0 %v63
  %106 = vmatprep.subr.mxu0 0.0
  %107 = vmatpush1.msra.mxu0 %v62
  %108 = vmatprep.subr.mxu0 0.0
  %109 = vmatpush1.msra.mxu0 %v61
  %110 = vmatprep.subr.mxu0 0.0
  %111 = vmatpush2.msra.mxu0 0.0
  %112 = vmatprep.subr.mxu0 0.0
  %113 = vmatpush2.msra.mxu0 0.0
  %114 = vmatprep.subr.mxu0 0.0
  %115 = vmatpush2.msra.mxu0 0.0
  %116 = vmatprep.subr.mxu0 0.0
  %117 = vmatpush2.msra.mxu0 0.0
  %118 = vmatprep.subr.mxu0 0.0
  %119 = vmatpush2.msra.mxu0 0.0
  %120 = vmatprep.subr.mxu0 0.0
  %121 = vmatpush2.msra.mxu0 0.0
  %122 = vmatprep.subr.mxu0 0.0
  %123 = vmatpush2.msra.mxu0 0.0
  %124 = vmatprep.subr.mxu0 0.0
  %125 = vmatpush2.msra.mxu0 0.0
  %126 = vmatprep.subr.mxu0 0.0
  %127 = vmatpush2.msra.mxu0 0.0
  %128 = vmatprep.subr.mxu0 0.0
  %129 = vmatpush2.msra.mxu0 0.0
  %130 = vmatprep.subr.mxu0 0.0
  %131 = vmatpush2.msra.mxu0 0.0
  %132 = vmatprep.subr.mxu0 0.0
  %133 = vmatpush2.msra.mxu0 0.0
  %134 = vmatprep.subr.mxu0 0.0
  %135 = vmatpush2.msra.mxu0 0.0
  %136 = vmatprep.subr.mxu0 0.0
  %137 = vmatpush2.msra.mxu0 0.0
  %138 = vmatprep.subr.mxu0 0.0
  %139 = vmatpush2.msra.mxu0 0.0
  %140 = vmatprep.subr.mxu0 0.0
  %141 = vmatpush2.msra.mxu0 0.0
  %142 = vmatprep.mubr.f32.mxu0 0.0
  %143 = vmatmul.mubr.f32.gmra.mxu0 %v67
  %v144 = vpop.f32.mrf.mxu0
  %v145 = vadd.f32 0.0, %v144
  %v146 = vpop.f32.mrf.mxu0
  %147 = vmatprep.mubr.f32.mxu0 0.0
  %148 = vmatmul.mubr.f32.gmra.mxu0 %v70
  %v149 = vpop.f32.mrf.mxu0
  %v150 = vadd.f32 0.0, %v149
  %v151 = vpop.f32.mrf.mxu0
  %152 = vmatprep.mubr.f32.mxu0 0.0
  %153 = vmatmul.mubr.f32.gmra.mxu0 %v73
  %v154 = vpop.f32.mrf.mxu0
  %v155 = vadd.f32 0.0, %v154
  %v156 = vpop.f32.mrf.mxu0
  %157 = vmatprep.mubr.f32.mxu0 0.0
  %158 = vmatmul.mubr.f32.gmra.mxu0 %v76
  %v159 = vpop.f32.mrf.mxu0
  %v160 = vadd.f32 0.0, %v159
  %v161 = vpop.f32.mrf.mxu0
  %162 = vdwg.mxu0
  %v163 = vld [vmem:[%s1 + $0x20] sm:$0xff]
  %v164 = vld [vmem:[%s1 + $0x28] sm:$0xff]
  %v165 = vld [vmem:[%s1 + $0x30] sm:$0xff]
  %v166 = vld [vmem:[%s1 + $0x38] sm:$0xff]
  %v167 = vld [vmem:[%s1 + $0x40] sm:$0xff]
  %v168 = vld [vmem:[%s1 + $0x48] sm:$0xff]
  %v169 = vld [vmem:[%s1 + $0x50] sm:$0xff]
  %v170 = vld [vmem:[%s1 + $0x58] sm:$0xff]
  %v171 = vld [vmem:[%s1 + $0x60] sm:$0xff]
  %v172 = vld [vmem:[%s1 + $0x68] sm:$0xff]
  %v173 = vld [vmem:[%s1 + $0x70] sm:$0xff]
  %v174 = vld [vmem:[%s1 + $0x78] sm:$0xff]
  %v175 = vld [vmem:[%s1 + $0x80] sm:$0xff]
  %v176 = vld [vmem:[%s1 + $0x88] sm:$0xff]
  %v177 = vld [vmem:[%s1 + $0x90] sm:$0xff]
  %v178 = vld [vmem:[%s1 + $0x98] sm:$0xff]
  %v179 = vld [vmem:[%s1 + $0xa0] sm:$0xff]
  %v180 = vld [vmem:[%s1 + $0xa8] sm:$0xff]
  %v181 = vld [vmem:[%s1 + $0xb0] sm:$0xff]
  %v182 = vld [vmem:[%s1 + $0xb8] sm:$0xff]
  %v183 = vld [vmem:[%s1 + $0xc0] sm:$0xff]
  %v184 = vld [vmem:[%s1 + $0xc8] sm:$0xff]
  %v185 = vld [vmem:[%s1 + $0xd0] sm:$0xff]
  %v186 = vld [vmem:[%s1 + $0xd8] sm:$0xff]
  %v187 = vld [vmem:[%s1 + $0xe0] sm:$0xff]
  %v188 = vld [vmem:[%s1 + $0xe8] sm:$0xff]
  %v189 = vld [vmem:[%s1 + $0xf0] sm:$0xff]
  %v190 = vld [vmem:[%s1 + $0xf8] sm:$0xff]
  %v191 = vld [vmem:[%s1 + $0x100] sm:$0xff]
  %v192 = vld [vmem:[%s1 + $0x108] sm:$0xff]
  %v193 = vld [vmem:[%s1 + $0x110] sm:$0xff]
  %v194 = vld [vmem:[%s1 + $0x118] sm:$0xff]
  %v195 = vld [vmem:[%s1 + $0x120] sm:$0xff]
  %v196 = vld [vmem:[%s1 + $0x128] sm:$0xff]
  %v197 = vld [vmem:[%s1 + $0x130] sm:$0xff]
  %v198 = vld [vmem:[%s1 + $0x138] sm:$0xff]
  %v199 = vmul.f32 %v145, %v173
  %v200 = vmul.f32 %v150, %v174
  %v201 = vmul.f32 %v155, %v175
  %v202 = vmul.f32 %v160, %v176
  %v203 = vmul.f32 %v145, %v177
  %v204 = vmul.f32 %v150, %v178
  %v205 = vmul.f32 %v155, %v179
  %v206 = vmul.f32 %v160, %v180
  %v207 = vmul.f32 %v145, %v181
  %v208 = vmul.f32 %v150, %v182
  %v209 = vmul.f32 %v155, %v183
  %v210 = vmul.f32 %v160, %v184
  %v211 = vmul.f32 %v145, %v185
  %v212 = vmul.f32 %v150, %v186
  %v213 = vmul.f32 %v155, %v187
  %v214 = vmul.f32 %v160, %v188
  %215 = vmatprep.subr.mxu0 0.0
  %216 = vmatpush1.msra.mxu0 %v214
  %217 = vmatprep.subr.mxu0 0.0
  %218 = vmatpush1.msra.mxu0 %v213
  %219 = vmatprep.subr.mxu0 0.0
  %220 = vmatpush1.msra.mxu0 %v212
  %221 = vmatprep.subr.mxu0 0.0
  %222 = vmatpush1.msra.mxu0 %v211
  %223 = vmatprep.subr.mxu0 0.0
  %224 = vmatpush1.msra.mxu0 %v210
  %225 = vmatprep.subr.mxu0 0.0
  %226 = vmatpush1.msra.mxu0 %v209
  %227 = vmatprep.subr.mxu0 0.0
  %228 = vmatpush1.msra.mxu0 %v208
  %229 = vmatprep.subr.mxu0 0.0
  %230 = vmatpush1.msra.mxu0 %v207
  %231 = vmatprep.subr.mxu0 0.0
  %232 = vmatpush1.msra.mxu0 %v206
  %233 = vmatprep.subr.mxu0 0.0
  %234 = vmatpush1.msra.mxu0 %v205
  %235 = vmatprep.subr.mxu0 0.0
  %236 = vmatpush1.msra.mxu0 %v204
  %237 = vmatprep.subr.mxu0 0.0
  %238 = vmatpush1.msra.mxu0 %v203
  %239 = vmatprep.subr.mxu0 0.0
  %240 = vmatpush1.msra.mxu0 %v202
  %241 = vmatprep.subr.mxu0 0.0
  %242 = vmatpush1.msra.mxu0 %v201
  %243 = vmatprep.subr.mxu0 0.0
  %244 = vmatpush1.msra.mxu0 %v200
  %245 = vmatprep.subr.mxu0 0.0
  %246 = vmatpush1.msra.mxu0 %v199
  %247 = vmatprep.subr.mxu0 0.0
  %248 = vmatpush2.msra.mxu0 0.0
  %249 = vmatprep.subr.mxu0 0.0
  %250 = vmatpush2.msra.mxu0 0.0
  %251 = vmatprep.subr.mxu0 0.0
  %252 = vmatpush2.msra.mxu0 0.0
  %253 = vmatprep.subr.mxu0 0.0
  %254 = vmatpush2.msra.mxu0 0.0
  %255 = vmatprep.subr.mxu0 0.0
  %256 = vmatpush2.msra.mxu0 0.0
  %257 = vmatprep.subr.mxu0 0.0
  %258 = vmatpush2.msra.mxu0 0.0
  %259 = vmatprep.subr.mxu0 0.0
  %260 = vmatpush2.msra.mxu0 0.0
  %261 = vmatprep.subr.mxu0 0.0
  %262 = vmatpush2.msra.mxu0 0.0
  %263 = vmatprep.subr.mxu0 0.0
  %264 = vmatpush2.msra.mxu0 0.0
  %265 = vmatprep.subr.mxu0 0.0
  %266 = vmatpush2.msra.mxu0 0.0
  %267 = vmatprep.subr.mxu0 0.0
  %268 = vmatpush2.msra.mxu0 0.0
  %269 = vmatprep.subr.mxu0 0.0
  %270 = vmatpush2.msra.mxu0 0.0
  %271 = vmatprep.subr.mxu0 0.0
  %272 = vmatpush2.msra.mxu0 0.0
  %273 = vmatprep.subr.mxu0 0.0
  %274 = vmatpush2.msra.mxu0 0.0
  %275 = vmatprep.subr.mxu0 0.0
  %276 = vmatpush2.msra.mxu0 0.0
  %277 = vmatprep.subr.mxu0 0.0
  %278 = vmatpush2.msra.mxu0 0.0
  %279 = vmatprep.mubr.f32.mxu0 0.0
  %280 = vmatmul.mubr.f32.gmra.mxu0 %v163
  %v281 = vpop.f32.mrf.mxu0
  %v282 = vadd.f32 0.0, %v281
  %v283 = vpop.f32.mrf.mxu0
  %284 = vmatprep.mubr.f32.mxu0 0.0
  %285 = vmatmul.mubr.f32.gmra.mxu0 %v164
  %v286 = vpop.f32.mrf.mxu0
  %v287 = vadd.f32 0.0, %v286
  %v288 = vpop.f32.mrf.mxu0
  %289 = vmatprep.mubr.f32.mxu0 0.0
  %290 = vmatmul.mubr.f32.gmra.mxu0 %v165
  %v291 = vpop.f32.mrf.mxu0
  %v292 = vadd.f32 0.0, %v291
  %v293 = vpop.f32.mrf.mxu0
  %294 = vmatprep.mubr.f32.mxu0 0.0
  %295 = vmatmul.mubr.f32.gmra.mxu0 %v166
  %v296 = vpop.f32.mrf.mxu0
  %v297 = vadd.f32 0.0, %v296
  %v298 = vpop.f32.mrf.mxu0
  %299 = vmatprep.mubr.f32.mxu0 0.0
  %300 = vmatmul.mubr.f32.gmra.mxu0 %v167
  %v301 = vpop.f32.mrf.mxu0
  %v302 = vadd.f32 0.0, %v301
  %v303 = vpop.f32.mrf.mxu0
  %304 = vmatprep.mubr.f32.mxu0 0.0
  %305 = vmatmul.mubr.f32.gmra.mxu0 %v168
  %v306 = vpop.f32.mrf.mxu0
  %v307 = vadd.f32 0.0, %v306
  %v308 = vpop.f32.mrf.mxu0
  %309 = vmatprep.mubr.f32.mxu0 0.0
  %310 = vmatmul.mubr.f32.gmra.mxu0 %v169
  %v311 = vpop.f32.mrf.mxu0
  %v312 = vadd.f32 0.0, %v311
  %v313 = vpop.f32.mrf.mxu0
  %314 = vmatprep.mubr.f32.mxu0 0.0
  %315 = vmatmul.mubr.f32.gmra.mxu0 %v170
  %v316 = vpop.f32.mrf.mxu0
  %v317 = vadd.f32 0.0, %v316
  %v318 = vpop.f32.mrf.mxu0
  %319 = vmatprep.mubr.f32.mxu0 0.0
  %320 = vmatmul.mubr.f32.gmra.mxu0 %v171
  %v321 = vpop.f32.mrf.mxu0
  %v322 = vadd.f32 0.0, %v321
  %v323 = vpop.f32.mrf.mxu0
  %324 = vmatprep.mubr.f32.mxu0 0.0
  %325 = vmatmul.mubr.f32.gmra.mxu0 %v172
  %v326 = vpop.f32.mrf.mxu0
  %v327 = vadd.f32 0.0, %v326
  %v328 = vpop.f32.mrf.mxu0
  %329 = vdwg.mxu0
  %v330 = vmul.f32 %v282, %v189
  %v331 = vmul.f32 %v287, %v190
  %v332 = vmul.f32 %v292, %v191
  %v333 = vmul.f32 %v297, %v192
  %v334 = vmul.f32 %v302, %v193
  %v335 = vmul.f32 %v307, %v194
  %v336 = vmul.f32 %v312, %v195
  %v337 = vmul.f32 %v317, %v196
  %v338 = vmul.f32 %v322, %v197
  %v339 = vmul.f32 %v327, %v198
  %v340 = vld [vmem:[%s2] sm:$0xff]
  %v341 = vld [vmem:[%s2 + $0x8] sm:$0xff]
  %v342 = vld [vmem:[%s2 + $0x10] sm:$0xff]
  %v343 = vld [vmem:[%s2 + $0x18] sm:$0xff]
  %v344 = vld [vmem:[%s2 + $0x20] sm:$0xff]
  %v345 = vld [vmem:[%s2 + $0x28] sm:$0xff]
  %v346 = vld [vmem:[%s2 + $0x30] sm:$0xff]
  %v347 = vld [vmem:[%s2 + $0x38] sm:$0xff]
  %v348 = vld [vmem:[%s2 + $0x40] sm:$0xff]
  %v349 = vld [vmem:[%s2 + $0x48] sm:$0xff]
  %v350 = vld [vmem:[%s2 + $0x50] sm:$0xff]
  %v351 = vld [vmem:[%s2 + $0x58] sm:$0xff]
  %v352 = vld [vmem:[%s2 + $0x60] sm:$0xff]
  %v353 = vld [vmem:[%s2 + $0x68] sm:$0xff]
  %v354 = vld [vmem:[%s2 + $0x70] sm:$0xff]
  %v355 = vld [vmem:[%s2 + $0x78] sm:$0xff]
  %v356 = vld [vmem:[%s2 + $0x80] sm:$0xff]
  %v357 = vld [vmem:[%s2 + $0x88] sm:$0xff]
  %v358 = vld [vmem:[%s2 + $0x90] sm:$0xff]
  %v359 = vld [vmem:[%s2 + $0x98] sm:$0xff]
  %v360 = vld [vmem:[%s2 + $0xa0] sm:$0xff]
  %v361 = vld [vmem:[%s2 + $0xa8] sm:$0xff]
  %v362 = vld [vmem:[%s2 + $0xb0] sm:$0xff]
  %v363 = vld [vmem:[%s2 + $0xb8] sm:$0xff]
  %v364 = vld [vmem:[%s2 + $0xc0] sm:$0xff]
  %v365 = vld [vmem:[%s2 + $0xc8] sm:$0xff]
  %366 = vmatprep.subr.mxu0 0.0
  %367 = vmatpush1.msra.mxu0 %v355
  %368 = vmatprep.subr.mxu0 0.0
  %369 = vmatpush1.msra.mxu0 %v354
  %370 = vmatprep.subr.mxu0 0.0
  %371 = vmatpush1.msra.mxu0 %v353
  %372 = vmatprep.subr.mxu0 0.0
  %373 = vmatpush1.msra.mxu0 %v352
  %374 = vmatprep.subr.mxu0 0.0
  %375 = vmatpush1.msra.mxu0 %v351
  %376 = vmatprep.subr.mxu0 0.0
  %377 = vmatpush1.msra.mxu0 %v350
  %378 = vmatprep.subr.mxu0 0.0
  %379 = vmatpush1.msra.mxu0 %v349
  %380 = vmatprep.subr.mxu0 0.0
  %381 = vmatpush1.msra.mxu0 %v348
  %382 = vmatprep.subr.mxu0 0.0
  %383 = vmatpush1.msra.mxu0 %v347
  %384 = vmatprep.subr.mxu0 0.0
  %385 = vmatpush1.msra.mxu0 %v346
  %386 = vmatprep.subr.mxu0 0.0
  %387 = vmatpush1.msra.mxu0 %v345
  %388 = vmatprep.subr.mxu0 0.0
  %389 = vmatpush1.msra.mxu0 %v344
  %390 = vmatprep.subr.mxu0 0.0
  %391 = vmatpush1.msra.mxu0 %v343
  %392 = vmatprep.subr.mxu0 0.0
  %393 = vmatpush1.msra.mxu0 %v342
  %394 = vmatprep.subr.mxu0 0.0
  %395 = vmatpush1.msra.mxu0 %v341
  %396 = vmatprep.subr.mxu0 0.0
  %397 = vmatpush1.msra.mxu0 %v340
  %398 = vmatprep.subr.mxu0 0.0
  %399 = vmatpush2.msra.mxu0 0.0
  %400 = vmatprep.subr.mxu0 0.0
  %401 = vmatpush2.msra.mxu0 0.0
  %402 = vmatprep.subr.mxu0 0.0
  %403 = vmatpush2.msra.mxu0 0.0
  %404 = vmatprep.subr.mxu0 0.0
  %405 = vmatpush2.msra.mxu0 0.0
  %406 = vmatprep.subr.mxu0 0.0
  %407 = vmatpush2.msra.mxu0 0.0
  %408 = vmatprep.subr.mxu0 0.0
  %409 = vmatpush2.msra.mxu0 0.0
  %410 = vmatprep.subr.mxu0 0.0
  %411 = vmatpush2.msra.mxu0 0.0
  %412 = vmatprep.subr.mxu0 0.0
  %413 = vmatpush2.msra.mxu0 0.0
  %414 = vmatprep.subr.mxu0 0.0
  %415 = vmatpush2.msra.mxu0 0.0
  %416 = vmatprep.subr.mxu0 0.0
  %417 = vmatpush2.msra.mxu0 0.0
  %418 = vmatprep.subr.mxu0 0.0
  %419 = vmatpush2.msra.mxu0 0.0
  %420 = vmatprep.subr.mxu0 0.0
  %421 = vmatpush2.msra.mxu0 0.0
  %422 = vmatprep.subr.mxu0 0.0
  %423 = vmatpush2.msra.mxu0 0.0
  %424 = vmatprep.subr.mxu0 0.0
  %425 = vmatpush2.msra.mxu0 0.0
  %426 = vmatprep.subr.mxu0 0.0
  %427 = vmatpush2.msra.mxu0 0.0
  %428 = vmatprep.subr.mxu0 0.0
  %429 = vmatpush2.msra.mxu0 0.0
  %430 = vmatprep.mubr.f32.mxu0 0.0
  %431 = vmatmul.mubr.f32.gmra.mxu0 %v330
  %v432 = vpop.f32.mrf.mxu0
  %v433 = vadd.f32 0.0, %v432
  %v434 = vpop.f32.mrf.mxu0
  %435 = vmatprep.mubr.f32.mxu0 0.0
  %436 = vmatmul.mubr.f32.gmra.mxu0 %v331
  %v437 = vpop.f32.mrf.mxu0
  %v438 = vadd.f32 0.0, %v437
  %v439 = vpop.f32.mrf.mxu0
  %440 = vmatprep.mubr.f32.mxu0 0.0
  %441 = vmatmul.mubr.f32.gmra.mxu0 %v332
  %v442 = vpop.f32.mrf.mxu0
  %v443 = vadd.f32 0.0, %v442
  %v444 = vpop.f32.mrf.mxu0
  %445 = vmatprep.mubr.f32.mxu0 0.0
  %446 = vmatmul.mubr.f32.gmra.mxu0 %v333
  %v447 = vpop.f32.mrf.mxu0
  %v448 = vadd.f32 0.0, %v447
  %v449 = vpop.f32.mrf.mxu0
  %450 = vmatprep.mubr.f32.mxu0 0.0
  %451 = vmatmul.mubr.f32.gmra.mxu0 %v334
  %v452 = vpop.f32.mrf.mxu0
  %v453 = vadd.f32 0.0, %v452
  %v454 = vpop.f32.mrf.mxu0
  %455 = vmatprep.mubr.f32.mxu0 0.0
  %456 = vmatmul.mubr.f32.gmra.mxu0 %v335
  %v457 = vpop.f32.mrf.mxu0
  %v458 = vadd.f32 0.0, %v457
  %v459 = vpop.f32.mrf.mxu0
  %460 = vmatprep.mubr.f32.mxu0 0.0
  %461 = vmatmul.mubr.f32.gmra.mxu0 %v336
  %v462 = vpop.f32.mrf.mxu0
  %v463 = vadd.f32 0.0, %v462
  %v464 = vpop.f32.mrf.mxu0
  %465 = vmatprep.mubr.f32.mxu0 0.0
  %466 = vmatmul.mubr.f32.gmra.mxu0 %v337
  %v467 = vpop.f32.mrf.mxu0
  %v468 = vadd.f32 0.0, %v467
  %v469 = vpop.f32.mrf.mxu0
  %470 = vmatprep.mubr.f32.mxu0 0.0
  %471 = vmatmul.mubr.f32.gmra.mxu0 %v338
  %v472 = vpop.f32.mrf.mxu0
  %v473 = vadd.f32 0.0, %v472
  %v474 = vpop.f32.mrf.mxu0
  %475 = vmatprep.mubr.f32.mxu0 0.0
  %476 = vmatmul.mubr.f32.gmra.mxu0 %v339
  %v477 = vpop.f32.mrf.mxu0
  %v478 = vadd.f32 0.0, %v477
  %v479 = vpop.f32.mrf.mxu0
  %480 = vdwg.mxu0
  %v481 = vadd.f32 %v356, %v433
  %v482 = vadd.f32 %v357, %v438
  %v483 = vadd.f32 %v358, %v443
  %v484 = vadd.f32 %v359, %v448
  %v485 = vadd.f32 %v360, %v453
  %v486 = vadd.f32 %v361, %v458
  %v487 = vadd.f32 %v362, %v463
  %v488 = vadd.f32 %v363, %v468
  %v489 = vadd.f32 %v364, %v473
  %v490 = vadd.f32 %v365, %v478
  %v491 = vld [vmem:[%s3] sm:$0xff]
  %v492 = vld [vmem:[%s3 + $0x8] sm:$0xff]
  %v493 = vld [vmem:[%s3 + $0x10] sm:$0xff]
  %v494 = vld [vmem:[%s3 + $0x18] sm:$0xff]
  %v495 = vld [vmem:[%s3 + $0x20] sm:$0xff]
  %v496 = vld [vmem:[%s3 + $0x28] sm:$0xff]
  %v497 = vld [vmem:[%s3 + $0x30] sm:$0xff]
  %v498 = vld [vmem:[%s3 + $0x38] sm:$0xff]
  %v499 = vld [vmem:[%s3 + $0x40] sm:$0xff]
  %v500 = vld [vmem:[%s3 + $0x48] sm:$0xff]
  %v501 = vld [vmem:[%s4] sm:$0xff]
  %v502 = vld [vmem:[%s4 + $0x8] sm:$0xff]
  %v503 = vld [vmem:[%s4 + $0x10] sm:$0xff]
  %v504 = vld [vmem:[%s4 + $0x18] sm:$0xff]
  %v505 = vld [vmem:[%s4 + $0x20] sm:$0xff]
  %v506 = vld [vmem:[%s4 + $0x28] sm:$0xff]
  %v507 = vld [vmem:[%s4 + $0x30] sm:$0xff]
  %v508 = vld [vmem:[%s4 + $0x38] sm:$0xff]
  %v509 = vld [vmem:[%s4 + $0x40] sm:$0xff]
  %v510 = vld [vmem:[%s4 + $0x48] sm:$0xff]
  %v511 = vld [vmem:[%s4 + $0x50] sm:$0xff]
  %v512 = vld [vmem:[%s4 + $0x58] sm:$0xff]
  %v513 = vld [vmem:[%s4 + $0x60] sm:$0xff]
  %v514 = vld [vmem:[%s4 + $0x68] sm:$0xff]
  %v515 = vld [vmem:[%s4 + $0x70] sm:$0xff]
  %v516 = vld [vmem:[%s4 + $0x78] sm:$0xff]
  %s517 = scalar_lea.vmem %s5, 2
  %v518 = vld [vmem:[%s517] ss:$8 sm:$0x3]
  %v520 = vlaneseq
  %v521 = vshrl.u32 %v520, 7
  %v522 = vsub.s32 0, %v521
  %v523 = vrot.slane %v518, %v522
  %v524 = vlaneseq
  %v525 = vshrl.u32 %v524, 7
  %v526 = vsub.s32 1, %v525
  %v527 = vrot.slane %v518, %v526
  %vm530 = vcmask 523264
  %v532 = vsel %vm530, %v481, 0
  %v535 = vsel %vm530, %v482, 0
  %v538 = vsel %vm530, %v483, 0
  %v541 = vsel %vm530, %v484, 0
  %v544 = vsel %vm530, %v485, 0
  %v547 = vsel %vm530, %v486, 0
  %v550 = vsel %vm530, %v487, 0
  %v553 = vsel %vm530, %v488, 0
  %v556 = vsel %vm530, %v489, 0
  %v559 = vsel %vm530, %v490, 0
  %561 = vmatprep.subr.mxu0 0.0
  %562 = vmatpush1.msra.mxu0 0.0
  %563 = vmatprep.subr.mxu0 0.0
  %564 = vmatpush1.msra.mxu0 0.0
  %565 = vmatprep.subr.mxu0 0.0
  %566 = vmatpush1.msra.mxu0 0.0
  %567 = vmatprep.subr.mxu0 0.0
  %568 = vmatpush1.msra.mxu0 0.0
  %569 = vmatprep.subr.mxu0 0.0
  %570 = vmatpush1.msra.mxu0 0.0
  %571 = vmatprep.subr.mxu0 0.0
  %572 = vmatpush1.msra.mxu0 0.0
  %573 = vmatprep.subr.mxu0 0.0
  %574 = vmatpush1.msra.mxu0 0.0
  %575 = vmatprep.subr.mxu0 0.0
  %576 = vmatpush1.msra.mxu0 0.0
  %577 = vmatprep.subr.mxu0 %v516
  %578 = vmatpush1.msra.mxu0 %v515
  %579 = vmatprep.subr.mxu0 %v514
  %580 = vmatpush1.msra.mxu0 %v513
  %581 = vmatprep.subr.mxu0 %v512
  %582 = vmatpush1.msra.mxu0 %v511
  %583 = vmatprep.subr.mxu0 %v510
  %584 = vmatpush1.msra.mxu0 %v509
  %585 = vmatprep.subr.mxu0 %v508
  %586 = vmatpush1.msra.mxu0 %v507
  %587 = vmatprep.subr.mxu0 %v506
  %588 = vmatpush1.msra.mxu0 %v505
  %589 = vmatprep.subr.mxu0 %v504
  %590 = vmatpush1.msra.mxu0 %v503
  %591 = vmatprep.subr.mxu0 %v502
  %592 = vmatpush1.msra.mxu0 %v501
  %593 = vmatprep.subr.mxu0 0.0
  %594 = vmatpush2.msra.mxu0 0.0
  %595 = vmatprep.subr.mxu0 0.0
  %596 = vmatpush2.msra.mxu0 0.0
  %597 = vmatprep.subr.mxu0 0.0
  %598 = vmatpush2.msra.mxu0 0.0
  %599 = vmatprep.subr.mxu0 0.0
  %600 = vmatpush2.msra.mxu0 0.0
  %601 = vmatprep.subr.mxu0 0.0
  %602 = vmatpush2.msra.mxu0 0.0
  %603 = vmatprep.subr.mxu0 0.0
  %604 = vmatpush2.msra.mxu0 0.0
  %605 = vmatprep.subr.mxu0 0.0
  %606 = vmatpush2.msra.mxu0 0.0
  %607 = vmatprep.subr.mxu0 0.0
  %608 = vmatpush2.msra.mxu0 0.0
  %609 = vmatprep.subr.mxu0 0.0
  %610 = vmatpush2.msra.mxu0 0.0
  %611 = vmatprep.subr.mxu0 0.0
  %612 = vmatpush2.msra.mxu0 0.0
  %613 = vmatprep.subr.mxu0 0.0
  %614 = vmatpush2.msra.mxu0 0.0
  %615 = vmatprep.subr.mxu0 0.0
  %616 = vmatpush2.msra.mxu0 0.0
  %617 = vmatprep.subr.mxu0 0.0
  %618 = vmatpush2.msra.mxu0 0.0
  %619 = vmatprep.subr.mxu0 0.0
  %620 = vmatpush2.msra.mxu0 0.0
  %621 = vmatprep.subr.mxu0 0.0
  %622 = vmatpush2.msra.mxu0 0.0
  %623 = vmatprep.subr.mxu0 0.0
  %624 = vmatpush2.msra.mxu0 0.0
  %625 = vmatprep.mubr.f32.mxu0 0.0
  %626 = vmatmul.mubr.f32.gmra.mxu0 %v532
  %v627 = vpop.f32.mrf.mxu0
  %v628 = vadd.f32 %v523, %v627
  %v629 = vpop.f32.mrf.mxu0
  %v630 = vadd.f32 %v527, %v629
  %631 = vmatprep.mubr.f32.mxu0 0.0
  %632 = vmatmul.mubr.f32.gmra.mxu0 %v535
  %v633 = vpop.f32.mrf.mxu0
  %v634 = vadd.f32 %v523, %v633
  %v635 = vpop.f32.mrf.mxu0
  %v636 = vadd.f32 %v527, %v635
  %637 = vmatprep.mubr.f32.mxu0 0.0
  %638 = vmatmul.mubr.f32.gmra.mxu0 %v538
  %v639 = vpop.f32.mrf.mxu0
  %v640 = vadd.f32 %v523, %v639
  %v641 = vpop.f32.mrf.mxu0
  %v642 = vadd.f32 %v527, %v641
  %643 = vmatprep.mubr.f32.mxu0 0.0
  %644 = vmatmul.mubr.f32.gmra.mxu0 %v541
  %v645 = vpop.f32.mrf.mxu0
  %v646 = vadd.f32 %v523, %v645
  %v647 = vpop.f32.mrf.mxu0
  %v648 = vadd.f32 %v527, %v647
  %649 = vmatprep.mubr.f32.mxu0 0.0
  %650 = vmatmul.mubr.f32.gmra.mxu0 %v544
  %v651 = vpop.f32.mrf.mxu0
  %v652 = vadd.f32 %v523, %v651
  %v653 = vpop.f32.mrf.mxu0
  %v654 = vadd.f32 %v527, %v653
  %655 = vmatprep.mubr.f32.mxu0 0.0
  %656 = vmatmul.mubr.f32.gmra.mxu0 %v547
  %v657 = vpop.f32.mrf.mxu0
  %v658 = vadd.f32 %v523, %v657
  %v659 = vpop.f32.mrf.mxu0
  %v660 = vadd.f32 %v527, %v659
  %661 = vmatprep.mubr.f32.mxu0 0.0
  %662 = vmatmul.mubr.f32.gmra.mxu0 %v550
  %v663 = vpop.f32.mrf.mxu0
  %v664 = vadd.f32 %v523, %v663
  %v665 = vpop.f32.mrf.mxu0
  %v666 = vadd.f32 %v527, %v665
  %667 = vmatprep.mubr.f32.mxu0 0.0
  %668 = vmatmul.mubr.f32.gmra.mxu0 %v553
  %v669 = vpop.f32.mrf.mxu0
  %v670 = vadd.f32 %v523, %v669
  %v671 = vpop.f32.mrf.mxu0
  %v672 = vadd.f32 %v527, %v671
  %673 = vmatprep.mubr.f32.mxu0 0.0
  %674 = vmatmul.mubr.f32.gmra.mxu0 %v556
  %v675 = vpop.f32.mrf.mxu0
  %v676 = vadd.f32 %v523, %v675
  %v677 = vpop.f32.mrf.mxu0
  %v678 = vadd.f32 %v527, %v677
  %679 = vmatprep.mubr.f32.mxu0 0.0
  %680 = vmatmul.mubr.f32.gmra.mxu0 %v559
  %v681 = vpop.f32.mrf.mxu0
  %v682 = vadd.f32 %v523, %v681
  %v683 = vpop.f32.mrf.mxu0
  %v684 = vadd.f32 %v527, %v683
  %685 = vdwg.mxu0
  %v686 = vld [vmem:[%s4 + $0x80] sm:$0xff]
  %v687 = vld [vmem:[%s4 + $0x90] sm:$0xff]
  %v688 = vld [vmem:[%s4 + $0xa0] sm:$0xff]
  %v689 = vld [vmem:[%s4 + $0xb0] sm:$0xff]
  %v690 = vld [vmem:[%s4 + $0xc0] sm:$0xff]
  %v691 = vld [vmem:[%s4 + $0xd0] sm:$0xff]
  %v692 = vld [vmem:[%s4 + $0xe0] sm:$0xff]
  %v693 = vld [vmem:[%s4 + $0xf0] sm:$0xff]
  %704 = vrot.lane.b32.xlu0 %v628, 64
  %v705 = vpop.permute.xlu0 %704
  %706 = vrot.lane.b32.xlu0 %v634, 64
  %v707 = vpop.permute.xlu0 %706
  %708 = vrot.lane.b32.xlu0 %v640, 64
  %v709 = vpop.permute.xlu0 %708
  %710 = vrot.lane.b32.xlu0 %v646, 64
  %v711 = vpop.permute.xlu0 %710
  %712 = vrot.lane.b32.xlu0 %v652, 64
  %v713 = vpop.permute.xlu0 %712
  %714 = vrot.lane.b32.xlu0 %v658, 64
  %v715 = vpop.permute.xlu0 %714
  %716 = vrot.lane.b32.xlu0 %v664, 64
  %v717 = vpop.permute.xlu0 %716
  %718 = vrot.lane.b32.xlu0 %v670, 64
  %v719 = vpop.permute.xlu0 %718
  %720 = vrot.lane.b32.xlu0 %v676, 64
  %v721 = vpop.permute.xlu0 %720
  %722 = vrot.lane.b32.xlu0 %v682, 64
  %v723 = vpop.permute.xlu0 %722
  %vm724 = vcmask 130048
  %v725 = vsel %vm724, %v628, 0
  %v727 = vsel %vm724, %v634, 0
  %v729 = vsel %vm724, %v640, 0
  %v731 = vsel %vm724, %v646, 0
  %v733 = vsel %vm724, %v652, 0
  %v735 = vsel %vm724, %v658, 0
  %v737 = vsel %vm724, %v664, 0
  %v739 = vsel %vm724, %v670, 0
  %v741 = vsel %vm724, %v676, 0
  %v743 = vsel %vm724, %v682, 0
  %v745 = vsel %vm724, %v705, 0
  %v747 = vsel %vm724, %v707, 0
  %v749 = vsel %vm724, %v709, 0
  %v751 = vsel %vm724, %v711, 0
  %v753 = vsel %vm724, %v713, 0
  %v755 = vsel %vm724, %v715, 0
  %v757 = vsel %vm724, %v717, 0
  %v759 = vsel %vm724, %v719, 0
  %v761 = vsel %vm724, %v721, 0
  %v763 = vsel %vm724, %v723, 0
  %765 = vmatprep.subr.mxu0 0.0
  %766 = vmatpush1.xpose.msra.mxu0 0.0
  %767 = vmatprep.subr.mxu0 0.0
  %768 = vmatpush1.xpose.msra.mxu0 0.0
  %769 = vmatprep.subr.mxu0 0.0
  %770 = vmatpush1.xpose.msra.mxu0 0.0
  %771 = vmatprep.subr.mxu0 0.0
  %772 = vmatpush1.xpose.msra.mxu0 0.0
  %773 = vmatprep.subr.mxu0 0.0
  %774 = vmatpush1.xpose.msra.mxu0 0.0
  %775 = vmatprep.subr.mxu0 0.0
  %776 = vmatpush1.xpose.msra.mxu0 0.0
  %777 = vmatprep.subr.mxu0 0.0
  %778 = vmatpush1.xpose.msra.mxu0 %v763
  %779 = vmatprep.subr.mxu0 0.0
  %780 = vmatpush1.xpose.msra.mxu0 %v761
  %781 = vmatprep.subr.mxu0 0.0
  %782 = vmatpush1.xpose.msra.mxu0 %v759
  %783 = vmatprep.subr.mxu0 0.0
  %784 = vmatpush1.xpose.msra.mxu0 %v757
  %785 = vmatprep.subr.mxu0 0.0
  %786 = vmatpush1.xpose.msra.mxu0 %v755
  %787 = vmatprep.subr.mxu0 0.0
  %788 = vmatpush1.xpose.msra.mxu0 %v753
  %789 = vmatprep.subr.mxu0 0.0
  %790 = vmatpush1.xpose.msra.mxu0 %v751
  %791 = vmatprep.subr.mxu0 0.0
  %792 = vmatpush1.xpose.msra.mxu0 %v749
  %793 = vmatprep.subr.mxu0 0.0
  %794 = vmatpush1.xpose.msra.mxu0 %v747
  %795 = vmatprep.subr.mxu0 0.0
  %796 = vmatpush1.xpose.msra.mxu0 %v745
  %797 = vmatprep.subr.mxu0 0.0
  %798 = vmatpush2.xpose.msra.mxu0 0.0
  %799 = vmatprep.subr.mxu0 0.0
  %800 = vmatpush2.xpose.msra.mxu0 0.0
  %801 = vmatprep.subr.mxu0 0.0
  %802 = vmatpush2.xpose.msra.mxu0 0.0
  %803 = vmatprep.subr.mxu0 0.0
  %804 = vmatpush2.xpose.msra.mxu0 0.0
  %805 = vmatprep.subr.mxu0 0.0
  %806 = vmatpush2.xpose.msra.mxu0 0.0
  %807 = vmatprep.subr.mxu0 0.0
  %808 = vmatpush2.xpose.msra.mxu0 0.0
  %809 = vmatprep.subr.mxu0 0.0
  %810 = vmatpush2.xpose.msra.mxu0 0.0
  %811 = vmatprep.subr.mxu0 0.0
  %812 = vmatpush2.xpose.msra.mxu0 0.0
  %813 = vmatprep.subr.mxu0 0.0
  %814 = vmatpush2.xpose.msra.mxu0 0.0
  %815 = vmatprep.subr.mxu0 0.0
  %816 = vmatpush2.xpose.msra.mxu0 0.0
  %817 = vmatprep.subr.mxu0 0.0
  %818 = vmatpush2.xpose.msra.mxu0 0.0
  %819 = vmatprep.subr.mxu0 0.0
  %820 = vmatpush2.xpose.msra.mxu0 0.0
  %821 = vmatprep.subr.mxu0 0.0
  %822 = vmatpush2.xpose.msra.mxu0 0.0
  %823 = vmatprep.subr.mxu0 0.0
  %824 = vmatpush2.xpose.msra.mxu0 0.0
  %825 = vmatprep.subr.mxu0 0.0
  %826 = vmatpush2.xpose.msra.mxu0 0.0
  %827 = vmatprep.subr.mxu0 0.0
  %828 = vmatpush2.xpose.msra.mxu0 0.0
  %829 = vmatprep.mubr.f32.mxu0 0.0
  %830 = vmatmul.mubr.f32.gmra.mxu0 %v725
  %v831 = vpop.f32.mrf.mxu0
  %v832 = vadd.f32 %v491, %v831
  %v833 = vpop.f32.mrf.mxu0
  %834 = vmatprep.mubr.f32.mxu0 0.0
  %835 = vmatmul.mubr.f32.gmra.mxu0 %v727
  %v836 = vpop.f32.mrf.mxu0
  %v837 = vadd.f32 %v492, %v836
  %v838 = vpop.f32.mrf.mxu0
  %839 = vmatprep.mubr.f32.mxu0 0.0
  %840 = vmatmul.mubr.f32.gmra.mxu0 %v729
  %v841 = vpop.f32.mrf.mxu0
  %v842 = vadd.f32 %v493, %v841
  %v843 = vpop.f32.mrf.mxu0
  %844 = vmatprep.mubr.f32.mxu0 0.0
  %845 = vmatmul.mubr.f32.gmra.mxu0 %v731
  %v846 = vpop.f32.mrf.mxu0
  %v847 = vadd.f32 %v494, %v846
  %v848 = vpop.f32.mrf.mxu0
  %849 = vmatprep.mubr.f32.mxu0 0.0
  %850 = vmatmul.mubr.f32.gmra.mxu0 %v733
  %v851 = vpop.f32.mrf.mxu0
  %v852 = vadd.f32 %v495, %v851
  %v853 = vpop.f32.mrf.mxu0
  %854 = vmatprep.mubr.f32.mxu0 0.0
  %855 = vmatmul.mubr.f32.gmra.mxu0 %v735
  %v856 = vpop.f32.mrf.mxu0
  %v857 = vadd.f32 %v496, %v856
  %v858 = vpop.f32.mrf.mxu0
  %859 = vmatprep.mubr.f32.mxu0 0.0
  %860 = vmatmul.mubr.f32.gmra.mxu0 %v737
  %v861 = vpop.f32.mrf.mxu0
  %v862 = vadd.f32 %v497, %v861
  %v863 = vpop.f32.mrf.mxu0
  %864 = vmatprep.mubr.f32.mxu0 0.0
  %865 = vmatmul.mubr.f32.gmra.mxu0 %v739
  %v866 = vpop.f32.mrf.mxu0
  %v867 = vadd.f32 %v498, %v866
  %v868 = vpop.f32.mrf.mxu0
  %869 = vmatprep.mubr.f32.mxu0 0.0
  %870 = vmatmul.mubr.f32.gmra.mxu0 %v741
  %v871 = vpop.f32.mrf.mxu0
  %v872 = vadd.f32 %v499, %v871
  %v873 = vpop.f32.mrf.mxu0
  %874 = vmatprep.mubr.f32.mxu0 0.0
  %875 = vmatmul.mubr.f32.gmra.mxu0 %v743
  %v876 = vpop.f32.mrf.mxu0
  %v877 = vadd.f32 %v500, %v876
  %v878 = vpop.f32.mrf.mxu0
  %879 = vdwg.mxu0
  %vm880 = vcmask 654336
  %v881 = vsel %vm880, %v832, -inf
  %882 = vmax.xlane.f32.xlu0 %v881
  %v883 = vpop.xlane.xlu0 %882
  %v884 = vsel %vm880, %v837, -inf
  %885 = vmax.xlane.f32.xlu0 %v884
  %v886 = vpop.xlane.xlu0 %885
  %v887 = vsel %vm880, %v842, -inf
  %888 = vmax.xlane.f32.xlu0 %v887
  %v889 = vpop.xlane.xlu0 %888
  %v890 = vsel %vm880, %v847, -inf
  %891 = vmax.xlane.f32.xlu0 %v890
  %v892 = vpop.xlane.xlu0 %891
  %v893 = vsel %vm880, %v852, -inf
  %894 = vmax.xlane.f32.xlu0 %v893
  %v895 = vpop.xlane.xlu0 %894
  %v896 = vsel %vm880, %v857, -inf
  %897 = vmax.xlane.f32.xlu0 %v896
  %v898 = vpop.xlane.xlu0 %897
  %v899 = vsel %vm880, %v862, -inf
  %900 = vmax.xlane.f32.xlu0 %v899
  %v901 = vpop.xlane.xlu0 %900
  %v902 = vsel %vm880, %v867, -inf
  %903 = vmax.xlane.f32.xlu0 %v902
  %v904 = vpop.xlane.xlu0 %903
  %v905 = vsel %vm880, %v872, -inf
  %906 = vmax.xlane.f32.xlu0 %v905
  %v907 = vpop.xlane.xlu0 %906
  %v908 = vsel %vm880, %v877, -inf
  %909 = vmax.xlane.f32.xlu0 %v908
  %v910 = vpop.xlane.xlu0 %909
  %v911 = vsub.f32 %v832, %v883
  %v912 = vsub.f32 %v837, %v886
  %v913 = vsub.f32 %v842, %v889
  %v914 = vsub.f32 %v847, %v892
  %v915 = vsub.f32 %v852, %v895
  %v916 = vsub.f32 %v857, %v898
  %v917 = vsub.f32 %v862, %v901
  %v918 = vsub.f32 %v867, %v904
  %v919 = vsub.f32 %v872, %v907
  %v920 = vsub.f32 %v877, %v910
  %v921 = vmul.f32 %v911, 1.442695
  %v922 = vpow.pop %v921
  %v923 = vmul.f32 %v912, 1.442695
  %v924 = vpow.pop %v923
  %v925 = vmul.f32 %v913, 1.442695
  %v926 = vpow.pop %v925
  %v927 = vmul.f32 %v914, 1.442695
  %v928 = vpow.pop %v927
  %v929 = vmul.f32 %v915, 1.442695
  %v930 = vpow.pop %v929
  %v931 = vmul.f32 %v916, 1.442695
  %v932 = vpow.pop %v931
  %v933 = vmul.f32 %v917, 1.442695
  %v934 = vpow.pop %v933
  %v935 = vmul.f32 %v918, 1.442695
  %v936 = vpow.pop %v935
  %v937 = vmul.f32 %v919, 1.442695
  %v938 = vpow.pop %v937
  %v939 = vmul.f32 %v920, 1.442695
  %v940 = vpow.pop %v939
  %v941 = vsel %vm880, %v922, 0.0
  %942 = vadd.xlane.f32.xlu0 %v941
  %v943 = vpop.xlane.xlu0 %942
  %v944 = vsel %vm880, %v924, 0.0
  %945 = vadd.xlane.f32.xlu0 %v944
  %v946 = vpop.xlane.xlu0 %945
  %v947 = vsel %vm880, %v926, 0.0
  %948 = vadd.xlane.f32.xlu0 %v947
  %v949 = vpop.xlane.xlu0 %948
  %v950 = vsel %vm880, %v928, 0.0
  %951 = vadd.xlane.f32.xlu0 %v950
  %v952 = vpop.xlane.xlu0 %951
  %v953 = vsel %vm880, %v930, 0.0
  %954 = vadd.xlane.f32.xlu0 %v953
  %v955 = vpop.xlane.xlu0 %954
  %v956 = vsel %vm880, %v932, 0.0
  %957 = vadd.xlane.f32.xlu0 %v956
  %v958 = vpop.xlane.xlu0 %957
  %v959 = vsel %vm880, %v934, 0.0
  %960 = vadd.xlane.f32.xlu0 %v959
  %v961 = vpop.xlane.xlu0 %960
  %v962 = vsel %vm880, %v936, 0.0
  %963 = vadd.xlane.f32.xlu0 %v962
  %v964 = vpop.xlane.xlu0 %963
  %v965 = vsel %vm880, %v938, 0.0
  %966 = vadd.xlane.f32.xlu0 %v965
  %v967 = vpop.xlane.xlu0 %966
  %v968 = vsel %vm880, %v940, 0.0
  %969 = vadd.xlane.f32.xlu0 %v968
  %v970 = vpop.xlane.xlu0 %969
  %v971 = vrcp.pop %v943
  %v972 = vrcp.pop %v946
  %v973 = vrcp.pop %v949
  %v974 = vrcp.pop %v952
  %v975 = vrcp.pop %v955
  %v976 = vrcp.pop %v958
  %v977 = vrcp.pop %v961
  %v978 = vrcp.pop %v964
  %v979 = vrcp.pop %v967
  %v980 = vrcp.pop %v970
  %v981 = vmul.f32 %v922, %v971
  %v982 = vmul.f32 %v924, %v972
  %v983 = vmul.f32 %v926, %v973
  %v984 = vmul.f32 %v928, %v974
  %v985 = vmul.f32 %v930, %v975
  %v986 = vmul.f32 %v932, %v976
  %v987 = vmul.f32 %v934, %v977
  %v988 = vmul.f32 %v936, %v978
  %v989 = vmul.f32 %v938, %v979
  %v990 = vmul.f32 %v940, %v980
  %v992 = vsel %vm880, %v981, 0
  %v995 = vsel %vm880, %v982, 0
  %v998 = vsel %vm880, %v983, 0
  %v1001 = vsel %vm880, %v984, 0
  %v1004 = vsel %vm880, %v985, 0
  %v1007 = vsel %vm880, %v986, 0
  %v1010 = vsel %vm880, %v987, 0
  %v1013 = vsel %vm880, %v988, 0
  %v1016 = vsel %vm880, %v989, 0
  %v1019 = vsel %vm880, %v990, 0
  %1021 = vmatprep.subr.mxu0 0.0
  %1022 = vmatpush1.msra.mxu0 0.0
  %1023 = vmatprep.subr.mxu0 0.0
  %1024 = vmatpush1.msra.mxu0 0.0
  %1025 = vmatprep.subr.mxu0 0.0
  %1026 = vmatpush1.msra.mxu0 0.0
  %1027 = vmatprep.subr.mxu0 0.0
  %1028 = vmatpush1.msra.mxu0 0.0
  %1029 = vmatprep.subr.mxu0 0.0
  %1030 = vmatpush1.msra.mxu0 0.0
  %1031 = vmatprep.subr.mxu0 0.0
  %1032 = vmatpush1.msra.mxu0 0.0
  %1033 = vmatprep.subr.mxu0 0.0
  %1034 = vmatpush1.msra.mxu0 %v684
  %1035 = vmatprep.subr.mxu0 0.0
  %1036 = vmatpush1.msra.mxu0 %v678
  %1037 = vmatprep.subr.mxu0 0.0
  %1038 = vmatpush1.msra.mxu0 %v672
  %1039 = vmatprep.subr.mxu0 0.0
  %1040 = vmatpush1.msra.mxu0 %v666
  %1041 = vmatprep.subr.mxu0 0.0
  %1042 = vmatpush1.msra.mxu0 %v660
  %1043 = vmatprep.subr.mxu0 0.0
  %1044 = vmatpush1.msra.mxu0 %v654
  %1045 = vmatprep.subr.mxu0 0.0
  %1046 = vmatpush1.msra.mxu0 %v648
  %1047 = vmatprep.subr.mxu0 0.0
  %1048 = vmatpush1.msra.mxu0 %v642
  %1049 = vmatprep.subr.mxu0 0.0
  %1050 = vmatpush1.msra.mxu0 %v636
  %1051 = vmatprep.subr.mxu0 0.0
  %1052 = vmatpush1.msra.mxu0 %v630
  %1053 = vmatprep.subr.mxu0 0.0
  %1054 = vmatpush2.msra.mxu0 0.0
  %1055 = vmatprep.subr.mxu0 0.0
  %1056 = vmatpush2.msra.mxu0 0.0
  %1057 = vmatprep.subr.mxu0 0.0
  %1058 = vmatpush2.msra.mxu0 0.0
  %1059 = vmatprep.subr.mxu0 0.0
  %1060 = vmatpush2.msra.mxu0 0.0
  %1061 = vmatprep.subr.mxu0 0.0
  %1062 = vmatpush2.msra.mxu0 0.0
  %1063 = vmatprep.subr.mxu0 0.0
  %1064 = vmatpush2.msra.mxu0 0.0
  %1065 = vmatprep.subr.mxu0 0.0
  %1066 = vmatpush2.msra.mxu0 0.0
  %1067 = vmatprep.subr.mxu0 0.0
  %1068 = vmatpush2.msra.mxu0 0.0
  %1069 = vmatprep.subr.mxu0 0.0
  %1070 = vmatpush2.msra.mxu0 0.0
  %1071 = vmatprep.subr.mxu0 0.0
  %1072 = vmatpush2.msra.mxu0 0.0
  %1073 = vmatprep.subr.mxu0 0.0
  %1074 = vmatpush2.msra.mxu0 0.0
  %1075 = vmatprep.subr.mxu0 0.0
  %1076 = vmatpush2.msra.mxu0 0.0
  %1077 = vmatprep.subr.mxu0 0.0
  %1078 = vmatpush2.msra.mxu0 0.0
  %1079 = vmatprep.subr.mxu0 0.0
  %1080 = vmatpush2.msra.mxu0 0.0
  %1081 = vmatprep.subr.mxu0 0.0
  %1082 = vmatpush2.msra.mxu0 0.0
  %1083 = vmatprep.subr.mxu0 0.0
  %1084 = vmatpush2.msra.mxu0 0.0
  %1085 = vmatprep.mubr.f32.mxu0 0.0
  %1086 = vmatmul.mubr.f32.gmra.mxu0 %v992
  %v1087 = vpop.f32.mrf.mxu0
  %v1088 = vadd.f32 0.0, %v1087
  %v1089 = vpop.f32.mrf.mxu0
  %1090 = vmatprep.mubr.f32.mxu0 0.0
  %1091 = vmatmul.mubr.f32.gmra.mxu0 %v995
  %v1092 = vpop.f32.mrf.mxu0
  %v1093 = vadd.f32 0.0, %v1092
  %v1094 = vpop.f32.mrf.mxu0
  %1095 = vmatprep.mubr.f32.mxu0 0.0
  %1096 = vmatmul.mubr.f32.gmra.mxu0 %v998
  %v1097 = vpop.f32.mrf.mxu0
  %v1098 = vadd.f32 0.0, %v1097
  %v1099 = vpop.f32.mrf.mxu0
  %1100 = vmatprep.mubr.f32.mxu0 0.0
  %1101 = vmatmul.mubr.f32.gmra.mxu0 %v1001
  %v1102 = vpop.f32.mrf.mxu0
  %v1103 = vadd.f32 0.0, %v1102
  %v1104 = vpop.f32.mrf.mxu0
  %1105 = vmatprep.mubr.f32.mxu0 0.0
  %1106 = vmatmul.mubr.f32.gmra.mxu0 %v1004
  %v1107 = vpop.f32.mrf.mxu0
  %v1108 = vadd.f32 0.0, %v1107
  %v1109 = vpop.f32.mrf.mxu0
  %1110 = vmatprep.mubr.f32.mxu0 0.0
  %1111 = vmatmul.mubr.f32.gmra.mxu0 %v1007
  %v1112 = vpop.f32.mrf.mxu0
  %v1113 = vadd.f32 0.0, %v1112
  %v1114 = vpop.f32.mrf.mxu0
  %1115 = vmatprep.mubr.f32.mxu0 0.0
  %1116 = vmatmul.mubr.f32.gmra.mxu0 %v1010
  %v1117 = vpop.f32.mrf.mxu0
  %v1118 = vadd.f32 0.0, %v1117
  %v1119 = vpop.f32.mrf.mxu0
  %1120 = vmatprep.mubr.f32.mxu0 0.0
  %1121 = vmatmul.mubr.f32.gmra.mxu0 %v1013
  %v1122 = vpop.f32.mrf.mxu0
  %v1123 = vadd.f32 0.0, %v1122
  %v1124 = vpop.f32.mrf.mxu0
  %1125 = vmatprep.mubr.f32.mxu0 0.0
  %1126 = vmatmul.mubr.f32.gmra.mxu0 %v1016
  %v1127 = vpop.f32.mrf.mxu0
  %v1128 = vadd.f32 0.0, %v1127
  %v1129 = vpop.f32.mrf.mxu0
  %1130 = vmatprep.mubr.f32.mxu0 0.0
  %1131 = vmatmul.mubr.f32.gmra.mxu0 %v1019
  %v1132 = vpop.f32.mrf.mxu0
  %v1133 = vadd.f32 0.0, %v1132
  %v1134 = vpop.f32.mrf.mxu0
  %1135 = vdwg.mxu0
  %1136 = vrot.lane.b32.xlu0 %v628, 112
  %v1137 = vpop.permute.xlu0 %1136
  %1138 = vrot.lane.b32.xlu0 %v634, 112
  %v1139 = vpop.permute.xlu0 %1138
  %1140 = vrot.lane.b32.xlu0 %v640, 112
  %v1141 = vpop.permute.xlu0 %1140
  %1142 = vrot.lane.b32.xlu0 %v646, 112
  %v1143 = vpop.permute.xlu0 %1142
  %1144 = vrot.lane.b32.xlu0 %v652, 112
  %v1145 = vpop.permute.xlu0 %1144
  %1146 = vrot.lane.b32.xlu0 %v658, 112
  %v1147 = vpop.permute.xlu0 %1146
  %1148 = vrot.lane.b32.xlu0 %v664, 112
  %v1149 = vpop.permute.xlu0 %1148
  %1150 = vrot.lane.b32.xlu0 %v670, 112
  %v1151 = vpop.permute.xlu0 %1150
  %1152 = vrot.lane.b32.xlu0 %v676, 112
  %v1153 = vpop.permute.xlu0 %1152
  %1154 = vrot.lane.b32.xlu0 %v682, 112
  %v1155 = vpop.permute.xlu0 %1154
  %1156 = vrot.lane.b32.xlu0 %v628, 48
  %v1157 = vpop.permute.xlu0 %1156
  %1158 = vrot.lane.b32.xlu0 %v634, 48
  %v1159 = vpop.permute.xlu0 %1158
  %1160 = vrot.lane.b32.xlu0 %v640, 48
  %v1161 = vpop.permute.xlu0 %1160
  %1162 = vrot.lane.b32.xlu0 %v646, 48
  %v1163 = vpop.permute.xlu0 %1162
  %1164 = vrot.lane.b32.xlu0 %v652, 48
  %v1165 = vpop.permute.xlu0 %1164
  %1166 = vrot.lane.b32.xlu0 %v658, 48
  %v1167 = vpop.permute.xlu0 %1166
  %1168 = vrot.lane.b32.xlu0 %v664, 48
  %v1169 = vpop.permute.xlu0 %1168
  %1170 = vrot.lane.b32.xlu0 %v670, 48
  %v1171 = vpop.permute.xlu0 %1170
  %1172 = vrot.lane.b32.xlu0 %v676, 48
  %v1173 = vpop.permute.xlu0 %1172
  %1174 = vrot.lane.b32.xlu0 %v682, 48
  %v1175 = vpop.permute.xlu0 %1174
  %v1176 = vsel %vm724, %v1137, 0
  %v1178 = vsel %vm724, %v1139, 0
  %v1180 = vsel %vm724, %v1141, 0
  %v1182 = vsel %vm724, %v1143, 0
  %v1184 = vsel %vm724, %v1145, 0
  %v1186 = vsel %vm724, %v1147, 0
  %v1188 = vsel %vm724, %v1149, 0
  %v1190 = vsel %vm724, %v1151, 0
  %v1192 = vsel %vm724, %v1153, 0
  %v1194 = vsel %vm724, %v1155, 0
  %v1196 = vsel %vm724, %v1157, 0
  %v1198 = vsel %vm724, %v1159, 0
  %v1200 = vsel %vm724, %v1161, 0
  %v1202 = vsel %vm724, %v1163, 0
  %v1204 = vsel %vm724, %v1165, 0
  %v1206 = vsel %vm724, %v1167, 0
  %v1208 = vsel %vm724, %v1169, 0
  %v1210 = vsel %vm724, %v1171, 0
  %v1212 = vsel %vm724, %v1173, 0
  %v1214 = vsel %vm724, %v1175, 0
  %1216 = vmatprep.subr.mxu0 0.0
  %1217 = vmatpush1.xpose.msra.mxu0 0.0
  %1218 = vmatprep.subr.mxu0 0.0
  %1219 = vmatpush1.xpose.msra.mxu0 0.0
  %1220 = vmatprep.subr.mxu0 0.0
  %1221 = vmatpush1.xpose.msra.mxu0 0.0
  %1222 = vmatprep.subr.mxu0 0.0
  %1223 = vmatpush1.xpose.msra.mxu0 0.0
  %1224 = vmatprep.subr.mxu0 0.0
  %1225 = vmatpush1.xpose.msra.mxu0 0.0
  %1226 = vmatprep.subr.mxu0 0.0
  %1227 = vmatpush1.xpose.msra.mxu0 0.0
  %1228 = vmatprep.subr.mxu0 0.0
  %1229 = vmatpush1.xpose.msra.mxu0 %v1214
  %1230 = vmatprep.subr.mxu0 0.0
  %1231 = vmatpush1.xpose.msra.mxu0 %v1212
  %1232 = vmatprep.subr.mxu0 0.0
  %1233 = vmatpush1.xpose.msra.mxu0 %v1210
  %1234 = vmatprep.subr.mxu0 0.0
  %1235 = vmatpush1.xpose.msra.mxu0 %v1208
  %1236 = vmatprep.subr.mxu0 0.0
  %1237 = vmatpush1.xpose.msra.mxu0 %v1206
  %1238 = vmatprep.subr.mxu0 0.0
  %1239 = vmatpush1.xpose.msra.mxu0 %v1204
  %1240 = vmatprep.subr.mxu0 0.0
  %1241 = vmatpush1.xpose.msra.mxu0 %v1202
  %1242 = vmatprep.subr.mxu0 0.0
  %1243 = vmatpush1.xpose.msra.mxu0 %v1200
  %1244 = vmatprep.subr.mxu0 0.0
  %1245 = vmatpush1.xpose.msra.mxu0 %v1198
  %1246 = vmatprep.subr.mxu0 0.0
  %1247 = vmatpush1.xpose.msra.mxu0 %v1196
  %1248 = vmatprep.subr.mxu0 0.0
  %1249 = vmatpush2.xpose.msra.mxu0 0.0
  %1250 = vmatprep.subr.mxu0 0.0
  %1251 = vmatpush2.xpose.msra.mxu0 0.0
  %1252 = vmatprep.subr.mxu0 0.0
  %1253 = vmatpush2.xpose.msra.mxu0 0.0
  %1254 = vmatprep.subr.mxu0 0.0
  %1255 = vmatpush2.xpose.msra.mxu0 0.0
  %1256 = vmatprep.subr.mxu0 0.0
  %1257 = vmatpush2.xpose.msra.mxu0 0.0
  %1258 = vmatprep.subr.mxu0 0.0
  %1259 = vmatpush2.xpose.msra.mxu0 0.0
  %1260 = vmatprep.subr.mxu0 0.0
  %1261 = vmatpush2.xpose.msra.mxu0 0.0
  %1262 = vmatprep.subr.mxu0 0.0
  %1263 = vmatpush2.xpose.msra.mxu0 0.0
  %1264 = vmatprep.subr.mxu0 0.0
  %1265 = vmatpush2.xpose.msra.mxu0 0.0
  %1266 = vmatprep.subr.mxu0 0.0
  %1267 = vmatpush2.xpose.msra.mxu0 0.0
  %1268 = vmatprep.subr.mxu0 0.0
  %1269 = vmatpush2.xpose.msra.mxu0 0.0
  %1270 = vmatprep.subr.mxu0 0.0
  %1271 = vmatpush2.xpose.msra.mxu0 0.0
  %1272 = vmatprep.subr.mxu0 0.0
  %1273 = vmatpush2.xpose.msra.mxu0 0.0
  %1274 = vmatprep.subr.mxu0 0.0
  %1275 = vmatpush2.xpose.msra.mxu0 0.0
  %1276 = vmatprep.subr.mxu0 0.0
  %1277 = vmatpush2.xpose.msra.mxu0 0.0
  %1278 = vmatprep.subr.mxu0 0.0
  %1279 = vmatpush2.xpose.msra.mxu0 0.0
  %1280 = vmatprep.mubr.f32.mxu0 0.0
  %1281 = vmatmul.mubr.f32.gmra.mxu0 %v1176
  %v1282 = vpop.f32.mrf.mxu0
  %v1283 = vadd.f32 %v491, %v1282
  %v1284 = vpop.f32.mrf.mxu0
  %1285 = vmatprep.mubr.f32.mxu0 0.0
  %1286 = vmatmul.mubr.f32.gmra.mxu0 %v1178
  %v1287 = vpop.f32.mrf.mxu0
  %v1288 = vadd.f32 %v492, %v1287
  %v1289 = vpop.f32.mrf.mxu0
  %1290 = vmatprep.mubr.f32.mxu0 0.0
  %1291 = vmatmul.mubr.f32.gmra.mxu0 %v1180
  %v1292 = vpop.f32.mrf.mxu0
  %v1293 = vadd.f32 %v493, %v1292
  %v1294 = vpop.f32.mrf.mxu0
  %1295 = vmatprep.mubr.f32.mxu0 0.0
  %1296 = vmatmul.mubr.f32.gmra.mxu0 %v1182
  %v1297 = vpop.f32.mrf.mxu0
  %v1298 = vadd.f32 %v494, %v1297
  %v1299 = vpop.f32.mrf.mxu0
  %1300 = vmatprep.mubr.f32.mxu0 0.0
  %1301 = vmatmul.mubr.f32.gmra.mxu0 %v1184
  %v1302 = vpop.f32.mrf.mxu0
  %v1303 = vadd.f32 %v495, %v1302
  %v1304 = vpop.f32.mrf.mxu0
  %1305 = vmatprep.mubr.f32.mxu0 0.0
  %1306 = vmatmul.mubr.f32.gmra.mxu0 %v1186
  %v1307 = vpop.f32.mrf.mxu0
  %v1308 = vadd.f32 %v496, %v1307
  %v1309 = vpop.f32.mrf.mxu0
  %1310 = vmatprep.mubr.f32.mxu0 0.0
  %1311 = vmatmul.mubr.f32.gmra.mxu0 %v1188
  %v1312 = vpop.f32.mrf.mxu0
  %v1313 = vadd.f32 %v497, %v1312
  %v1314 = vpop.f32.mrf.mxu0
  %1315 = vmatprep.mubr.f32.mxu0 0.0
  %1316 = vmatmul.mubr.f32.gmra.mxu0 %v1190
  %v1317 = vpop.f32.mrf.mxu0
  %v1318 = vadd.f32 %v498, %v1317
  %v1319 = vpop.f32.mrf.mxu0
  %1320 = vmatprep.mubr.f32.mxu0 0.0
  %1321 = vmatmul.mubr.f32.gmra.mxu0 %v1192
  %v1322 = vpop.f32.mrf.mxu0
  %v1323 = vadd.f32 %v499, %v1322
  %v1324 = vpop.f32.mrf.mxu0
  %1325 = vmatprep.mubr.f32.mxu0 0.0
  %1326 = vmatmul.mubr.f32.gmra.mxu0 %v1194
  %v1327 = vpop.f32.mrf.mxu0
  %v1328 = vadd.f32 %v500, %v1327
  %v1329 = vpop.f32.mrf.mxu0
  %1330 = vdwg.mxu0
  %v1331 = vsel %vm880, %v1283, -inf
  %1332 = vmax.xlane.f32.xlu0 %v1331
  %v1333 = vpop.xlane.xlu0 %1332
  %v1334 = vsel %vm880, %v1288, -inf
  %1335 = vmax.xlane.f32.xlu0 %v1334
  %v1336 = vpop.xlane.xlu0 %1335
  %v1337 = vsel %vm880, %v1293, -inf
  %1338 = vmax.xlane.f32.xlu0 %v1337
  %v1339 = vpop.xlane.xlu0 %1338
  %v1340 = vsel %vm880, %v1298, -inf
  %1341 = vmax.xlane.f32.xlu0 %v1340
  %v1342 = vpop.xlane.xlu0 %1341
  %v1343 = vsel %vm880, %v1303, -inf
  %1344 = vmax.xlane.f32.xlu0 %v1343
  %v1345 = vpop.xlane.xlu0 %1344
  %v1346 = vsel %vm880, %v1308, -inf
  %1347 = vmax.xlane.f32.xlu0 %v1346
  %v1348 = vpop.xlane.xlu0 %1347
  %v1349 = vsel %vm880, %v1313, -inf
  %1350 = vmax.xlane.f32.xlu0 %v1349
  %v1351 = vpop.xlane.xlu0 %1350
  %v1352 = vsel %vm880, %v1318, -inf
  %1353 = vmax.xlane.f32.xlu0 %v1352
  %v1354 = vpop.xlane.xlu0 %1353
  %v1355 = vsel %vm880, %v1323, -inf
  %1356 = vmax.xlane.f32.xlu0 %v1355
  %v1357 = vpop.xlane.xlu0 %1356
  %v1358 = vsel %vm880, %v1328, -inf
  %1359 = vmax.xlane.f32.xlu0 %v1358
  %v1360 = vpop.xlane.xlu0 %1359
  %v1361 = vsub.f32 %v1283, %v1333
  %v1362 = vsub.f32 %v1288, %v1336
  %v1363 = vsub.f32 %v1293, %v1339
  %v1364 = vsub.f32 %v1298, %v1342
  %v1365 = vsub.f32 %v1303, %v1345
  %v1366 = vsub.f32 %v1308, %v1348
  %v1367 = vsub.f32 %v1313, %v1351
  %v1368 = vsub.f32 %v1318, %v1354
  %v1369 = vsub.f32 %v1323, %v1357
  %v1370 = vsub.f32 %v1328, %v1360
  %v1371 = vmul.f32 %v1361, 1.442695
  %v1372 = vpow.pop %v1371
  %v1373 = vmul.f32 %v1362, 1.442695
  %v1374 = vpow.pop %v1373
  %v1375 = vmul.f32 %v1363, 1.442695
  %v1376 = vpow.pop %v1375
  %v1377 = vmul.f32 %v1364, 1.442695
  %v1378 = vpow.pop %v1377
  %v1379 = vmul.f32 %v1365, 1.442695
  %v1380 = vpow.pop %v1379
  %v1381 = vmul.f32 %v1366, 1.442695
  %v1382 = vpow.pop %v1381
  %v1383 = vmul.f32 %v1367, 1.442695
  %v1384 = vpow.pop %v1383
  %v1385 = vmul.f32 %v1368, 1.442695
  %v1386 = vpow.pop %v1385
  %v1387 = vmul.f32 %v1369, 1.442695
  %v1388 = vpow.pop %v1387
  %v1389 = vmul.f32 %v1370, 1.442695
  %v1390 = vpow.pop %v1389
  %v1391 = vsel %vm880, %v1372, 0.0
  %1392 = vadd.xlane.f32.xlu0 %v1391
  %v1393 = vpop.xlane.xlu0 %1392
  %v1394 = vsel %vm880, %v1374, 0.0
  %1395 = vadd.xlane.f32.xlu0 %v1394
  %v1396 = vpop.xlane.xlu0 %1395
  %v1397 = vsel %vm880, %v1376, 0.0
  %1398 = vadd.xlane.f32.xlu0 %v1397
  %v1399 = vpop.xlane.xlu0 %1398
  %v1400 = vsel %vm880, %v1378, 0.0
  %1401 = vadd.xlane.f32.xlu0 %v1400
  %v1402 = vpop.xlane.xlu0 %1401
  %v1403 = vsel %vm880, %v1380, 0.0
  %1404 = vadd.xlane.f32.xlu0 %v1403
  %v1405 = vpop.xlane.xlu0 %1404
  %v1406 = vsel %vm880, %v1382, 0.0
  %1407 = vadd.xlane.f32.xlu0 %v1406
  %v1408 = vpop.xlane.xlu0 %1407
  %v1409 = vsel %vm880, %v1384, 0.0
  %1410 = vadd.xlane.f32.xlu0 %v1409
  %v1411 = vpop.xlane.xlu0 %1410
  %v1412 = vsel %vm880, %v1386, 0.0
  %1413 = vadd.xlane.f32.xlu0 %v1412
  %v1414 = vpop.xlane.xlu0 %1413
  %v1415 = vsel %vm880, %v1388, 0.0
  %1416 = vadd.xlane.f32.xlu0 %v1415
  %v1417 = vpop.xlane.xlu0 %1416
  %v1418 = vsel %vm880, %v1390, 0.0
  %1419 = vadd.xlane.f32.xlu0 %v1418
  %v1420 = vpop.xlane.xlu0 %1419
  %v1421 = vrcp.pop %v1393
  %v1422 = vrcp.pop %v1396
  %v1423 = vrcp.pop %v1399
  %v1424 = vrcp.pop %v1402
  %v1425 = vrcp.pop %v1405
  %v1426 = vrcp.pop %v1408
  %v1427 = vrcp.pop %v1411
  %v1428 = vrcp.pop %v1414
  %v1429 = vrcp.pop %v1417
  %v1430 = vrcp.pop %v1420
  %v1431 = vmul.f32 %v1372, %v1421
  %v1432 = vmul.f32 %v1374, %v1422
  %v1433 = vmul.f32 %v1376, %v1423
  %v1434 = vmul.f32 %v1378, %v1424
  %v1435 = vmul.f32 %v1380, %v1425
  %v1436 = vmul.f32 %v1382, %v1426
  %v1437 = vmul.f32 %v1384, %v1427
  %v1438 = vmul.f32 %v1386, %v1428
  %v1439 = vmul.f32 %v1388, %v1429
  %v1440 = vmul.f32 %v1390, %v1430
  %1451 = vrot.lane.b32.xlu0 %v630, 112
  %v1452 = vpop.permute.xlu0 %1451
  %1453 = vrot.lane.b32.xlu0 %v636, 112
  %v1454 = vpop.permute.xlu0 %1453
  %1455 = vrot.lane.b32.xlu0 %v642, 112
  %v1456 = vpop.permute.xlu0 %1455
  %1457 = vrot.lane.b32.xlu0 %v648, 112
  %v1458 = vpop.permute.xlu0 %1457
  %1459 = vrot.lane.b32.xlu0 %v654, 112
  %v1460 = vpop.permute.xlu0 %1459
  %1461 = vrot.lane.b32.xlu0 %v660, 112
  %v1462 = vpop.permute.xlu0 %1461
  %1463 = vrot.lane.b32.xlu0 %v666, 112
  %v1464 = vpop.permute.xlu0 %1463
  %1465 = vrot.lane.b32.xlu0 %v672, 112
  %v1466 = vpop.permute.xlu0 %1465
  %1467 = vrot.lane.b32.xlu0 %v678, 112
  %v1468 = vpop.permute.xlu0 %1467
  %1469 = vrot.lane.b32.xlu0 %v684, 112
  %v1470 = vpop.permute.xlu0 %1469
  %v1482 = vsel %vm880, %v1431, 0
  %v1485 = vsel %vm880, %v1432, 0
  %v1488 = vsel %vm880, %v1433, 0
  %v1491 = vsel %vm880, %v1434, 0
  %v1494 = vsel %vm880, %v1435, 0
  %v1497 = vsel %vm880, %v1436, 0
  %v1500 = vsel %vm880, %v1437, 0
  %v1503 = vsel %vm880, %v1438, 0
  %v1506 = vsel %vm880, %v1439, 0
  %v1509 = vsel %vm880, %v1440, 0
  %1511 = vmatprep.subr.mxu0 0.0
  %1512 = vmatpush1.msra.mxu0 0.0
  %1513 = vmatprep.subr.mxu0 0.0
  %1514 = vmatpush1.msra.mxu0 0.0
  %1515 = vmatprep.subr.mxu0 0.0
  %1516 = vmatpush1.msra.mxu0 0.0
  %1517 = vmatprep.subr.mxu0 0.0
  %1518 = vmatpush1.msra.mxu0 0.0
  %1519 = vmatprep.subr.mxu0 0.0
  %1520 = vmatpush1.msra.mxu0 0.0
  %1521 = vmatprep.subr.mxu0 0.0
  %1522 = vmatpush1.msra.mxu0 0.0
  %1523 = vmatprep.subr.mxu0 0.0
  %1524 = vmatpush1.msra.mxu0 %v1470
  %1525 = vmatprep.subr.mxu0 0.0
  %1526 = vmatpush1.msra.mxu0 %v1468
  %1527 = vmatprep.subr.mxu0 0.0
  %1528 = vmatpush1.msra.mxu0 %v1466
  %1529 = vmatprep.subr.mxu0 0.0
  %1530 = vmatpush1.msra.mxu0 %v1464
  %1531 = vmatprep.subr.mxu0 0.0
  %1532 = vmatpush1.msra.mxu0 %v1462
  %1533 = vmatprep.subr.mxu0 0.0
  %1534 = vmatpush1.msra.mxu0 %v1460
  %1535 = vmatprep.subr.mxu0 0.0
  %1536 = vmatpush1.msra.mxu0 %v1458
  %1537 = vmatprep.subr.mxu0 0.0
  %1538 = vmatpush1.msra.mxu0 %v1456
  %1539 = vmatprep.subr.mxu0 0.0
  %1540 = vmatpush1.msra.mxu0 %v1454
  %1541 = vmatprep.subr.mxu0 0.0
  %1542 = vmatpush1.msra.mxu0 %v1452
  %1543 = vmatprep.subr.mxu0 0.0
  %1544 = vmatpush2.msra.mxu0 0.0
  %1545 = vmatprep.subr.mxu0 0.0
  %1546 = vmatpush2.msra.mxu0 0.0
  %1547 = vmatprep.subr.mxu0 0.0
  %1548 = vmatpush2.msra.mxu0 0.0
  %1549 = vmatprep.subr.mxu0 0.0
  %1550 = vmatpush2.msra.mxu0 0.0
  %1551 = vmatprep.subr.mxu0 0.0
  %1552 = vmatpush2.msra.mxu0 0.0
  %1553 = vmatprep.subr.mxu0 0.0
  %1554 = vmatpush2.msra.mxu0 0.0
  %1555 = vmatprep.subr.mxu0 0.0
  %1556 = vmatpush2.msra.mxu0 0.0
  %1557 = vmatprep.subr.mxu0 0.0
  %1558 = vmatpush2.msra.mxu0 0.0
  %1559 = vmatprep.subr.mxu0 0.0
  %1560 = vmatpush2.msra.mxu0 0.0
  %1561 = vmatprep.subr.mxu0 0.0
  %1562 = vmatpush2.msra.mxu0 0.0
  %1563 = vmatprep.subr.mxu0 0.0
  %1564 = vmatpush2.msra.mxu0 0.0
  %1565 = vmatprep.subr.mxu0 0.0
  %1566 = vmatpush2.msra.mxu0 0.0
  %1567 = vmatprep.subr.mxu0 0.0
  %1568 = vmatpush2.msra.mxu0 0.0
  %1569 = vmatprep.subr.mxu0 0.0
  %1570 = vmatpush2.msra.mxu0 0.0
  %1571 = vmatprep.subr.mxu0 0.0
  %1572 = vmatpush2.msra.mxu0 0.0
  %1573 = vmatprep.subr.mxu0 0.0
  %1574 = vmatpush2.msra.mxu0 0.0
  %1575 = vmatprep.mubr.f32.mxu0 0.0
  %1576 = vmatmul.mubr.f32.gmra.mxu0 %v1482
  %v1577 = vpop.f32.mrf.mxu0
  %v1578 = vadd.f32 0.0, %v1577
  %v1579 = vpop.f32.mrf.mxu0
  %1580 = vmatprep.mubr.f32.mxu0 0.0
  %1581 = vmatmul.mubr.f32.gmra.mxu0 %v1485
  %v1582 = vpop.f32.mrf.mxu0
  %v1583 = vadd.f32 0.0, %v1582
  %v1584 = vpop.f32.mrf.mxu0
  %1585 = vmatprep.mubr.f32.mxu0 0.0
  %1586 = vmatmul.mubr.f32.gmra.mxu0 %v1488
  %v1587 = vpop.f32.mrf.mxu0
  %v1588 = vadd.f32 0.0, %v1587
  %v1589 = vpop.f32.mrf.mxu0
  %1590 = vmatprep.mubr.f32.mxu0 0.0
  %1591 = vmatmul.mubr.f32.gmra.mxu0 %v1491
  %v1592 = vpop.f32.mrf.mxu0
  %v1593 = vadd.f32 0.0, %v1592
  %v1594 = vpop.f32.mrf.mxu0
  %1595 = vmatprep.mubr.f32.mxu0 0.0
  %1596 = vmatmul.mubr.f32.gmra.mxu0 %v1494
  %v1597 = vpop.f32.mrf.mxu0
  %v1598 = vadd.f32 0.0, %v1597
  %v1599 = vpop.f32.mrf.mxu0
  %1600 = vmatprep.mubr.f32.mxu0 0.0
  %1601 = vmatmul.mubr.f32.gmra.mxu0 %v1497
  %v1602 = vpop.f32.mrf.mxu0
  %v1603 = vadd.f32 0.0, %v1602
  %v1604 = vpop.f32.mrf.mxu0
  %1605 = vmatprep.mubr.f32.mxu0 0.0
  %1606 = vmatmul.mubr.f32.gmra.mxu0 %v1500
  %v1607 = vpop.f32.mrf.mxu0
  %v1608 = vadd.f32 0.0, %v1607
  %v1609 = vpop.f32.mrf.mxu0
  %1610 = vmatprep.mubr.f32.mxu0 0.0
  %1611 = vmatmul.mubr.f32.gmra.mxu0 %v1503
  %v1612 = vpop.f32.mrf.mxu0
  %v1613 = vadd.f32 0.0, %v1612
  %v1614 = vpop.f32.mrf.mxu0
  %1615 = vmatprep.mubr.f32.mxu0 0.0
  %1616 = vmatmul.mubr.f32.gmra.mxu0 %v1506
  %v1617 = vpop.f32.mrf.mxu0
  %v1618 = vadd.f32 0.0, %v1617
  %v1619 = vpop.f32.mrf.mxu0
  %1620 = vmatprep.mubr.f32.mxu0 0.0
  %1621 = vmatmul.mubr.f32.gmra.mxu0 %v1509
  %v1622 = vpop.f32.mrf.mxu0
  %v1623 = vadd.f32 0.0, %v1622
  %v1624 = vpop.f32.mrf.mxu0
  %1625 = vdwg.mxu0
  %v1627 = vsel %vm724, %v1578, 0
  %v1630 = vsel %vm724, %v1583, 0
  %v1633 = vsel %vm724, %v1588, 0
  %v1636 = vsel %vm724, %v1593, 0
  %v1639 = vsel %vm724, %v1598, 0
  %v1642 = vsel %vm724, %v1603, 0
  %v1645 = vsel %vm724, %v1608, 0
  %v1648 = vsel %vm724, %v1613, 0
  %v1651 = vsel %vm724, %v1618, 0
  %v1654 = vsel %vm724, %v1623, 0
  %1656 = vmatprep.subr.mxu0 0.0
  %1657 = vmatpush1.msra.mxu0 0.0
  %1658 = vmatprep.subr.mxu0 0.0
  %1659 = vmatpush1.msra.mxu0 0.0
  %1660 = vmatprep.subr.mxu0 0.0
  %1661 = vmatpush1.msra.mxu0 0.0
  %1662 = vmatprep.subr.mxu0 0.0
  %1663 = vmatpush1.msra.mxu0 0.0
  %1664 = vmatprep.subr.mxu0 0.0
  %1665 = vmatpush1.msra.mxu0 0.0
  %1666 = vmatprep.subr.mxu0 0.0
  %1667 = vmatpush1.msra.mxu0 0.0
  %1668 = vmatprep.subr.mxu0 0.0
  %1669 = vmatpush1.msra.mxu0 0.0
  %1670 = vmatprep.subr.mxu0 0.0
  %1671 = vmatpush1.msra.mxu0 0.0
  %1672 = vmatprep.subr.mxu0 0.0
  %1673 = vmatpush1.msra.mxu0 0.0
  %1674 = vmatprep.subr.mxu0 0.0
  %1675 = vmatpush1.msra.mxu0 0.0
  %1676 = vmatprep.subr.mxu0 0.0
  %1677 = vmatpush1.msra.mxu0 0.0
  %1678 = vmatprep.subr.mxu0 0.0
  %1679 = vmatpush1.msra.mxu0 0.0
  %1680 = vmatprep.subr.mxu0 0.0
  %1681 = vmatpush1.msra.mxu0 0.0
  %1682 = vmatprep.subr.mxu0 0.0
  %1683 = vmatpush1.msra.mxu0 0.0
  %1684 = vmatprep.subr.mxu0 0.0
  %1685 = vmatpush1.msra.mxu0 %v689
  %1686 = vmatprep.subr.mxu0 0.0
  %1687 = vmatpush1.msra.mxu0 %v688
  %1688 = vmatprep.subr.mxu0 0.0
  %1689 = vmatpush2.msra.mxu0 0.0
  %1690 = vmatprep.subr.mxu0 0.0
  %1691 = vmatpush2.msra.mxu0 0.0
  %1692 = vmatprep.subr.mxu0 0.0
  %1693 = vmatpush2.msra.mxu0 0.0
  %1694 = vmatprep.subr.mxu0 0.0
  %1695 = vmatpush2.msra.mxu0 0.0
  %1696 = vmatprep.subr.mxu0 0.0
  %1697 = vmatpush2.msra.mxu0 0.0
  %1698 = vmatprep.subr.mxu0 0.0
  %1699 = vmatpush2.msra.mxu0 0.0
  %1700 = vmatprep.subr.mxu0 0.0
  %1701 = vmatpush2.msra.mxu0 0.0
  %1702 = vmatprep.subr.mxu0 0.0
  %1703 = vmatpush2.msra.mxu0 0.0
  %1704 = vmatprep.subr.mxu0 0.0
  %1705 = vmatpush2.msra.mxu0 0.0
  %1706 = vmatprep.subr.mxu0 0.0
  %1707 = vmatpush2.msra.mxu0 0.0
  %1708 = vmatprep.subr.mxu0 0.0
  %1709 = vmatpush2.msra.mxu0 0.0
  %1710 = vmatprep.subr.mxu0 0.0
  %1711 = vmatpush2.msra.mxu0 0.0
  %1712 = vmatprep.subr.mxu0 0.0
  %1713 = vmatpush2.msra.mxu0 0.0
  %1714 = vmatprep.subr.mxu0 0.0
  %1715 = vmatpush2.msra.mxu0 0.0
  %1716 = vmatprep.subr.mxu0 0.0
  %1717 = vmatpush2.msra.mxu0 0.0
  %1718 = vmatprep.subr.mxu0 0.0
  %1719 = vmatpush2.msra.mxu0 0.0
  %1720 = vmatprep.mubr.f32.mxu0 0.0
  %1721 = vmatmul.mubr.f32.gmra.mxu0 %v1627
  %v1722 = vpop.f32.mrf.mxu0
  %v1723 = vadd.f32 0.0, %v1722
  %v1724 = vpop.f32.mrf.mxu0
  %1725 = vmatprep.mubr.f32.mxu0 0.0
  %1726 = vmatmul.mubr.f32.gmra.mxu0 %v1630
  %v1727 = vpop.f32.mrf.mxu0
  %v1728 = vadd.f32 0.0, %v1727
  %v1729 = vpop.f32.mrf.mxu0
  %1730 = vmatprep.mubr.f32.mxu0 0.0
  %1731 = vmatmul.mubr.f32.gmra.mxu0 %v1633
  %v1732 = vpop.f32.mrf.mxu0
  %v1733 = vadd.f32 0.0, %v1732
  %v1734 = vpop.f32.mrf.mxu0
  %1735 = vmatprep.mubr.f32.mxu0 0.0
  %1736 = vmatmul.mubr.f32.gmra.mxu0 %v1636
  %v1737 = vpop.f32.mrf.mxu0
  %v1738 = vadd.f32 0.0, %v1737
  %v1739 = vpop.f32.mrf.mxu0
  %1740 = vmatprep.mubr.f32.mxu0 0.0
  %1741 = vmatmul.mubr.f32.gmra.mxu0 %v1639
  %v1742 = vpop.f32.mrf.mxu0
  %v1743 = vadd.f32 0.0, %v1742
  %v1744 = vpop.f32.mrf.mxu0
  %1745 = vmatprep.mubr.f32.mxu0 0.0
  %1746 = vmatmul.mubr.f32.gmra.mxu0 %v1642
  %v1747 = vpop.f32.mrf.mxu0
  %v1748 = vadd.f32 0.0, %v1747
  %v1749 = vpop.f32.mrf.mxu0
  %1750 = vmatprep.mubr.f32.mxu0 0.0
  %1751 = vmatmul.mubr.f32.gmra.mxu0 %v1645
  %v1752 = vpop.f32.mrf.mxu0
  %v1753 = vadd.f32 0.0, %v1752
  %v1754 = vpop.f32.mrf.mxu0
  %1755 = vmatprep.mubr.f32.mxu0 0.0
  %1756 = vmatmul.mubr.f32.gmra.mxu0 %v1648
  %v1757 = vpop.f32.mrf.mxu0
  %v1758 = vadd.f32 0.0, %v1757
  %v1759 = vpop.f32.mrf.mxu0
  %1760 = vmatprep.mubr.f32.mxu0 0.0
  %1761 = vmatmul.mubr.f32.gmra.mxu0 %v1651
  %v1762 = vpop.f32.mrf.mxu0
  %v1763 = vadd.f32 0.0, %v1762
  %v1764 = vpop.f32.mrf.mxu0
  %1765 = vmatprep.mubr.f32.mxu0 0.0
  %1766 = vmatmul.mubr.f32.gmra.mxu0 %v1654
  %v1767 = vpop.f32.mrf.mxu0
  %v1768 = vadd.f32 0.0, %v1767
  %v1769 = vpop.f32.mrf.mxu0
  %1770 = vdwg.mxu0
  %v1772 = vsel %vm724, %v1088, 0
  %v1775 = vsel %vm724, %v1093, 0
  %v1778 = vsel %vm724, %v1098, 0
  %v1781 = vsel %vm724, %v1103, 0
  %v1784 = vsel %vm724, %v1108, 0
  %v1787 = vsel %vm724, %v1113, 0
  %v1790 = vsel %vm724, %v1118, 0
  %v1793 = vsel %vm724, %v1123, 0
  %v1796 = vsel %vm724, %v1128, 0
  %v1799 = vsel %vm724, %v1133, 0
  %1801 = vmatprep.subr.mxu0 0.0
  %1802 = vmatpush1.msra.mxu0 0.0
  %1803 = vmatprep.subr.mxu0 0.0
  %1804 = vmatpush1.msra.mxu0 0.0
  %1805 = vmatprep.subr.mxu0 0.0
  %1806 = vmatpush1.msra.mxu0 0.0
  %1807 = vmatprep.subr.mxu0 0.0
  %1808 = vmatpush1.msra.mxu0 0.0
  %1809 = vmatprep.subr.mxu0 0.0
  %1810 = vmatpush1.msra.mxu0 0.0
  %1811 = vmatprep.subr.mxu0 0.0
  %1812 = vmatpush1.msra.mxu0 0.0
  %1813 = vmatprep.subr.mxu0 0.0
  %1814 = vmatpush1.msra.mxu0 0.0
  %1815 = vmatprep.subr.mxu0 0.0
  %1816 = vmatpush1.msra.mxu0 0.0
  %1817 = vmatprep.subr.mxu0 0.0
  %1818 = vmatpush1.msra.mxu0 0.0
  %1819 = vmatprep.subr.mxu0 0.0
  %1820 = vmatpush1.msra.mxu0 0.0
  %1821 = vmatprep.subr.mxu0 0.0
  %1822 = vmatpush1.msra.mxu0 0.0
  %1823 = vmatprep.subr.mxu0 0.0
  %1824 = vmatpush1.msra.mxu0 0.0
  %1825 = vmatprep.subr.mxu0 0.0
  %1826 = vmatpush1.msra.mxu0 0.0
  %1827 = vmatprep.subr.mxu0 0.0
  %1828 = vmatpush1.msra.mxu0 0.0
  %1829 = vmatprep.subr.mxu0 0.0
  %1830 = vmatpush1.msra.mxu0 %v687
  %1831 = vmatprep.subr.mxu0 0.0
  %1832 = vmatpush1.msra.mxu0 %v686
  %1833 = vmatprep.subr.mxu0 0.0
  %1834 = vmatpush2.msra.mxu0 0.0
  %1835 = vmatprep.subr.mxu0 0.0
  %1836 = vmatpush2.msra.mxu0 0.0
  %1837 = vmatprep.subr.mxu0 0.0
  %1838 = vmatpush2.msra.mxu0 0.0
  %1839 = vmatprep.subr.mxu0 0.0
  %1840 = vmatpush2.msra.mxu0 0.0
  %1841 = vmatprep.subr.mxu0 0.0
  %1842 = vmatpush2.msra.mxu0 0.0
  %1843 = vmatprep.subr.mxu0 0.0
  %1844 = vmatpush2.msra.mxu0 0.0
  %1845 = vmatprep.subr.mxu0 0.0
  %1846 = vmatpush2.msra.mxu0 0.0
  %1847 = vmatprep.subr.mxu0 0.0
  %1848 = vmatpush2.msra.mxu0 0.0
  %1849 = vmatprep.subr.mxu0 0.0
  %1850 = vmatpush2.msra.mxu0 0.0
  %1851 = vmatprep.subr.mxu0 0.0
  %1852 = vmatpush2.msra.mxu0 0.0
  %1853 = vmatprep.subr.mxu0 0.0
  %1854 = vmatpush2.msra.mxu0 0.0
  %1855 = vmatprep.subr.mxu0 0.0
  %1856 = vmatpush2.msra.mxu0 0.0
  %1857 = vmatprep.subr.mxu0 0.0
  %1858 = vmatpush2.msra.mxu0 0.0
  %1859 = vmatprep.subr.mxu0 0.0
  %1860 = vmatpush2.msra.mxu0 0.0
  %1861 = vmatprep.subr.mxu0 0.0
  %1862 = vmatpush2.msra.mxu0 0.0
  %1863 = vmatprep.subr.mxu0 0.0
  %1864 = vmatpush2.msra.mxu0 0.0
  %1865 = vmatprep.mubr.f32.mxu0 0.0
  %1866 = vmatmul.mubr.f32.gmra.mxu0 %v1772
  %v1867 = vpop.f32.mrf.mxu0
  %v1868 = vadd.f32 %v1723, %v1867
  %v1869 = vpop.f32.mrf.mxu0
  %1870 = vmatprep.mubr.f32.mxu0 0.0
  %1871 = vmatmul.mubr.f32.gmra.mxu0 %v1775
  %v1872 = vpop.f32.mrf.mxu0
  %v1873 = vadd.f32 %v1728, %v1872
  %v1874 = vpop.f32.mrf.mxu0
  %1875 = vmatprep.mubr.f32.mxu0 0.0
  %1876 = vmatmul.mubr.f32.gmra.mxu0 %v1778
  %v1877 = vpop.f32.mrf.mxu0
  %v1878 = vadd.f32 %v1733, %v1877
  %v1879 = vpop.f32.mrf.mxu0
  %1880 = vmatprep.mubr.f32.mxu0 0.0
  %1881 = vmatmul.mubr.f32.gmra.mxu0 %v1781
  %v1882 = vpop.f32.mrf.mxu0
  %v1883 = vadd.f32 %v1738, %v1882
  %v1884 = vpop.f32.mrf.mxu0
  %1885 = vmatprep.mubr.f32.mxu0 0.0
  %1886 = vmatmul.mubr.f32.gmra.mxu0 %v1784
  %v1887 = vpop.f32.mrf.mxu0
  %v1888 = vadd.f32 %v1743, %v1887
  %v1889 = vpop.f32.mrf.mxu0
  %1890 = vmatprep.mubr.f32.mxu0 0.0
  %1891 = vmatmul.mubr.f32.gmra.mxu0 %v1787
  %v1892 = vpop.f32.mrf.mxu0
  %v1893 = vadd.f32 %v1748, %v1892
  %v1894 = vpop.f32.mrf.mxu0
  %1895 = vmatprep.mubr.f32.mxu0 0.0
  %1896 = vmatmul.mubr.f32.gmra.mxu0 %v1790
  %v1897 = vpop.f32.mrf.mxu0
  %v1898 = vadd.f32 %v1753, %v1897
  %v1899 = vpop.f32.mrf.mxu0
  %1900 = vmatprep.mubr.f32.mxu0 0.0
  %1901 = vmatmul.mubr.f32.gmra.mxu0 %v1793
  %v1902 = vpop.f32.mrf.mxu0
  %v1903 = vadd.f32 %v1758, %v1902
  %v1904 = vpop.f32.mrf.mxu0
  %1905 = vmatprep.mubr.f32.mxu0 0.0
  %1906 = vmatmul.mubr.f32.gmra.mxu0 %v1796
  %v1907 = vpop.f32.mrf.mxu0
  %v1908 = vadd.f32 %v1763, %v1907
  %v1909 = vpop.f32.mrf.mxu0
  %1910 = vmatprep.mubr.f32.mxu0 0.0
  %1911 = vmatmul.mubr.f32.gmra.mxu0 %v1799
  %v1912 = vpop.f32.mrf.mxu0
  %v1913 = vadd.f32 %v1768, %v1912
  %v1914 = vpop.f32.mrf.mxu0
  %1915 = vdwg.mxu0
  %1916 = vrot.lane.b32.xlu0 %v628, 96
  %v1917 = vpop.permute.xlu0 %1916
  %1918 = vrot.lane.b32.xlu0 %v634, 96
  %v1919 = vpop.permute.xlu0 %1918
  %1920 = vrot.lane.b32.xlu0 %v640, 96
  %v1921 = vpop.permute.xlu0 %1920
  %1922 = vrot.lane.b32.xlu0 %v646, 96
  %v1923 = vpop.permute.xlu0 %1922
  %1924 = vrot.lane.b32.xlu0 %v652, 96
  %v1925 = vpop.permute.xlu0 %1924
  %1926 = vrot.lane.b32.xlu0 %v658, 96
  %v1927 = vpop.permute.xlu0 %1926
  %1928 = vrot.lane.b32.xlu0 %v664, 96
  %v1929 = vpop.permute.xlu0 %1928
  %1930 = vrot.lane.b32.xlu0 %v670, 96
  %v1931 = vpop.permute.xlu0 %1930
  %1932 = vrot.lane.b32.xlu0 %v676, 96
  %v1933 = vpop.permute.xlu0 %1932
  %1934 = vrot.lane.b32.xlu0 %v682, 96
  %v1935 = vpop.permute.xlu0 %1934
  %1936 = vrot.lane.b32.xlu0 %v628, 32
  %v1937 = vpop.permute.xlu0 %1936
  %1938 = vrot.lane.b32.xlu0 %v634, 32
  %v1939 = vpop.permute.xlu0 %1938
  %1940 = vrot.lane.b32.xlu0 %v640, 32
  %v1941 = vpop.permute.xlu0 %1940
  %1942 = vrot.lane.b32.xlu0 %v646, 32
  %v1943 = vpop.permute.xlu0 %1942
  %1944 = vrot.lane.b32.xlu0 %v652, 32
  %v1945 = vpop.permute.xlu0 %1944
  %1946 = vrot.lane.b32.xlu0 %v658, 32
  %v1947 = vpop.permute.xlu0 %1946
  %1948 = vrot.lane.b32.xlu0 %v664, 32
  %v1949 = vpop.permute.xlu0 %1948
  %1950 = vrot.lane.b32.xlu0 %v670, 32
  %v1951 = vpop.permute.xlu0 %1950
  %1952 = vrot.lane.b32.xlu0 %v676, 32
  %v1953 = vpop.permute.xlu0 %1952
  %1954 = vrot.lane.b32.xlu0 %v682, 32
  %v1955 = vpop.permute.xlu0 %1954
  %v1956 = vsel %vm724, %v1917, 0
  %v1958 = vsel %vm724, %v1919, 0
  %v1960 = vsel %vm724, %v1921, 0
  %v1962 = vsel %vm724, %v1923, 0
  %v1964 = vsel %vm724, %v1925, 0
  %v1966 = vsel %vm724, %v1927, 0
  %v1968 = vsel %vm724, %v1929, 0
  %v1970 = vsel %vm724, %v1931, 0
  %v1972 = vsel %vm724, %v1933, 0
  %v1974 = vsel %vm724, %v1935, 0
  %v1976 = vsel %vm724, %v1937, 0
  %v1978 = vsel %vm724, %v1939, 0
  %v1980 = vsel %vm724, %v1941, 0
  %v1982 = vsel %vm724, %v1943, 0
  %v1984 = vsel %vm724, %v1945, 0
  %v1986 = vsel %vm724, %v1947, 0
  %v1988 = vsel %vm724, %v1949, 0
  %v1990 = vsel %vm724, %v1951, 0
  %v1992 = vsel %vm724, %v1953, 0
  %v1994 = vsel %vm724, %v1955, 0
  %1996 = vmatprep.subr.mxu0 0.0
  %1997 = vmatpush1.xpose.msra.mxu0 0.0
  %1998 = vmatprep.subr.mxu0 0.0
  %1999 = vmatpush1.xpose.msra.mxu0 0.0
  %2000 = vmatprep.subr.mxu0 0.0
  %2001 = vmatpush1.xpose.msra.mxu0 0.0
  %2002 = vmatprep.subr.mxu0 0.0
  %2003 = vmatpush1.xpose.msra.mxu0 0.0
  %2004 = vmatprep.subr.mxu0 0.0
  %2005 = vmatpush1.xpose.msra.mxu0 0.0
  %2006 = vmatprep.subr.mxu0 0.0
  %2007 = vmatpush1.xpose.msra.mxu0 0.0
  %2008 = vmatprep.subr.mxu0 0.0
  %2009 = vmatpush1.xpose.msra.mxu0 %v1994
  %2010 = vmatprep.subr.mxu0 0.0
  %2011 = vmatpush1.xpose.msra.mxu0 %v1992
  %2012 = vmatprep.subr.mxu0 0.0
  %2013 = vmatpush1.xpose.msra.mxu0 %v1990
  %2014 = vmatprep.subr.mxu0 0.0
  %2015 = vmatpush1.xpose.msra.mxu0 %v1988
  %2016 = vmatprep.subr.mxu0 0.0
  %2017 = vmatpush1.xpose.msra.mxu0 %v1986
  %2018 = vmatprep.subr.mxu0 0.0
  %2019 = vmatpush1.xpose.msra.mxu0 %v1984
  %2020 = vmatprep.subr.mxu0 0.0
  %2021 = vmatpush1.xpose.msra.mxu0 %v1982
  %2022 = vmatprep.subr.mxu0 0.0
  %2023 = vmatpush1.xpose.msra.mxu0 %v1980
  %2024 = vmatprep.subr.mxu0 0.0
  %2025 = vmatpush1.xpose.msra.mxu0 %v1978
  %2026 = vmatprep.subr.mxu0 0.0
  %2027 = vmatpush1.xpose.msra.mxu0 %v1976
  %2028 = vmatprep.subr.mxu0 0.0
  %2029 = vmatpush2.xpose.msra.mxu0 0.0
  %2030 = vmatprep.subr.mxu0 0.0
  %2031 = vmatpush2.xpose.msra.mxu0 0.0
  %2032 = vmatprep.subr.mxu0 0.0
  %2033 = vmatpush2.xpose.msra.mxu0 0.0
  %2034 = vmatprep.subr.mxu0 0.0
  %2035 = vmatpush2.xpose.msra.mxu0 0.0
  %2036 = vmatprep.subr.mxu0 0.0
  %2037 = vmatpush2.xpose.msra.mxu0 0.0
  %2038 = vmatprep.subr.mxu0 0.0
  %2039 = vmatpush2.xpose.msra.mxu0 0.0
  %2040 = vmatprep.subr.mxu0 0.0
  %2041 = vmatpush2.xpose.msra.mxu0 0.0
  %2042 = vmatprep.subr.mxu0 0.0
  %2043 = vmatpush2.xpose.msra.mxu0 0.0
  %2044 = vmatprep.subr.mxu0 0.0
  %2045 = vmatpush2.xpose.msra.mxu0 0.0
  %2046 = vmatprep.subr.mxu0 0.0
  %2047 = vmatpush2.xpose.msra.mxu0 0.0
  %2048 = vmatprep.subr.mxu0 0.0
  %2049 = vmatpush2.xpose.msra.mxu0 0.0
  %2050 = vmatprep.subr.mxu0 0.0
  %2051 = vmatpush2.xpose.msra.mxu0 0.0
  %2052 = vmatprep.subr.mxu0 0.0
  %2053 = vmatpush2.xpose.msra.mxu0 0.0
  %2054 = vmatprep.subr.mxu0 0.0
  %2055 = vmatpush2.xpose.msra.mxu0 0.0
  %2056 = vmatprep.subr.mxu0 0.0
  %2057 = vmatpush2.xpose.msra.mxu0 0.0
  %2058 = vmatprep.subr.mxu0 0.0
  %2059 = vmatpush2.xpose.msra.mxu0 0.0
  %2060 = vmatprep.mubr.f32.mxu0 0.0
  %2061 = vmatmul.mubr.f32.gmra.mxu0 %v1956
  %v2062 = vpop.f32.mrf.mxu0
  %v2063 = vadd.f32 %v491, %v2062
  %v2064 = vpop.f32.mrf.mxu0
  %2065 = vmatprep.mubr.f32.mxu0 0.0
  %2066 = vmatmul.mubr.f32.gmra.mxu0 %v1958
  %v2067 = vpop.f32.mrf.mxu0
  %v2068 = vadd.f32 %v492, %v2067
  %v2069 = vpop.f32.mrf.mxu0
  %2070 = vmatprep.mubr.f32.mxu0 0.0
  %2071 = vmatmul.mubr.f32.gmra.mxu0 %v1960
  %v2072 = vpop.f32.mrf.mxu0
  %v2073 = vadd.f32 %v493, %v2072
  %v2074 = vpop.f32.mrf.mxu0
  %2075 = vmatprep.mubr.f32.mxu0 0.0
  %2076 = vmatmul.mubr.f32.gmra.mxu0 %v1962
  %v2077 = vpop.f32.mrf.mxu0
  %v2078 = vadd.f32 %v494, %v2077
  %v2079 = vpop.f32.mrf.mxu0
  %2080 = vmatprep.mubr.f32.mxu0 0.0
  %2081 = vmatmul.mubr.f32.gmra.mxu0 %v1964
  %v2082 = vpop.f32.mrf.mxu0
  %v2083 = vadd.f32 %v495, %v2082
  %v2084 = vpop.f32.mrf.mxu0
  %2085 = vmatprep.mubr.f32.mxu0 0.0
  %2086 = vmatmul.mubr.f32.gmra.mxu0 %v1966
  %v2087 = vpop.f32.mrf.mxu0
  %v2088 = vadd.f32 %v496, %v2087
  %v2089 = vpop.f32.mrf.mxu0
  %2090 = vmatprep.mubr.f32.mxu0 0.0
  %2091 = vmatmul.mubr.f32.gmra.mxu0 %v1968
  %v2092 = vpop.f32.mrf.mxu0
  %v2093 = vadd.f32 %v497, %v2092
  %v2094 = vpop.f32.mrf.mxu0
  %2095 = vmatprep.mubr.f32.mxu0 0.0
  %2096 = vmatmul.mubr.f32.gmra.mxu0 %v1970
  %v2097 = vpop.f32.mrf.mxu0
  %v2098 = vadd.f32 %v498, %v2097
  %v2099 = vpop.f32.mrf.mxu0
  %2100 = vmatprep.mubr.f32.mxu0 0.0
  %2101 = vmatmul.mubr.f32.gmra.mxu0 %v1972
  %v2102 = vpop.f32.mrf.mxu0
  %v2103 = vadd.f32 %v499, %v2102
  %v2104 = vpop.f32.mrf.mxu0
  %2105 = vmatprep.mubr.f32.mxu0 0.0
  %2106 = vmatmul.mubr.f32.gmra.mxu0 %v1974
  %v2107 = vpop.f32.mrf.mxu0
  %v2108 = vadd.f32 %v500, %v2107
  %v2109 = vpop.f32.mrf.mxu0
  %2110 = vdwg.mxu0
  %v2111 = vsel %vm880, %v2063, -inf
  %2112 = vmax.xlane.f32.xlu0 %v2111
  %v2113 = vpop.xlane.xlu0 %2112
  %v2114 = vsel %vm880, %v2068, -inf
  %2115 = vmax.xlane.f32.xlu0 %v2114
  %v2116 = vpop.xlane.xlu0 %2115
  %v2117 = vsel %vm880, %v2073, -inf
  %2118 = vmax.xlane.f32.xlu0 %v2117
  %v2119 = vpop.xlane.xlu0 %2118
  %v2120 = vsel %vm880, %v2078, -inf
  %2121 = vmax.xlane.f32.xlu0 %v2120
  %v2122 = vpop.xlane.xlu0 %2121
  %v2123 = vsel %vm880, %v2083, -inf
  %2124 = vmax.xlane.f32.xlu0 %v2123
  %v2125 = vpop.xlane.xlu0 %2124
  %v2126 = vsel %vm880, %v2088, -inf
  %2127 = vmax.xlane.f32.xlu0 %v2126
  %v2128 = vpop.xlane.xlu0 %2127
  %v2129 = vsel %vm880, %v2093, -inf
  %2130 = vmax.xlane.f32.xlu0 %v2129
  %v2131 = vpop.xlane.xlu0 %2130
  %v2132 = vsel %vm880, %v2098, -inf
  %2133 = vmax.xlane.f32.xlu0 %v2132
  %v2134 = vpop.xlane.xlu0 %2133
  %v2135 = vsel %vm880, %v2103, -inf
  %2136 = vmax.xlane.f32.xlu0 %v2135
  %v2137 = vpop.xlane.xlu0 %2136
  %v2138 = vsel %vm880, %v2108, -inf
  %2139 = vmax.xlane.f32.xlu0 %v2138
  %v2140 = vpop.xlane.xlu0 %2139
  %v2141 = vsub.f32 %v2063, %v2113
  %v2142 = vsub.f32 %v2068, %v2116
  %v2143 = vsub.f32 %v2073, %v2119
  %v2144 = vsub.f32 %v2078, %v2122
  %v2145 = vsub.f32 %v2083, %v2125
  %v2146 = vsub.f32 %v2088, %v2128
  %v2147 = vsub.f32 %v2093, %v2131
  %v2148 = vsub.f32 %v2098, %v2134
  %v2149 = vsub.f32 %v2103, %v2137
  %v2150 = vsub.f32 %v2108, %v2140
  %v2151 = vmul.f32 %v2141, 1.442695
  %v2152 = vpow.pop %v2151
  %v2153 = vmul.f32 %v2142, 1.442695
  %v2154 = vpow.pop %v2153
  %v2155 = vmul.f32 %v2143, 1.442695
  %v2156 = vpow.pop %v2155
  %v2157 = vmul.f32 %v2144, 1.442695
  %v2158 = vpow.pop %v2157
  %v2159 = vmul.f32 %v2145, 1.442695
  %v2160 = vpow.pop %v2159
  %v2161 = vmul.f32 %v2146, 1.442695
  %v2162 = vpow.pop %v2161
  %v2163 = vmul.f32 %v2147, 1.442695
  %v2164 = vpow.pop %v2163
  %v2165 = vmul.f32 %v2148, 1.442695
  %v2166 = vpow.pop %v2165
  %v2167 = vmul.f32 %v2149, 1.442695
  %v2168 = vpow.pop %v2167
  %v2169 = vmul.f32 %v2150, 1.442695
  %v2170 = vpow.pop %v2169
  %v2171 = vsel %vm880, %v2152, 0.0
  %2172 = vadd.xlane.f32.xlu0 %v2171
  %v2173 = vpop.xlane.xlu0 %2172
  %v2174 = vsel %vm880, %v2154, 0.0
  %2175 = vadd.xlane.f32.xlu0 %v2174
  %v2176 = vpop.xlane.xlu0 %2175
  %v2177 = vsel %vm880, %v2156, 0.0
  %2178 = vadd.xlane.f32.xlu0 %v2177
  %v2179 = vpop.xlane.xlu0 %2178
  %v2180 = vsel %vm880, %v2158, 0.0
  %2181 = vadd.xlane.f32.xlu0 %v2180
  %v2182 = vpop.xlane.xlu0 %2181
  %v2183 = vsel %vm880, %v2160, 0.0
  %2184 = vadd.xlane.f32.xlu0 %v2183
  %v2185 = vpop.xlane.xlu0 %2184
  %v2186 = vsel %vm880, %v2162, 0.0
  %2187 = vadd.xlane.f32.xlu0 %v2186
  %v2188 = vpop.xlane.xlu0 %2187
  %v2189 = vsel %vm880, %v2164, 0.0
  %2190 = vadd.xlane.f32.xlu0 %v2189
  %v2191 = vpop.xlane.xlu0 %2190
  %v2192 = vsel %vm880, %v2166, 0.0
  %2193 = vadd.xlane.f32.xlu0 %v2192
  %v2194 = vpop.xlane.xlu0 %2193
  %v2195 = vsel %vm880, %v2168, 0.0
  %2196 = vadd.xlane.f32.xlu0 %v2195
  %v2197 = vpop.xlane.xlu0 %2196
  %v2198 = vsel %vm880, %v2170, 0.0
  %2199 = vadd.xlane.f32.xlu0 %v2198
  %v2200 = vpop.xlane.xlu0 %2199
  %v2201 = vrcp.pop %v2173
  %v2202 = vrcp.pop %v2176
  %v2203 = vrcp.pop %v2179
  %v2204 = vrcp.pop %v2182
  %v2205 = vrcp.pop %v2185
  %v2206 = vrcp.pop %v2188
  %v2207 = vrcp.pop %v2191
  %v2208 = vrcp.pop %v2194
  %v2209 = vrcp.pop %v2197
  %v2210 = vrcp.pop %v2200
  %v2211 = vmul.f32 %v2152, %v2201
  %v2212 = vmul.f32 %v2154, %v2202
  %v2213 = vmul.f32 %v2156, %v2203
  %v2214 = vmul.f32 %v2158, %v2204
  %v2215 = vmul.f32 %v2160, %v2205
  %v2216 = vmul.f32 %v2162, %v2206
  %v2217 = vmul.f32 %v2164, %v2207
  %v2218 = vmul.f32 %v2166, %v2208
  %v2219 = vmul.f32 %v2168, %v2209
  %v2220 = vmul.f32 %v2170, %v2210
  %2221 = vrot.lane.b32.xlu0 %v630, 96
  %v2222 = vpop.permute.xlu0 %2221
  %2223 = vrot.lane.b32.xlu0 %v636, 96
  %v2224 = vpop.permute.xlu0 %2223
  %2225 = vrot.lane.b32.xlu0 %v642, 96
  %v2226 = vpop.permute.xlu0 %2225
  %2227 = vrot.lane.b32.xlu0 %v648, 96
  %v2228 = vpop.permute.xlu0 %2227
  %2229 = vrot.lane.b32.xlu0 %v654, 96
  %v2230 = vpop.permute.xlu0 %2229
  %2231 = vrot.lane.b32.xlu0 %v660, 96
  %v2232 = vpop.permute.xlu0 %2231
  %2233 = vrot.lane.b32.xlu0 %v666, 96
  %v2234 = vpop.permute.xlu0 %2233
  %2235 = vrot.lane.b32.xlu0 %v672, 96
  %v2236 = vpop.permute.xlu0 %2235
  %2237 = vrot.lane.b32.xlu0 %v678, 96
  %v2238 = vpop.permute.xlu0 %2237
  %2239 = vrot.lane.b32.xlu0 %v684, 96
  %v2240 = vpop.permute.xlu0 %2239
  %v2252 = vsel %vm880, %v2211, 0
  %v2255 = vsel %vm880, %v2212, 0
  %v2258 = vsel %vm880, %v2213, 0
  %v2261 = vsel %vm880, %v2214, 0
  %v2264 = vsel %vm880, %v2215, 0
  %v2267 = vsel %vm880, %v2216, 0
  %v2270 = vsel %vm880, %v2217, 0
  %v2273 = vsel %vm880, %v2218, 0
  %v2276 = vsel %vm880, %v2219, 0
  %v2279 = vsel %vm880, %v2220, 0
  %2281 = vmatprep.subr.mxu0 0.0
  %2282 = vmatpush1.msra.mxu0 0.0
  %2283 = vmatprep.subr.mxu0 0.0
  %2284 = vmatpush1.msra.mxu0 0.0
  %2285 = vmatprep.subr.mxu0 0.0
  %2286 = vmatpush1.msra.mxu0 0.0
  %2287 = vmatprep.subr.mxu0 0.0
  %2288 = vmatpush1.msra.mxu0 0.0
  %2289 = vmatprep.subr.mxu0 0.0
  %2290 = vmatpush1.msra.mxu0 0.0
  %2291 = vmatprep.subr.mxu0 0.0
  %2292 = vmatpush1.msra.mxu0 0.0
  %2293 = vmatprep.subr.mxu0 0.0
  %2294 = vmatpush1.msra.mxu0 %v2240
  %2295 = vmatprep.subr.mxu0 0.0
  %2296 = vmatpush1.msra.mxu0 %v2238
  %2297 = vmatprep.subr.mxu0 0.0
  %2298 = vmatpush1.msra.mxu0 %v2236
  %2299 = vmatprep.subr.mxu0 0.0
  %2300 = vmatpush1.msra.mxu0 %v2234
  %2301 = vmatprep.subr.mxu0 0.0
  %2302 = vmatpush1.msra.mxu0 %v2232
  %2303 = vmatprep.subr.mxu0 0.0
  %2304 = vmatpush1.msra.mxu0 %v2230
  %2305 = vmatprep.subr.mxu0 0.0
  %2306 = vmatpush1.msra.mxu0 %v2228
  %2307 = vmatprep.subr.mxu0 0.0
  %2308 = vmatpush1.msra.mxu0 %v2226
  %2309 = vmatprep.subr.mxu0 0.0
  %2310 = vmatpush1.msra.mxu0 %v2224
  %2311 = vmatprep.subr.mxu0 0.0
  %2312 = vmatpush1.msra.mxu0 %v2222
  %2313 = vmatprep.subr.mxu0 0.0
  %2314 = vmatpush2.msra.mxu0 0.0
  %2315 = vmatprep.subr.mxu0 0.0
  %2316 = vmatpush2.msra.mxu0 0.0
  %2317 = vmatprep.subr.mxu0 0.0
  %2318 = vmatpush2.msra.mxu0 0.0
  %2319 = vmatprep.subr.mxu0 0.0
  %2320 = vmatpush2.msra.mxu0 0.0
  %2321 = vmatprep.subr.mxu0 0.0
  %2322 = vmatpush2.msra.mxu0 0.0
  %2323 = vmatprep.subr.mxu0 0.0
  %2324 = vmatpush2.msra.mxu0 0.0
  %2325 = vmatprep.subr.mxu0 0.0
  %2326 = vmatpush2.msra.mxu0 0.0
  %2327 = vmatprep.subr.mxu0 0.0
  %2328 = vmatpush2.msra.mxu0 0.0
  %2329 = vmatprep.subr.mxu0 0.0
  %2330 = vmatpush2.msra.mxu0 0.0
  %2331 = vmatprep.subr.mxu0 0.0
  %2332 = vmatpush2.msra.mxu0 0.0
  %2333 = vmatprep.subr.mxu0 0.0
  %2334 = vmatpush2.msra.mxu0 0.0
  %2335 = vmatprep.subr.mxu0 0.0
  %2336 = vmatpush2.msra.mxu0 0.0
  %2337 = vmatprep.subr.mxu0 0.0
  %2338 = vmatpush2.msra.mxu0 0.0
  %2339 = vmatprep.subr.mxu0 0.0
  %2340 = vmatpush2.msra.mxu0 0.0
  %2341 = vmatprep.subr.mxu0 0.0
  %2342 = vmatpush2.msra.mxu0 0.0
  %2343 = vmatprep.subr.mxu0 0.0
  %2344 = vmatpush2.msra.mxu0 0.0
  %2345 = vmatprep.mubr.f32.mxu0 0.0
  %2346 = vmatmul.mubr.f32.gmra.mxu0 %v2252
  %v2347 = vpop.f32.mrf.mxu0
  %v2348 = vadd.f32 0.0, %v2347
  %v2349 = vpop.f32.mrf.mxu0
  %2350 = vmatprep.mubr.f32.mxu0 0.0
  %2351 = vmatmul.mubr.f32.gmra.mxu0 %v2255
  %v2352 = vpop.f32.mrf.mxu0
  %v2353 = vadd.f32 0.0, %v2352
  %v2354 = vpop.f32.mrf.mxu0
  %2355 = vmatprep.mubr.f32.mxu0 0.0
  %2356 = vmatmul.mubr.f32.gmra.mxu0 %v2258
  %v2357 = vpop.f32.mrf.mxu0
  %v2358 = vadd.f32 0.0, %v2357
  %v2359 = vpop.f32.mrf.mxu0
  %2360 = vmatprep.mubr.f32.mxu0 0.0
  %2361 = vmatmul.mubr.f32.gmra.mxu0 %v2261
  %v2362 = vpop.f32.mrf.mxu0
  %v2363 = vadd.f32 0.0, %v2362
  %v2364 = vpop.f32.mrf.mxu0
  %2365 = vmatprep.mubr.f32.mxu0 0.0
  %2366 = vmatmul.mubr.f32.gmra.mxu0 %v2264
  %v2367 = vpop.f32.mrf.mxu0
  %v2368 = vadd.f32 0.0, %v2367
  %v2369 = vpop.f32.mrf.mxu0
  %2370 = vmatprep.mubr.f32.mxu0 0.0
  %2371 = vmatmul.mubr.f32.gmra.mxu0 %v2267
  %v2372 = vpop.f32.mrf.mxu0
  %v2373 = vadd.f32 0.0, %v2372
  %v2374 = vpop.f32.mrf.mxu0
  %2375 = vmatprep.mubr.f32.mxu0 0.0
  %2376 = vmatmul.mubr.f32.gmra.mxu0 %v2270
  %v2377 = vpop.f32.mrf.mxu0
  %v2378 = vadd.f32 0.0, %v2377
  %v2379 = vpop.f32.mrf.mxu0
  %2380 = vmatprep.mubr.f32.mxu0 0.0
  %2381 = vmatmul.mubr.f32.gmra.mxu0 %v2273
  %v2382 = vpop.f32.mrf.mxu0
  %v2383 = vadd.f32 0.0, %v2382
  %v2384 = vpop.f32.mrf.mxu0
  %2385 = vmatprep.mubr.f32.mxu0 0.0
  %2386 = vmatmul.mubr.f32.gmra.mxu0 %v2276
  %v2387 = vpop.f32.mrf.mxu0
  %v2388 = vadd.f32 0.0, %v2387
  %v2389 = vpop.f32.mrf.mxu0
  %2390 = vmatprep.mubr.f32.mxu0 0.0
  %2391 = vmatmul.mubr.f32.gmra.mxu0 %v2279
  %v2392 = vpop.f32.mrf.mxu0
  %v2393 = vadd.f32 0.0, %v2392
  %v2394 = vpop.f32.mrf.mxu0
  %2395 = vdwg.mxu0
  %v2397 = vsel %vm724, %v2348, 0
  %v2400 = vsel %vm724, %v2353, 0
  %v2403 = vsel %vm724, %v2358, 0
  %v2406 = vsel %vm724, %v2363, 0
  %v2409 = vsel %vm724, %v2368, 0
  %v2412 = vsel %vm724, %v2373, 0
  %v2415 = vsel %vm724, %v2378, 0
  %v2418 = vsel %vm724, %v2383, 0
  %v2421 = vsel %vm724, %v2388, 0
  %v2424 = vsel %vm724, %v2393, 0
  %2426 = vmatprep.subr.mxu0 0.0
  %2427 = vmatpush1.msra.mxu0 0.0
  %2428 = vmatprep.subr.mxu0 0.0
  %2429 = vmatpush1.msra.mxu0 0.0
  %2430 = vmatprep.subr.mxu0 0.0
  %2431 = vmatpush1.msra.mxu0 0.0
  %2432 = vmatprep.subr.mxu0 0.0
  %2433 = vmatpush1.msra.mxu0 0.0
  %2434 = vmatprep.subr.mxu0 0.0
  %2435 = vmatpush1.msra.mxu0 0.0
  %2436 = vmatprep.subr.mxu0 0.0
  %2437 = vmatpush1.msra.mxu0 0.0
  %2438 = vmatprep.subr.mxu0 0.0
  %2439 = vmatpush1.msra.mxu0 0.0
  %2440 = vmatprep.subr.mxu0 0.0
  %2441 = vmatpush1.msra.mxu0 0.0
  %2442 = vmatprep.subr.mxu0 0.0
  %2443 = vmatpush1.msra.mxu0 0.0
  %2444 = vmatprep.subr.mxu0 0.0
  %2445 = vmatpush1.msra.mxu0 0.0
  %2446 = vmatprep.subr.mxu0 0.0
  %2447 = vmatpush1.msra.mxu0 0.0
  %2448 = vmatprep.subr.mxu0 0.0
  %2449 = vmatpush1.msra.mxu0 0.0
  %2450 = vmatprep.subr.mxu0 0.0
  %2451 = vmatpush1.msra.mxu0 0.0
  %2452 = vmatprep.subr.mxu0 0.0
  %2453 = vmatpush1.msra.mxu0 0.0
  %2454 = vmatprep.subr.mxu0 0.0
  %2455 = vmatpush1.msra.mxu0 %v691
  %2456 = vmatprep.subr.mxu0 0.0
  %2457 = vmatpush1.msra.mxu0 %v690
  %2458 = vmatprep.subr.mxu0 0.0
  %2459 = vmatpush2.msra.mxu0 0.0
  %2460 = vmatprep.subr.mxu0 0.0
  %2461 = vmatpush2.msra.mxu0 0.0
  %2462 = vmatprep.subr.mxu0 0.0
  %2463 = vmatpush2.msra.mxu0 0.0
  %2464 = vmatprep.subr.mxu0 0.0
  %2465 = vmatpush2.msra.mxu0 0.0
  %2466 = vmatprep.subr.mxu0 0.0
  %2467 = vmatpush2.msra.mxu0 0.0
  %2468 = vmatprep.subr.mxu0 0.0
  %2469 = vmatpush2.msra.mxu0 0.0
  %2470 = vmatprep.subr.mxu0 0.0
  %2471 = vmatpush2.msra.mxu0 0.0
  %2472 = vmatprep.subr.mxu0 0.0
  %2473 = vmatpush2.msra.mxu0 0.0
  %2474 = vmatprep.subr.mxu0 0.0
  %2475 = vmatpush2.msra.mxu0 0.0
  %2476 = vmatprep.subr.mxu0 0.0
  %2477 = vmatpush2.msra.mxu0 0.0
  %2478 = vmatprep.subr.mxu0 0.0
  %2479 = vmatpush2.msra.mxu0 0.0
  %2480 = vmatprep.subr.mxu0 0.0
  %2481 = vmatpush2.msra.mxu0 0.0
  %2482 = vmatprep.subr.mxu0 0.0
  %2483 = vmatpush2.msra.mxu0 0.0
  %2484 = vmatprep.subr.mxu0 0.0
  %2485 = vmatpush2.msra.mxu0 0.0
  %2486 = vmatprep.subr.mxu0 0.0
  %2487 = vmatpush2.msra.mxu0 0.0
  %2488 = vmatprep.subr.mxu0 0.0
  %2489 = vmatpush2.msra.mxu0 0.0
  %2490 = vmatprep.mubr.f32.mxu0 0.0
  %2491 = vmatmul.mubr.f32.gmra.mxu0 %v2397
  %v2492 = vpop.f32.mrf.mxu0
  %v2493 = vadd.f32 0.0, %v2492
  %v2494 = vpop.f32.mrf.mxu0
  %2495 = vmatprep.mubr.f32.mxu0 0.0
  %2496 = vmatmul.mubr.f32.gmra.mxu0 %v2400
  %v2497 = vpop.f32.mrf.mxu0
  %v2498 = vadd.f32 0.0, %v2497
  %v2499 = vpop.f32.mrf.mxu0
  %2500 = vmatprep.mubr.f32.mxu0 0.0
  %2501 = vmatmul.mubr.f32.gmra.mxu0 %v2403
  %v2502 = vpop.f32.mrf.mxu0
  %v2503 = vadd.f32 0.0, %v2502
  %v2504 = vpop.f32.mrf.mxu0
  %2505 = vmatprep.mubr.f32.mxu0 0.0
  %2506 = vmatmul.mubr.f32.gmra.mxu0 %v2406
  %v2507 = vpop.f32.mrf.mxu0
  %v2508 = vadd.f32 0.0, %v2507
  %v2509 = vpop.f32.mrf.mxu0
  %2510 = vmatprep.mubr.f32.mxu0 0.0
  %2511 = vmatmul.mubr.f32.gmra.mxu0 %v2409
  %v2512 = vpop.f32.mrf.mxu0
  %v2513 = vadd.f32 0.0, %v2512
  %v2514 = vpop.f32.mrf.mxu0
  %2515 = vmatprep.mubr.f32.mxu0 0.0
  %2516 = vmatmul.mubr.f32.gmra.mxu0 %v2412
  %v2517 = vpop.f32.mrf.mxu0
  %v2518 = vadd.f32 0.0, %v2517
  %v2519 = vpop.f32.mrf.mxu0
  %2520 = vmatprep.mubr.f32.mxu0 0.0
  %2521 = vmatmul.mubr.f32.gmra.mxu0 %v2415
  %v2522 = vpop.f32.mrf.mxu0
  %v2523 = vadd.f32 0.0, %v2522
  %v2524 = vpop.f32.mrf.mxu0
  %2525 = vmatprep.mubr.f32.mxu0 0.0
  %2526 = vmatmul.mubr.f32.gmra.mxu0 %v2418
  %v2527 = vpop.f32.mrf.mxu0
  %v2528 = vadd.f32 0.0, %v2527
  %v2529 = vpop.f32.mrf.mxu0
  %2530 = vmatprep.mubr.f32.mxu0 0.0
  %2531 = vmatmul.mubr.f32.gmra.mxu0 %v2421
  %v2532 = vpop.f32.mrf.mxu0
  %v2533 = vadd.f32 0.0, %v2532
  %v2534 = vpop.f32.mrf.mxu0
  %2535 = vmatprep.mubr.f32.mxu0 0.0
  %2536 = vmatmul.mubr.f32.gmra.mxu0 %v2424
  %v2537 = vpop.f32.mrf.mxu0
  %v2538 = vadd.f32 0.0, %v2537
  %v2539 = vpop.f32.mrf.mxu0
  %2540 = vdwg.mxu0
  %v2541 = vadd.f32 %v1868, %v2493
  %v2542 = vadd.f32 %v1873, %v2498
  %v2543 = vadd.f32 %v1878, %v2503
  %v2544 = vadd.f32 %v1883, %v2508
  %v2545 = vadd.f32 %v1888, %v2513
  %v2546 = vadd.f32 %v1893, %v2518
  %v2547 = vadd.f32 %v1898, %v2523
  %v2548 = vadd.f32 %v1903, %v2528
  %v2549 = vadd.f32 %v1908, %v2533
  %v2550 = vadd.f32 %v1913, %v2538
  %2551 = vrot.lane.b32.xlu0 %v628, 80
  %v2552 = vpop.permute.xlu0 %2551
  %2553 = vrot.lane.b32.xlu0 %v634, 80
  %v2554 = vpop.permute.xlu0 %2553
  %2555 = vrot.lane.b32.xlu0 %v640, 80
  %v2556 = vpop.permute.xlu0 %2555
  %2557 = vrot.lane.b32.xlu0 %v646, 80
  %v2558 = vpop.permute.xlu0 %2557
  %2559 = vrot.lane.b32.xlu0 %v652, 80
  %v2560 = vpop.permute.xlu0 %2559
  %2561 = vrot.lane.b32.xlu0 %v658, 80
  %v2562 = vpop.permute.xlu0 %2561
  %2563 = vrot.lane.b32.xlu0 %v664, 80
  %v2564 = vpop.permute.xlu0 %2563
  %2565 = vrot.lane.b32.xlu0 %v670, 80
  %v2566 = vpop.permute.xlu0 %2565
  %2567 = vrot.lane.b32.xlu0 %v676, 80
  %v2568 = vpop.permute.xlu0 %2567
  %2569 = vrot.lane.b32.xlu0 %v682, 80
  %v2570 = vpop.permute.xlu0 %2569
  %2571 = vrot.lane.b32.xlu0 %v628, 16
  %v2572 = vpop.permute.xlu0 %2571
  %2573 = vrot.lane.b32.xlu0 %v634, 16
  %v2574 = vpop.permute.xlu0 %2573
  %2575 = vrot.lane.b32.xlu0 %v640, 16
  %v2576 = vpop.permute.xlu0 %2575
  %2577 = vrot.lane.b32.xlu0 %v646, 16
  %v2578 = vpop.permute.xlu0 %2577
  %2579 = vrot.lane.b32.xlu0 %v652, 16
  %v2580 = vpop.permute.xlu0 %2579
  %2581 = vrot.lane.b32.xlu0 %v658, 16
  %v2582 = vpop.permute.xlu0 %2581
  %2583 = vrot.lane.b32.xlu0 %v664, 16
  %v2584 = vpop.permute.xlu0 %2583
  %2585 = vrot.lane.b32.xlu0 %v670, 16
  %v2586 = vpop.permute.xlu0 %2585
  %2587 = vrot.lane.b32.xlu0 %v676, 16
  %v2588 = vpop.permute.xlu0 %2587
  %2589 = vrot.lane.b32.xlu0 %v682, 16
  %v2590 = vpop.permute.xlu0 %2589
  %v2591 = vsel %vm724, %v2552, 0
  %v2593 = vsel %vm724, %v2554, 0
  %v2595 = vsel %vm724, %v2556, 0
  %v2597 = vsel %vm724, %v2558, 0
  %v2599 = vsel %vm724, %v2560, 0
  %v2601 = vsel %vm724, %v2562, 0
  %v2603 = vsel %vm724, %v2564, 0
  %v2605 = vsel %vm724, %v2566, 0
  %v2607 = vsel %vm724, %v2568, 0
  %v2609 = vsel %vm724, %v2570, 0
  %v2611 = vsel %vm724, %v2572, 0
  %v2613 = vsel %vm724, %v2574, 0
  %v2615 = vsel %vm724, %v2576, 0
  %v2617 = vsel %vm724, %v2578, 0
  %v2619 = vsel %vm724, %v2580, 0
  %v2621 = vsel %vm724, %v2582, 0
  %v2623 = vsel %vm724, %v2584, 0
  %v2625 = vsel %vm724, %v2586, 0
  %v2627 = vsel %vm724, %v2588, 0
  %v2629 = vsel %vm724, %v2590, 0
  %2631 = vmatprep.subr.mxu0 0.0
  %2632 = vmatpush1.xpose.msra.mxu0 0.0
  %2633 = vmatprep.subr.mxu0 0.0
  %2634 = vmatpush1.xpose.msra.mxu0 0.0
  %2635 = vmatprep.subr.mxu0 0.0
  %2636 = vmatpush1.xpose.msra.mxu0 0.0
  %2637 = vmatprep.subr.mxu0 0.0
  %2638 = vmatpush1.xpose.msra.mxu0 0.0
  %2639 = vmatprep.subr.mxu0 0.0
  %2640 = vmatpush1.xpose.msra.mxu0 0.0
  %2641 = vmatprep.subr.mxu0 0.0
  %2642 = vmatpush1.xpose.msra.mxu0 0.0
  %2643 = vmatprep.subr.mxu0 0.0
  %2644 = vmatpush1.xpose.msra.mxu0 %v2629
  %2645 = vmatprep.subr.mxu0 0.0
  %2646 = vmatpush1.xpose.msra.mxu0 %v2627
  %2647 = vmatprep.subr.mxu0 0.0
  %2648 = vmatpush1.xpose.msra.mxu0 %v2625
  %2649 = vmatprep.subr.mxu0 0.0
  %2650 = vmatpush1.xpose.msra.mxu0 %v2623
  %2651 = vmatprep.subr.mxu0 0.0
  %2652 = vmatpush1.xpose.msra.mxu0 %v2621
  %2653 = vmatprep.subr.mxu0 0.0
  %2654 = vmatpush1.xpose.msra.mxu0 %v2619
  %2655 = vmatprep.subr.mxu0 0.0
  %2656 = vmatpush1.xpose.msra.mxu0 %v2617
  %2657 = vmatprep.subr.mxu0 0.0
  %2658 = vmatpush1.xpose.msra.mxu0 %v2615
  %2659 = vmatprep.subr.mxu0 0.0
  %2660 = vmatpush1.xpose.msra.mxu0 %v2613
  %2661 = vmatprep.subr.mxu0 0.0
  %2662 = vmatpush1.xpose.msra.mxu0 %v2611
  %2663 = vmatprep.subr.mxu0 0.0
  %2664 = vmatpush2.xpose.msra.mxu0 0.0
  %2665 = vmatprep.subr.mxu0 0.0
  %2666 = vmatpush2.xpose.msra.mxu0 0.0
  %2667 = vmatprep.subr.mxu0 0.0
  %2668 = vmatpush2.xpose.msra.mxu0 0.0
  %2669 = vmatprep.subr.mxu0 0.0
  %2670 = vmatpush2.xpose.msra.mxu0 0.0
  %2671 = vmatprep.subr.mxu0 0.0
  %2672 = vmatpush2.xpose.msra.mxu0 0.0
  %2673 = vmatprep.subr.mxu0 0.0
  %2674 = vmatpush2.xpose.msra.mxu0 0.0
  %2675 = vmatprep.subr.mxu0 0.0
  %2676 = vmatpush2.xpose.msra.mxu0 0.0
  %2677 = vmatprep.subr.mxu0 0.0
  %2678 = vmatpush2.xpose.msra.mxu0 0.0
  %2679 = vmatprep.subr.mxu0 0.0
  %2680 = vmatpush2.xpose.msra.mxu0 0.0
  %2681 = vmatprep.subr.mxu0 0.0
  %2682 = vmatpush2.xpose.msra.mxu0 0.0
  %2683 = vmatprep.subr.mxu0 0.0
  %2684 = vmatpush2.xpose.msra.mxu0 0.0
  %2685 = vmatprep.subr.mxu0 0.0
  %2686 = vmatpush2.xpose.msra.mxu0 0.0
  %2687 = vmatprep.subr.mxu0 0.0
  %2688 = vmatpush2.xpose.msra.mxu0 0.0
  %2689 = vmatprep.subr.mxu0 0.0
  %2690 = vmatpush2.xpose.msra.mxu0 0.0
  %2691 = vmatprep.subr.mxu0 0.0
  %2692 = vmatpush2.xpose.msra.mxu0 0.0
  %2693 = vmatprep.subr.mxu0 0.0
  %2694 = vmatpush2.xpose.msra.mxu0 0.0
  %2695 = vmatprep.mubr.f32.mxu0 0.0
  %2696 = vmatmul.mubr.f32.gmra.mxu0 %v2591
  %v2697 = vpop.f32.mrf.mxu0
  %v2698 = vadd.f32 %v491, %v2697
  %v2699 = vpop.f32.mrf.mxu0
  %2700 = vmatprep.mubr.f32.mxu0 0.0
  %2701 = vmatmul.mubr.f32.gmra.mxu0 %v2593
  %v2702 = vpop.f32.mrf.mxu0
  %v2703 = vadd.f32 %v492, %v2702
  %v2704 = vpop.f32.mrf.mxu0
  %2705 = vmatprep.mubr.f32.mxu0 0.0
  %2706 = vmatmul.mubr.f32.gmra.mxu0 %v2595
  %v2707 = vpop.f32.mrf.mxu0
  %v2708 = vadd.f32 %v493, %v2707
  %v2709 = vpop.f32.mrf.mxu0
  %2710 = vmatprep.mubr.f32.mxu0 0.0
  %2711 = vmatmul.mubr.f32.gmra.mxu0 %v2597
  %v2712 = vpop.f32.mrf.mxu0
  %v2713 = vadd.f32 %v494, %v2712
  %v2714 = vpop.f32.mrf.mxu0
  %2715 = vmatprep.mubr.f32.mxu0 0.0
  %2716 = vmatmul.mubr.f32.gmra.mxu0 %v2599
  %v2717 = vpop.f32.mrf.mxu0
  %v2718 = vadd.f32 %v495, %v2717
  %v2719 = vpop.f32.mrf.mxu0
  %2720 = vmatprep.mubr.f32.mxu0 0.0
  %2721 = vmatmul.mubr.f32.gmra.mxu0 %v2601
  %v2722 = vpop.f32.mrf.mxu0
  %v2723 = vadd.f32 %v496, %v2722
  %v2724 = vpop.f32.mrf.mxu0
  %2725 = vmatprep.mubr.f32.mxu0 0.0
  %2726 = vmatmul.mubr.f32.gmra.mxu0 %v2603
  %v2727 = vpop.f32.mrf.mxu0
  %v2728 = vadd.f32 %v497, %v2727
  %v2729 = vpop.f32.mrf.mxu0
  %2730 = vmatprep.mubr.f32.mxu0 0.0
  %2731 = vmatmul.mubr.f32.gmra.mxu0 %v2605
  %v2732 = vpop.f32.mrf.mxu0
  %v2733 = vadd.f32 %v498, %v2732
  %v2734 = vpop.f32.mrf.mxu0
  %2735 = vmatprep.mubr.f32.mxu0 0.0
  %2736 = vmatmul.mubr.f32.gmra.mxu0 %v2607
  %v2737 = vpop.f32.mrf.mxu0
  %v2738 = vadd.f32 %v499, %v2737
  %v2739 = vpop.f32.mrf.mxu0
  %2740 = vmatprep.mubr.f32.mxu0 0.0
  %2741 = vmatmul.mubr.f32.gmra.mxu0 %v2609
  %v2742 = vpop.f32.mrf.mxu0
  %v2743 = vadd.f32 %v500, %v2742
  %v2744 = vpop.f32.mrf.mxu0
  %2745 = vdwg.mxu0
  %v2746 = vsel %vm880, %v2698, -inf
  %2747 = vmax.xlane.f32.xlu0 %v2746
  %v2748 = vpop.xlane.xlu0 %2747
  %v2749 = vsel %vm880, %v2703, -inf
  %2750 = vmax.xlane.f32.xlu0 %v2749
  %v2751 = vpop.xlane.xlu0 %2750
  %v2752 = vsel %vm880, %v2708, -inf
  %2753 = vmax.xlane.f32.xlu0 %v2752
  %v2754 = vpop.xlane.xlu0 %2753
  %v2755 = vsel %vm880, %v2713, -inf
  %2756 = vmax.xlane.f32.xlu0 %v2755
  %v2757 = vpop.xlane.xlu0 %2756
  %v2758 = vsel %vm880, %v2718, -inf
  %2759 = vmax.xlane.f32.xlu0 %v2758
  %v2760 = vpop.xlane.xlu0 %2759
  %v2761 = vsel %vm880, %v2723, -inf
  %2762 = vmax.xlane.f32.xlu0 %v2761
  %v2763 = vpop.xlane.xlu0 %2762
  %v2764 = vsel %vm880, %v2728, -inf
  %2765 = vmax.xlane.f32.xlu0 %v2764
  %v2766 = vpop.xlane.xlu0 %2765
  %v2767 = vsel %vm880, %v2733, -inf
  %2768 = vmax.xlane.f32.xlu0 %v2767
  %v2769 = vpop.xlane.xlu0 %2768
  %v2770 = vsel %vm880, %v2738, -inf
  %2771 = vmax.xlane.f32.xlu0 %v2770
  %v2772 = vpop.xlane.xlu0 %2771
  %v2773 = vsel %vm880, %v2743, -inf
  %2774 = vmax.xlane.f32.xlu0 %v2773
  %v2775 = vpop.xlane.xlu0 %2774
  %v2776 = vsub.f32 %v2698, %v2748
  %v2777 = vsub.f32 %v2703, %v2751
  %v2778 = vsub.f32 %v2708, %v2754
  %v2779 = vsub.f32 %v2713, %v2757
  %v2780 = vsub.f32 %v2718, %v2760
  %v2781 = vsub.f32 %v2723, %v2763
  %v2782 = vsub.f32 %v2728, %v2766
  %v2783 = vsub.f32 %v2733, %v2769
  %v2784 = vsub.f32 %v2738, %v2772
  %v2785 = vsub.f32 %v2743, %v2775
  %v2786 = vmul.f32 %v2776, 1.442695
  %v2787 = vpow.pop %v2786
  %v2788 = vmul.f32 %v2777, 1.442695
  %v2789 = vpow.pop %v2788
  %v2790 = vmul.f32 %v2778, 1.442695
  %v2791 = vpow.pop %v2790
  %v2792 = vmul.f32 %v2779, 1.442695
  %v2793 = vpow.pop %v2792
  %v2794 = vmul.f32 %v2780, 1.442695
  %v2795 = vpow.pop %v2794
  %v2796 = vmul.f32 %v2781, 1.442695
  %v2797 = vpow.pop %v2796
  %v2798 = vmul.f32 %v2782, 1.442695
  %v2799 = vpow.pop %v2798
  %v2800 = vmul.f32 %v2783, 1.442695
  %v2801 = vpow.pop %v2800
  %v2802 = vmul.f32 %v2784, 1.442695
  %v2803 = vpow.pop %v2802
  %v2804 = vmul.f32 %v2785, 1.442695
  %v2805 = vpow.pop %v2804
  %v2806 = vsel %vm880, %v2787, 0.0
  %2807 = vadd.xlane.f32.xlu0 %v2806
  %v2808 = vpop.xlane.xlu0 %2807
  %v2809 = vsel %vm880, %v2789, 0.0
  %2810 = vadd.xlane.f32.xlu0 %v2809
  %v2811 = vpop.xlane.xlu0 %2810
  %v2812 = vsel %vm880, %v2791, 0.0
  %2813 = vadd.xlane.f32.xlu0 %v2812
  %v2814 = vpop.xlane.xlu0 %2813
  %v2815 = vsel %vm880, %v2793, 0.0
  %2816 = vadd.xlane.f32.xlu0 %v2815
  %v2817 = vpop.xlane.xlu0 %2816
  %v2818 = vsel %vm880, %v2795, 0.0
  %2819 = vadd.xlane.f32.xlu0 %v2818
  %v2820 = vpop.xlane.xlu0 %2819
  %v2821 = vsel %vm880, %v2797, 0.0
  %2822 = vadd.xlane.f32.xlu0 %v2821
  %v2823 = vpop.xlane.xlu0 %2822
  %v2824 = vsel %vm880, %v2799, 0.0
  %2825 = vadd.xlane.f32.xlu0 %v2824
  %v2826 = vpop.xlane.xlu0 %2825
  %v2827 = vsel %vm880, %v2801, 0.0
  %2828 = vadd.xlane.f32.xlu0 %v2827
  %v2829 = vpop.xlane.xlu0 %2828
  %v2830 = vsel %vm880, %v2803, 0.0
  %2831 = vadd.xlane.f32.xlu0 %v2830
  %v2832 = vpop.xlane.xlu0 %2831
  %v2833 = vsel %vm880, %v2805, 0.0
  %2834 = vadd.xlane.f32.xlu0 %v2833
  %v2835 = vpop.xlane.xlu0 %2834
  %v2836 = vrcp.pop %v2808
  %v2837 = vrcp.pop %v2811
  %v2838 = vrcp.pop %v2814
  %v2839 = vrcp.pop %v2817
  %v2840 = vrcp.pop %v2820
  %v2841 = vrcp.pop %v2823
  %v2842 = vrcp.pop %v2826
  %v2843 = vrcp.pop %v2829
  %v2844 = vrcp.pop %v2832
  %v2845 = vrcp.pop %v2835
  %v2846 = vmul.f32 %v2787, %v2836
  %v2847 = vmul.f32 %v2789, %v2837
  %v2848 = vmul.f32 %v2791, %v2838
  %v2849 = vmul.f32 %v2793, %v2839
  %v2850 = vmul.f32 %v2795, %v2840
  %v2851 = vmul.f32 %v2797, %v2841
  %v2852 = vmul.f32 %v2799, %v2842
  %v2853 = vmul.f32 %v2801, %v2843
  %v2854 = vmul.f32 %v2803, %v2844
  %v2855 = vmul.f32 %v2805, %v2845
  %2856 = vrot.lane.b32.xlu0 %v630, 80
  %v2857 = vpop.permute.xlu0 %2856
  %2858 = vrot.lane.b32.xlu0 %v636, 80
  %v2859 = vpop.permute.xlu0 %2858
  %2860 = vrot.lane.b32.xlu0 %v642, 80
  %v2861 = vpop.permute.xlu0 %2860
  %2862 = vrot.lane.b32.xlu0 %v648, 80
  %v2863 = vpop.permute.xlu0 %2862
  %2864 = vrot.lane.b32.xlu0 %v654, 80
  %v2865 = vpop.permute.xlu0 %2864
  %2866 = vrot.lane.b32.xlu0 %v660, 80
  %v2867 = vpop.permute.xlu0 %2866
  %2868 = vrot.lane.b32.xlu0 %v666, 80
  %v2869 = vpop.permute.xlu0 %2868
  %2870 = vrot.lane.b32.xlu0 %v672, 80
  %v2871 = vpop.permute.xlu0 %2870
  %2872 = vrot.lane.b32.xlu0 %v678, 80
  %v2873 = vpop.permute.xlu0 %2872
  %2874 = vrot.lane.b32.xlu0 %v684, 80
  %v2875 = vpop.permute.xlu0 %2874
  %v2887 = vsel %vm880, %v2846, 0
  %v2890 = vsel %vm880, %v2847, 0
  %v2893 = vsel %vm880, %v2848, 0
  %v2896 = vsel %vm880, %v2849, 0
  %v2899 = vsel %vm880, %v2850, 0
  %v2902 = vsel %vm880, %v2851, 0
  %v2905 = vsel %vm880, %v2852, 0
  %v2908 = vsel %vm880, %v2853, 0
  %v2911 = vsel %vm880, %v2854, 0
  %v2914 = vsel %vm880, %v2855, 0
  %2916 = vmatprep.subr.mxu0 0.0
  %2917 = vmatpush1.msra.mxu0 0.0
  %2918 = vmatprep.subr.mxu0 0.0
  %2919 = vmatpush1.msra.mxu0 0.0
  %2920 = vmatprep.subr.mxu0 0.0
  %2921 = vmatpush1.msra.mxu0 0.0
  %2922 = vmatprep.subr.mxu0 0.0
  %2923 = vmatpush1.msra.mxu0 0.0
  %2924 = vmatprep.subr.mxu0 0.0
  %2925 = vmatpush1.msra.mxu0 0.0
  %2926 = vmatprep.subr.mxu0 0.0
  %2927 = vmatpush1.msra.mxu0 0.0
  %2928 = vmatprep.subr.mxu0 0.0
  %2929 = vmatpush1.msra.mxu0 %v2875
  %2930 = vmatprep.subr.mxu0 0.0
  %2931 = vmatpush1.msra.mxu0 %v2873
  %2932 = vmatprep.subr.mxu0 0.0
  %2933 = vmatpush1.msra.mxu0 %v2871
  %2934 = vmatprep.subr.mxu0 0.0
  %2935 = vmatpush1.msra.mxu0 %v2869
  %2936 = vmatprep.subr.mxu0 0.0
  %2937 = vmatpush1.msra.mxu0 %v2867
  %2938 = vmatprep.subr.mxu0 0.0
  %2939 = vmatpush1.msra.mxu0 %v2865
  %2940 = vmatprep.subr.mxu0 0.0
  %2941 = vmatpush1.msra.mxu0 %v2863
  %2942 = vmatprep.subr.mxu0 0.0
  %2943 = vmatpush1.msra.mxu0 %v2861
  %2944 = vmatprep.subr.mxu0 0.0
  %2945 = vmatpush1.msra.mxu0 %v2859
  %2946 = vmatprep.subr.mxu0 0.0
  %2947 = vmatpush1.msra.mxu0 %v2857
  %2948 = vmatprep.subr.mxu0 0.0
  %2949 = vmatpush2.msra.mxu0 0.0
  %2950 = vmatprep.subr.mxu0 0.0
  %2951 = vmatpush2.msra.mxu0 0.0
  %2952 = vmatprep.subr.mxu0 0.0
  %2953 = vmatpush2.msra.mxu0 0.0
  %2954 = vmatprep.subr.mxu0 0.0
  %2955 = vmatpush2.msra.mxu0 0.0
  %2956 = vmatprep.subr.mxu0 0.0
  %2957 = vmatpush2.msra.mxu0 0.0
  %2958 = vmatprep.subr.mxu0 0.0
  %2959 = vmatpush2.msra.mxu0 0.0
  %2960 = vmatprep.subr.mxu0 0.0
  %2961 = vmatpush2.msra.mxu0 0.0
  %2962 = vmatprep.subr.mxu0 0.0
  %2963 = vmatpush2.msra.mxu0 0.0
  %2964 = vmatprep.subr.mxu0 0.0
  %2965 = vmatpush2.msra.mxu0 0.0
  %2966 = vmatprep.subr.mxu0 0.0
  %2967 = vmatpush2.msra.mxu0 0.0
  %2968 = vmatprep.subr.mxu0 0.0
  %2969 = vmatpush2.msra.mxu0 0.0
  %2970 = vmatprep.subr.mxu0 0.0
  %2971 = vmatpush2.msra.mxu0 0.0
  %2972 = vmatprep.subr.mxu0 0.0
  %2973 = vmatpush2.msra.mxu0 0.0
  %2974 = vmatprep.subr.mxu0 0.0
  %2975 = vmatpush2.msra.mxu0 0.0
  %2976 = vmatprep.subr.mxu0 0.0
  %2977 = vmatpush2.msra.mxu0 0.0
  %2978 = vmatprep.subr.mxu0 0.0
  %2979 = vmatpush2.msra.mxu0 0.0
  %2980 = vmatprep.mubr.f32.mxu0 0.0
  %2981 = vmatmul.mubr.f32.gmra.mxu0 %v2887
  %v2982 = vpop.f32.mrf.mxu0
  %v2983 = vadd.f32 0.0, %v2982
  %v2984 = vpop.f32.mrf.mxu0
  %2985 = vmatprep.mubr.f32.mxu0 0.0
  %2986 = vmatmul.mubr.f32.gmra.mxu0 %v2890
  %v2987 = vpop.f32.mrf.mxu0
  %v2988 = vadd.f32 0.0, %v2987
  %v2989 = vpop.f32.mrf.mxu0
  %2990 = vmatprep.mubr.f32.mxu0 0.0
  %2991 = vmatmul.mubr.f32.gmra.mxu0 %v2893
  %v2992 = vpop.f32.mrf.mxu0
  %v2993 = vadd.f32 0.0, %v2992
  %v2994 = vpop.f32.mrf.mxu0
  %2995 = vmatprep.mubr.f32.mxu0 0.0
  %2996 = vmatmul.mubr.f32.gmra.mxu0 %v2896
  %v2997 = vpop.f32.mrf.mxu0
  %v2998 = vadd.f32 0.0, %v2997
  %v2999 = vpop.f32.mrf.mxu0
  %3000 = vmatprep.mubr.f32.mxu0 0.0
  %3001 = vmatmul.mubr.f32.gmra.mxu0 %v2899
  %v3002 = vpop.f32.mrf.mxu0
  %v3003 = vadd.f32 0.0, %v3002
  %v3004 = vpop.f32.mrf.mxu0
  %3005 = vmatprep.mubr.f32.mxu0 0.0
  %3006 = vmatmul.mubr.f32.gmra.mxu0 %v2902
  %v3007 = vpop.f32.mrf.mxu0
  %v3008 = vadd.f32 0.0, %v3007
  %v3009 = vpop.f32.mrf.mxu0
  %3010 = vmatprep.mubr.f32.mxu0 0.0
  %3011 = vmatmul.mubr.f32.gmra.mxu0 %v2905
  %v3012 = vpop.f32.mrf.mxu0
  %v3013 = vadd.f32 0.0, %v3012
  %v3014 = vpop.f32.mrf.mxu0
  %3015 = vmatprep.mubr.f32.mxu0 0.0
  %3016 = vmatmul.mubr.f32.gmra.mxu0 %v2908
  %v3017 = vpop.f32.mrf.mxu0
  %v3018 = vadd.f32 0.0, %v3017
  %v3019 = vpop.f32.mrf.mxu0
  %3020 = vmatprep.mubr.f32.mxu0 0.0
  %3021 = vmatmul.mubr.f32.gmra.mxu0 %v2911
  %v3022 = vpop.f32.mrf.mxu0
  %v3023 = vadd.f32 0.0, %v3022
  %v3024 = vpop.f32.mrf.mxu0
  %3025 = vmatprep.mubr.f32.mxu0 0.0
  %3026 = vmatmul.mubr.f32.gmra.mxu0 %v2914
  %v3027 = vpop.f32.mrf.mxu0
  %v3028 = vadd.f32 0.0, %v3027
  %v3029 = vpop.f32.mrf.mxu0
  %3030 = vdwg.mxu0
  %v3032 = vsel %vm724, %v2983, 0
  %v3035 = vsel %vm724, %v2988, 0
  %v3038 = vsel %vm724, %v2993, 0
  %v3041 = vsel %vm724, %v2998, 0
  %v3044 = vsel %vm724, %v3003, 0
  %v3047 = vsel %vm724, %v3008, 0
  %v3050 = vsel %vm724, %v3013, 0
  %v3053 = vsel %vm724, %v3018, 0
  %v3056 = vsel %vm724, %v3023, 0
  %v3059 = vsel %vm724, %v3028, 0
  %3061 = vmatprep.subr.mxu0 0.0
  %3062 = vmatpush1.msra.mxu0 0.0
  %3063 = vmatprep.subr.mxu0 0.0
  %3064 = vmatpush1.msra.mxu0 0.0
  %3065 = vmatprep.subr.mxu0 0.0
  %3066 = vmatpush1.msra.mxu0 0.0
  %3067 = vmatprep.subr.mxu0 0.0
  %3068 = vmatpush1.msra.mxu0 0.0
  %3069 = vmatprep.subr.mxu0 0.0
  %3070 = vmatpush1.msra.mxu0 0.0
  %3071 = vmatprep.subr.mxu0 0.0
  %3072 = vmatpush1.msra.mxu0 0.0
  %3073 = vmatprep.subr.mxu0 0.0
  %3074 = vmatpush1.msra.mxu0 0.0
  %3075 = vmatprep.subr.mxu0 0.0
  %3076 = vmatpush1.msra.mxu0 0.0
  %3077 = vmatprep.subr.mxu0 0.0
  %3078 = vmatpush1.msra.mxu0 0.0
  %3079 = vmatprep.subr.mxu0 0.0
  %3080 = vmatpush1.msra.mxu0 0.0
  %3081 = vmatprep.subr.mxu0 0.0
  %3082 = vmatpush1.msra.mxu0 0.0
  %3083 = vmatprep.subr.mxu0 0.0
  %3084 = vmatpush1.msra.mxu0 0.0
  %3085 = vmatprep.subr.mxu0 0.0
  %3086 = vmatpush1.msra.mxu0 0.0
  %3087 = vmatprep.subr.mxu0 0.0
  %3088 = vmatpush1.msra.mxu0 0.0
  %3089 = vmatprep.subr.mxu0 0.0
  %3090 = vmatpush1.msra.mxu0 %v693
  %3091 = vmatprep.subr.mxu0 0.0
  %3092 = vmatpush1.msra.mxu0 %v692
  %3093 = vmatprep.subr.mxu0 0.0
  %3094 = vmatpush2.msra.mxu0 0.0
  %3095 = vmatprep.subr.mxu0 0.0
  %3096 = vmatpush2.msra.mxu0 0.0
  %3097 = vmatprep.subr.mxu0 0.0
  %3098 = vmatpush2.msra.mxu0 0.0
  %3099 = vmatprep.subr.mxu0 0.0
  %3100 = vmatpush2.msra.mxu0 0.0
  %3101 = vmatprep.subr.mxu0 0.0
  %3102 = vmatpush2.msra.mxu0 0.0
  %3103 = vmatprep.subr.mxu0 0.0
  %3104 = vmatpush2.msra.mxu0 0.0
  %3105 = vmatprep.subr.mxu0 0.0
  %3106 = vmatpush2.msra.mxu0 0.0
  %3107 = vmatprep.subr.mxu0 0.0
  %3108 = vmatpush2.msra.mxu0 0.0
  %3109 = vmatprep.subr.mxu0 0.0
  %3110 = vmatpush2.msra.mxu0 0.0
  %3111 = vmatprep.subr.mxu0 0.0
  %3112 = vmatpush2.msra.mxu0 0.0
  %3113 = vmatprep.subr.mxu0 0.0
  %3114 = vmatpush2.msra.mxu0 0.0
  %3115 = vmatprep.subr.mxu0 0.0
  %3116 = vmatpush2.msra.mxu0 0.0
  %3117 = vmatprep.subr.mxu0 0.0
  %3118 = vmatpush2.msra.mxu0 0.0
  %3119 = vmatprep.subr.mxu0 0.0
  %3120 = vmatpush2.msra.mxu0 0.0
  %3121 = vmatprep.subr.mxu0 0.0
  %3122 = vmatpush2.msra.mxu0 0.0
  %3123 = vmatprep.subr.mxu0 0.0
  %3124 = vmatpush2.msra.mxu0 0.0
  %3125 = vmatprep.mubr.f32.mxu0 0.0
  %3126 = vmatmul.mubr.f32.gmra.mxu0 %v3032
  %v3127 = vpop.f32.mrf.mxu0
  %v3128 = vadd.f32 0.0, %v3127
  %v3129 = vpop.f32.mrf.mxu0
  %3130 = vmatprep.mubr.f32.mxu0 0.0
  %3131 = vmatmul.mubr.f32.gmra.mxu0 %v3035
  %v3132 = vpop.f32.mrf.mxu0
  %v3133 = vadd.f32 0.0, %v3132
  %v3134 = vpop.f32.mrf.mxu0
  %3135 = vmatprep.mubr.f32.mxu0 0.0
  %3136 = vmatmul.mubr.f32.gmra.mxu0 %v3038
  %v3137 = vpop.f32.mrf.mxu0
  %v3138 = vadd.f32 0.0, %v3137
  %v3139 = vpop.f32.mrf.mxu0
  %3140 = vmatprep.mubr.f32.mxu0 0.0
  %3141 = vmatmul.mubr.f32.gmra.mxu0 %v3041
  %v3142 = vpop.f32.mrf.mxu0
  %v3143 = vadd.f32 0.0, %v3142
  %v3144 = vpop.f32.mrf.mxu0
  %3145 = vmatprep.mubr.f32.mxu0 0.0
  %3146 = vmatmul.mubr.f32.gmra.mxu0 %v3044
  %v3147 = vpop.f32.mrf.mxu0
  %v3148 = vadd.f32 0.0, %v3147
  %v3149 = vpop.f32.mrf.mxu0
  %3150 = vmatprep.mubr.f32.mxu0 0.0
  %3151 = vmatmul.mubr.f32.gmra.mxu0 %v3047
  %v3152 = vpop.f32.mrf.mxu0
  %v3153 = vadd.f32 0.0, %v3152
  %v3154 = vpop.f32.mrf.mxu0
  %3155 = vmatprep.mubr.f32.mxu0 0.0
  %3156 = vmatmul.mubr.f32.gmra.mxu0 %v3050
  %v3157 = vpop.f32.mrf.mxu0
  %v3158 = vadd.f32 0.0, %v3157
  %v3159 = vpop.f32.mrf.mxu0
  %3160 = vmatprep.mubr.f32.mxu0 0.0
  %3161 = vmatmul.mubr.f32.gmra.mxu0 %v3053
  %v3162 = vpop.f32.mrf.mxu0
  %v3163 = vadd.f32 0.0, %v3162
  %v3164 = vpop.f32.mrf.mxu0
  %3165 = vmatprep.mubr.f32.mxu0 0.0
  %3166 = vmatmul.mubr.f32.gmra.mxu0 %v3056
  %v3167 = vpop.f32.mrf.mxu0
  %v3168 = vadd.f32 0.0, %v3167
  %v3169 = vpop.f32.mrf.mxu0
  %3170 = vmatprep.mubr.f32.mxu0 0.0
  %3171 = vmatmul.mubr.f32.gmra.mxu0 %v3059
  %v3172 = vpop.f32.mrf.mxu0
  %v3173 = vadd.f32 0.0, %v3172
  %v3174 = vpop.f32.mrf.mxu0
  %3175 = vdwg.mxu0
  %v3176 = vadd.f32 %v2541, %v3128
  %v3177 = vadd.f32 %v2542, %v3133
  %v3178 = vadd.f32 %v2543, %v3138
  %v3179 = vadd.f32 %v2544, %v3143
  %v3180 = vadd.f32 %v2545, %v3148
  %v3181 = vadd.f32 %v2546, %v3153
  %v3182 = vadd.f32 %v2547, %v3158
  %v3183 = vadd.f32 %v2548, %v3163
  %v3184 = vadd.f32 %v2549, %v3168
  %v3185 = vadd.f32 %v2550, %v3173
  %v3186 = vld [vmem:[%s5 + $0x3] ss:$0 sm:$0xff]
  %v3187 = vadd.f32 %v3176, %v3186
  %v3188 = vadd.f32 %v3177, %v3186
  %v3189 = vadd.f32 %v3178, %v3186
  %v3190 = vadd.f32 %v3179, %v3186
  %v3191 = vadd.f32 %v3180, %v3186
  %v3192 = vadd.f32 %v3181, %v3186
  %v3193 = vadd.f32 %v3182, %v3186
  %v3194 = vadd.f32 %v3183, %v3186
  %v3195 = vadd.f32 %v3184, %v3186
  %v3196 = vadd.f32 %v3185, %v3186
  %v3197 = vadd.f32 %v481, %v3187
  %v3198 = vadd.f32 %v482, %v3188
  %v3199 = vadd.f32 %v483, %v3189
  %v3200 = vadd.f32 %v484, %v3190
  %v3201 = vadd.f32 %v485, %v3191
  %v3202 = vadd.f32 %v486, %v3192
  %v3203 = vadd.f32 %v487, %v3193
  %v3204 = vadd.f32 %v488, %v3194
  %v3205 = vadd.f32 %v489, %v3195
  %v3206 = vadd.f32 %v490, %v3196
  %v3207 = vld [vmem:[%s5 + $0x4] ss:$0 sm:$0xff]
  %v3208 = vld [vmem:[%s5 + $0x5] ss:$0 sm:$0xff]
  %v3209 = vsel %vm530, %v3197, 0.0
  %3210 = vadd.xlane.f32.xlu0 %v3209
  %v3211 = vpop.xlane.xlu0 %3210
  %v3212 = vsel %vm530, %v3198, 0.0
  %3213 = vadd.xlane.f32.xlu0 %v3212
  %v3214 = vpop.xlane.xlu0 %3213
  %v3215 = vsel %vm530, %v3199, 0.0
  %3216 = vadd.xlane.f32.xlu0 %v3215
  %v3217 = vpop.xlane.xlu0 %3216
  %v3218 = vsel %vm530, %v3200, 0.0
  %3219 = vadd.xlane.f32.xlu0 %v3218
  %v3220 = vpop.xlane.xlu0 %3219
  %v3221 = vsel %vm530, %v3201, 0.0
  %3222 = vadd.xlane.f32.xlu0 %v3221
  %v3223 = vpop.xlane.xlu0 %3222
  %v3224 = vsel %vm530, %v3202, 0.0
  %3225 = vadd.xlane.f32.xlu0 %v3224
  %v3226 = vpop.xlane.xlu0 %3225
  %v3227 = vsel %vm530, %v3203, 0.0
  %3228 = vadd.xlane.f32.xlu0 %v3227
  %v3229 = vpop.xlane.xlu0 %3228
  %v3230 = vsel %vm530, %v3204, 0.0
  %3231 = vadd.xlane.f32.xlu0 %v3230
  %v3232 = vpop.xlane.xlu0 %3231
  %v3233 = vsel %vm530, %v3205, 0.0
  %3234 = vadd.xlane.f32.xlu0 %v3233
  %v3235 = vpop.xlane.xlu0 %3234
  %v3236 = vsel %vm530, %v3206, 0.0
  %3237 = vadd.xlane.f32.xlu0 %v3236
  %v3238 = vpop.xlane.xlu0 %3237
  %v3239 = vrcp.pop 64.0
  %v3240 = vmul.f32 %v3211, %v3239
  %v3241 = vmul.f32 %v3214, %v3239
  %v3242 = vmul.f32 %v3217, %v3239
  %v3243 = vmul.f32 %v3220, %v3239
  %v3244 = vmul.f32 %v3223, %v3239
  %v3245 = vmul.f32 %v3226, %v3239
  %v3246 = vmul.f32 %v3229, %v3239
  %v3247 = vmul.f32 %v3232, %v3239
  %v3248 = vmul.f32 %v3235, %v3239
  %v3249 = vmul.f32 %v3238, %v3239
  %v3250 = vsub.f32 %v3197, %v3240
  %v3251 = vsub.f32 %v3198, %v3241
  %v3252 = vsub.f32 %v3199, %v3242
  %v3253 = vsub.f32 %v3200, %v3243
  %v3254 = vsub.f32 %v3201, %v3244
  %v3255 = vsub.f32 %v3202, %v3245
  %v3256 = vsub.f32 %v3203, %v3246
  %v3257 = vsub.f32 %v3204, %v3247
  %v3258 = vsub.f32 %v3205, %v3248
  %v3259 = vsub.f32 %v3206, %v3249
  %v3260 = vmul.f32 %v3250, %v3250
  %v3261 = vmul.f32 %v3251, %v3251
  %v3262 = vmul.f32 %v3252, %v3252
  %v3263 = vmul.f32 %v3253, %v3253
  %v3264 = vmul.f32 %v3254, %v3254
  %v3265 = vmul.f32 %v3255, %v3255
  %v3266 = vmul.f32 %v3256, %v3256
  %v3267 = vmul.f32 %v3257, %v3257
  %v3268 = vmul.f32 %v3258, %v3258
  %v3269 = vmul.f32 %v3259, %v3259
  %v3270 = vsel %vm530, %v3260, 0.0
  %3271 = vadd.xlane.f32.xlu0 %v3270
  %v3272 = vpop.xlane.xlu0 %3271
  %v3273 = vsel %vm530, %v3261, 0.0
  %3274 = vadd.xlane.f32.xlu0 %v3273
  %v3275 = vpop.xlane.xlu0 %3274
  %v3276 = vsel %vm530, %v3262, 0.0
  %3277 = vadd.xlane.f32.xlu0 %v3276
  %v3278 = vpop.xlane.xlu0 %3277
  %v3279 = vsel %vm530, %v3263, 0.0
  %3280 = vadd.xlane.f32.xlu0 %v3279
  %v3281 = vpop.xlane.xlu0 %3280
  %v3282 = vsel %vm530, %v3264, 0.0
  %3283 = vadd.xlane.f32.xlu0 %v3282
  %v3284 = vpop.xlane.xlu0 %3283
  %v3285 = vsel %vm530, %v3265, 0.0
  %3286 = vadd.xlane.f32.xlu0 %v3285
  %v3287 = vpop.xlane.xlu0 %3286
  %v3288 = vsel %vm530, %v3266, 0.0
  %3289 = vadd.xlane.f32.xlu0 %v3288
  %v3290 = vpop.xlane.xlu0 %3289
  %v3291 = vsel %vm530, %v3267, 0.0
  %3292 = vadd.xlane.f32.xlu0 %v3291
  %v3293 = vpop.xlane.xlu0 %3292
  %v3294 = vsel %vm530, %v3268, 0.0
  %3295 = vadd.xlane.f32.xlu0 %v3294
  %v3296 = vpop.xlane.xlu0 %3295
  %v3297 = vsel %vm530, %v3269, 0.0
  %3298 = vadd.xlane.f32.xlu0 %v3297
  %v3299 = vpop.xlane.xlu0 %3298
  %v3300 = vmul.f32 %v3272, %v3239
  %v3301 = vmul.f32 %v3275, %v3239
  %v3302 = vmul.f32 %v3278, %v3239
  %v3303 = vmul.f32 %v3281, %v3239
  %v3304 = vmul.f32 %v3284, %v3239
  %v3305 = vmul.f32 %v3287, %v3239
  %v3306 = vmul.f32 %v3290, %v3239
  %v3307 = vmul.f32 %v3293, %v3239
  %v3308 = vmul.f32 %v3296, %v3239
  %v3309 = vmul.f32 %v3299, %v3239
  %v3310 = vadd.f32 %v3300, 1e-05
  %v3311 = vadd.f32 %v3301, 1e-05
  %v3312 = vadd.f32 %v3302, 1e-05
  %v3313 = vadd.f32 %v3303, 1e-05
  %v3314 = vadd.f32 %v3304, 1e-05
  %v3315 = vadd.f32 %v3305, 1e-05
  %v3316 = vadd.f32 %v3306, 1e-05
  %v3317 = vadd.f32 %v3307, 1e-05
  %v3318 = vadd.f32 %v3308, 1e-05
  %v3319 = vadd.f32 %v3309, 1e-05
  %v3320 = vrsqrt.pop %v3310
  %v3321 = vrsqrt.pop %v3311
  %v3322 = vrsqrt.pop %v3312
  %v3323 = vrsqrt.pop %v3313
  %v3324 = vrsqrt.pop %v3314
  %v3325 = vrsqrt.pop %v3315
  %v3326 = vrsqrt.pop %v3316
  %v3327 = vrsqrt.pop %v3317
  %v3328 = vrsqrt.pop %v3318
  %v3329 = vrsqrt.pop %v3319
  %v3330 = vmul.f32 %v3250, %v3320
  %v3331 = vmul.f32 %v3251, %v3321
  %v3332 = vmul.f32 %v3252, %v3322
  %v3333 = vmul.f32 %v3253, %v3323
  %v3334 = vmul.f32 %v3254, %v3324
  %v3335 = vmul.f32 %v3255, %v3325
  %v3336 = vmul.f32 %v3256, %v3326
  %v3337 = vmul.f32 %v3257, %v3327
  %v3338 = vmul.f32 %v3258, %v3328
  %v3339 = vmul.f32 %v3259, %v3329
  %v3340 = vmul.f32 %v3330, %v3207
  %v3341 = vmul.f32 %v3331, %v3207
  %v3342 = vmul.f32 %v3332, %v3207
  %v3343 = vmul.f32 %v3333, %v3207
  %v3344 = vmul.f32 %v3334, %v3207
  %v3345 = vmul.f32 %v3335, %v3207
  %v3346 = vmul.f32 %v3336, %v3207
  %v3347 = vmul.f32 %v3337, %v3207
  %v3348 = vmul.f32 %v3338, %v3207
  %v3349 = vmul.f32 %v3339, %v3207
  %v3350 = vadd.f32 %v3340, %v3208
  %v3351 = vadd.f32 %v3341, %v3208
  %v3352 = vadd.f32 %v3342, %v3208
  %v3353 = vadd.f32 %v3343, %v3208
  %v3354 = vadd.f32 %v3344, %v3208
  %v3355 = vadd.f32 %v3345, %v3208
  %v3356 = vadd.f32 %v3346, %v3208
  %v3357 = vadd.f32 %v3347, %v3208
  %v3358 = vadd.f32 %v3348, %v3208
  %v3359 = vadd.f32 %v3349, %v3208
  %v3360 = vld [vmem:[%s4 + $0x100] sm:$0xff]
  %v3361 = vld [vmem:[%s4 + $0x110] sm:$0xff]
  %v3362 = vld [vmem:[%s4 + $0x120] sm:$0xff]
  %v3363 = vld [vmem:[%s4 + $0x130] sm:$0xff]
  %v3364 = vld [vmem:[%s4 + $0x140] sm:$0xff]
  %v3365 = vld [vmem:[%s4 + $0x150] sm:$0xff]
  %v3366 = vld [vmem:[%s4 + $0x160] sm:$0xff]
  %v3367 = vld [vmem:[%s4 + $0x170] sm:$0xff]
  %v3368 = vld [vmem:[%s4 + $0x180] sm:$0xff]
  %v3369 = vld [vmem:[%s4 + $0x190] sm:$0xff]
  %v3370 = vld [vmem:[%s4 + $0x1a0] sm:$0xff]
  %v3371 = vld [vmem:[%s4 + $0x1b0] sm:$0xff]
  %v3372 = vld [vmem:[%s4 + $0x1c0] sm:$0xff]
  %v3373 = vld [vmem:[%s4 + $0x1d0] sm:$0xff]
  %v3374 = vld [vmem:[%s4 + $0x1e0] sm:$0xff]
  %v3375 = vld [vmem:[%s4 + $0x1f0] sm:$0xff]
  %v3376 = vld [vmem:[%s4 + $0x200] sm:$0xff]
  %v3377 = vld [vmem:[%s4 + $0x210] sm:$0xff]
  %v3378 = vld [vmem:[%s4 + $0x220] sm:$0xff]
  %v3379 = vld [vmem:[%s4 + $0x230] sm:$0xff]
  %v3380 = vld [vmem:[%s4 + $0x240] sm:$0xff]
  %v3381 = vld [vmem:[%s4 + $0x250] sm:$0xff]
  %v3382 = vld [vmem:[%s4 + $0x260] sm:$0xff]
  %v3383 = vld [vmem:[%s4 + $0x270] sm:$0xff]
  %v3384 = vld [vmem:[%s5 + $0x6] ss:$0 sm:$0xff]
  %v3386 = vsel %vm530, %v3350, 0
  %v3389 = vsel %vm530, %v3351, 0
  %v3392 = vsel %vm530, %v3352, 0
  %v3395 = vsel %vm530, %v3353, 0
  %v3398 = vsel %vm530, %v3354, 0
  %v3401 = vsel %vm530, %v3355, 0
  %v3404 = vsel %vm530, %v3356, 0
  %v3407 = vsel %vm530, %v3357, 0
  %v3410 = vsel %vm530, %v3358, 0
  %v3413 = vsel %vm530, %v3359, 0
  %3415 = vmatprep.subr.mxu0 0.0
  %3416 = vmatpush1.msra.mxu0 0.0
  %3417 = vmatprep.subr.mxu0 0.0
  %3418 = vmatpush1.msra.mxu0 0.0
  %3419 = vmatprep.subr.mxu0 0.0
  %3420 = vmatpush1.msra.mxu0 0.0
  %3421 = vmatprep.subr.mxu0 0.0
  %3422 = vmatpush1.msra.mxu0 0.0
  %3423 = vmatprep.subr.mxu0 0.0
  %3424 = vmatpush1.msra.mxu0 0.0
  %3425 = vmatprep.subr.mxu0 0.0
  %3426 = vmatpush1.msra.mxu0 0.0
  %3427 = vmatprep.subr.mxu0 0.0
  %3428 = vmatpush1.msra.mxu0 0.0
  %3429 = vmatprep.subr.mxu0 0.0
  %3430 = vmatpush1.msra.mxu0 0.0
  %3431 = vmatprep.subr.mxu0 0.0
  %3432 = vmatpush1.msra.mxu0 %v3367
  %3433 = vmatprep.subr.mxu0 0.0
  %3434 = vmatpush1.msra.mxu0 %v3366
  %3435 = vmatprep.subr.mxu0 0.0
  %3436 = vmatpush1.msra.mxu0 %v3365
  %3437 = vmatprep.subr.mxu0 0.0
  %3438 = vmatpush1.msra.mxu0 %v3364
  %3439 = vmatprep.subr.mxu0 0.0
  %3440 = vmatpush1.msra.mxu0 %v3363
  %3441 = vmatprep.subr.mxu0 0.0
  %3442 = vmatpush1.msra.mxu0 %v3362
  %3443 = vmatprep.subr.mxu0 0.0
  %3444 = vmatpush1.msra.mxu0 %v3361
  %3445 = vmatprep.subr.mxu0 0.0
  %3446 = vmatpush1.msra.mxu0 %v3360
  %3447 = vmatprep.subr.mxu0 0.0
  %3448 = vmatpush2.msra.mxu0 0.0
  %3449 = vmatprep.subr.mxu0 0.0
  %3450 = vmatpush2.msra.mxu0 0.0
  %3451 = vmatprep.subr.mxu0 0.0
  %3452 = vmatpush2.msra.mxu0 0.0
  %3453 = vmatprep.subr.mxu0 0.0
  %3454 = vmatpush2.msra.mxu0 0.0
  %3455 = vmatprep.subr.mxu0 0.0
  %3456 = vmatpush2.msra.mxu0 0.0
  %3457 = vmatprep.subr.mxu0 0.0
  %3458 = vmatpush2.msra.mxu0 0.0
  %3459 = vmatprep.subr.mxu0 0.0
  %3460 = vmatpush2.msra.mxu0 0.0
  %3461 = vmatprep.subr.mxu0 0.0
  %3462 = vmatpush2.msra.mxu0 0.0
  %3463 = vmatprep.subr.mxu0 0.0
  %3464 = vmatpush2.msra.mxu0 0.0
  %3465 = vmatprep.subr.mxu0 0.0
  %3466 = vmatpush2.msra.mxu0 0.0
  %3467 = vmatprep.subr.mxu0 0.0
  %3468 = vmatpush2.msra.mxu0 0.0
  %3469 = vmatprep.subr.mxu0 0.0
  %3470 = vmatpush2.msra.mxu0 0.0
  %3471 = vmatprep.subr.mxu0 0.0
  %3472 = vmatpush2.msra.mxu0 0.0
  %3473 = vmatprep.subr.mxu0 0.0
  %3474 = vmatpush2.msra.mxu0 0.0
  %3475 = vmatprep.subr.mxu0 0.0
  %3476 = vmatpush2.msra.mxu0 0.0
  %3477 = vmatprep.subr.mxu0 0.0
  %3478 = vmatpush2.msra.mxu0 0.0
  %3479 = vmatprep.mubr.f32.mxu0 0.0
  %3480 = vmatmul.mubr.f32.gmra.mxu0 %v3386
  %v3481 = vpop.f32.mrf.mxu0
  %v3482 = vadd.f32 %v3384, %v3481
  %v3483 = vpop.f32.mrf.mxu0
  %3484 = vmatprep.mubr.f32.mxu0 0.0
  %3485 = vmatmul.mubr.f32.gmra.mxu0 %v3389
  %v3486 = vpop.f32.mrf.mxu0
  %v3487 = vadd.f32 %v3384, %v3486
  %v3488 = vpop.f32.mrf.mxu0
  %3489 = vmatprep.mubr.f32.mxu0 0.0
  %3490 = vmatmul.mubr.f32.gmra.mxu0 %v3392
  %v3491 = vpop.f32.mrf.mxu0
  %v3492 = vadd.f32 %v3384, %v3491
  %v3493 = vpop.f32.mrf.mxu0
  %3494 = vmatprep.mubr.f32.mxu0 0.0
  %3495 = vmatmul.mubr.f32.gmra.mxu0 %v3395
  %v3496 = vpop.f32.mrf.mxu0
  %v3497 = vadd.f32 %v3384, %v3496
  %v3498 = vpop.f32.mrf.mxu0
  %3499 = vmatprep.mubr.f32.mxu0 0.0
  %3500 = vmatmul.mubr.f32.gmra.mxu0 %v3398
  %v3501 = vpop.f32.mrf.mxu0
  %v3502 = vadd.f32 %v3384, %v3501
  %v3503 = vpop.f32.mrf.mxu0
  %3504 = vmatprep.mubr.f32.mxu0 0.0
  %3505 = vmatmul.mubr.f32.gmra.mxu0 %v3401
  %v3506 = vpop.f32.mrf.mxu0
  %v3507 = vadd.f32 %v3384, %v3506
  %v3508 = vpop.f32.mrf.mxu0
  %3509 = vmatprep.mubr.f32.mxu0 0.0
  %3510 = vmatmul.mubr.f32.gmra.mxu0 %v3404
  %v3511 = vpop.f32.mrf.mxu0
  %v3512 = vadd.f32 %v3384, %v3511
  %v3513 = vpop.f32.mrf.mxu0
  %3514 = vmatprep.mubr.f32.mxu0 0.0
  %3515 = vmatmul.mubr.f32.gmra.mxu0 %v3407
  %v3516 = vpop.f32.mrf.mxu0
  %v3517 = vadd.f32 %v3384, %v3516
  %v3518 = vpop.f32.mrf.mxu0
  %3519 = vmatprep.mubr.f32.mxu0 0.0
  %3520 = vmatmul.mubr.f32.gmra.mxu0 %v3410
  %v3521 = vpop.f32.mrf.mxu0
  %v3522 = vadd.f32 %v3384, %v3521
  %v3523 = vpop.f32.mrf.mxu0
  %3524 = vmatprep.mubr.f32.mxu0 0.0
  %3525 = vmatmul.mubr.f32.gmra.mxu0 %v3413
  %v3526 = vpop.f32.mrf.mxu0
  %v3527 = vadd.f32 %v3384, %v3526
  %v3528 = vpop.f32.mrf.mxu0
  %3529 = vdwg.mxu0
  %v3530 = vmax.f32 %v3482, 0.0
  %v3531 = vmax.f32 %v3487, 0.0
  %v3532 = vmax.f32 %v3492, 0.0
  %v3533 = vmax.f32 %v3497, 0.0
  %v3534 = vmax.f32 %v3502, 0.0
  %v3535 = vmax.f32 %v3507, 0.0
  %v3536 = vmax.f32 %v3512, 0.0
  %v3537 = vmax.f32 %v3517, 0.0
  %v3538 = vmax.f32 %v3522, 0.0
  %v3539 = vmax.f32 %v3527, 0.0
  %v3540 = vld [vmem:[%s5 + $0x7] ss:$0 sm:$0xff]
  %3541 = vmatprep.subr.mxu0 0.0
  %3542 = vmatpush1.msra.mxu0 %v3383
  %3543 = vmatprep.subr.mxu0 0.0
  %3544 = vmatpush1.msra.mxu0 %v3382
  %3545 = vmatprep.subr.mxu0 0.0
  %3546 = vmatpush1.msra.mxu0 %v3381
  %3547 = vmatprep.subr.mxu0 0.0
  %3548 = vmatpush1.msra.mxu0 %v3380
  %3549 = vmatprep.subr.mxu0 0.0
  %3550 = vmatpush1.msra.mxu0 %v3379
  %3551 = vmatprep.subr.mxu0 0.0
  %3552 = vmatpush1.msra.mxu0 %v3378
  %3553 = vmatprep.subr.mxu0 0.0
  %3554 = vmatpush1.msra.mxu0 %v3377
  %3555 = vmatprep.subr.mxu0 0.0
  %3556 = vmatpush1.msra.mxu0 %v3376
  %3557 = vmatprep.subr.mxu0 0.0
  %3558 = vmatpush1.msra.mxu0 %v3375
  %3559 = vmatprep.subr.mxu0 0.0
  %3560 = vmatpush1.msra.mxu0 %v3374
  %3561 = vmatprep.subr.mxu0 0.0
  %3562 = vmatpush1.msra.mxu0 %v3373
  %3563 = vmatprep.subr.mxu0 0.0
  %3564 = vmatpush1.msra.mxu0 %v3372
  %3565 = vmatprep.subr.mxu0 0.0
  %3566 = vmatpush1.msra.mxu0 %v3371
  %3567 = vmatprep.subr.mxu0 0.0
  %3568 = vmatpush1.msra.mxu0 %v3370
  %3569 = vmatprep.subr.mxu0 0.0
  %3570 = vmatpush1.msra.mxu0 %v3369
  %3571 = vmatprep.subr.mxu0 0.0
  %3572 = vmatpush1.msra.mxu0 %v3368
  %3573 = vmatprep.subr.mxu0 0.0
  %3574 = vmatpush2.msra.mxu0 0.0
  %3575 = vmatprep.subr.mxu0 0.0
  %3576 = vmatpush2.msra.mxu0 0.0
  %3577 = vmatprep.subr.mxu0 0.0
  %3578 = vmatpush2.msra.mxu0 0.0
  %3579 = vmatprep.subr.mxu0 0.0
  %3580 = vmatpush2.msra.mxu0 0.0
  %3581 = vmatprep.subr.mxu0 0.0
  %3582 = vmatpush2.msra.mxu0 0.0
  %3583 = vmatprep.subr.mxu0 0.0
  %3584 = vmatpush2.msra.mxu0 0.0
  %3585 = vmatprep.subr.mxu0 0.0
  %3586 = vmatpush2.msra.mxu0 0.0
  %3587 = vmatprep.subr.mxu0 0.0
  %3588 = vmatpush2.msra.mxu0 0.0
  %3589 = vmatprep.subr.mxu0 0.0
  %3590 = vmatpush2.msra.mxu0 0.0
  %3591 = vmatprep.subr.mxu0 0.0
  %3592 = vmatpush2.msra.mxu0 0.0
  %3593 = vmatprep.subr.mxu0 0.0
  %3594 = vmatpush2.msra.mxu0 0.0
  %3595 = vmatprep.subr.mxu0 0.0
  %3596 = vmatpush2.msra.mxu0 0.0
  %3597 = vmatprep.subr.mxu0 0.0
  %3598 = vmatpush2.msra.mxu0 0.0
  %3599 = vmatprep.subr.mxu0 0.0
  %3600 = vmatpush2.msra.mxu0 0.0
  %3601 = vmatprep.subr.mxu0 0.0
  %3602 = vmatpush2.msra.mxu0 0.0
  %3603 = vmatprep.subr.mxu0 0.0
  %3604 = vmatpush2.msra.mxu0 0.0
  %3605 = vmatprep.mubr.f32.mxu0 0.0
  %3606 = vmatmul.mubr.f32.gmra.mxu0 %v3530
  %v3607 = vpop.f32.mrf.mxu0
  %v3608 = vadd.f32 %v3540, %v3607
  %v3609 = vpop.f32.mrf.mxu0
  %3610 = vmatprep.mubr.f32.mxu0 0.0
  %3611 = vmatmul.mubr.f32.gmra.mxu0 %v3531
  %v3612 = vpop.f32.mrf.mxu0
  %v3613 = vadd.f32 %v3540, %v3612
  %v3614 = vpop.f32.mrf.mxu0
  %3615 = vmatprep.mubr.f32.mxu0 0.0
  %3616 = vmatmul.mubr.f32.gmra.mxu0 %v3532
  %v3617 = vpop.f32.mrf.mxu0
  %v3618 = vadd.f32 %v3540, %v3617
  %v3619 = vpop.f32.mrf.mxu0
  %3620 = vmatprep.mubr.f32.mxu0 0.0
  %3621 = vmatmul.mubr.f32.gmra.mxu0 %v3533
  %v3622 = vpop.f32.mrf.mxu0
  %v3623 = vadd.f32 %v3540, %v3622
  %v3624 = vpop.f32.mrf.mxu0
  %3625 = vmatprep.mubr.f32.mxu0 0.0
  %3626 = vmatmul.mubr.f32.gmra.mxu0 %v3534
  %v3627 = vpop.f32.mrf.mxu0
  %v3628 = vadd.f32 %v3540, %v3627
  %v3629 = vpop.f32.mrf.mxu0
  %3630 = vmatprep.mubr.f32.mxu0 0.0
  %3631 = vmatmul.mubr.f32.gmra.mxu0 %v3535
  %v3632 = vpop.f32.mrf.mxu0
  %v3633 = vadd.f32 %v3540, %v3632
  %v3634 = vpop.f32.mrf.mxu0
  %3635 = vmatprep.mubr.f32.mxu0 0.0
  %3636 = vmatmul.mubr.f32.gmra.mxu0 %v3536
  %v3637 = vpop.f32.mrf.mxu0
  %v3638 = vadd.f32 %v3540, %v3637
  %v3639 = vpop.f32.mrf.mxu0
  %3640 = vmatprep.mubr.f32.mxu0 0.0
  %3641 = vmatmul.mubr.f32.gmra.mxu0 %v3537
  %v3642 = vpop.f32.mrf.mxu0
  %v3643 = vadd.f32 %v3540, %v3642
  %v3644 = vpop.f32.mrf.mxu0
  %3645 = vmatprep.mubr.f32.mxu0 0.0
  %3646 = vmatmul.mubr.f32.gmra.mxu0 %v3538
  %v3647 = vpop.f32.mrf.mxu0
  %v3648 = vadd.f32 %v3540, %v3647
  %v3649 = vpop.f32.mrf.mxu0
  %3650 = vmatprep.mubr.f32.mxu0 0.0
  %3651 = vmatmul.mubr.f32.gmra.mxu0 %v3539
  %v3652 = vpop.f32.mrf.mxu0
  %v3653 = vadd.f32 %v3540, %v3652
  %v3654 = vpop.f32.mrf.mxu0
  %3655 = vdwg.mxu0
  %v3656 = vadd.f32 %v3350, %v3608
  %v3657 = vadd.f32 %v3351, %v3613
  %v3658 = vadd.f32 %v3352, %v3618
  %v3659 = vadd.f32 %v3353, %v3623
  %v3660 = vadd.f32 %v3354, %v3628
  %v3661 = vadd.f32 %v3355, %v3633
  %v3662 = vadd.f32 %v3356, %v3638
  %v3663 = vadd.f32 %v3357, %v3643
  %v3664 = vadd.f32 %v3358, %v3648
  %v3665 = vadd.f32 %v3359, %v3653
  %v3666 = vld [vmem:[%s5 + $0x10] ss:$0 sm:$0xff]
  %v3667 = vld [vmem:[%s5 + $0x11] ss:$0 sm:$0xff]
  %v3668 = vsel %vm530, %v3656, 0.0
  %3669 = vadd.xlane.f32.xlu0 %v3668
  %v3670 = vpop.xlane.xlu0 %3669
  %v3671 = vsel %vm530, %v3657, 0.0
  %3672 = vadd.xlane.f32.xlu0 %v3671
  %v3673 = vpop.xlane.xlu0 %3672
  %v3674 = vsel %vm530, %v3658, 0.0
  %3675 = vadd.xlane.f32.xlu0 %v3674
  %v3676 = vpop.xlane.xlu0 %3675
  %v3677 = vsel %vm530, %v3659, 0.0
  %3678 = vadd.xlane.f32.xlu0 %v3677
  %v3679 = vpop.xlane.xlu0 %3678
  %v3680 = vsel %vm530, %v3660, 0.0
  %3681 = vadd.xlane.f32.xlu0 %v3680
  %v3682 = vpop.xlane.xlu0 %3681
  %v3683 = vsel %vm530, %v3661, 0.0
  %3684 = vadd.xlane.f32.xlu0 %v3683
  %v3685 = vpop.xlane.xlu0 %3684
  %v3686 = vsel %vm530, %v3662, 0.0
  %3687 = vadd.xlane.f32.xlu0 %v3686
  %v3688 = vpop.xlane.xlu0 %3687
  %v3689 = vsel %vm530, %v3663, 0.0
  %3690 = vadd.xlane.f32.xlu0 %v3689
  %v3691 = vpop.xlane.xlu0 %3690
  %v3692 = vsel %vm530, %v3664, 0.0
  %3693 = vadd.xlane.f32.xlu0 %v3692
  %v3694 = vpop.xlane.xlu0 %3693
  %v3695 = vsel %vm530, %v3665, 0.0
  %3696 = vadd.xlane.f32.xlu0 %v3695
  %v3697 = vpop.xlane.xlu0 %3696
  %v3698 = vmul.f32 %v3670, %v3239
  %v3699 = vmul.f32 %v3673, %v3239
  %v3700 = vmul.f32 %v3676, %v3239
  %v3701 = vmul.f32 %v3679, %v3239
  %v3702 = vmul.f32 %v3682, %v3239
  %v3703 = vmul.f32 %v3685, %v3239
  %v3704 = vmul.f32 %v3688, %v3239
  %v3705 = vmul.f32 %v3691, %v3239
  %v3706 = vmul.f32 %v3694, %v3239
  %v3707 = vmul.f32 %v3697, %v3239
  %v3708 = vsub.f32 %v3656, %v3698
  %v3709 = vsub.f32 %v3657, %v3699
  %v3710 = vsub.f32 %v3658, %v3700
  %v3711 = vsub.f32 %v3659, %v3701
  %v3712 = vsub.f32 %v3660, %v3702
  %v3713 = vsub.f32 %v3661, %v3703
  %v3714 = vsub.f32 %v3662, %v3704
  %v3715 = vsub.f32 %v3663, %v3705
  %v3716 = vsub.f32 %v3664, %v3706
  %v3717 = vsub.f32 %v3665, %v3707
  %v3718 = vmul.f32 %v3708, %v3708
  %v3719 = vmul.f32 %v3709, %v3709
  %v3720 = vmul.f32 %v3710, %v3710
  %v3721 = vmul.f32 %v3711, %v3711
  %v3722 = vmul.f32 %v3712, %v3712
  %v3723 = vmul.f32 %v3713, %v3713
  %v3724 = vmul.f32 %v3714, %v3714
  %v3725 = vmul.f32 %v3715, %v3715
  %v3726 = vmul.f32 %v3716, %v3716
  %v3727 = vmul.f32 %v3717, %v3717
  %v3728 = vsel %vm530, %v3718, 0.0
  %3729 = vadd.xlane.f32.xlu0 %v3728
  %v3730 = vpop.xlane.xlu0 %3729
  %v3731 = vsel %vm530, %v3719, 0.0
  %3732 = vadd.xlane.f32.xlu0 %v3731
  %v3733 = vpop.xlane.xlu0 %3732
  %v3734 = vsel %vm530, %v3720, 0.0
  %3735 = vadd.xlane.f32.xlu0 %v3734
  %v3736 = vpop.xlane.xlu0 %3735
  %v3737 = vsel %vm530, %v3721, 0.0
  %3738 = vadd.xlane.f32.xlu0 %v3737
  %v3739 = vpop.xlane.xlu0 %3738
  %v3740 = vsel %vm530, %v3722, 0.0
  %3741 = vadd.xlane.f32.xlu0 %v3740
  %v3742 = vpop.xlane.xlu0 %3741
  %v3743 = vsel %vm530, %v3723, 0.0
  %3744 = vadd.xlane.f32.xlu0 %v3743
  %v3745 = vpop.xlane.xlu0 %3744
  %v3746 = vsel %vm530, %v3724, 0.0
  %3747 = vadd.xlane.f32.xlu0 %v3746
  %v3748 = vpop.xlane.xlu0 %3747
  %v3749 = vsel %vm530, %v3725, 0.0
  %3750 = vadd.xlane.f32.xlu0 %v3749
  %v3751 = vpop.xlane.xlu0 %3750
  %v3752 = vsel %vm530, %v3726, 0.0
  %3753 = vadd.xlane.f32.xlu0 %v3752
  %v3754 = vpop.xlane.xlu0 %3753
  %v3755 = vsel %vm530, %v3727, 0.0
  %3756 = vadd.xlane.f32.xlu0 %v3755
  %v3757 = vpop.xlane.xlu0 %3756
  %v3758 = vmul.f32 %v3730, %v3239
  %v3759 = vmul.f32 %v3733, %v3239
  %v3760 = vmul.f32 %v3736, %v3239
  %v3761 = vmul.f32 %v3739, %v3239
  %v3762 = vmul.f32 %v3742, %v3239
  %v3763 = vmul.f32 %v3745, %v3239
  %v3764 = vmul.f32 %v3748, %v3239
  %v3765 = vmul.f32 %v3751, %v3239
  %v3766 = vmul.f32 %v3754, %v3239
  %v3767 = vmul.f32 %v3757, %v3239
  %v3768 = vadd.f32 %v3758, 1e-05
  %v3769 = vadd.f32 %v3759, 1e-05
  %v3770 = vadd.f32 %v3760, 1e-05
  %v3771 = vadd.f32 %v3761, 1e-05
  %v3772 = vadd.f32 %v3762, 1e-05
  %v3773 = vadd.f32 %v3763, 1e-05
  %v3774 = vadd.f32 %v3764, 1e-05
  %v3775 = vadd.f32 %v3765, 1e-05
  %v3776 = vadd.f32 %v3766, 1e-05
  %v3777 = vadd.f32 %v3767, 1e-05
  %v3778 = vrsqrt.pop %v3768
  %v3779 = vrsqrt.pop %v3769
  %v3780 = vrsqrt.pop %v3770
  %v3781 = vrsqrt.pop %v3771
  %v3782 = vrsqrt.pop %v3772
  %v3783 = vrsqrt.pop %v3773
  %v3784 = vrsqrt.pop %v3774
  %v3785 = vrsqrt.pop %v3775
  %v3786 = vrsqrt.pop %v3776
  %v3787 = vrsqrt.pop %v3777
  %v3788 = vmul.f32 %v3708, %v3778
  %v3789 = vmul.f32 %v3709, %v3779
  %v3790 = vmul.f32 %v3710, %v3780
  %v3791 = vmul.f32 %v3711, %v3781
  %v3792 = vmul.f32 %v3712, %v3782
  %v3793 = vmul.f32 %v3713, %v3783
  %v3794 = vmul.f32 %v3714, %v3784
  %v3795 = vmul.f32 %v3715, %v3785
  %v3796 = vmul.f32 %v3716, %v3786
  %v3797 = vmul.f32 %v3717, %v3787
  %v3798 = vmul.f32 %v3788, %v3666
  %v3799 = vmul.f32 %v3789, %v3666
  %v3800 = vmul.f32 %v3790, %v3666
  %v3801 = vmul.f32 %v3791, %v3666
  %v3802 = vmul.f32 %v3792, %v3666
  %v3803 = vmul.f32 %v3793, %v3666
  %v3804 = vmul.f32 %v3794, %v3666
  %v3805 = vmul.f32 %v3795, %v3666
  %v3806 = vmul.f32 %v3796, %v3666
  %v3807 = vmul.f32 %v3797, %v3666
  %v3808 = vadd.f32 %v3798, %v3667
  %v3809 = vadd.f32 %v3799, %v3667
  %v3810 = vadd.f32 %v3800, %v3667
  %v3811 = vadd.f32 %v3801, %v3667
  %v3812 = vadd.f32 %v3802, %v3667
  %v3813 = vadd.f32 %v3803, %v3667
  %v3814 = vadd.f32 %v3804, %v3667
  %v3815 = vadd.f32 %v3805, %v3667
  %v3816 = vadd.f32 %v3806, %v3667
  %v3817 = vadd.f32 %v3807, %v3667
  %s3818 = scalar_lea.vmem %s4, 640
  %v3819 = vld [vmem:[%s3818] sm:$0xff]
  %v3820 = vld [vmem:[%s3818 + $0x8] sm:$0xff]
  %v3821 = vld [vmem:[%s3818 + $0x10] sm:$0xff]
  %v3822 = vld [vmem:[%s3818 + $0x18] sm:$0xff]
  %v3823 = vld [vmem:[%s3818 + $0x20] sm:$0xff]
  %v3824 = vld [vmem:[%s3818 + $0x28] sm:$0xff]
  %v3825 = vld [vmem:[%s3818 + $0x30] sm:$0xff]
  %v3826 = vld [vmem:[%s3818 + $0x38] sm:$0xff]
  %v3827 = vld [vmem:[%s3818 + $0x40] sm:$0xff]
  %v3828 = vld [vmem:[%s3818 + $0x48] sm:$0xff]
  %v3829 = vld [vmem:[%s3818 + $0x50] sm:$0xff]
  %v3830 = vld [vmem:[%s3818 + $0x58] sm:$0xff]
  %v3831 = vld [vmem:[%s3818 + $0x60] sm:$0xff]
  %v3832 = vld [vmem:[%s3818 + $0x68] sm:$0xff]
  %v3833 = vld [vmem:[%s3818 + $0x70] sm:$0xff]
  %v3834 = vld [vmem:[%s3818 + $0x78] sm:$0xff]
  %s3835 = scalar_lea.vmem %s5, 18
  %v3836 = vld [vmem:[%s3835] ss:$8 sm:$0x3]
  %v3838 = vlaneseq
  %v3839 = vshrl.u32 %v3838, 7
  %v3840 = vsub.s32 0, %v3839
  %v3841 = vrot.slane %v3836, %v3840
  %v3842 = vlaneseq
  %v3843 = vshrl.u32 %v3842, 7
  %v3844 = vsub.s32 1, %v3843
  %v3845 = vrot.slane %v3836, %v3844
  %v3849 = vsel %vm530, %v3808, 0
  %v3852 = vsel %vm530, %v3809, 0
  %v3855 = vsel %vm530, %v3810, 0
  %v3858 = vsel %vm530, %v3811, 0
  %v3861 = vsel %vm530, %v3812, 0
  %v3864 = vsel %vm530, %v3813, 0
  %v3867 = vsel %vm530, %v3814, 0
  %v3870 = vsel %vm530, %v3815, 0
  %v3873 = vsel %vm530, %v3816, 0
  %v3876 = vsel %vm530, %v3817, 0
  %3878 = vmatprep.subr.mxu0 0.0
  %3879 = vmatpush1.msra.mxu0 0.0
  %3880 = vmatprep.subr.mxu0 0.0
  %3881 = vmatpush1.msra.mxu0 0.0
  %3882 = vmatprep.subr.mxu0 0.0
  %3883 = vmatpush1.msra.mxu0 0.0
  %3884 = vmatprep.subr.mxu0 0.0
  %3885 = vmatpush1.msra.mxu0 0.0
  %3886 = vmatprep.subr.mxu0 0.0
  %3887 = vmatpush1.msra.mxu0 0.0
  %3888 = vmatprep.subr.mxu0 0.0
  %3889 = vmatpush1.msra.mxu0 0.0
  %3890 = vmatprep.subr.mxu0 0.0
  %3891 = vmatpush1.msra.mxu0 0.0
  %3892 = vmatprep.subr.mxu0 0.0
  %3893 = vmatpush1.msra.mxu0 0.0
  %3894 = vmatprep.subr.mxu0 %v3834
  %3895 = vmatpush1.msra.mxu0 %v3833
  %3896 = vmatprep.subr.mxu0 %v3832
  %3897 = vmatpush1.msra.mxu0 %v3831
  %3898 = vmatprep.subr.mxu0 %v3830
  %3899 = vmatpush1.msra.mxu0 %v3829
  %3900 = vmatprep.subr.mxu0 %v3828
  %3901 = vmatpush1.msra.mxu0 %v3827
  %3902 = vmatprep.subr.mxu0 %v3826
  %3903 = vmatpush1.msra.mxu0 %v3825
  %3904 = vmatprep.subr.mxu0 %v3824
  %3905 = vmatpush1.msra.mxu0 %v3823
  %3906 = vmatprep.subr.mxu0 %v3822
  %3907 = vmatpush1.msra.mxu0 %v3821
  %3908 = vmatprep.subr.mxu0 %v3820
  %3909 = vmatpush1.msra.mxu0 %v3819
  %3910 = vmatprep.subr.mxu0 0.0
  %3911 = vmatpush2.msra.mxu0 0.0
  %3912 = vmatprep.subr.mxu0 0.0
  %3913 = vmatpush2.msra.mxu0 0.0
  %3914 = vmatprep.subr.mxu0 0.0
  %3915 = vmatpush2.msra.mxu0 0.0
  %3916 = vmatprep.subr.mxu0 0.0
  %3917 = vmatpush2.msra.mxu0 0.0
  %3918 = vmatprep.subr.mxu0 0.0
  %3919 = vmatpush2.msra.mxu0 0.0
  %3920 = vmatprep.subr.mxu0 0.0
  %3921 = vmatpush2.msra.mxu0 0.0
  %3922 = vmatprep.subr.mxu0 0.0
  %3923 = vmatpush2.msra.mxu0 0.0
  %3924 = vmatprep.subr.mxu0 0.0
  %3925 = vmatpush2.msra.mxu0 0.0
  %3926 = vmatprep.subr.mxu0 0.0
  %3927 = vmatpush2.msra.mxu0 0.0
  %3928 = vmatprep.subr.mxu0 0.0
  %3929 = vmatpush2.msra.mxu0 0.0
  %3930 = vmatprep.subr.mxu0 0.0
  %3931 = vmatpush2.msra.mxu0 0.0
  %3932 = vmatprep.subr.mxu0 0.0
  %3933 = vmatpush2.msra.mxu0 0.0
  %3934 = vmatprep.subr.mxu0 0.0
  %3935 = vmatpush2.msra.mxu0 0.0
  %3936 = vmatprep.subr.mxu0 0.0
  %3937 = vmatpush2.msra.mxu0 0.0
  %3938 = vmatprep.subr.mxu0 0.0
  %3939 = vmatpush2.msra.mxu0 0.0
  %3940 = vmatprep.subr.mxu0 0.0
  %3941 = vmatpush2.msra.mxu0 0.0
  %3942 = vmatprep.mubr.f32.mxu0 0.0
  %3943 = vmatmul.mubr.f32.gmra.mxu0 %v3849
  %v3944 = vpop.f32.mrf.mxu0
  %v3945 = vadd.f32 %v3841, %v3944
  %v3946 = vpop.f32.mrf.mxu0
  %v3947 = vadd.f32 %v3845, %v3946
  %3948 = vmatprep.mubr.f32.mxu0 0.0
  %3949 = vmatmul.mubr.f32.gmra.mxu0 %v3852
  %v3950 = vpop.f32.mrf.mxu0
  %v3951 = vadd.f32 %v3841, %v3950
  %v3952 = vpop.f32.mrf.mxu0
  %v3953 = vadd.f32 %v3845, %v3952
  %3954 = vmatprep.mubr.f32.mxu0 0.0
  %3955 = vmatmul.mubr.f32.gmra.mxu0 %v3855
  %v3956 = vpop.f32.mrf.mxu0
  %v3957 = vadd.f32 %v3841, %v3956
  %v3958 = vpop.f32.mrf.mxu0
  %v3959 = vadd.f32 %v3845, %v3958
  %3960 = vmatprep.mubr.f32.mxu0 0.0
  %3961 = vmatmul.mubr.f32.gmra.mxu0 %v3858
  %v3962 = vpop.f32.mrf.mxu0
  %v3963 = vadd.f32 %v3841, %v3962
  %v3964 = vpop.f32.mrf.mxu0
  %v3965 = vadd.f32 %v3845, %v3964
  %3966 = vmatprep.mubr.f32.mxu0 0.0
  %3967 = vmatmul.mubr.f32.gmra.mxu0 %v3861
  %v3968 = vpop.f32.mrf.mxu0
  %v3969 = vadd.f32 %v3841, %v3968
  %v3970 = vpop.f32.mrf.mxu0
  %v3971 = vadd.f32 %v3845, %v3970
  %3972 = vmatprep.mubr.f32.mxu0 0.0
  %3973 = vmatmul.mubr.f32.gmra.mxu0 %v3864
  %v3974 = vpop.f32.mrf.mxu0
  %v3975 = vadd.f32 %v3841, %v3974
  %v3976 = vpop.f32.mrf.mxu0
  %v3977 = vadd.f32 %v3845, %v3976
  %3978 = vmatprep.mubr.f32.mxu0 0.0
  %3979 = vmatmul.mubr.f32.gmra.mxu0 %v3867
  %v3980 = vpop.f32.mrf.mxu0
  %v3981 = vadd.f32 %v3841, %v3980
  %v3982 = vpop.f32.mrf.mxu0
  %v3983 = vadd.f32 %v3845, %v3982
  %3984 = vmatprep.mubr.f32.mxu0 0.0
  %3985 = vmatmul.mubr.f32.gmra.mxu0 %v3870
  %v3986 = vpop.f32.mrf.mxu0
  %v3987 = vadd.f32 %v3841, %v3986
  %v3988 = vpop.f32.mrf.mxu0
  %v3989 = vadd.f32 %v3845, %v3988
  %3990 = vmatprep.mubr.f32.mxu0 0.0
  %3991 = vmatmul.mubr.f32.gmra.mxu0 %v3873
  %v3992 = vpop.f32.mrf.mxu0
  %v3993 = vadd.f32 %v3841, %v3992
  %v3994 = vpop.f32.mrf.mxu0
  %v3995 = vadd.f32 %v3845, %v3994
  %3996 = vmatprep.mubr.f32.mxu0 0.0
  %3997 = vmatmul.mubr.f32.gmra.mxu0 %v3876
  %v3998 = vpop.f32.mrf.mxu0
  %v3999 = vadd.f32 %v3841, %v3998
  %v4000 = vpop.f32.mrf.mxu0
  %v4001 = vadd.f32 %v3845, %v4000
  %4002 = vdwg.mxu0
  %v4003 = vld [vmem:[%s3818 + $0x80] sm:$0xff]
  %v4004 = vld [vmem:[%s3818 + $0x90] sm:$0xff]
  %v4005 = vld [vmem:[%s3818 + $0xa0] sm:$0xff]
  %v4006 = vld [vmem:[%s3818 + $0xb0] sm:$0xff]
  %v4007 = vld [vmem:[%s3818 + $0xc0] sm:$0xff]
  %v4008 = vld [vmem:[%s3818 + $0xd0] sm:$0xff]
  %v4009 = vld [vmem:[%s3818 + $0xe0] sm:$0xff]
  %v4010 = vld [vmem:[%s3818 + $0xf0] sm:$0xff]
  %4021 = vrot.lane.b32.xlu0 %v3945, 64
  %v4022 = vpop.permute.xlu0 %4021
  %4023 = vrot.lane.b32.xlu0 %v3951, 64
  %v4024 = vpop.permute.xlu0 %4023
  %4025 = vrot.lane.b32.xlu0 %v3957, 64
  %v4026 = vpop.permute.xlu0 %4025
  %4027 = vrot.lane.b32.xlu0 %v3963, 64
  %v4028 = vpop.permute.xlu0 %4027
  %4029 = vrot.lane.b32.xlu0 %v3969, 64
  %v4030 = vpop.permute.xlu0 %4029
  %4031 = vrot.lane.b32.xlu0 %v3975, 64
  %v4032 = vpop.permute.xlu0 %4031
  %4033 = vrot.lane.b32.xlu0 %v3981, 64
  %v4034 = vpop.permute.xlu0 %4033
  %4035 = vrot.lane.b32.xlu0 %v3987, 64
  %v4036 = vpop.permute.xlu0 %4035
  %4037 = vrot.lane.b32.xlu0 %v3993, 64
  %v4038 = vpop.permute.xlu0 %4037
  %4039 = vrot.lane.b32.xlu0 %v3999, 64
  %v4040 = vpop.permute.xlu0 %4039
  %v4041 = vsel %vm724, %v3945, 0
  %v4043 = vsel %vm724, %v3951, 0
  %v4045 = vsel %vm724, %v3957, 0
  %v4047 = vsel %vm724, %v3963, 0
  %v4049 = vsel %vm724, %v3969, 0
  %v4051 = vsel %vm724, %v3975, 0
  %v4053 = vsel %vm724, %v3981, 0
  %v4055 = vsel %vm724, %v3987, 0
  %v4057 = vsel %vm724, %v3993, 0
  %v4059 = vsel %vm724, %v3999, 0
  %v4061 = vsel %vm724, %v4022, 0
  %v4063 = vsel %vm724, %v4024, 0
  %v4065 = vsel %vm724, %v4026, 0
  %v4067 = vsel %vm724, %v4028, 0
  %v4069 = vsel %vm724, %v4030, 0
  %v4071 = vsel %vm724, %v4032, 0
  %v4073 = vsel %vm724, %v4034, 0
  %v4075 = vsel %vm724, %v4036, 0
  %v4077 = vsel %vm724, %v4038, 0
  %v4079 = vsel %vm724, %v4040, 0
  %4081 = vmatprep.subr.mxu0 0.0
  %4082 = vmatpush1.xpose.msra.mxu0 0.0
  %4083 = vmatprep.subr.mxu0 0.0
  %4084 = vmatpush1.xpose.msra.mxu0 0.0
  %4085 = vmatprep.subr.mxu0 0.0
  %4086 = vmatpush1.xpose.msra.mxu0 0.0
  %4087 = vmatprep.subr.mxu0 0.0
  %4088 = vmatpush1.xpose.msra.mxu0 0.0
  %4089 = vmatprep.subr.mxu0 0.0
  %4090 = vmatpush1.xpose.msra.mxu0 0.0
  %4091 = vmatprep.subr.mxu0 0.0
  %4092 = vmatpush1.xpose.msra.mxu0 0.0
  %4093 = vmatprep.subr.mxu0 0.0
  %4094 = vmatpush1.xpose.msra.mxu0 %v4079
  %4095 = vmatprep.subr.mxu0 0.0
  %4096 = vmatpush1.xpose.msra.mxu0 %v4077
  %4097 = vmatprep.subr.mxu0 0.0
  %4098 = vmatpush1.xpose.msra.mxu0 %v4075
  %4099 = vmatprep.subr.mxu0 0.0
  %4100 = vmatpush1.xpose.msra.mxu0 %v4073
  %4101 = vmatprep.subr.mxu0 0.0
  %4102 = vmatpush1.xpose.msra.mxu0 %v4071
  %4103 = vmatprep.subr.mxu0 0.0
  %4104 = vmatpush1.xpose.msra.mxu0 %v4069
  %4105 = vmatprep.subr.mxu0 0.0
  %4106 = vmatpush1.xpose.msra.mxu0 %v4067
  %4107 = vmatprep.subr.mxu0 0.0
  %4108 = vmatpush1.xpose.msra.mxu0 %v4065
  %4109 = vmatprep.subr.mxu0 0.0
  %4110 = vmatpush1.xpose.msra.mxu0 %v4063
  %4111 = vmatprep.subr.mxu0 0.0
  %4112 = vmatpush1.xpose.msra.mxu0 %v4061
  %4113 = vmatprep.subr.mxu0 0.0
  %4114 = vmatpush2.xpose.msra.mxu0 0.0
  %4115 = vmatprep.subr.mxu0 0.0
  %4116 = vmatpush2.xpose.msra.mxu0 0.0
  %4117 = vmatprep.subr.mxu0 0.0
  %4118 = vmatpush2.xpose.msra.mxu0 0.0
  %4119 = vmatprep.subr.mxu0 0.0
  %4120 = vmatpush2.xpose.msra.mxu0 0.0
  %4121 = vmatprep.subr.mxu0 0.0
  %4122 = vmatpush2.xpose.msra.mxu0 0.0
  %4123 = vmatprep.subr.mxu0 0.0
  %4124 = vmatpush2.xpose.msra.mxu0 0.0
  %4125 = vmatprep.subr.mxu0 0.0
  %4126 = vmatpush2.xpose.msra.mxu0 0.0
  %4127 = vmatprep.subr.mxu0 0.0
  %4128 = vmatpush2.xpose.msra.mxu0 0.0
  %4129 = vmatprep.subr.mxu0 0.0
  %4130 = vmatpush2.xpose.msra.mxu0 0.0
  %4131 = vmatprep.subr.mxu0 0.0
  %4132 = vmatpush2.xpose.msra.mxu0 0.0
  %4133 = vmatprep.subr.mxu0 0.0
  %4134 = vmatpush2.xpose.msra.mxu0 0.0
  %4135 = vmatprep.subr.mxu0 0.0
  %4136 = vmatpush2.xpose.msra.mxu0 0.0
  %4137 = vmatprep.subr.mxu0 0.0
  %4138 = vmatpush2.xpose.msra.mxu0 0.0
  %4139 = vmatprep.subr.mxu0 0.0
  %4140 = vmatpush2.xpose.msra.mxu0 0.0
  %4141 = vmatprep.subr.mxu0 0.0
  %4142 = vmatpush2.xpose.msra.mxu0 0.0
  %4143 = vmatprep.subr.mxu0 0.0
  %4144 = vmatpush2.xpose.msra.mxu0 0.0
  %4145 = vmatprep.mubr.f32.mxu0 0.0
  %4146 = vmatmul.mubr.f32.gmra.mxu0 %v4041
  %v4147 = vpop.f32.mrf.mxu0
  %v4148 = vadd.f32 %v491, %v4147
  %v4149 = vpop.f32.mrf.mxu0
  %4150 = vmatprep.mubr.f32.mxu0 0.0
  %4151 = vmatmul.mubr.f32.gmra.mxu0 %v4043
  %v4152 = vpop.f32.mrf.mxu0
  %v4153 = vadd.f32 %v492, %v4152
  %v4154 = vpop.f32.mrf.mxu0
  %4155 = vmatprep.mubr.f32.mxu0 0.0
  %4156 = vmatmul.mubr.f32.gmra.mxu0 %v4045
  %v4157 = vpop.f32.mrf.mxu0
  %v4158 = vadd.f32 %v493, %v4157
  %v4159 = vpop.f32.mrf.mxu0
  %4160 = vmatprep.mubr.f32.mxu0 0.0
  %4161 = vmatmul.mubr.f32.gmra.mxu0 %v4047
  %v4162 = vpop.f32.mrf.mxu0
  %v4163 = vadd.f32 %v494, %v4162
  %v4164 = vpop.f32.mrf.mxu0
  %4165 = vmatprep.mubr.f32.mxu0 0.0
  %4166 = vmatmul.mubr.f32.gmra.mxu0 %v4049
  %v4167 = vpop.f32.mrf.mxu0
  %v4168 = vadd.f32 %v495, %v4167
  %v4169 = vpop.f32.mrf.mxu0
  %4170 = vmatprep.mubr.f32.mxu0 0.0
  %4171 = vmatmul.mubr.f32.gmra.mxu0 %v4051
  %v4172 = vpop.f32.mrf.mxu0
  %v4173 = vadd.f32 %v496, %v4172
  %v4174 = vpop.f32.mrf.mxu0
  %4175 = vmatprep.mubr.f32.mxu0 0.0
  %4176 = vmatmul.mubr.f32.gmra.mxu0 %v4053
  %v4177 = vpop.f32.mrf.mxu0
  %v4178 = vadd.f32 %v497, %v4177
  %v4179 = vpop.f32.mrf.mxu0
  %4180 = vmatprep.mubr.f32.mxu0 0.0
  %4181 = vmatmul.mubr.f32.gmra.mxu0 %v4055
  %v4182 = vpop.f32.mrf.mxu0
  %v4183 = vadd.f32 %v498, %v4182
  %v4184 = vpop.f32.mrf.mxu0
  %4185 = vmatprep.mubr.f32.mxu0 0.0
  %4186 = vmatmul.mubr.f32.gmra.mxu0 %v4057
  %v4187 = vpop.f32.mrf.mxu0
  %v4188 = vadd.f32 %v499, %v4187
  %v4189 = vpop.f32.mrf.mxu0
  %4190 = vmatprep.mubr.f32.mxu0 0.0
  %4191 = vmatmul.mubr.f32.gmra.mxu0 %v4059
  %v4192 = vpop.f32.mrf.mxu0
  %v4193 = vadd.f32 %v500, %v4192
  %v4194 = vpop.f32.mrf.mxu0
  %4195 = vdwg.mxu0
  %v4196 = vsel %vm880, %v4148, -inf
  %4197 = vmax.xlane.f32.xlu0 %v4196
  %v4198 = vpop.xlane.xlu0 %4197
  %v4199 = vsel %vm880, %v4153, -inf
  %4200 = vmax.xlane.f32.xlu0 %v4199
  %v4201 = vpop.xlane.xlu0 %4200
  %v4202 = vsel %vm880, %v4158, -inf
  %4203 = vmax.xlane.f32.xlu0 %v4202
  %v4204 = vpop.xlane.xlu0 %4203
  %v4205 = vsel %vm880, %v4163, -inf
  %4206 = vmax.xlane.f32.xlu0 %v4205
  %v4207 = vpop.xlane.xlu0 %4206
  %v4208 = vsel %vm880, %v4168, -inf
  %4209 = vmax.xlane.f32.xlu0 %v4208
  %v4210 = vpop.xlane.xlu0 %4209
  %v4211 = vsel %vm880, %v4173, -inf
  %4212 = vmax.xlane.f32.xlu0 %v4211
  %v4213 = vpop.xlane.xlu0 %4212
  %v4214 = vsel %vm880, %v4178, -inf
  %4215 = vmax.xlane.f32.xlu0 %v4214
  %v4216 = vpop.xlane.xlu0 %4215
  %v4217 = vsel %vm880, %v4183, -inf
  %4218 = vmax.xlane.f32.xlu0 %v4217
  %v4219 = vpop.xlane.xlu0 %4218
  %v4220 = vsel %vm880, %v4188, -inf
  %4221 = vmax.xlane.f32.xlu0 %v4220
  %v4222 = vpop.xlane.xlu0 %4221
  %v4223 = vsel %vm880, %v4193, -inf
  %4224 = vmax.xlane.f32.xlu0 %v4223
  %v4225 = vpop.xlane.xlu0 %4224
  %v4226 = vsub.f32 %v4148, %v4198
  %v4227 = vsub.f32 %v4153, %v4201
  %v4228 = vsub.f32 %v4158, %v4204
  %v4229 = vsub.f32 %v4163, %v4207
  %v4230 = vsub.f32 %v4168, %v4210
  %v4231 = vsub.f32 %v4173, %v4213
  %v4232 = vsub.f32 %v4178, %v4216
  %v4233 = vsub.f32 %v4183, %v4219
  %v4234 = vsub.f32 %v4188, %v4222
  %v4235 = vsub.f32 %v4193, %v4225
  %v4236 = vmul.f32 %v4226, 1.442695
  %v4237 = vpow.pop %v4236
  %v4238 = vmul.f32 %v4227, 1.442695
  %v4239 = vpow.pop %v4238
  %v4240 = vmul.f32 %v4228, 1.442695
  %v4241 = vpow.pop %v4240
  %v4242 = vmul.f32 %v4229, 1.442695
  %v4243 = vpow.pop %v4242
  %v4244 = vmul.f32 %v4230, 1.442695
  %v4245 = vpow.pop %v4244
  %v4246 = vmul.f32 %v4231, 1.442695
  %v4247 = vpow.pop %v4246
  %v4248 = vmul.f32 %v4232, 1.442695
  %v4249 = vpow.pop %v4248
  %v4250 = vmul.f32 %v4233, 1.442695
  %v4251 = vpow.pop %v4250
  %v4252 = vmul.f32 %v4234, 1.442695
  %v4253 = vpow.pop %v4252
  %v4254 = vmul.f32 %v4235, 1.442695
  %v4255 = vpow.pop %v4254
  %v4256 = vsel %vm880, %v4237, 0.0
  %4257 = vadd.xlane.f32.xlu0 %v4256
  %v4258 = vpop.xlane.xlu0 %4257
  %v4259 = vsel %vm880, %v4239, 0.0
  %4260 = vadd.xlane.f32.xlu0 %v4259
  %v4261 = vpop.xlane.xlu0 %4260
  %v4262 = vsel %vm880, %v4241, 0.0
  %4263 = vadd.xlane.f32.xlu0 %v4262
  %v4264 = vpop.xlane.xlu0 %4263
  %v4265 = vsel %vm880, %v4243, 0.0
  %4266 = vadd.xlane.f32.xlu0 %v4265
  %v4267 = vpop.xlane.xlu0 %4266
  %v4268 = vsel %vm880, %v4245, 0.0
  %4269 = vadd.xlane.f32.xlu0 %v4268
  %v4270 = vpop.xlane.xlu0 %4269
  %v4271 = vsel %vm880, %v4247, 0.0
  %4272 = vadd.xlane.f32.xlu0 %v4271
  %v4273 = vpop.xlane.xlu0 %4272
  %v4274 = vsel %vm880, %v4249, 0.0
  %4275 = vadd.xlane.f32.xlu0 %v4274
  %v4276 = vpop.xlane.xlu0 %4275
  %v4277 = vsel %vm880, %v4251, 0.0
  %4278 = vadd.xlane.f32.xlu0 %v4277
  %v4279 = vpop.xlane.xlu0 %4278
  %v4280 = vsel %vm880, %v4253, 0.0
  %4281 = vadd.xlane.f32.xlu0 %v4280
  %v4282 = vpop.xlane.xlu0 %4281
  %v4283 = vsel %vm880, %v4255, 0.0
  %4284 = vadd.xlane.f32.xlu0 %v4283
  %v4285 = vpop.xlane.xlu0 %4284
  %v4286 = vrcp.pop %v4258
  %v4287 = vrcp.pop %v4261
  %v4288 = vrcp.pop %v4264
  %v4289 = vrcp.pop %v4267
  %v4290 = vrcp.pop %v4270
  %v4291 = vrcp.pop %v4273
  %v4292 = vrcp.pop %v4276
  %v4293 = vrcp.pop %v4279
  %v4294 = vrcp.pop %v4282
  %v4295 = vrcp.pop %v4285
  %v4296 = vmul.f32 %v4237, %v4286
  %v4297 = vmul.f32 %v4239, %v4287
  %v4298 = vmul.f32 %v4241, %v4288
  %v4299 = vmul.f32 %v4243, %v4289
  %v4300 = vmul.f32 %v4245, %v4290
  %v4301 = vmul.f32 %v4247, %v4291
  %v4302 = vmul.f32 %v4249, %v4292
  %v4303 = vmul.f32 %v4251, %v4293
  %v4304 = vmul.f32 %v4253, %v4294
  %v4305 = vmul.f32 %v4255, %v4295
  %v4307 = vsel %vm880, %v4296, 0
  %v4310 = vsel %vm880, %v4297, 0
  %v4313 = vsel %vm880, %v4298, 0
  %v4316 = vsel %vm880, %v4299, 0
  %v4319 = vsel %vm880, %v4300, 0
  %v4322 = vsel %vm880, %v4301, 0
  %v4325 = vsel %vm880, %v4302, 0
  %v4328 = vsel %vm880, %v4303, 0
  %v4331 = vsel %vm880, %v4304, 0
  %v4334 = vsel %vm880, %v4305, 0
  %4336 = vmatprep.subr.mxu0 0.0
  %4337 = vmatpush1.msra.mxu0 0.0
  %4338 = vmatprep.subr.mxu0 0.0
  %4339 = vmatpush1.msra.mxu0 0.0
  %4340 = vmatprep.subr.mxu0 0.0
  %4341 = vmatpush1.msra.mxu0 0.0
  %4342 = vmatprep.subr.mxu0 0.0
  %4343 = vmatpush1.msra.mxu0 0.0
  %4344 = vmatprep.subr.mxu0 0.0
  %4345 = vmatpush1.msra.mxu0 0.0
  %4346 = vmatprep.subr.mxu0 0.0
  %4347 = vmatpush1.msra.mxu0 0.0
  %4348 = vmatprep.subr.mxu0 0.0
  %4349 = vmatpush1.msra.mxu0 %v4001
  %4350 = vmatprep.subr.mxu0 0.0
  %4351 = vmatpush1.msra.mxu0 %v3995
  %4352 = vmatprep.subr.mxu0 0.0
  %4353 = vmatpush1.msra.mxu0 %v3989
  %4354 = vmatprep.subr.mxu0 0.0
  %4355 = vmatpush1.msra.mxu0 %v3983
  %4356 = vmatprep.subr.mxu0 0.0
  %4357 = vmatpush1.msra.mxu0 %v3977
  %4358 = vmatprep.subr.mxu0 0.0
  %4359 = vmatpush1.msra.mxu0 %v3971
  %4360 = vmatprep.subr.mxu0 0.0
  %4361 = vmatpush1.msra.mxu0 %v3965
  %4362 = vmatprep.subr.mxu0 0.0
  %4363 = vmatpush1.msra.mxu0 %v3959
  %4364 = vmatprep.subr.mxu0 0.0
  %4365 = vmatpush1.msra.mxu0 %v3953
  %4366 = vmatprep.subr.mxu0 0.0
  %4367 = vmatpush1.msra.mxu0 %v3947
  %4368 = vmatprep.subr.mxu0 0.0
  %4369 = vmatpush2.msra.mxu0 0.0
  %4370 = vmatprep.subr.mxu0 0.0
  %4371 = vmatpush2.msra.mxu0 0.0
  %4372 = vmatprep.subr.mxu0 0.0
  %4373 = vmatpush2.msra.mxu0 0.0
  %4374 = vmatprep.subr.mxu0 0.0
  %4375 = vmatpush2.msra.mxu0 0.0
  %4376 = vmatprep.subr.mxu0 0.0
  %4377 = vmatpush2.msra.mxu0 0.0
  %4378 = vmatprep.subr.mxu0 0.0
  %4379 = vmatpush2.msra.mxu0 0.0
  %4380 = vmatprep.subr.mxu0 0.0
  %4381 = vmatpush2.msra.mxu0 0.0
  %4382 = vmatprep.subr.mxu0 0.0
  %4383 = vmatpush2.msra.mxu0 0.0
  %4384 = vmatprep.subr.mxu0 0.0
  %4385 = vmatpush2.msra.mxu0 0.0
  %4386 = vmatprep.subr.mxu0 0.0
  %4387 = vmatpush2.msra.mxu0 0.0
  %4388 = vmatprep.subr.mxu0 0.0
  %4389 = vmatpush2.msra.mxu0 0.0
  %4390 = vmatprep.subr.mxu0 0.0
  %4391 = vmatpush2.msra.mxu0 0.0
  %4392 = vmatprep.subr.mxu0 0.0
  %4393 = vmatpush2.msra.mxu0 0.0
  %4394 = vmatprep.subr.mxu0 0.0
  %4395 = vmatpush2.msra.mxu0 0.0
  %4396 = vmatprep.subr.mxu0 0.0
  %4397 = vmatpush2.msra.mxu0 0.0
  %4398 = vmatprep.subr.mxu0 0.0
  %4399 = vmatpush2.msra.mxu0 0.0
  %4400 = vmatprep.mubr.f32.mxu0 0.0
  %4401 = vmatmul.mubr.f32.gmra.mxu0 %v4307
  %v4402 = vpop.f32.mrf.mxu0
  %v4403 = vadd.f32 0.0, %v4402
  %v4404 = vpop.f32.mrf.mxu0
  %4405 = vmatprep.mubr.f32.mxu0 0.0
  %4406 = vmatmul.mubr.f32.gmra.mxu0 %v4310
  %v4407 = vpop.f32.mrf.mxu0
  %v4408 = vadd.f32 0.0, %v4407
  %v4409 = vpop.f32.mrf.mxu0
  %4410 = vmatprep.mubr.f32.mxu0 0.0
  %4411 = vmatmul.mubr.f32.gmra.mxu0 %v4313
  %v4412 = vpop.f32.mrf.mxu0
  %v4413 = vadd.f32 0.0, %v4412
  %v4414 = vpop.f32.mrf.mxu0
  %4415 = vmatprep.mubr.f32.mxu0 0.0
  %4416 = vmatmul.mubr.f32.gmra.mxu0 %v4316
  %v4417 = vpop.f32.mrf.mxu0
  %v4418 = vadd.f32 0.0, %v4417
  %v4419 = vpop.f32.mrf.mxu0
  %4420 = vmatprep.mubr.f32.mxu0 0.0
  %4421 = vmatmul.mubr.f32.gmra.mxu0 %v4319
  %v4422 = vpop.f32.mrf.mxu0
  %v4423 = vadd.f32 0.0, %v4422
  %v4424 = vpop.f32.mrf.mxu0
  %4425 = vmatprep.mubr.f32.mxu0 0.0
  %4426 = vmatmul.mubr.f32.gmra.mxu0 %v4322
  %v4427 = vpop.f32.mrf.mxu0
  %v4428 = vadd.f32 0.0, %v4427
  %v4429 = vpop.f32.mrf.mxu0
  %4430 = vmatprep.mubr.f32.mxu0 0.0
  %4431 = vmatmul.mubr.f32.gmra.mxu0 %v4325
  %v4432 = vpop.f32.mrf.mxu0
  %v4433 = vadd.f32 0.0, %v4432
  %v4434 = vpop.f32.mrf.mxu0
  %4435 = vmatprep.mubr.f32.mxu0 0.0
  %4436 = vmatmul.mubr.f32.gmra.mxu0 %v4328
  %v4437 = vpop.f32.mrf.mxu0
  %v4438 = vadd.f32 0.0, %v4437
  %v4439 = vpop.f32.mrf.mxu0
  %4440 = vmatprep.mubr.f32.mxu0 0.0
  %4441 = vmatmul.mubr.f32.gmra.mxu0 %v4331
  %v4442 = vpop.f32.mrf.mxu0
  %v4443 = vadd.f32 0.0, %v4442
  %v4444 = vpop.f32.mrf.mxu0
  %4445 = vmatprep.mubr.f32.mxu0 0.0
  %4446 = vmatmul.mubr.f32.gmra.mxu0 %v4334
  %v4447 = vpop.f32.mrf.mxu0
  %v4448 = vadd.f32 0.0, %v4447
  %v4449 = vpop.f32.mrf.mxu0
  %4450 = vdwg.mxu0
  %4451 = vrot.lane.b32.xlu0 %v3945, 112
  %v4452 = vpop.permute.xlu0 %4451
  %4453 = vrot.lane.b32.xlu0 %v3951, 112
  %v4454 = vpop.permute.xlu0 %4453
  %4455 = vrot.lane.b32.xlu0 %v3957, 112
  %v4456 = vpop.permute.xlu0 %4455
  %4457 = vrot.lane.b32.xlu0 %v3963, 112
  %v4458 = vpop.permute.xlu0 %4457
  %4459 = vrot.lane.b32.xlu0 %v3969, 112
  %v4460 = vpop.permute.xlu0 %4459
  %4461 = vrot.lane.b32.xlu0 %v3975, 112
  %v4462 = vpop.permute.xlu0 %4461
  %4463 = vrot.lane.b32.xlu0 %v3981, 112
  %v4464 = vpop.permute.xlu0 %4463
  %4465 = vrot.lane.b32.xlu0 %v3987, 112
  %v4466 = vpop.permute.xlu0 %4465
  %4467 = vrot.lane.b32.xlu0 %v3993, 112
  %v4468 = vpop.permute.xlu0 %4467
  %4469 = vrot.lane.b32.xlu0 %v3999, 112
  %v4470 = vpop.permute.xlu0 %4469
  %4471 = vrot.lane.b32.xlu0 %v3945, 48
  %v4472 = vpop.permute.xlu0 %4471
  %4473 = vrot.lane.b32.xlu0 %v3951, 48
  %v4474 = vpop.permute.xlu0 %4473
  %4475 = vrot.lane.b32.xlu0 %v3957, 48
  %v4476 = vpop.permute.xlu0 %4475
  %4477 = vrot.lane.b32.xlu0 %v3963, 48
  %v4478 = vpop.permute.xlu0 %4477
  %4479 = vrot.lane.b32.xlu0 %v3969, 48
  %v4480 = vpop.permute.xlu0 %4479
  %4481 = vrot.lane.b32.xlu0 %v3975, 48
  %v4482 = vpop.permute.xlu0 %4481
  %4483 = vrot.lane.b32.xlu0 %v3981, 48
  %v4484 = vpop.permute.xlu0 %4483
  %4485 = vrot.lane.b32.xlu0 %v3987, 48
  %v4486 = vpop.permute.xlu0 %4485
  %4487 = vrot.lane.b32.xlu0 %v3993, 48
  %v4488 = vpop.permute.xlu0 %4487
  %4489 = vrot.lane.b32.xlu0 %v3999, 48
  %v4490 = vpop.permute.xlu0 %4489
  %v4491 = vsel %vm724, %v4452, 0
  %v4493 = vsel %vm724, %v4454, 0
  %v4495 = vsel %vm724, %v4456, 0
  %v4497 = vsel %vm724, %v4458, 0
  %v4499 = vsel %vm724, %v4460, 0
  %v4501 = vsel %vm724, %v4462, 0
  %v4503 = vsel %vm724, %v4464, 0
  %v4505 = vsel %vm724, %v4466, 0
  %v4507 = vsel %vm724, %v4468, 0
  %v4509 = vsel %vm724, %v4470, 0
  %v4511 = vsel %vm724, %v4472, 0
  %v4513 = vsel %vm724, %v4474, 0
  %v4515 = vsel %vm724, %v4476, 0
  %v4517 = vsel %vm724, %v4478, 0
  %v4519 = vsel %vm724, %v4480, 0
  %v4521 = vsel %vm724, %v4482, 0
  %v4523 = vsel %vm724, %v4484, 0
  %v4525 = vsel %vm724, %v4486, 0
  %v4527 = vsel %vm724, %v4488, 0
  %v4529 = vsel %vm724, %v4490, 0
  %4531 = vmatprep.subr.mxu0 0.0
  %4532 = vmatpush1.xpose.msra.mxu0 0.0
  %4533 = vmatprep.subr.mxu0 0.0
  %4534 = vmatpush1.xpose.msra.mxu0 0.0
  %4535 = vmatprep.subr.mxu0 0.0
  %4536 = vmatpush1.xpose.msra.mxu0 0.0
  %4537 = vmatprep.subr.mxu0 0.0
  %4538 = vmatpush1.xpose.msra.mxu0 0.0
  %4539 = vmatprep.subr.mxu0 0.0
  %4540 = vmatpush1.xpose.msra.mxu0 0.0
  %4541 = vmatprep.subr.mxu0 0.0
  %4542 = vmatpush1.xpose.msra.mxu0 0.0
  %4543 = vmatprep.subr.mxu0 0.0
  %4544 = vmatpush1.xpose.msra.mxu0 %v4529
  %4545 = vmatprep.subr.mxu0 0.0
  %4546 = vmatpush1.xpose.msra.mxu0 %v4527
  %4547 = vmatprep.subr.mxu0 0.0
  %4548 = vmatpush1.xpose.msra.mxu0 %v4525
  %4549 = vmatprep.subr.mxu0 0.0
  %4550 = vmatpush1.xpose.msra.mxu0 %v4523
  %4551 = vmatprep.subr.mxu0 0.0
  %4552 = vmatpush1.xpose.msra.mxu0 %v4521
  %4553 = vmatprep.subr.mxu0 0.0
  %4554 = vmatpush1.xpose.msra.mxu0 %v4519
  %4555 = vmatprep.subr.mxu0 0.0
  %4556 = vmatpush1.xpose.msra.mxu0 %v4517
  %4557 = vmatprep.subr.mxu0 0.0
  %4558 = vmatpush1.xpose.msra.mxu0 %v4515
  %4559 = vmatprep.subr.mxu0 0.0
  %4560 = vmatpush1.xpose.msra.mxu0 %v4513
  %4561 = vmatprep.subr.mxu0 0.0
  %4562 = vmatpush1.xpose.msra.mxu0 %v4511
  %4563 = vmatprep.subr.mxu0 0.0
  %4564 = vmatpush2.xpose.msra.mxu0 0.0
  %4565 = vmatprep.subr.mxu0 0.0
  %4566 = vmatpush2.xpose.msra.mxu0 0.0
  %4567 = vmatprep.subr.mxu0 0.0
  %4568 = vmatpush2.xpose.msra.mxu0 0.0
  %4569 = vmatprep.subr.mxu0 0.0
  %4570 = vmatpush2.xpose.msra.mxu0 0.0
  %4571 = vmatprep.subr.mxu0 0.0
  %4572 = vmatpush2.xpose.msra.mxu0 0.0
  %4573 = vmatprep.subr.mxu0 0.0
  %4574 = vmatpush2.xpose.msra.mxu0 0.0
  %4575 = vmatprep.subr.mxu0 0.0
  %4576 = vmatpush2.xpose.msra.mxu0 0.0
  %4577 = vmatprep.subr.mxu0 0.0
  %4578 = vmatpush2.xpose.msra.mxu0 0.0
  %4579 = vmatprep.subr.mxu0 0.0
  %4580 = vmatpush2.xpose.msra.mxu0 0.0
  %4581 = vmatprep.subr.mxu0 0.0
  %4582 = vmatpush2.xpose.msra.mxu0 0.0
  %4583 = vmatprep.subr.mxu0 0.0
  %4584 = vmatpush2.xpose.msra.mxu0 0.0
  %4585 = vmatprep.subr.mxu0 0.0
  %4586 = vmatpush2.xpose.msra.mxu0 0.0
  %4587 = vmatprep.subr.mxu0 0.0
  %4588 = vmatpush2.xpose.msra.mxu0 0.0
  %4589 = vmatprep.subr.mxu0 0.0
  %4590 = vmatpush2.xpose.msra.mxu0 0.0
  %4591 = vmatprep.subr.mxu0 0.0
  %4592 = vmatpush2.xpose.msra.mxu0 0.0
  %4593 = vmatprep.subr.mxu0 0.0
  %4594 = vmatpush2.xpose.msra.mxu0 0.0
  %4595 = vmatprep.mubr.f32.mxu0 0.0
  %4596 = vmatmul.mubr.f32.gmra.mxu0 %v4491
  %v4597 = vpop.f32.mrf.mxu0
  %v4598 = vadd.f32 %v491, %v4597
  %v4599 = vpop.f32.mrf.mxu0
  %4600 = vmatprep.mubr.f32.mxu0 0.0
  %4601 = vmatmul.mubr.f32.gmra.mxu0 %v4493
  %v4602 = vpop.f32.mrf.mxu0
  %v4603 = vadd.f32 %v492, %v4602
  %v4604 = vpop.f32.mrf.mxu0
  %4605 = vmatprep.mubr.f32.mxu0 0.0
  %4606 = vmatmul.mubr.f32.gmra.mxu0 %v4495
  %v4607 = vpop.f32.mrf.mxu0
  %v4608 = vadd.f32 %v493, %v4607
  %v4609 = vpop.f32.mrf.mxu0
  %4610 = vmatprep.mubr.f32.mxu0 0.0
  %4611 = vmatmul.mubr.f32.gmra.mxu0 %v4497
  %v4612 = vpop.f32.mrf.mxu0
  %v4613 = vadd.f32 %v494, %v4612
  %v4614 = vpop.f32.mrf.mxu0
  %4615 = vmatprep.mubr.f32.mxu0 0.0
  %4616 = vmatmul.mubr.f32.gmra.mxu0 %v4499
  %v4617 = vpop.f32.mrf.mxu0
  %v4618 = vadd.f32 %v495, %v4617
  %v4619 = vpop.f32.mrf.mxu0
  %4620 = vmatprep.mubr.f32.mxu0 0.0
  %4621 = vmatmul.mubr.f32.gmra.mxu0 %v4501
  %v4622 = vpop.f32.mrf.mxu0
  %v4623 = vadd.f32 %v496, %v4622
  %v4624 = vpop.f32.mrf.mxu0
  %4625 = vmatprep.mubr.f32.mxu0 0.0
  %4626 = vmatmul.mubr.f32.gmra.mxu0 %v4503
  %v4627 = vpop.f32.mrf.mxu0
  %v4628 = vadd.f32 %v497, %v4627
  %v4629 = vpop.f32.mrf.mxu0
  %4630 = vmatprep.mubr.f32.mxu0 0.0
  %4631 = vmatmul.mubr.f32.gmra.mxu0 %v4505
  %v4632 = vpop.f32.mrf.mxu0
  %v4633 = vadd.f32 %v498, %v4632
  %v4634 = vpop.f32.mrf.mxu0
  %4635 = vmatprep.mubr.f32.mxu0 0.0
  %4636 = vmatmul.mubr.f32.gmra.mxu0 %v4507
  %v4637 = vpop.f32.mrf.mxu0
  %v4638 = vadd.f32 %v499, %v4637
  %v4639 = vpop.f32.mrf.mxu0
  %4640 = vmatprep.mubr.f32.mxu0 0.0
  %4641 = vmatmul.mubr.f32.gmra.mxu0 %v4509
  %v4642 = vpop.f32.mrf.mxu0
  %v4643 = vadd.f32 %v500, %v4642
  %v4644 = vpop.f32.mrf.mxu0
  %4645 = vdwg.mxu0
  %v4646 = vsel %vm880, %v4598, -inf
  %4647 = vmax.xlane.f32.xlu0 %v4646
  %v4648 = vpop.xlane.xlu0 %4647
  %v4649 = vsel %vm880, %v4603, -inf
  %4650 = vmax.xlane.f32.xlu0 %v4649
  %v4651 = vpop.xlane.xlu0 %4650
  %v4652 = vsel %vm880, %v4608, -inf
  %4653 = vmax.xlane.f32.xlu0 %v4652
  %v4654 = vpop.xlane.xlu0 %4653
  %v4655 = vsel %vm880, %v4613, -inf
  %4656 = vmax.xlane.f32.xlu0 %v4655
  %v4657 = vpop.xlane.xlu0 %4656
  %v4658 = vsel %vm880, %v4618, -inf
  %4659 = vmax.xlane.f32.xlu0 %v4658
  %v4660 = vpop.xlane.xlu0 %4659
  %v4661 = vsel %vm880, %v4623, -inf
  %4662 = vmax.xlane.f32.xlu0 %v4661
  %v4663 = vpop.xlane.xlu0 %4662
  %v4664 = vsel %vm880, %v4628, -inf
  %4665 = vmax.xlane.f32.xlu0 %v4664
  %v4666 = vpop.xlane.xlu0 %4665
  %v4667 = vsel %vm880, %v4633, -inf
  %4668 = vmax.xlane.f32.xlu0 %v4667
  %v4669 = vpop.xlane.xlu0 %4668
  %v4670 = vsel %vm880, %v4638, -inf
  %4671 = vmax.xlane.f32.xlu0 %v4670
  %v4672 = vpop.xlane.xlu0 %4671
  %v4673 = vsel %vm880, %v4643, -inf
  %4674 = vmax.xlane.f32.xlu0 %v4673
  %v4675 = vpop.xlane.xlu0 %4674
  %v4676 = vsub.f32 %v4598, %v4648
  %v4677 = vsub.f32 %v4603, %v4651
  %v4678 = vsub.f32 %v4608, %v4654
  %v4679 = vsub.f32 %v4613, %v4657
  %v4680 = vsub.f32 %v4618, %v4660
  %v4681 = vsub.f32 %v4623, %v4663
  %v4682 = vsub.f32 %v4628, %v4666
  %v4683 = vsub.f32 %v4633, %v4669
  %v4684 = vsub.f32 %v4638, %v4672
  %v4685 = vsub.f32 %v4643, %v4675
  %v4686 = vmul.f32 %v4676, 1.442695
  %v4687 = vpow.pop %v4686
  %v4688 = vmul.f32 %v4677, 1.442695
  %v4689 = vpow.pop %v4688
  %v4690 = vmul.f32 %v4678, 1.442695
  %v4691 = vpow.pop %v4690
  %v4692 = vmul.f32 %v4679, 1.442695
  %v4693 = vpow.pop %v4692
  %v4694 = vmul.f32 %v4680, 1.442695
  %v4695 = vpow.pop %v4694
  %v4696 = vmul.f32 %v4681, 1.442695
  %v4697 = vpow.pop %v4696
  %v4698 = vmul.f32 %v4682, 1.442695
  %v4699 = vpow.pop %v4698
  %v4700 = vmul.f32 %v4683, 1.442695
  %v4701 = vpow.pop %v4700
  %v4702 = vmul.f32 %v4684, 1.442695
  %v4703 = vpow.pop %v4702
  %v4704 = vmul.f32 %v4685, 1.442695
  %v4705 = vpow.pop %v4704
  %v4706 = vsel %vm880, %v4687, 0.0
  %4707 = vadd.xlane.f32.xlu0 %v4706
  %v4708 = vpop.xlane.xlu0 %4707
  %v4709 = vsel %vm880, %v4689, 0.0
  %4710 = vadd.xlane.f32.xlu0 %v4709
  %v4711 = vpop.xlane.xlu0 %4710
  %v4712 = vsel %vm880, %v4691, 0.0
  %4713 = vadd.xlane.f32.xlu0 %v4712
  %v4714 = vpop.xlane.xlu0 %4713
  %v4715 = vsel %vm880, %v4693, 0.0
  %4716 = vadd.xlane.f32.xlu0 %v4715
  %v4717 = vpop.xlane.xlu0 %4716
  %v4718 = vsel %vm880, %v4695, 0.0
  %4719 = vadd.xlane.f32.xlu0 %v4718
  %v4720 = vpop.xlane.xlu0 %4719
  %v4721 = vsel %vm880, %v4697, 0.0
  %4722 = vadd.xlane.f32.xlu0 %v4721
  %v4723 = vpop.xlane.xlu0 %4722
  %v4724 = vsel %vm880, %v4699, 0.0
  %4725 = vadd.xlane.f32.xlu0 %v4724
  %v4726 = vpop.xlane.xlu0 %4725
  %v4727 = vsel %vm880, %v4701, 0.0
  %4728 = vadd.xlane.f32.xlu0 %v4727
  %v4729 = vpop.xlane.xlu0 %4728
  %v4730 = vsel %vm880, %v4703, 0.0
  %4731 = vadd.xlane.f32.xlu0 %v4730
  %v4732 = vpop.xlane.xlu0 %4731
  %v4733 = vsel %vm880, %v4705, 0.0
  %4734 = vadd.xlane.f32.xlu0 %v4733
  %v4735 = vpop.xlane.xlu0 %4734
  %v4736 = vrcp.pop %v4708
  %v4737 = vrcp.pop %v4711
  %v4738 = vrcp.pop %v4714
  %v4739 = vrcp.pop %v4717
  %v4740 = vrcp.pop %v4720
  %v4741 = vrcp.pop %v4723
  %v4742 = vrcp.pop %v4726
  %v4743 = vrcp.pop %v4729
  %v4744 = vrcp.pop %v4732
  %v4745 = vrcp.pop %v4735
  %v4746 = vmul.f32 %v4687, %v4736
  %v4747 = vmul.f32 %v4689, %v4737
  %v4748 = vmul.f32 %v4691, %v4738
  %v4749 = vmul.f32 %v4693, %v4739
  %v4750 = vmul.f32 %v4695, %v4740
  %v4751 = vmul.f32 %v4697, %v4741
  %v4752 = vmul.f32 %v4699, %v4742
  %v4753 = vmul.f32 %v4701, %v4743
  %v4754 = vmul.f32 %v4703, %v4744
  %v4755 = vmul.f32 %v4705, %v4745
  %4766 = vrot.lane.b32.xlu0 %v3947, 112
  %v4767 = vpop.permute.xlu0 %4766
  %4768 = vrot.lane.b32.xlu0 %v3953, 112
  %v4769 = vpop.permute.xlu0 %4768
  %4770 = vrot.lane.b32.xlu0 %v3959, 112
  %v4771 = vpop.permute.xlu0 %4770
  %4772 = vrot.lane.b32.xlu0 %v3965, 112
  %v4773 = vpop.permute.xlu0 %4772
  %4774 = vrot.lane.b32.xlu0 %v3971, 112
  %v4775 = vpop.permute.xlu0 %4774
  %4776 = vrot.lane.b32.xlu0 %v3977, 112
  %v4777 = vpop.permute.xlu0 %4776
  %4778 = vrot.lane.b32.xlu0 %v3983, 112
  %v4779 = vpop.permute.xlu0 %4778
  %4780 = vrot.lane.b32.xlu0 %v3989, 112
  %v4781 = vpop.permute.xlu0 %4780
  %4782 = vrot.lane.b32.xlu0 %v3995, 112
  %v4783 = vpop.permute.xlu0 %4782
  %4784 = vrot.lane.b32.xlu0 %v4001, 112
  %v4785 = vpop.permute.xlu0 %4784
  %v4797 = vsel %vm880, %v4746, 0
  %v4800 = vsel %vm880, %v4747, 0
  %v4803 = vsel %vm880, %v4748, 0
  %v4806 = vsel %vm880, %v4749, 0
  %v4809 = vsel %vm880, %v4750, 0
  %v4812 = vsel %vm880, %v4751, 0
  %v4815 = vsel %vm880, %v4752, 0
  %v4818 = vsel %vm880, %v4753, 0
  %v4821 = vsel %vm880, %v4754, 0
  %v4824 = vsel %vm880, %v4755, 0
  %4826 = vmatprep.subr.mxu0 0.0
  %4827 = vmatpush1.msra.mxu0 0.0
  %4828 = vmatprep.subr.mxu0 0.0
  %4829 = vmatpush1.msra.mxu0 0.0
  %4830 = vmatprep.subr.mxu0 0.0
  %4831 = vmatpush1.msra.mxu0 0.0
  %4832 = vmatprep.subr.mxu0 0.0
  %4833 = vmatpush1.msra.mxu0 0.0
  %4834 = vmatprep.subr.mxu0 0.0
  %4835 = vmatpush1.msra.mxu0 0.0
  %4836 = vmatprep.subr.mxu0 0.0
  %4837 = vmatpush1.msra.mxu0 0.0
  %4838 = vmatprep.subr.mxu0 0.0
  %4839 = vmatpush1.msra.mxu0 %v4785
  %4840 = vmatprep.subr.mxu0 0.0
  %4841 = vmatpush1.msra.mxu0 %v4783
  %4842 = vmatprep.subr.mxu0 0.0
  %4843 = vmatpush1.msra.mxu0 %v4781
  %4844 = vmatprep.subr.mxu0 0.0
  %4845 = vmatpush1.msra.mxu0 %v4779
  %4846 = vmatprep.subr.mxu0 0.0
  %4847 = vmatpush1.msra.mxu0 %v4777
  %4848 = vmatprep.subr.mxu0 0.0
  %4849 = vmatpush1.msra.mxu0 %v4775
  %4850 = vmatprep.subr.mxu0 0.0
  %4851 = vmatpush1.msra.mxu0 %v4773
  %4852 = vmatprep.subr.mxu0 0.0
  %4853 = vmatpush1.msra.mxu0 %v4771
  %4854 = vmatprep.subr.mxu0 0.0
  %4855 = vmatpush1.msra.mxu0 %v4769
  %4856 = vmatprep.subr.mxu0 0.0
  %4857 = vmatpush1.msra.mxu0 %v4767
  %4858 = vmatprep.subr.mxu0 0.0
  %4859 = vmatpush2.msra.mxu0 0.0
  %4860 = vmatprep.subr.mxu0 0.0
  %4861 = vmatpush2.msra.mxu0 0.0
  %4862 = vmatprep.subr.mxu0 0.0
  %4863 = vmatpush2.msra.mxu0 0.0
  %4864 = vmatprep.subr.mxu0 0.0
  %4865 = vmatpush2.msra.mxu0 0.0
  %4866 = vmatprep.subr.mxu0 0.0
  %4867 = vmatpush2.msra.mxu0 0.0
  %4868 = vmatprep.subr.mxu0 0.0
  %4869 = vmatpush2.msra.mxu0 0.0
  %4870 = vmatprep.subr.mxu0 0.0
  %4871 = vmatpush2.msra.mxu0 0.0
  %4872 = vmatprep.subr.mxu0 0.0
  %4873 = vmatpush2.msra.mxu0 0.0
  %4874 = vmatprep.subr.mxu0 0.0
  %4875 = vmatpush2.msra.mxu0 0.0
  %4876 = vmatprep.subr.mxu0 0.0
  %4877 = vmatpush2.msra.mxu0 0.0
  %4878 = vmatprep.subr.mxu0 0.0
  %4879 = vmatpush2.msra.mxu0 0.0
  %4880 = vmatprep.subr.mxu0 0.0
  %4881 = vmatpush2.msra.mxu0 0.0
  %4882 = vmatprep.subr.mxu0 0.0
  %4883 = vmatpush2.msra.mxu0 0.0
  %4884 = vmatprep.subr.mxu0 0.0
  %4885 = vmatpush2.msra.mxu0 0.0
  %4886 = vmatprep.subr.mxu0 0.0
  %4887 = vmatpush2.msra.mxu0 0.0
  %4888 = vmatprep.subr.mxu0 0.0
  %4889 = vmatpush2.msra.mxu0 0.0
  %4890 = vmatprep.mubr.f32.mxu0 0.0
  %4891 = vmatmul.mubr.f32.gmra.mxu0 %v4797
  %v4892 = vpop.f32.mrf.mxu0
  %v4893 = vadd.f32 0.0, %v4892
  %v4894 = vpop.f32.mrf.mxu0
  %4895 = vmatprep.mubr.f32.mxu0 0.0
  %4896 = vmatmul.mubr.f32.gmra.mxu0 %v4800
  %v4897 = vpop.f32.mrf.mxu0
  %v4898 = vadd.f32 0.0, %v4897
  %v4899 = vpop.f32.mrf.mxu0
  %4900 = vmatprep.mubr.f32.mxu0 0.0
  %4901 = vmatmul.mubr.f32.gmra.mxu0 %v4803
  %v4902 = vpop.f32.mrf.mxu0
  %v4903 = vadd.f32 0.0, %v4902
  %v4904 = vpop.f32.mrf.mxu0
  %4905 = vmatprep.mubr.f32.mxu0 0.0
  %4906 = vmatmul.mubr.f32.gmra.mxu0 %v4806
  %v4907 = vpop.f32.mrf.mxu0
  %v4908 = vadd.f32 0.0, %v4907
  %v4909 = vpop.f32.mrf.mxu0
  %4910 = vmatprep.mubr.f32.mxu0 0.0
  %4911 = vmatmul.mubr.f32.gmra.mxu0 %v4809
  %v4912 = vpop.f32.mrf.mxu0
  %v4913 = vadd.f32 0.0, %v4912
  %v4914 = vpop.f32.mrf.mxu0
  %4915 = vmatprep.mubr.f32.mxu0 0.0
  %4916 = vmatmul.mubr.f32.gmra.mxu0 %v4812
  %v4917 = vpop.f32.mrf.mxu0
  %v4918 = vadd.f32 0.0, %v4917
  %v4919 = vpop.f32.mrf.mxu0
  %4920 = vmatprep.mubr.f32.mxu0 0.0
  %4921 = vmatmul.mubr.f32.gmra.mxu0 %v4815
  %v4922 = vpop.f32.mrf.mxu0
  %v4923 = vadd.f32 0.0, %v4922
  %v4924 = vpop.f32.mrf.mxu0
  %4925 = vmatprep.mubr.f32.mxu0 0.0
  %4926 = vmatmul.mubr.f32.gmra.mxu0 %v4818
  %v4927 = vpop.f32.mrf.mxu0
  %v4928 = vadd.f32 0.0, %v4927
  %v4929 = vpop.f32.mrf.mxu0
  %4930 = vmatprep.mubr.f32.mxu0 0.0
  %4931 = vmatmul.mubr.f32.gmra.mxu0 %v4821
  %v4932 = vpop.f32.mrf.mxu0
  %v4933 = vadd.f32 0.0, %v4932
  %v4934 = vpop.f32.mrf.mxu0
  %4935 = vmatprep.mubr.f32.mxu0 0.0
  %4936 = vmatmul.mubr.f32.gmra.mxu0 %v4824
  %v4937 = vpop.f32.mrf.mxu0
  %v4938 = vadd.f32 0.0, %v4937
  %v4939 = vpop.f32.mrf.mxu0
  %4940 = vdwg.mxu0
  %v4942 = vsel %vm724, %v4893, 0
  %v4945 = vsel %vm724, %v4898, 0
  %v4948 = vsel %vm724, %v4903, 0
  %v4951 = vsel %vm724, %v4908, 0
  %v4954 = vsel %vm724, %v4913, 0
  %v4957 = vsel %vm724, %v4918, 0
  %v4960 = vsel %vm724, %v4923, 0
  %v4963 = vsel %vm724, %v4928, 0
  %v4966 = vsel %vm724, %v4933, 0
  %v4969 = vsel %vm724, %v4938, 0
  %4971 = vmatprep.subr.mxu0 0.0
  %4972 = vmatpush1.msra.mxu0 0.0
  %4973 = vmatprep.subr.mxu0 0.0
  %4974 = vmatpush1.msra.mxu0 0.0
  %4975 = vmatprep.subr.mxu0 0.0
  %4976 = vmatpush1.msra.mxu0 0.0
  %4977 = vmatprep.subr.mxu0 0.0
  %4978 = vmatpush1.msra.mxu0 0.0
  %4979 = vmatprep.subr.mxu0 0.0
  %4980 = vmatpush1.msra.mxu0 0.0
  %4981 = vmatprep.subr.mxu0 0.0
  %4982 = vmatpush1.msra.mxu0 0.0
  %4983 = vmatprep.subr.mxu0 0.0
  %4984 = vmatpush1.msra.mxu0 0.0
  %4985 = vmatprep.subr.mxu0 0.0
  %4986 = vmatpush1.msra.mxu0 0.0
  %4987 = vmatprep.subr.mxu0 0.0
  %4988 = vmatpush1.msra.mxu0 0.0
  %4989 = vmatprep.subr.mxu0 0.0
  %4990 = vmatpush1.msra.mxu0 0.0
  %4991 = vmatprep.subr.mxu0 0.0
  %4992 = vmatpush1.msra.mxu0 0.0
  %4993 = vmatprep.subr.mxu0 0.0
  %4994 = vmatpush1.msra.mxu0 0.0
  %4995 = vmatprep.subr.mxu0 0.0
  %4996 = vmatpush1.msra.mxu0 0.0
  %4997 = vmatprep.subr.mxu0 0.0
  %4998 = vmatpush1.msra.mxu0 0.0
  %4999 = vmatprep.subr.mxu0 0.0
  %5000 = vmatpush1.msra.mxu0 %v4006
  %5001 = vmatprep.subr.mxu0 0.0
  %5002 = vmatpush1.msra.mxu0 %v4005
  %5003 = vmatprep.subr.mxu0 0.0
  %5004 = vmatpush2.msra.mxu0 0.0
  %5005 = vmatprep.subr.mxu0 0.0
  %5006 = vmatpush2.msra.mxu0 0.0
  %5007 = vmatprep.subr.mxu0 0.0
  %5008 = vmatpush2.msra.mxu0 0.0
  %5009 = vmatprep.subr.mxu0 0.0
  %5010 = vmatpush2.msra.mxu0 0.0
  %5011 = vmatprep.subr.mxu0 0.0
  %5012 = vmatpush2.msra.mxu0 0.0
  %5013 = vmatprep.subr.mxu0 0.0
  %5014 = vmatpush2.msra.mxu0 0.0
  %5015 = vmatprep.subr.mxu0 0.0
  %5016 = vmatpush2.msra.mxu0 0.0
  %5017 = vmatprep.subr.mxu0 0.0
  %5018 = vmatpush2.msra.mxu0 0.0
  %5019 = vmatprep.subr.mxu0 0.0
  %5020 = vmatpush2.msra.mxu0 0.0
  %5021 = vmatprep.subr.mxu0 0.0
  %5022 = vmatpush2.msra.mxu0 0.0
  %5023 = vmatprep.subr.mxu0 0.0
  %5024 = vmatpush2.msra.mxu0 0.0
  %5025 = vmatprep.subr.mxu0 0.0
  %5026 = vmatpush2.msra.mxu0 0.0
  %5027 = vmatprep.subr.mxu0 0.0
  %5028 = vmatpush2.msra.mxu0 0.0
  %5029 = vmatprep.subr.mxu0 0.0
  %5030 = vmatpush2.msra.mxu0 0.0
  %5031 = vmatprep.subr.mxu0 0.0
  %5032 = vmatpush2.msra.mxu0 0.0
  %5033 = vmatprep.subr.mxu0 0.0
  %5034 = vmatpush2.msra.mxu0 0.0
  %5035 = vmatprep.mubr.f32.mxu0 0.0
  %5036 = vmatmul.mubr.f32.gmra.mxu0 %v4942
  %v5037 = vpop.f32.mrf.mxu0
  %v5038 = vadd.f32 0.0, %v5037
  %v5039 = vpop.f32.mrf.mxu0
  %5040 = vmatprep.mubr.f32.mxu0 0.0
  %5041 = vmatmul.mubr.f32.gmra.mxu0 %v4945
  %v5042 = vpop.f32.mrf.mxu0
  %v5043 = vadd.f32 0.0, %v5042
  %v5044 = vpop.f32.mrf.mxu0
  %5045 = vmatprep.mubr.f32.mxu0 0.0
  %5046 = vmatmul.mubr.f32.gmra.mxu0 %v4948
  %v5047 = vpop.f32.mrf.mxu0
  %v5048 = vadd.f32 0.0, %v5047
  %v5049 = vpop.f32.mrf.mxu0
  %5050 = vmatprep.mubr.f32.mxu0 0.0
  %5051 = vmatmul.mubr.f32.gmra.mxu0 %v4951
  %v5052 = vpop.f32.mrf.mxu0
  %v5053 = vadd.f32 0.0, %v5052
  %v5054 = vpop.f32.mrf.mxu0
  %5055 = vmatprep.mubr.f32.mxu0 0.0
  %5056 = vmatmul.mubr.f32.gmra.mxu0 %v4954
  %v5057 = vpop.f32.mrf.mxu0
  %v5058 = vadd.f32 0.0, %v5057
  %v5059 = vpop.f32.mrf.mxu0
  %5060 = vmatprep.mubr.f32.mxu0 0.0
  %5061 = vmatmul.mubr.f32.gmra.mxu0 %v4957
  %v5062 = vpop.f32.mrf.mxu0
  %v5063 = vadd.f32 0.0, %v5062
  %v5064 = vpop.f32.mrf.mxu0
  %5065 = vmatprep.mubr.f32.mxu0 0.0
  %5066 = vmatmul.mubr.f32.gmra.mxu0 %v4960
  %v5067 = vpop.f32.mrf.mxu0
  %v5068 = vadd.f32 0.0, %v5067
  %v5069 = vpop.f32.mrf.mxu0
  %5070 = vmatprep.mubr.f32.mxu0 0.0
  %5071 = vmatmul.mubr.f32.gmra.mxu0 %v4963
  %v5072 = vpop.f32.mrf.mxu0
  %v5073 = vadd.f32 0.0, %v5072
  %v5074 = vpop.f32.mrf.mxu0
  %5075 = vmatprep.mubr.f32.mxu0 0.0
  %5076 = vmatmul.mubr.f32.gmra.mxu0 %v4966
  %v5077 = vpop.f32.mrf.mxu0
  %v5078 = vadd.f32 0.0, %v5077
  %v5079 = vpop.f32.mrf.mxu0
  %5080 = vmatprep.mubr.f32.mxu0 0.0
  %5081 = vmatmul.mubr.f32.gmra.mxu0 %v4969
  %v5082 = vpop.f32.mrf.mxu0
  %v5083 = vadd.f32 0.0, %v5082
  %v5084 = vpop.f32.mrf.mxu0
  %5085 = vdwg.mxu0
  %v5087 = vsel %vm724, %v4403, 0
  %v5090 = vsel %vm724, %v4408, 0
  %v5093 = vsel %vm724, %v4413, 0
  %v5096 = vsel %vm724, %v4418, 0
  %v5099 = vsel %vm724, %v4423, 0
  %v5102 = vsel %vm724, %v4428, 0
  %v5105 = vsel %vm724, %v4433, 0
  %v5108 = vsel %vm724, %v4438, 0
  %v5111 = vsel %vm724, %v4443, 0
  %v5114 = vsel %vm724, %v4448, 0
  %5116 = vmatprep.subr.mxu0 0.0
  %5117 = vmatpush1.msra.mxu0 0.0
  %5118 = vmatprep.subr.mxu0 0.0
  %5119 = vmatpush1.msra.mxu0 0.0
  %5120 = vmatprep.subr.mxu0 0.0
  %5121 = vmatpush1.msra.mxu0 0.0
  %5122 = vmatprep.subr.mxu0 0.0
  %5123 = vmatpush1.msra.mxu0 0.0
  %5124 = vmatprep.subr.mxu0 0.0
  %5125 = vmatpush1.msra.mxu0 0.0
  %5126 = vmatprep.subr.mxu0 0.0
  %5127 = vmatpush1.msra.mxu0 0.0
  %5128 = vmatprep.subr.mxu0 0.0
  %5129 = vmatpush1.msra.mxu0 0.0
  %5130 = vmatprep.subr.mxu0 0.0
  %5131 = vmatpush1.msra.mxu0 0.0
  %5132 = vmatprep.subr.mxu0 0.0
  %5133 = vmatpush1.msra.mxu0 0.0
  %5134 = vmatprep.subr.mxu0 0.0
  %5135 = vmatpush1.msra.mxu0 0.0
  %5136 = vmatprep.subr.mxu0 0.0
  %5137 = vmatpush1.msra.mxu0 0.0
  %5138 = vmatprep.subr.mxu0 0.0
  %5139 = vmatpush1.msra.mxu0 0.0
  %5140 = vmatprep.subr.mxu0 0.0
  %5141 = vmatpush1.msra.mxu0 0.0
  %5142 = vmatprep.subr.mxu0 0.0
  %5143 = vmatpush1.msra.mxu0 0.0
  %5144 = vmatprep.subr.mxu0 0.0
  %5145 = vmatpush1.msra.mxu0 %v4004
  %5146 = vmatprep.subr.mxu0 0.0
  %5147 = vmatpush1.msra.mxu0 %v4003
  %5148 = vmatprep.subr.mxu0 0.0
  %5149 = vmatpush2.msra.mxu0 0.0
  %5150 = vmatprep.subr.mxu0 0.0
  %5151 = vmatpush2.msra.mxu0 0.0
  %5152 = vmatprep.subr.mxu0 0.0
  %5153 = vmatpush2.msra.mxu0 0.0
  %5154 = vmatprep.subr.mxu0 0.0
  %5155 = vmatpush2.msra.mxu0 0.0
  %5156 = vmatprep.subr.mxu0 0.0
  %5157 = vmatpush2.msra.mxu0 0.0
  %5158 = vmatprep.subr.mxu0 0.0
  %5159 = vmatpush2.msra.mxu0 0.0
  %5160 = vmatprep.subr.mxu0 0.0
  %5161 = vmatpush2.msra.mxu0 0.0
  %5162 = vmatprep.subr.mxu0 0.0
  %5163 = vmatpush2.msra.mxu0 0.0
  %5164 = vmatprep.subr.mxu0 0.0
  %5165 = vmatpush2.msra.mxu0 0.0
  %5166 = vmatprep.subr.mxu0 0.0
  %5167 = vmatpush2.msra.mxu0 0.0
  %5168 = vmatprep.subr.mxu0 0.0
  %5169 = vmatpush2.msra.mxu0 0.0
  %5170 = vmatprep.subr.mxu0 0.0
  %5171 = vmatpush2.msra.mxu0 0.0
  %5172 = vmatprep.subr.mxu0 0.0
  %5173 = vmatpush2.msra.mxu0 0.0
  %5174 = vmatprep.subr.mxu0 0.0
  %5175 = vmatpush2.msra.mxu0 0.0
  %5176 = vmatprep.subr.mxu0 0.0
  %5177 = vmatpush2.msra.mxu0 0.0
  %5178 = vmatprep.subr.mxu0 0.0
  %5179 = vmatpush2.msra.mxu0 0.0
  %5180 = vmatprep.mubr.f32.mxu0 0.0
  %5181 = vmatmul.mubr.f32.gmra.mxu0 %v5087
  %v5182 = vpop.f32.mrf.mxu0
  %v5183 = vadd.f32 %v5038, %v5182
  %v5184 = vpop.f32.mrf.mxu0
  %5185 = vmatprep.mubr.f32.mxu0 0.0
  %5186 = vmatmul.mubr.f32.gmra.mxu0 %v5090
  %v5187 = vpop.f32.mrf.mxu0
  %v5188 = vadd.f32 %v5043, %v5187
  %v5189 = vpop.f32.mrf.mxu0
  %5190 = vmatprep.mubr.f32.mxu0 0.0
  %5191 = vmatmul.mubr.f32.gmra.mxu0 %v5093
  %v5192 = vpop.f32.mrf.mxu0
  %v5193 = vadd.f32 %v5048, %v5192
  %v5194 = vpop.f32.mrf.mxu0
  %5195 = vmatprep.mubr.f32.mxu0 0.0
  %5196 = vmatmul.mubr.f32.gmra.mxu0 %v5096
  %v5197 = vpop.f32.mrf.mxu0
  %v5198 = vadd.f32 %v5053, %v5197
  %v5199 = vpop.f32.mrf.mxu0
  %5200 = vmatprep.mubr.f32.mxu0 0.0
  %5201 = vmatmul.mubr.f32.gmra.mxu0 %v5099
  %v5202 = vpop.f32.mrf.mxu0
  %v5203 = vadd.f32 %v5058, %v5202
  %v5204 = vpop.f32.mrf.mxu0
  %5205 = vmatprep.mubr.f32.mxu0 0.0
  %5206 = vmatmul.mubr.f32.gmra.mxu0 %v5102
  %v5207 = vpop.f32.mrf.mxu0
  %v5208 = vadd.f32 %v5063, %v5207
  %v5209 = vpop.f32.mrf.mxu0
  %5210 = vmatprep.mubr.f32.mxu0 0.0
  %5211 = vmatmul.mubr.f32.gmra.mxu0 %v5105
  %v5212 = vpop.f32.mrf.mxu0
  %v5213 = vadd.f32 %v5068, %v5212
  %v5214 = vpop.f32.mrf.mxu0
  %5215 = vmatprep.mubr.f32.mxu0 0.0
  %5216 = vmatmul.mubr.f32.gmra.mxu0 %v5108
  %v5217 = vpop.f32.mrf.mxu0
  %v5218 = vadd.f32 %v5073, %v5217
  %v5219 = vpop.f32.mrf.mxu0
  %5220 = vmatprep.mubr.f32.mxu0 0.0
  %5221 = vmatmul.mubr.f32.gmra.mxu0 %v5111
  %v5222 = vpop.f32.mrf.mxu0
  %v5223 = vadd.f32 %v5078, %v5222
  %v5224 = vpop.f32.mrf.mxu0
  %5225 = vmatprep.mubr.f32.mxu0 0.0
  %5226 = vmatmul.mubr.f32.gmra.mxu0 %v5114
  %v5227 = vpop.f32.mrf.mxu0
  %v5228 = vadd.f32 %v5083, %v5227
  %v5229 = vpop.f32.mrf.mxu0
  %5230 = vdwg.mxu0
  %5231 = vrot.lane.b32.xlu0 %v3945, 96
  %v5232 = vpop.permute.xlu0 %5231
  %5233 = vrot.lane.b32.xlu0 %v3951, 96
  %v5234 = vpop.permute.xlu0 %5233
  %5235 = vrot.lane.b32.xlu0 %v3957, 96
  %v5236 = vpop.permute.xlu0 %5235
  %5237 = vrot.lane.b32.xlu0 %v3963, 96
  %v5238 = vpop.permute.xlu0 %5237
  %5239 = vrot.lane.b32.xlu0 %v3969, 96
  %v5240 = vpop.permute.xlu0 %5239
  %5241 = vrot.lane.b32.xlu0 %v3975, 96
  %v5242 = vpop.permute.xlu0 %5241
  %5243 = vrot.lane.b32.xlu0 %v3981, 96
  %v5244 = vpop.permute.xlu0 %5243
  %5245 = vrot.lane.b32.xlu0 %v3987, 96
  %v5246 = vpop.permute.xlu0 %5245
  %5247 = vrot.lane.b32.xlu0 %v3993, 96
  %v5248 = vpop.permute.xlu0 %5247
  %5249 = vrot.lane.b32.xlu0 %v3999, 96
  %v5250 = vpop.permute.xlu0 %5249
  %5251 = vrot.lane.b32.xlu0 %v3945, 32
  %v5252 = vpop.permute.xlu0 %5251
  %5253 = vrot.lane.b32.xlu0 %v3951, 32
  %v5254 = vpop.permute.xlu0 %5253
  %5255 = vrot.lane.b32.xlu0 %v3957, 32
  %v5256 = vpop.permute.xlu0 %5255
  %5257 = vrot.lane.b32.xlu0 %v3963, 32
  %v5258 = vpop.permute.xlu0 %5257
  %5259 = vrot.lane.b32.xlu0 %v3969, 32
  %v5260 = vpop.permute.xlu0 %5259
  %5261 = vrot.lane.b32.xlu0 %v3975, 32
  %v5262 = vpop.permute.xlu0 %5261
  %5263 = vrot.lane.b32.xlu0 %v3981, 32
  %v5264 = vpop.permute.xlu0 %5263
  %5265 = vrot.lane.b32.xlu0 %v3987, 32
  %v5266 = vpop.permute.xlu0 %5265
  %5267 = vrot.lane.b32.xlu0 %v3993, 32
  %v5268 = vpop.permute.xlu0 %5267
  %5269 = vrot.lane.b32.xlu0 %v3999, 32
  %v5270 = vpop.permute.xlu0 %5269
  %v5271 = vsel %vm724, %v5232, 0
  %v5273 = vsel %vm724, %v5234, 0
  %v5275 = vsel %vm724, %v5236, 0
  %v5277 = vsel %vm724, %v5238, 0
  %v5279 = vsel %vm724, %v5240, 0
  %v5281 = vsel %vm724, %v5242, 0
  %v5283 = vsel %vm724, %v5244, 0
  %v5285 = vsel %vm724, %v5246, 0
  %v5287 = vsel %vm724, %v5248, 0
  %v5289 = vsel %vm724, %v5250, 0
  %v5291 = vsel %vm724, %v5252, 0
  %v5293 = vsel %vm724, %v5254, 0
  %v5295 = vsel %vm724, %v5256, 0
  %v5297 = vsel %vm724, %v5258, 0
  %v5299 = vsel %vm724, %v5260, 0
  %v5301 = vsel %vm724, %v5262, 0
  %v5303 = vsel %vm724, %v5264, 0
  %v5305 = vsel %vm724, %v5266, 0
  %v5307 = vsel %vm724, %v5268, 0
  %v5309 = vsel %vm724, %v5270, 0
  %5311 = vmatprep.subr.mxu0 0.0
  %5312 = vmatpush1.xpose.msra.mxu0 0.0
  %5313 = vmatprep.subr.mxu0 0.0
  %5314 = vmatpush1.xpose.msra.mxu0 0.0
  %5315 = vmatprep.subr.mxu0 0.0
  %5316 = vmatpush1.xpose.msra.mxu0 0.0
  %5317 = vmatprep.subr.mxu0 0.0
  %5318 = vmatpush1.xpose.msra.mxu0 0.0
  %5319 = vmatprep.subr.mxu0 0.0
  %5320 = vmatpush1.xpose.msra.mxu0 0.0
  %5321 = vmatprep.subr.mxu0 0.0
  %5322 = vmatpush1.xpose.msra.mxu0 0.0
  %5323 = vmatprep.subr.mxu0 0.0
  %5324 = vmatpush1.xpose.msra.mxu0 %v5309
  %5325 = vmatprep.subr.mxu0 0.0
  %5326 = vmatpush1.xpose.msra.mxu0 %v5307
  %5327 = vmatprep.subr.mxu0 0.0
  %5328 = vmatpush1.xpose.msra.mxu0 %v5305
  %5329 = vmatprep.subr.mxu0 0.0
  %5330 = vmatpush1.xpose.msra.mxu0 %v5303
  %5331 = vmatprep.subr.mxu0 0.0
  %5332 = vmatpush1.xpose.msra.mxu0 %v5301
  %5333 = vmatprep.subr.mxu0 0.0
  %5334 = vmatpush1.xpose.msra.mxu0 %v5299
  %5335 = vmatprep.subr.mxu0 0.0
  %5336 = vmatpush1.xpose.msra.mxu0 %v5297
  %5337 = vmatprep.subr.mxu0 0.0
  %5338 = vmatpush1.xpose.msra.mxu0 %v5295
  %5339 = vmatprep.subr.mxu0 0.0
  %5340 = vmatpush1.xpose.msra.mxu0 %v5293
  %5341 = vmatprep.subr.mxu0 0.0
  %5342 = vmatpush1.xpose.msra.mxu0 %v5291
  %5343 = vmatprep.subr.mxu0 0.0
  %5344 = vmatpush2.xpose.msra.mxu0 0.0
  %5345 = vmatprep.subr.mxu0 0.0
  %5346 = vmatpush2.xpose.msra.mxu0 0.0
  %5347 = vmatprep.subr.mxu0 0.0
  %5348 = vmatpush2.xpose.msra.mxu0 0.0
  %5349 = vmatprep.subr.mxu0 0.0
  %5350 = vmatpush2.xpose.msra.mxu0 0.0
  %5351 = vmatprep.subr.mxu0 0.0
  %5352 = vmatpush2.xpose.msra.mxu0 0.0
  %5353 = vmatprep.subr.mxu0 0.0
  %5354 = vmatpush2.xpose.msra.mxu0 0.0
  %5355 = vmatprep.subr.mxu0 0.0
  %5356 = vmatpush2.xpose.msra.mxu0 0.0
  %5357 = vmatprep.subr.mxu0 0.0
  %5358 = vmatpush2.xpose.msra.mxu0 0.0
  %5359 = vmatprep.subr.mxu0 0.0
  %5360 = vmatpush2.xpose.msra.mxu0 0.0
  %5361 = vmatprep.subr.mxu0 0.0
  %5362 = vmatpush2.xpose.msra.mxu0 0.0
  %5363 = vmatprep.subr.mxu0 0.0
  %5364 = vmatpush2.xpose.msra.mxu0 0.0
  %5365 = vmatprep.subr.mxu0 0.0
  %5366 = vmatpush2.xpose.msra.mxu0 0.0
  %5367 = vmatprep.subr.mxu0 0.0
  %5368 = vmatpush2.xpose.msra.mxu0 0.0
  %5369 = vmatprep.subr.mxu0 0.0
  %5370 = vmatpush2.xpose.msra.mxu0 0.0
  %5371 = vmatprep.subr.mxu0 0.0
  %5372 = vmatpush2.xpose.msra.mxu0 0.0
  %5373 = vmatprep.subr.mxu0 0.0
  %5374 = vmatpush2.xpose.msra.mxu0 0.0
  %5375 = vmatprep.mubr.f32.mxu0 0.0
  %5376 = vmatmul.mubr.f32.gmra.mxu0 %v5271
  %v5377 = vpop.f32.mrf.mxu0
  %v5378 = vadd.f32 %v491, %v5377
  %v5379 = vpop.f32.mrf.mxu0
  %5380 = vmatprep.mubr.f32.mxu0 0.0
  %5381 = vmatmul.mubr.f32.gmra.mxu0 %v5273
  %v5382 = vpop.f32.mrf.mxu0
  %v5383 = vadd.f32 %v492, %v5382
  %v5384 = vpop.f32.mrf.mxu0
  %5385 = vmatprep.mubr.f32.mxu0 0.0
  %5386 = vmatmul.mubr.f32.gmra.mxu0 %v5275
  %v5387 = vpop.f32.mrf.mxu0
  %v5388 = vadd.f32 %v493, %v5387
  %v5389 = vpop.f32.mrf.mxu0
  %5390 = vmatprep.mubr.f32.mxu0 0.0
  %5391 = vmatmul.mubr.f32.gmra.mxu0 %v5277
  %v5392 = vpop.f32.mrf.mxu0
  %v5393 = vadd.f32 %v494, %v5392
  %v5394 = vpop.f32.mrf.mxu0
  %5395 = vmatprep.mubr.f32.mxu0 0.0
  %5396 = vmatmul.mubr.f32.gmra.mxu0 %v5279
  %v5397 = vpop.f32.mrf.mxu0
  %v5398 = vadd.f32 %v495, %v5397
  %v5399 = vpop.f32.mrf.mxu0
  %5400 = vmatprep.mubr.f32.mxu0 0.0
  %5401 = vmatmul.mubr.f32.gmra.mxu0 %v5281
  %v5402 = vpop.f32.mrf.mxu0
  %v5403 = vadd.f32 %v496, %v5402
  %v5404 = vpop.f32.mrf.mxu0
  %5405 = vmatprep.mubr.f32.mxu0 0.0
  %5406 = vmatmul.mubr.f32.gmra.mxu0 %v5283
  %v5407 = vpop.f32.mrf.mxu0
  %v5408 = vadd.f32 %v497, %v5407
  %v5409 = vpop.f32.mrf.mxu0
  %5410 = vmatprep.mubr.f32.mxu0 0.0
  %5411 = vmatmul.mubr.f32.gmra.mxu0 %v5285
  %v5412 = vpop.f32.mrf.mxu0
  %v5413 = vadd.f32 %v498, %v5412
  %v5414 = vpop.f32.mrf.mxu0
  %5415 = vmatprep.mubr.f32.mxu0 0.0
  %5416 = vmatmul.mubr.f32.gmra.mxu0 %v5287
  %v5417 = vpop.f32.mrf.mxu0
  %v5418 = vadd.f32 %v499, %v5417
  %v5419 = vpop.f32.mrf.mxu0
  %5420 = vmatprep.mubr.f32.mxu0 0.0
  %5421 = vmatmul.mubr.f32.gmra.mxu0 %v5289
  %v5422 = vpop.f32.mrf.mxu0
  %v5423 = vadd.f32 %v500, %v5422
  %v5424 = vpop.f32.mrf.mxu0
  %5425 = vdwg.mxu0
  %v5426 = vsel %vm880, %v5378, -inf
  %5427 = vmax.xlane.f32.xlu0 %v5426
  %v5428 = vpop.xlane.xlu0 %5427
  %v5429 = vsel %vm880, %v5383, -inf
  %5430 = vmax.xlane.f32.xlu0 %v5429
  %v5431 = vpop.xlane.xlu0 %5430
  %v5432 = vsel %vm880, %v5388, -inf
  %5433 = vmax.xlane.f32.xlu0 %v5432
  %v5434 = vpop.xlane.xlu0 %5433
  %v5435 = vsel %vm880, %v5393, -inf
  %5436 = vmax.xlane.f32.xlu0 %v5435
  %v5437 = vpop.xlane.xlu0 %5436
  %v5438 = vsel %vm880, %v5398, -inf
  %5439 = vmax.xlane.f32.xlu0 %v5438
  %v5440 = vpop.xlane.xlu0 %5439
  %v5441 = vsel %vm880, %v5403, -inf
  %5442 = vmax.xlane.f32.xlu0 %v5441
  %v5443 = vpop.xlane.xlu0 %5442
  %v5444 = vsel %vm880, %v5408, -inf
  %5445 = vmax.xlane.f32.xlu0 %v5444
  %v5446 = vpop.xlane.xlu0 %5445
  %v5447 = vsel %vm880, %v5413, -inf
  %5448 = vmax.xlane.f32.xlu0 %v5447
  %v5449 = vpop.xlane.xlu0 %5448
  %v5450 = vsel %vm880, %v5418, -inf
  %5451 = vmax.xlane.f32.xlu0 %v5450
  %v5452 = vpop.xlane.xlu0 %5451
  %v5453 = vsel %vm880, %v5423, -inf
  %5454 = vmax.xlane.f32.xlu0 %v5453
  %v5455 = vpop.xlane.xlu0 %5454
  %v5456 = vsub.f32 %v5378, %v5428
  %v5457 = vsub.f32 %v5383, %v5431
  %v5458 = vsub.f32 %v5388, %v5434
  %v5459 = vsub.f32 %v5393, %v5437
  %v5460 = vsub.f32 %v5398, %v5440
  %v5461 = vsub.f32 %v5403, %v5443
  %v5462 = vsub.f32 %v5408, %v5446
  %v5463 = vsub.f32 %v5413, %v5449
  %v5464 = vsub.f32 %v5418, %v5452
  %v5465 = vsub.f32 %v5423, %v5455
  %v5466 = vmul.f32 %v5456, 1.442695
  %v5467 = vpow.pop %v5466
  %v5468 = vmul.f32 %v5457, 1.442695
  %v5469 = vpow.pop %v5468
  %v5470 = vmul.f32 %v5458, 1.442695
  %v5471 = vpow.pop %v5470
  %v5472 = vmul.f32 %v5459, 1.442695
  %v5473 = vpow.pop %v5472
  %v5474 = vmul.f32 %v5460, 1.442695
  %v5475 = vpow.pop %v5474
  %v5476 = vmul.f32 %v5461, 1.442695
  %v5477 = vpow.pop %v5476
  %v5478 = vmul.f32 %v5462, 1.442695
  %v5479 = vpow.pop %v5478
  %v5480 = vmul.f32 %v5463, 1.442695
  %v5481 = vpow.pop %v5480
  %v5482 = vmul.f32 %v5464, 1.442695
  %v5483 = vpow.pop %v5482
  %v5484 = vmul.f32 %v5465, 1.442695
  %v5485 = vpow.pop %v5484
  %v5486 = vsel %vm880, %v5467, 0.0
  %5487 = vadd.xlane.f32.xlu0 %v5486
  %v5488 = vpop.xlane.xlu0 %5487
  %v5489 = vsel %vm880, %v5469, 0.0
  %5490 = vadd.xlane.f32.xlu0 %v5489
  %v5491 = vpop.xlane.xlu0 %5490
  %v5492 = vsel %vm880, %v5471, 0.0
  %5493 = vadd.xlane.f32.xlu0 %v5492
  %v5494 = vpop.xlane.xlu0 %5493
  %v5495 = vsel %vm880, %v5473, 0.0
  %5496 = vadd.xlane.f32.xlu0 %v5495
  %v5497 = vpop.xlane.xlu0 %5496
  %v5498 = vsel %vm880, %v5475, 0.0
  %5499 = vadd.xlane.f32.xlu0 %v5498
  %v5500 = vpop.xlane.xlu0 %5499
  %v5501 = vsel %vm880, %v5477, 0.0
  %5502 = vadd.xlane.f32.xlu0 %v5501
  %v5503 = vpop.xlane.xlu0 %5502
  %v5504 = vsel %vm880, %v5479, 0.0
  %5505 = vadd.xlane.f32.xlu0 %v5504
  %v5506 = vpop.xlane.xlu0 %5505
  %v5507 = vsel %vm880, %v5481, 0.0
  %5508 = vadd.xlane.f32.xlu0 %v5507
  %v5509 = vpop.xlane.xlu0 %5508
  %v5510 = vsel %vm880, %v5483, 0.0
  %5511 = vadd.xlane.f32.xlu0 %v5510
  %v5512 = vpop.xlane.xlu0 %5511
  %v5513 = vsel %vm880, %v5485, 0.0
  %5514 = vadd.xlane.f32.xlu0 %v5513
  %v5515 = vpop.xlane.xlu0 %5514
  %v5516 = vrcp.pop %v5488
  %v5517 = vrcp.pop %v5491
  %v5518 = vrcp.pop %v5494
  %v5519 = vrcp.pop %v5497
  %v5520 = vrcp.pop %v5500
  %v5521 = vrcp.pop %v5503
  %v5522 = vrcp.pop %v5506
  %v5523 = vrcp.pop %v5509
  %v5524 = vrcp.pop %v5512
  %v5525 = vrcp.pop %v5515
  %v5526 = vmul.f32 %v5467, %v5516
  %v5527 = vmul.f32 %v5469, %v5517
  %v5528 = vmul.f32 %v5471, %v5518
  %v5529 = vmul.f32 %v5473, %v5519
  %v5530 = vmul.f32 %v5475, %v5520
  %v5531 = vmul.f32 %v5477, %v5521
  %v5532 = vmul.f32 %v5479, %v5522
  %v5533 = vmul.f32 %v5481, %v5523
  %v5534 = vmul.f32 %v5483, %v5524
  %v5535 = vmul.f32 %v5485, %v5525
  %5536 = vrot.lane.b32.xlu0 %v3947, 96
  %v5537 = vpop.permute.xlu0 %5536
  %5538 = vrot.lane.b32.xlu0 %v3953, 96
  %v5539 = vpop.permute.xlu0 %5538
  %5540 = vrot.lane.b32.xlu0 %v3959, 96
  %v5541 = vpop.permute.xlu0 %5540
  %5542 = vrot.lane.b32.xlu0 %v3965, 96
  %v5543 = vpop.permute.xlu0 %5542
  %5544 = vrot.lane.b32.xlu0 %v3971, 96
  %v5545 = vpop.permute.xlu0 %5544
  %5546 = vrot.lane.b32.xlu0 %v3977, 96
  %v5547 = vpop.permute.xlu0 %5546
  %5548 = vrot.lane.b32.xlu0 %v3983, 96
  %v5549 = vpop.permute.xlu0 %5548
  %5550 = vrot.lane.b32.xlu0 %v3989, 96
  %v5551 = vpop.permute.xlu0 %5550
  %5552 = vrot.lane.b32.xlu0 %v3995, 96
  %v5553 = vpop.permute.xlu0 %5552
  %5554 = vrot.lane.b32.xlu0 %v4001, 96
  %v5555 = vpop.permute.xlu0 %5554
  %v5567 = vsel %vm880, %v5526, 0
  %v5570 = vsel %vm880, %v5527, 0
  %v5573 = vsel %vm880, %v5528, 0
  %v5576 = vsel %vm880, %v5529, 0
  %v5579 = vsel %vm880, %v5530, 0
  %v5582 = vsel %vm880, %v5531, 0
  %v5585 = vsel %vm880, %v5532, 0
  %v5588 = vsel %vm880, %v5533, 0
  %v5591 = vsel %vm880, %v5534, 0
  %v5594 = vsel %vm880, %v5535, 0
  %5596 = vmatprep.subr.mxu0 0.0
  %5597 = vmatpush1.msra.mxu0 0.0
  %5598 = vmatprep.subr.mxu0 0.0
  %5599 = vmatpush1.msra.mxu0 0.0
  %5600 = vmatprep.subr.mxu0 0.0
  %5601 = vmatpush1.msra.mxu0 0.0
  %5602 = vmatprep.subr.mxu0 0.0
  %5603 = vmatpush1.msra.mxu0 0.0
  %5604 = vmatprep.subr.mxu0 0.0
  %5605 = vmatpush1.msra.mxu0 0.0
  %5606 = vmatprep.subr.mxu0 0.0
  %5607 = vmatpush1.msra.mxu0 0.0
  %5608 = vmatprep.subr.mxu0 0.0
  %5609 = vmatpush1.msra.mxu0 %v5555
  %5610 = vmatprep.subr.mxu0 0.0
  %5611 = vmatpush1.msra.mxu0 %v5553
  %5612 = vmatprep.subr.mxu0 0.0
  %5613 = vmatpush1.msra.mxu0 %v5551
  %5614 = vmatprep.subr.mxu0 0.0
  %5615 = vmatpush1.msra.mxu0 %v5549
  %5616 = vmatprep.subr.mxu0 0.0
  %5617 = vmatpush1.msra.mxu0 %v5547
  %5618 = vmatprep.subr.mxu0 0.0
  %5619 = vmatpush1.msra.mxu0 %v5545
  %5620 = vmatprep.subr.mxu0 0.0
  %5621 = vmatpush1.msra.mxu0 %v5543
  %5622 = vmatprep.subr.mxu0 0.0
  %5623 = vmatpush1.msra.mxu0 %v5541
  %5624 = vmatprep.subr.mxu0 0.0
  %5625 = vmatpush1.msra.mxu0 %v5539
  %5626 = vmatprep.subr.mxu0 0.0
  %5627 = vmatpush1.msra.mxu0 %v5537
  %5628 = vmatprep.subr.mxu0 0.0
  %5629 = vmatpush2.msra.mxu0 0.0
  %5630 = vmatprep.subr.mxu0 0.0
  %5631 = vmatpush2.msra.mxu0 0.0
  %5632 = vmatprep.subr.mxu0 0.0
  %5633 = vmatpush2.msra.mxu0 0.0
  %5634 = vmatprep.subr.mxu0 0.0
  %5635 = vmatpush2.msra.mxu0 0.0
  %5636 = vmatprep.subr.mxu0 0.0
  %5637 = vmatpush2.msra.mxu0 0.0
  %5638 = vmatprep.subr.mxu0 0.0
  %5639 = vmatpush2.msra.mxu0 0.0
  %5640 = vmatprep.subr.mxu0 0.0
  %5641 = vmatpush2.msra.mxu0 0.0
  %5642 = vmatprep.subr.mxu0 0.0
  %5643 = vmatpush2.msra.mxu0 0.0
  %5644 = vmatprep.subr.mxu0 0.0
  %5645 = vmatpush2.msra.mxu0 0.0
  %5646 = vmatprep.subr.mxu0 0.0
  %5647 = vmatpush2.msra.mxu0 0.0
  %5648 = vmatprep.subr.mxu0 0.0
  %5649 = vmatpush2.msra.mxu0 0.0
  %5650 = vmatprep.subr.mxu0 0.0
  %5651 = vmatpush2.msra.mxu0 0.0
  %5652 = vmatprep.subr.mxu0 0.0
  %5653 = vmatpush2.msra.mxu0 0.0
  %5654 = vmatprep.subr.mxu0 0.0
  %5655 = vmatpush2.msra.mxu0 0.0
  %5656 = vmatprep.subr.mxu0 0.0
  %5657 = vmatpush2.msra.mxu0 0.0
  %5658 = vmatprep.subr.mxu0 0.0
  %5659 = vmatpush2.msra.mxu0 0.0
  %5660 = vmatprep.mubr.f32.mxu0 0.0
  %5661 = vmatmul.mubr.f32.gmra.mxu0 %v5567
  %v5662 = vpop.f32.mrf.mxu0
  %v5663 = vadd.f32 0.0, %v5662
  %v5664 = vpop.f32.mrf.mxu0
  %5665 = vmatprep.mubr.f32.mxu0 0.0
  %5666 = vmatmul.mubr.f32.gmra.mxu0 %v5570
  %v5667 = vpop.f32.mrf.mxu0
  %v5668 = vadd.f32 0.0, %v5667
  %v5669 = vpop.f32.mrf.mxu0
  %5670 = vmatprep.mubr.f32.mxu0 0.0
  %5671 = vmatmul.mubr.f32.gmra.mxu0 %v5573
  %v5672 = vpop.f32.mrf.mxu0
  %v5673 = vadd.f32 0.0, %v5672
  %v5674 = vpop.f32.mrf.mxu0
  %5675 = vmatprep.mubr.f32.mxu0 0.0
  %5676 = vmatmul.mubr.f32.gmra.mxu0 %v5576
  %v5677 = vpop.f32.mrf.mxu0
  %v5678 = vadd.f32 0.0, %v5677
  %v5679 = vpop.f32.mrf.mxu0
  %5680 = vmatprep.mubr.f32.mxu0 0.0
  %5681 = vmatmul.mubr.f32.gmra.mxu0 %v5579
  %v5682 = vpop.f32.mrf.mxu0
  %v5683 = vadd.f32 0.0, %v5682
  %v5684 = vpop.f32.mrf.mxu0
  %5685 = vmatprep.mubr.f32.mxu0 0.0
  %5686 = vmatmul.mubr.f32.gmra.mxu0 %v5582
  %v5687 = vpop.f32.mrf.mxu0
  %v5688 = vadd.f32 0.0, %v5687
  %v5689 = vpop.f32.mrf.mxu0
  %5690 = vmatprep.mubr.f32.mxu0 0.0
  %5691 = vmatmul.mubr.f32.gmra.mxu0 %v5585
  %v5692 = vpop.f32.mrf.mxu0
  %v5693 = vadd.f32 0.0, %v5692
  %v5694 = vpop.f32.mrf.mxu0
  %5695 = vmatprep.mubr.f32.mxu0 0.0
  %5696 = vmatmul.mubr.f32.gmra.mxu0 %v5588
  %v5697 = vpop.f32.mrf.mxu0
  %v5698 = vadd.f32 0.0, %v5697
  %v5699 = vpop.f32.mrf.mxu0
  %5700 = vmatprep.mubr.f32.mxu0 0.0
  %5701 = vmatmul.mubr.f32.gmra.mxu0 %v5591
  %v5702 = vpop.f32.mrf.mxu0
  %v5703 = vadd.f32 0.0, %v5702
  %v5704 = vpop.f32.mrf.mxu0
  %5705 = vmatprep.mubr.f32.mxu0 0.0
  %5706 = vmatmul.mubr.f32.gmra.mxu0 %v5594
  %v5707 = vpop.f32.mrf.mxu0
  %v5708 = vadd.f32 0.0, %v5707
  %v5709 = vpop.f32.mrf.mxu0
  %5710 = vdwg.mxu0
  %v5712 = vsel %vm724, %v5663, 0
  %v5715 = vsel %vm724, %v5668, 0
  %v5718 = vsel %vm724, %v5673, 0
  %v5721 = vsel %vm724, %v5678, 0
  %v5724 = vsel %vm724, %v5683, 0
  %v5727 = vsel %vm724, %v5688, 0
  %v5730 = vsel %vm724, %v5693, 0
  %v5733 = vsel %vm724, %v5698, 0
  %v5736 = vsel %vm724, %v5703, 0
  %v5739 = vsel %vm724, %v5708, 0
  %5741 = vmatprep.subr.mxu0 0.0
  %5742 = vmatpush1.msra.mxu0 0.0
  %5743 = vmatprep.subr.mxu0 0.0
  %5744 = vmatpush1.msra.mxu0 0.0
  %5745 = vmatprep.subr.mxu0 0.0
  %5746 = vmatpush1.msra.mxu0 0.0
  %5747 = vmatprep.subr.mxu0 0.0
  %5748 = vmatpush1.msra.mxu0 0.0
  %5749 = vmatprep.subr.mxu0 0.0
  %5750 = vmatpush1.msra.mxu0 0.0
  %5751 = vmatprep.subr.mxu0 0.0
  %5752 = vmatpush1.msra.mxu0 0.0
  %5753 = vmatprep.subr.mxu0 0.0
  %5754 = vmatpush1.msra.mxu0 0.0
  %5755 = vmatprep.subr.mxu0 0.0
  %5756 = vmatpush1.msra.mxu0 0.0
  %5757 = vmatprep.subr.mxu0 0.0
  %5758 = vmatpush1.msra.mxu0 0.0
  %5759 = vmatprep.subr.mxu0 0.0
  %5760 = vmatpush1.msra.mxu0 0.0
  %5761 = vmatprep.subr.mxu0 0.0
  %5762 = vmatpush1.msra.mxu0 0.0
  %5763 = vmatprep.subr.mxu0 0.0
  %5764 = vmatpush1.msra.mxu0 0.0
  %5765 = vmatprep.subr.mxu0 0.0
  %5766 = vmatpush1.msra.mxu0 0.0
  %5767 = vmatprep.subr.mxu0 0.0
  %5768 = vmatpush1.msra.mxu0 0.0
  %5769 = vmatprep.subr.mxu0 0.0
  %5770 = vmatpush1.msra.mxu0 %v4008
  %5771 = vmatprep.subr.mxu0 0.0
  %5772 = vmatpush1.msra.mxu0 %v4007
  %5773 = vmatprep.subr.mxu0 0.0
  %5774 = vmatpush2.msra.mxu0 0.0
  %5775 = vmatprep.subr.mxu0 0.0
  %5776 = vmatpush2.msra.mxu0 0.0
  %5777 = vmatprep.subr.mxu0 0.0
  %5778 = vmatpush2.msra.mxu0 0.0
  %5779 = vmatprep.subr.mxu0 0.0
  %5780 = vmatpush2.msra.mxu0 0.0
  %5781 = vmatprep.subr.mxu0 0.0
  %5782 = vmatpush2.msra.mxu0 0.0
  %5783 = vmatprep.subr.mxu0 0.0
  %5784 = vmatpush2.msra.mxu0 0.0
  %5785 = vmatprep.subr.mxu0 0.0
  %5786 = vmatpush2.msra.mxu0 0.0
  %5787 = vmatprep.subr.mxu0 0.0
  %5788 = vmatpush2.msra.mxu0 0.0
  %5789 = vmatprep.subr.mxu0 0.0
  %5790 = vmatpush2.msra.mxu0 0.0
  %5791 = vmatprep.subr.mxu0 0.0
  %5792 = vmatpush2.msra.mxu0 0.0
  %5793 = vmatprep.subr.mxu0 0.0
  %5794 = vmatpush2.msra.mxu0 0.0
  %5795 = vmatprep.subr.mxu0 0.0
  %5796 = vmatpush2.msra.mxu0 0.0
  %5797 = vmatprep.subr.mxu0 0.0
  %5798 = vmatpush2.msra.mxu0 0.0
  %5799 = vmatprep.subr.mxu0 0.0
  %5800 = vmatpush2.msra.mxu0 0.0
  %5801 = vmatprep.subr.mxu0 0.0
  %5802 = vmatpush2.msra.mxu0 0.0
  %5803 = vmatprep.subr.mxu0 0.0
  %5804 = vmatpush2.msra.mxu0 0.0
  %5805 = vmatprep.mubr.f32.mxu0 0.0
  %5806 = vmatmul.mubr.f32.gmra.mxu0 %v5712
  %v5807 = vpop.f32.mrf.mxu0
  %v5808 = vadd.f32 0.0, %v5807
  %v5809 = vpop.f32.mrf.mxu0
  %5810 = vmatprep.mubr.f32.mxu0 0.0
  %5811 = vmatmul.mubr.f32.gmra.mxu0 %v5715
  %v5812 = vpop.f32.mrf.mxu0
  %v5813 = vadd.f32 0.0, %v5812
  %v5814 = vpop.f32.mrf.mxu0
  %5815 = vmatprep.mubr.f32.mxu0 0.0
  %5816 = vmatmul.mubr.f32.gmra.mxu0 %v5718
  %v5817 = vpop.f32.mrf.mxu0
  %v5818 = vadd.f32 0.0, %v5817
  %v5819 = vpop.f32.mrf.mxu0
  %5820 = vmatprep.mubr.f32.mxu0 0.0
  %5821 = vmatmul.mubr.f32.gmra.mxu0 %v5721
  %v5822 = vpop.f32.mrf.mxu0
  %v5823 = vadd.f32 0.0, %v5822
  %v5824 = vpop.f32.mrf.mxu0
  %5825 = vmatprep.mubr.f32.mxu0 0.0
  %5826 = vmatmul.mubr.f32.gmra.mxu0 %v5724
  %v5827 = vpop.f32.mrf.mxu0
  %v5828 = vadd.f32 0.0, %v5827
  %v5829 = vpop.f32.mrf.mxu0
  %5830 = vmatprep.mubr.f32.mxu0 0.0
  %5831 = vmatmul.mubr.f32.gmra.mxu0 %v5727
  %v5832 = vpop.f32.mrf.mxu0
  %v5833 = vadd.f32 0.0, %v5832
  %v5834 = vpop.f32.mrf.mxu0
  %5835 = vmatprep.mubr.f32.mxu0 0.0
  %5836 = vmatmul.mubr.f32.gmra.mxu0 %v5730
  %v5837 = vpop.f32.mrf.mxu0
  %v5838 = vadd.f32 0.0, %v5837
  %v5839 = vpop.f32.mrf.mxu0
  %5840 = vmatprep.mubr.f32.mxu0 0.0
  %5841 = vmatmul.mubr.f32.gmra.mxu0 %v5733
  %v5842 = vpop.f32.mrf.mxu0
  %v5843 = vadd.f32 0.0, %v5842
  %v5844 = vpop.f32.mrf.mxu0
  %5845 = vmatprep.mubr.f32.mxu0 0.0
  %5846 = vmatmul.mubr.f32.gmra.mxu0 %v5736
  %v5847 = vpop.f32.mrf.mxu0
  %v5848 = vadd.f32 0.0, %v5847
  %v5849 = vpop.f32.mrf.mxu0
  %5850 = vmatprep.mubr.f32.mxu0 0.0
  %5851 = vmatmul.mubr.f32.gmra.mxu0 %v5739
  %v5852 = vpop.f32.mrf.mxu0
  %v5853 = vadd.f32 0.0, %v5852
  %v5854 = vpop.f32.mrf.mxu0
  %5855 = vdwg.mxu0
  %v5856 = vadd.f32 %v5183, %v5808
  %v5857 = vadd.f32 %v5188, %v5813
  %v5858 = vadd.f32 %v5193, %v5818
  %v5859 = vadd.f32 %v5198, %v5823
  %v5860 = vadd.f32 %v5203, %v5828
  %v5861 = vadd.f32 %v5208, %v5833
  %v5862 = vadd.f32 %v5213, %v5838
  %v5863 = vadd.f32 %v5218, %v5843
  %v5864 = vadd.f32 %v5223, %v5848
  %v5865 = vadd.f32 %v5228, %v5853
  %5866 = vrot.lane.b32.xlu0 %v3945, 80
  %v5867 = vpop.permute.xlu0 %5866
  %5868 = vrot.lane.b32.xlu0 %v3951, 80
  %v5869 = vpop.permute.xlu0 %5868
  %5870 = vrot.lane.b32.xlu0 %v3957, 80
  %v5871 = vpop.permute.xlu0 %5870
  %5872 = vrot.lane.b32.xlu0 %v3963, 80
  %v5873 = vpop.permute.xlu0 %5872
  %5874 = vrot.lane.b32.xlu0 %v3969, 80
  %v5875 = vpop.permute.xlu0 %5874
  %5876 = vrot.lane.b32.xlu0 %v3975, 80
  %v5877 = vpop.permute.xlu0 %5876
  %5878 = vrot.lane.b32.xlu0 %v3981, 80
  %v5879 = vpop.permute.xlu0 %5878
  %5880 = vrot.lane.b32.xlu0 %v3987, 80
  %v5881 = vpop.permute.xlu0 %5880
  %5882 = vrot.lane.b32.xlu0 %v3993, 80
  %v5883 = vpop.permute.xlu0 %5882
  %5884 = vrot.lane.b32.xlu0 %v3999, 80
  %v5885 = vpop.permute.xlu0 %5884
  %5886 = vrot.lane.b32.xlu0 %v3945, 16
  %v5887 = vpop.permute.xlu0 %5886
  %5888 = vrot.lane.b32.xlu0 %v3951, 16
  %v5889 = vpop.permute.xlu0 %5888
  %5890 = vrot.lane.b32.xlu0 %v3957, 16
  %v5891 = vpop.permute.xlu0 %5890
  %5892 = vrot.lane.b32.xlu0 %v3963, 16
  %v5893 = vpop.permute.xlu0 %5892
  %5894 = vrot.lane.b32.xlu0 %v3969, 16
  %v5895 = vpop.permute.xlu0 %5894
  %5896 = vrot.lane.b32.xlu0 %v3975, 16
  %v5897 = vpop.permute.xlu0 %5896
  %5898 = vrot.lane.b32.xlu0 %v3981, 16
  %v5899 = vpop.permute.xlu0 %5898
  %5900 = vrot.lane.b32.xlu0 %v3987, 16
  %v5901 = vpop.permute.xlu0 %5900
  %5902 = vrot.lane.b32.xlu0 %v3993, 16
  %v5903 = vpop.permute.xlu0 %5902
  %5904 = vrot.lane.b32.xlu0 %v3999, 16
  %v5905 = vpop.permute.xlu0 %5904
  %v5906 = vsel %vm724, %v5867, 0
  %v5908 = vsel %vm724, %v5869, 0
  %v5910 = vsel %vm724, %v5871, 0
  %v5912 = vsel %vm724, %v5873, 0
  %v5914 = vsel %vm724, %v5875, 0
  %v5916 = vsel %vm724, %v5877, 0
  %v5918 = vsel %vm724, %v5879, 0
  %v5920 = vsel %vm724, %v5881, 0
  %v5922 = vsel %vm724, %v5883, 0
  %v5924 = vsel %vm724, %v5885, 0
  %v5926 = vsel %vm724, %v5887, 0
  %v5928 = vsel %vm724, %v5889, 0
  %v5930 = vsel %vm724, %v5891, 0
  %v5932 = vsel %vm724, %v5893, 0
  %v5934 = vsel %vm724, %v5895, 0
  %v5936 = vsel %vm724, %v5897, 0
  %v5938 = vsel %vm724, %v5899, 0
  %v5940 = vsel %vm724, %v5901, 0
  %v5942 = vsel %vm724, %v5903, 0
  %v5944 = vsel %vm724, %v5905, 0
  %5946 = vmatprep.subr.mxu0 0.0
  %5947 = vmatpush1.xpose.msra.mxu0 0.0
  %5948 = vmatprep.subr.mxu0 0.0
  %5949 = vmatpush1.xpose.msra.mxu0 0.0
  %5950 = vmatprep.subr.mxu0 0.0
  %5951 = vmatpush1.xpose.msra.mxu0 0.0
  %5952 = vmatprep.subr.mxu0 0.0
  %5953 = vmatpush1.xpose.msra.mxu0 0.0
  %5954 = vmatprep.subr.mxu0 0.0
  %5955 = vmatpush1.xpose.msra.mxu0 0.0
  %5956 = vmatprep.subr.mxu0 0.0
  %5957 = vmatpush1.xpose.msra.mxu0 0.0
  %5958 = vmatprep.subr.mxu0 0.0
  %5959 = vmatpush1.xpose.msra.mxu0 %v5944
  %5960 = vmatprep.subr.mxu0 0.0
  %5961 = vmatpush1.xpose.msra.mxu0 %v5942
  %5962 = vmatprep.subr.mxu0 0.0
  %5963 = vmatpush1.xpose.msra.mxu0 %v5940
  %5964 = vmatprep.subr.mxu0 0.0
  %5965 = vmatpush1.xpose.msra.mxu0 %v5938
  %5966 = vmatprep.subr.mxu0 0.0
  %5967 = vmatpush1.xpose.msra.mxu0 %v5936
  %5968 = vmatprep.subr.mxu0 0.0
  %5969 = vmatpush1.xpose.msra.mxu0 %v5934
  %5970 = vmatprep.subr.mxu0 0.0
  %5971 = vmatpush1.xpose.msra.mxu0 %v5932
  %5972 = vmatprep.subr.mxu0 0.0
  %5973 = vmatpush1.xpose.msra.mxu0 %v5930
  %5974 = vmatprep.subr.mxu0 0.0
  %5975 = vmatpush1.xpose.msra.mxu0 %v5928
  %5976 = vmatprep.subr.mxu0 0.0
  %5977 = vmatpush1.xpose.msra.mxu0 %v5926
  %5978 = vmatprep.subr.mxu0 0.0
  %5979 = vmatpush2.xpose.msra.mxu0 0.0
  %5980 = vmatprep.subr.mxu0 0.0
  %5981 = vmatpush2.xpose.msra.mxu0 0.0
  %5982 = vmatprep.subr.mxu0 0.0
  %5983 = vmatpush2.xpose.msra.mxu0 0.0
  %5984 = vmatprep.subr.mxu0 0.0
  %5985 = vmatpush2.xpose.msra.mxu0 0.0
  %5986 = vmatprep.subr.mxu0 0.0
  %5987 = vmatpush2.xpose.msra.mxu0 0.0
  %5988 = vmatprep.subr.mxu0 0.0
  %5989 = vmatpush2.xpose.msra.mxu0 0.0
  %5990 = vmatprep.subr.mxu0 0.0
  %5991 = vmatpush2.xpose.msra.mxu0 0.0
  %5992 = vmatprep.subr.mxu0 0.0
  %5993 = vmatpush2.xpose.msra.mxu0 0.0
  %5994 = vmatprep.subr.mxu0 0.0
  %5995 = vmatpush2.xpose.msra.mxu0 0.0
  %5996 = vmatprep.subr.mxu0 0.0
  %5997 = vmatpush2.xpose.msra.mxu0 0.0
  %5998 = vmatprep.subr.mxu0 0.0
  %5999 = vmatpush2.xpose.msra.mxu0 0.0
  %6000 = vmatprep.subr.mxu0 0.0
  %6001 = vmatpush2.xpose.msra.mxu0 0.0
  %6002 = vmatprep.subr.mxu0 0.0
  %6003 = vmatpush2.xpose.msra.mxu0 0.0
  %6004 = vmatprep.subr.mxu0 0.0
  %6005 = vmatpush2.xpose.msra.mxu0 0.0
  %6006 = vmatprep.subr.mxu0 0.0
  %6007 = vmatpush2.xpose.msra.mxu0 0.0
  %6008 = vmatprep.subr.mxu0 0.0
  %6009 = vmatpush2.xpose.msra.mxu0 0.0
  %6010 = vmatprep.mubr.f32.mxu0 0.0
  %6011 = vmatmul.mubr.f32.gmra.mxu0 %v5906
  %v6012 = vpop.f32.mrf.mxu0
  %v6013 = vadd.f32 %v491, %v6012
  %v6014 = vpop.f32.mrf.mxu0
  %6015 = vmatprep.mubr.f32.mxu0 0.0
  %6016 = vmatmul.mubr.f32.gmra.mxu0 %v5908
  %v6017 = vpop.f32.mrf.mxu0
  %v6018 = vadd.f32 %v492, %v6017
  %v6019 = vpop.f32.mrf.mxu0
  %6020 = vmatprep.mubr.f32.mxu0 0.0
  %6021 = vmatmul.mubr.f32.gmra.mxu0 %v5910
  %v6022 = vpop.f32.mrf.mxu0
  %v6023 = vadd.f32 %v493, %v6022
  %v6024 = vpop.f32.mrf.mxu0
  %6025 = vmatprep.mubr.f32.mxu0 0.0
  %6026 = vmatmul.mubr.f32.gmra.mxu0 %v5912
  %v6027 = vpop.f32.mrf.mxu0
  %v6028 = vadd.f32 %v494, %v6027
  %v6029 = vpop.f32.mrf.mxu0
  %6030 = vmatprep.mubr.f32.mxu0 0.0
  %6031 = vmatmul.mubr.f32.gmra.mxu0 %v5914
  %v6032 = vpop.f32.mrf.mxu0
  %v6033 = vadd.f32 %v495, %v6032
  %v6034 = vpop.f32.mrf.mxu0
  %6035 = vmatprep.mubr.f32.mxu0 0.0
  %6036 = vmatmul.mubr.f32.gmra.mxu0 %v5916
  %v6037 = vpop.f32.mrf.mxu0
  %v6038 = vadd.f32 %v496, %v6037
  %v6039 = vpop.f32.mrf.mxu0
  %6040 = vmatprep.mubr.f32.mxu0 0.0
  %6041 = vmatmul.mubr.f32.gmra.mxu0 %v5918
  %v6042 = vpop.f32.mrf.mxu0
  %v6043 = vadd.f32 %v497, %v6042
  %v6044 = vpop.f32.mrf.mxu0
  %6045 = vmatprep.mubr.f32.mxu0 0.0
  %6046 = vmatmul.mubr.f32.gmra.mxu0 %v5920
  %v6047 = vpop.f32.mrf.mxu0
  %v6048 = vadd.f32 %v498, %v6047
  %v6049 = vpop.f32.mrf.mxu0
  %6050 = vmatprep.mubr.f32.mxu0 0.0
  %6051 = vmatmul.mubr.f32.gmra.mxu0 %v5922
  %v6052 = vpop.f32.mrf.mxu0
  %v6053 = vadd.f32 %v499, %v6052
  %v6054 = vpop.f32.mrf.mxu0
  %6055 = vmatprep.mubr.f32.mxu0 0.0
  %6056 = vmatmul.mubr.f32.gmra.mxu0 %v5924
  %v6057 = vpop.f32.mrf.mxu0
  %v6058 = vadd.f32 %v500, %v6057
  %v6059 = vpop.f32.mrf.mxu0
  %6060 = vdwg.mxu0
  %v6061 = vsel %vm880, %v6013, -inf
  %6062 = vmax.xlane.f32.xlu0 %v6061
  %v6063 = vpop.xlane.xlu0 %6062
  %v6064 = vsel %vm880, %v6018, -inf
  %6065 = vmax.xlane.f32.xlu0 %v6064
  %v6066 = vpop.xlane.xlu0 %6065
  %v6067 = vsel %vm880, %v6023, -inf
  %6068 = vmax.xlane.f32.xlu0 %v6067
  %v6069 = vpop.xlane.xlu0 %6068
  %v6070 = vsel %vm880, %v6028, -inf
  %6071 = vmax.xlane.f32.xlu0 %v6070
  %v6072 = vpop.xlane.xlu0 %6071
  %v6073 = vsel %vm880, %v6033, -inf
  %6074 = vmax.xlane.f32.xlu0 %v6073
  %v6075 = vpop.xlane.xlu0 %6074
  %v6076 = vsel %vm880, %v6038, -inf
  %6077 = vmax.xlane.f32.xlu0 %v6076
  %v6078 = vpop.xlane.xlu0 %6077
  %v6079 = vsel %vm880, %v6043, -inf
  %6080 = vmax.xlane.f32.xlu0 %v6079
  %v6081 = vpop.xlane.xlu0 %6080
  %v6082 = vsel %vm880, %v6048, -inf
  %6083 = vmax.xlane.f32.xlu0 %v6082
  %v6084 = vpop.xlane.xlu0 %6083
  %v6085 = vsel %vm880, %v6053, -inf
  %6086 = vmax.xlane.f32.xlu0 %v6085
  %v6087 = vpop.xlane.xlu0 %6086
  %v6088 = vsel %vm880, %v6058, -inf
  %6089 = vmax.xlane.f32.xlu0 %v6088
  %v6090 = vpop.xlane.xlu0 %6089
  %v6091 = vsub.f32 %v6013, %v6063
  %v6092 = vsub.f32 %v6018, %v6066
  %v6093 = vsub.f32 %v6023, %v6069
  %v6094 = vsub.f32 %v6028, %v6072
  %v6095 = vsub.f32 %v6033, %v6075
  %v6096 = vsub.f32 %v6038, %v6078
  %v6097 = vsub.f32 %v6043, %v6081
  %v6098 = vsub.f32 %v6048, %v6084
  %v6099 = vsub.f32 %v6053, %v6087
  %v6100 = vsub.f32 %v6058, %v6090
  %v6101 = vmul.f32 %v6091, 1.442695
  %v6102 = vpow.pop %v6101
  %v6103 = vmul.f32 %v6092, 1.442695
  %v6104 = vpow.pop %v6103
  %v6105 = vmul.f32 %v6093, 1.442695
  %v6106 = vpow.pop %v6105
  %v6107 = vmul.f32 %v6094, 1.442695
  %v6108 = vpow.pop %v6107
  %v6109 = vmul.f32 %v6095, 1.442695
  %v6110 = vpow.pop %v6109
  %v6111 = vmul.f32 %v6096, 1.442695
  %v6112 = vpow.pop %v6111
  %v6113 = vmul.f32 %v6097, 1.442695
  %v6114 = vpow.pop %v6113
  %v6115 = vmul.f32 %v6098, 1.442695
  %v6116 = vpow.pop %v6115
  %v6117 = vmul.f32 %v6099, 1.442695
  %v6118 = vpow.pop %v6117
  %v6119 = vmul.f32 %v6100, 1.442695
  %v6120 = vpow.pop %v6119
  %v6121 = vsel %vm880, %v6102, 0.0
  %6122 = vadd.xlane.f32.xlu0 %v6121
  %v6123 = vpop.xlane.xlu0 %6122
  %v6124 = vsel %vm880, %v6104, 0.0
  %6125 = vadd.xlane.f32.xlu0 %v6124
  %v6126 = vpop.xlane.xlu0 %6125
  %v6127 = vsel %vm880, %v6106, 0.0
  %6128 = vadd.xlane.f32.xlu0 %v6127
  %v6129 = vpop.xlane.xlu0 %6128
  %v6130 = vsel %vm880, %v6108, 0.0
  %6131 = vadd.xlane.f32.xlu0 %v6130
  %v6132 = vpop.xlane.xlu0 %6131
  %v6133 = vsel %vm880, %v6110, 0.0
  %6134 = vadd.xlane.f32.xlu0 %v6133
  %v6135 = vpop.xlane.xlu0 %6134
  %v6136 = vsel %vm880, %v6112, 0.0
  %6137 = vadd.xlane.f32.xlu0 %v6136
  %v6138 = vpop.xlane.xlu0 %6137
  %v6139 = vsel %vm880, %v6114, 0.0
  %6140 = vadd.xlane.f32.xlu0 %v6139
  %v6141 = vpop.xlane.xlu0 %6140
  %v6142 = vsel %vm880, %v6116, 0.0
  %6143 = vadd.xlane.f32.xlu0 %v6142
  %v6144 = vpop.xlane.xlu0 %6143
  %v6145 = vsel %vm880, %v6118, 0.0
  %6146 = vadd.xlane.f32.xlu0 %v6145
  %v6147 = vpop.xlane.xlu0 %6146
  %v6148 = vsel %vm880, %v6120, 0.0
  %6149 = vadd.xlane.f32.xlu0 %v6148
  %v6150 = vpop.xlane.xlu0 %6149
  %v6151 = vrcp.pop %v6123
  %v6152 = vrcp.pop %v6126
  %v6153 = vrcp.pop %v6129
  %v6154 = vrcp.pop %v6132
  %v6155 = vrcp.pop %v6135
  %v6156 = vrcp.pop %v6138
  %v6157 = vrcp.pop %v6141
  %v6158 = vrcp.pop %v6144
  %v6159 = vrcp.pop %v6147
  %v6160 = vrcp.pop %v6150
  %v6161 = vmul.f32 %v6102, %v6151
  %v6162 = vmul.f32 %v6104, %v6152
  %v6163 = vmul.f32 %v6106, %v6153
  %v6164 = vmul.f32 %v6108, %v6154
  %v6165 = vmul.f32 %v6110, %v6155
  %v6166 = vmul.f32 %v6112, %v6156
  %v6167 = vmul.f32 %v6114, %v6157
  %v6168 = vmul.f32 %v6116, %v6158
  %v6169 = vmul.f32 %v6118, %v6159
  %v6170 = vmul.f32 %v6120, %v6160
  %6171 = vrot.lane.b32.xlu0 %v3947, 80
  %v6172 = vpop.permute.xlu0 %6171
  %6173 = vrot.lane.b32.xlu0 %v3953, 80
  %v6174 = vpop.permute.xlu0 %6173
  %6175 = vrot.lane.b32.xlu0 %v3959, 80
  %v6176 = vpop.permute.xlu0 %6175
  %6177 = vrot.lane.b32.xlu0 %v3965, 80
  %v6178 = vpop.permute.xlu0 %6177
  %6179 = vrot.lane.b32.xlu0 %v3971, 80
  %v6180 = vpop.permute.xlu0 %6179
  %6181 = vrot.lane.b32.xlu0 %v3977, 80
  %v6182 = vpop.permute.xlu0 %6181
  %6183 = vrot.lane.b32.xlu0 %v3983, 80
  %v6184 = vpop.permute.xlu0 %6183
  %6185 = vrot.lane.b32.xlu0 %v3989, 80
  %v6186 = vpop.permute.xlu0 %6185
  %6187 = vrot.lane.b32.xlu0 %v3995, 80
  %v6188 = vpop.permute.xlu0 %6187
  %6189 = vrot.lane.b32.xlu0 %v4001, 80
  %v6190 = vpop.permute.xlu0 %6189
  %v6202 = vsel %vm880, %v6161, 0
  %v6205 = vsel %vm880, %v6162, 0
  %v6208 = vsel %vm880, %v6163, 0
  %v6211 = vsel %vm880, %v6164, 0
  %v6214 = vsel %vm880, %v6165, 0
  %v6217 = vsel %vm880, %v6166, 0
  %v6220 = vsel %vm880, %v6167, 0
  %v6223 = vsel %vm880, %v6168, 0
  %v6226 = vsel %vm880, %v6169, 0
  %v6229 = vsel %vm880, %v6170, 0
  %6231 = vmatprep.subr.mxu0 0.0
  %6232 = vmatpush1.msra.mxu0 0.0
  %6233 = vmatprep.subr.mxu0 0.0
  %6234 = vmatpush1.msra.mxu0 0.0
  %6235 = vmatprep.subr.mxu0 0.0
  %6236 = vmatpush1.msra.mxu0 0.0
  %6237 = vmatprep.subr.mxu0 0.0
  %6238 = vmatpush1.msra.mxu0 0.0
  %6239 = vmatprep.subr.mxu0 0.0
  %6240 = vmatpush1.msra.mxu0 0.0
  %6241 = vmatprep.subr.mxu0 0.0
  %6242 = vmatpush1.msra.mxu0 0.0
  %6243 = vmatprep.subr.mxu0 0.0
  %6244 = vmatpush1.msra.mxu0 %v6190
  %6245 = vmatprep.subr.mxu0 0.0
  %6246 = vmatpush1.msra.mxu0 %v6188
  %6247 = vmatprep.subr.mxu0 0.0
  %6248 = vmatpush1.msra.mxu0 %v6186
  %6249 = vmatprep.subr.mxu0 0.0
  %6250 = vmatpush1.msra.mxu0 %v6184
  %6251 = vmatprep.subr.mxu0 0.0
  %6252 = vmatpush1.msra.mxu0 %v6182
  %6253 = vmatprep.subr.mxu0 0.0
  %6254 = vmatpush1.msra.mxu0 %v6180
  %6255 = vmatprep.subr.mxu0 0.0
  %6256 = vmatpush1.msra.mxu0 %v6178
  %6257 = vmatprep.subr.mxu0 0.0
  %6258 = vmatpush1.msra.mxu0 %v6176
  %6259 = vmatprep.subr.mxu0 0.0
  %6260 = vmatpush1.msra.mxu0 %v6174
  %6261 = vmatprep.subr.mxu0 0.0
  %6262 = vmatpush1.msra.mxu0 %v6172
  %6263 = vmatprep.subr.mxu0 0.0
  %6264 = vmatpush2.msra.mxu0 0.0
  %6265 = vmatprep.subr.mxu0 0.0
  %6266 = vmatpush2.msra.mxu0 0.0
  %6267 = vmatprep.subr.mxu0 0.0
  %6268 = vmatpush2.msra.mxu0 0.0
  %6269 = vmatprep.subr.mxu0 0.0
  %6270 = vmatpush2.msra.mxu0 0.0
  %6271 = vmatprep.subr.mxu0 0.0
  %6272 = vmatpush2.msra.mxu0 0.0
  %6273 = vmatprep.subr.mxu0 0.0
  %6274 = vmatpush2.msra.mxu0 0.0
  %6275 = vmatprep.subr.mxu0 0.0
  %6276 = vmatpush2.msra.mxu0 0.0
  %6277 = vmatprep.subr.mxu0 0.0
  %6278 = vmatpush2.msra.mxu0 0.0
  %6279 = vmatprep.subr.mxu0 0.0
  %6280 = vmatpush2.msra.mxu0 0.0
  %6281 = vmatprep.subr.mxu0 0.0
  %6282 = vmatpush2.msra.mxu0 0.0
  %6283 = vmatprep.subr.mxu0 0.0
  %6284 = vmatpush2.msra.mxu0 0.0
  %6285 = vmatprep.subr.mxu0 0.0
  %6286 = vmatpush2.msra.mxu0 0.0
  %6287 = vmatprep.subr.mxu0 0.0
  %6288 = vmatpush2.msra.mxu0 0.0
  %6289 = vmatprep.subr.mxu0 0.0
  %6290 = vmatpush2.msra.mxu0 0.0
  %6291 = vmatprep.subr.mxu0 0.0
  %6292 = vmatpush2.msra.mxu0 0.0
  %6293 = vmatprep.subr.mxu0 0.0
  %6294 = vmatpush2.msra.mxu0 0.0
  %6295 = vmatprep.mubr.f32.mxu0 0.0
  %6296 = vmatmul.mubr.f32.gmra.mxu0 %v6202
  %v6297 = vpop.f32.mrf.mxu0
  %v6298 = vadd.f32 0.0, %v6297
  %v6299 = vpop.f32.mrf.mxu0
  %6300 = vmatprep.mubr.f32.mxu0 0.0
  %6301 = vmatmul.mubr.f32.gmra.mxu0 %v6205
  %v6302 = vpop.f32.mrf.mxu0
  %v6303 = vadd.f32 0.0, %v6302
  %v6304 = vpop.f32.mrf.mxu0
  %6305 = vmatprep.mubr.f32.mxu0 0.0
  %6306 = vmatmul.mubr.f32.gmra.mxu0 %v6208
  %v6307 = vpop.f32.mrf.mxu0
  %v6308 = vadd.f32 0.0, %v6307
  %v6309 = vpop.f32.mrf.mxu0
  %6310 = vmatprep.mubr.f32.mxu0 0.0
  %6311 = vmatmul.mubr.f32.gmra.mxu0 %v6211
  %v6312 = vpop.f32.mrf.mxu0
  %v6313 = vadd.f32 0.0, %v6312
  %v6314 = vpop.f32.mrf.mxu0
  %6315 = vmatprep.mubr.f32.mxu0 0.0
  %6316 = vmatmul.mubr.f32.gmra.mxu0 %v6214
  %v6317 = vpop.f32.mrf.mxu0
  %v6318 = vadd.f32 0.0, %v6317
  %v6319 = vpop.f32.mrf.mxu0
  %6320 = vmatprep.mubr.f32.mxu0 0.0
  %6321 = vmatmul.mubr.f32.gmra.mxu0 %v6217
  %v6322 = vpop.f32.mrf.mxu0
  %v6323 = vadd.f32 0.0, %v6322
  %v6324 = vpop.f32.mrf.mxu0
  %6325 = vmatprep.mubr.f32.mxu0 0.0
  %6326 = vmatmul.mubr.f32.gmra.mxu0 %v6220
  %v6327 = vpop.f32.mrf.mxu0
  %v6328 = vadd.f32 0.0, %v6327
  %v6329 = vpop.f32.mrf.mxu0
  %6330 = vmatprep.mubr.f32.mxu0 0.0
  %6331 = vmatmul.mubr.f32.gmra.mxu0 %v6223
  %v6332 = vpop.f32.mrf.mxu0
  %v6333 = vadd.f32 0.0, %v6332
  %v6334 = vpop.f32.mrf.mxu0
  %6335 = vmatprep.mubr.f32.mxu0 0.0
  %6336 = vmatmul.mubr.f32.gmra.mxu0 %v6226
  %v6337 = vpop.f32.mrf.mxu0
  %v6338 = vadd.f32 0.0, %v6337
  %v6339 = vpop.f32.mrf.mxu0
  %6340 = vmatprep.mubr.f32.mxu0 0.0
  %6341 = vmatmul.mubr.f32.gmra.mxu0 %v6229
  %v6342 = vpop.f32.mrf.mxu0
  %v6343 = vadd.f32 0.0, %v6342
  %v6344 = vpop.f32.mrf.mxu0
  %6345 = vdwg.mxu0
  %v6347 = vsel %vm724, %v6298, 0
  %v6350 = vsel %vm724, %v6303, 0
  %v6353 = vsel %vm724, %v6308, 0
  %v6356 = vsel %vm724, %v6313, 0
  %v6359 = vsel %vm724, %v6318, 0
  %v6362 = vsel %vm724, %v6323, 0
  %v6365 = vsel %vm724, %v6328, 0
  %v6368 = vsel %vm724, %v6333, 0
  %v6371 = vsel %vm724, %v6338, 0
  %v6374 = vsel %vm724, %v6343, 0
  %6376 = vmatprep.subr.mxu0 0.0
  %6377 = vmatpush1.msra.mxu0 0.0
  %6378 = vmatprep.subr.mxu0 0.0
  %6379 = vmatpush1.msra.mxu0 0.0
  %6380 = vmatprep.subr.mxu0 0.0
  %6381 = vmatpush1.msra.mxu0 0.0
  %6382 = vmatprep.subr.mxu0 0.0
  %6383 = vmatpush1.msra.mxu0 0.0
  %6384 = vmatprep.subr.mxu0 0.0
  %6385 = vmatpush1.msra.mxu0 0.0
  %6386 = vmatprep.subr.mxu0 0.0
  %6387 = vmatpush1.msra.mxu0 0.0
  %6388 = vmatprep.subr.mxu0 0.0
  %6389 = vmatpush1.msra.mxu0 0.0
  %6390 = vmatprep.subr.mxu0 0.0
  %6391 = vmatpush1.msra.mxu0 0.0
  %6392 = vmatprep.subr.mxu0 0.0
  %6393 = vmatpush1.msra.mxu0 0.0
  %6394 = vmatprep.subr.mxu0 0.0
  %6395 = vmatpush1.msra.mxu0 0.0
  %6396 = vmatprep.subr.mxu0 0.0
  %6397 = vmatpush1.msra.mxu0 0.0
  %6398 = vmatprep.subr.mxu0 0.0
  %6399 = vmatpush1.msra.mxu0 0.0
  %6400 = vmatprep.subr.mxu0 0.0
  %6401 = vmatpush1.msra.mxu0 0.0
  %6402 = vmatprep.subr.mxu0 0.0
  %6403 = vmatpush1.msra.mxu0 0.0
  %6404 = vmatprep.subr.mxu0 0.0
  %6405 = vmatpush1.msra.mxu0 %v4010
  %6406 = vmatprep.subr.mxu0 0.0
  %6407 = vmatpush1.msra.mxu0 %v4009
  %6408 = vmatprep.subr.mxu0 0.0
  %6409 = vmatpush2.msra.mxu0 0.0
  %6410 = vmatprep.subr.mxu0 0.0
  %6411 = vmatpush2.msra.mxu0 0.0
  %6412 = vmatprep.subr.mxu0 0.0
  %6413 = vmatpush2.msra.mxu0 0.0
  %6414 = vmatprep.subr.mxu0 0.0
  %6415 = vmatpush2.msra.mxu0 0.0
  %6416 = vmatprep.subr.mxu0 0.0
  %6417 = vmatpush2.msra.mxu0 0.0
  %6418 = vmatprep.subr.mxu0 0.0
  %6419 = vmatpush2.msra.mxu0 0.0
  %6420 = vmatprep.subr.mxu0 0.0
  %6421 = vmatpush2.msra.mxu0 0.0
  %6422 = vmatprep.subr.mxu0 0.0
  %6423 = vmatpush2.msra.mxu0 0.0
  %6424 = vmatprep.subr.mxu0 0.0
  %6425 = vmatpush2.msra.mxu0 0.0
  %6426 = vmatprep.subr.mxu0 0.0
  %6427 = vmatpush2.msra.mxu0 0.0
  %6428 = vmatprep.subr.mxu0 0.0
  %6429 = vmatpush2.msra.mxu0 0.0
  %6430 = vmatprep.subr.mxu0 0.0
  %6431 = vmatpush2.msra.mxu0 0.0
  %6432 = vmatprep.subr.mxu0 0.0
  %6433 = vmatpush2.msra.mxu0 0.0
  %6434 = vmatprep.subr.mxu0 0.0
  %6435 = vmatpush2.msra.mxu0 0.0
  %6436 = vmatprep.subr.mxu0 0.0
  %6437 = vmatpush2.msra.mxu0 0.0
  %6438 = vmatprep.subr.mxu0 0.0
  %6439 = vmatpush2.msra.mxu0 0.0
  %6440 = vmatprep.mubr.f32.mxu0 0.0
  %6441 = vmatmul.mubr.f32.gmra.mxu0 %v6347
  %v6442 = vpop.f32.mrf.mxu0
  %v6443 = vadd.f32 0.0, %v6442
  %v6444 = vpop.f32.mrf.mxu0
  %6445 = vmatprep.mubr.f32.mxu0 0.0
  %6446 = vmatmul.mubr.f32.gmra.mxu0 %v6350
  %v6447 = vpop.f32.mrf.mxu0
  %v6448 = vadd.f32 0.0, %v6447
  %v6449 = vpop.f32.mrf.mxu0
  %6450 = vmatprep.mubr.f32.mxu0 0.0
  %6451 = vmatmul.mubr.f32.gmra.mxu0 %v6353
  %v6452 = vpop.f32.mrf.mxu0
  %v6453 = vadd.f32 0.0, %v6452
  %v6454 = vpop.f32.mrf.mxu0
  %6455 = vmatprep.mubr.f32.mxu0 0.0
  %6456 = vmatmul.mubr.f32.gmra.mxu0 %v6356
  %v6457 = vpop.f32.mrf.mxu0
  %v6458 = vadd.f32 0.0, %v6457
  %v6459 = vpop.f32.mrf.mxu0
  %6460 = vmatprep.mubr.f32.mxu0 0.0
  %6461 = vmatmul.mubr.f32.gmra.mxu0 %v6359
  %v6462 = vpop.f32.mrf.mxu0
  %v6463 = vadd.f32 0.0, %v6462
  %v6464 = vpop.f32.mrf.mxu0
  %6465 = vmatprep.mubr.f32.mxu0 0.0
  %6466 = vmatmul.mubr.f32.gmra.mxu0 %v6362
  %v6467 = vpop.f32.mrf.mxu0
  %v6468 = vadd.f32 0.0, %v6467
  %v6469 = vpop.f32.mrf.mxu0
  %6470 = vmatprep.mubr.f32.mxu0 0.0
  %6471 = vmatmul.mubr.f32.gmra.mxu0 %v6365
  %v6472 = vpop.f32.mrf.mxu0
  %v6473 = vadd.f32 0.0, %v6472
  %v6474 = vpop.f32.mrf.mxu0
  %6475 = vmatprep.mubr.f32.mxu0 0.0
  %6476 = vmatmul.mubr.f32.gmra.mxu0 %v6368
  %v6477 = vpop.f32.mrf.mxu0
  %v6478 = vadd.f32 0.0, %v6477
  %v6479 = vpop.f32.mrf.mxu0
  %6480 = vmatprep.mubr.f32.mxu0 0.0
  %6481 = vmatmul.mubr.f32.gmra.mxu0 %v6371
  %v6482 = vpop.f32.mrf.mxu0
  %v6483 = vadd.f32 0.0, %v6482
  %v6484 = vpop.f32.mrf.mxu0
  %6485 = vmatprep.mubr.f32.mxu0 0.0
  %6486 = vmatmul.mubr.f32.gmra.mxu0 %v6374
  %v6487 = vpop.f32.mrf.mxu0
  %v6488 = vadd.f32 0.0, %v6487
  %v6489 = vpop.f32.mrf.mxu0
  %6490 = vdwg.mxu0
  %v6491 = vadd.f32 %v5856, %v6443
  %v6492 = vadd.f32 %v5857, %v6448
  %v6493 = vadd.f32 %v5858, %v6453
  %v6494 = vadd.f32 %v5859, %v6458
  %v6495 = vadd.f32 %v5860, %v6463
  %v6496 = vadd.f32 %v5861, %v6468
  %v6497 = vadd.f32 %v5862, %v6473
  %v6498 = vadd.f32 %v5863, %v6478
  %v6499 = vadd.f32 %v5864, %v6483
  %v6500 = vadd.f32 %v5865, %v6488
  %v6501 = vld [vmem:[%s5 + $0x13] ss:$0 sm:$0xff]
  %v6502 = vadd.f32 %v6491, %v6501
  %v6503 = vadd.f32 %v6492, %v6501
  %v6504 = vadd.f32 %v6493, %v6501
  %v6505 = vadd.f32 %v6494, %v6501
  %v6506 = vadd.f32 %v6495, %v6501
  %v6507 = vadd.f32 %v6496, %v6501
  %v6508 = vadd.f32 %v6497, %v6501
  %v6509 = vadd.f32 %v6498, %v6501
  %v6510 = vadd.f32 %v6499, %v6501
  %v6511 = vadd.f32 %v6500, %v6501
  %v6512 = vadd.f32 %v3808, %v6502
  %v6513 = vadd.f32 %v3809, %v6503
  %v6514 = vadd.f32 %v3810, %v6504
  %v6515 = vadd.f32 %v3811, %v6505
  %v6516 = vadd.f32 %v3812, %v6506
  %v6517 = vadd.f32 %v3813, %v6507
  %v6518 = vadd.f32 %v3814, %v6508
  %v6519 = vadd.f32 %v3815, %v6509
  %v6520 = vadd.f32 %v3816, %v6510
  %v6521 = vadd.f32 %v3817, %v6511
  %v6522 = vld [vmem:[%s5 + $0x14] ss:$0 sm:$0xff]
  %v6523 = vld [vmem:[%s5 + $0x15] ss:$0 sm:$0xff]
  %v6524 = vsel %vm530, %v6512, 0.0
  %6525 = vadd.xlane.f32.xlu0 %v6524
  %v6526 = vpop.xlane.xlu0 %6525
  %v6527 = vsel %vm530, %v6513, 0.0
  %6528 = vadd.xlane.f32.xlu0 %v6527
  %v6529 = vpop.xlane.xlu0 %6528
  %v6530 = vsel %vm530, %v6514, 0.0
  %6531 = vadd.xlane.f32.xlu0 %v6530
  %v6532 = vpop.xlane.xlu0 %6531
  %v6533 = vsel %vm530, %v6515, 0.0
  %6534 = vadd.xlane.f32.xlu0 %v6533
  %v6535 = vpop.xlane.xlu0 %6534
  %v6536 = vsel %vm530, %v6516, 0.0
  %6537 = vadd.xlane.f32.xlu0 %v6536
  %v6538 = vpop.xlane.xlu0 %6537
  %v6539 = vsel %vm530, %v6517, 0.0
  %6540 = vadd.xlane.f32.xlu0 %v6539
  %v6541 = vpop.xlane.xlu0 %6540
  %v6542 = vsel %vm530, %v6518, 0.0
  %6543 = vadd.xlane.f32.xlu0 %v6542
  %v6544 = vpop.xlane.xlu0 %6543
  %v6545 = vsel %vm530, %v6519, 0.0
  %6546 = vadd.xlane.f32.xlu0 %v6545
  %v6547 = vpop.xlane.xlu0 %6546
  %v6548 = vsel %vm530, %v6520, 0.0
  %6549 = vadd.xlane.f32.xlu0 %v6548
  %v6550 = vpop.xlane.xlu0 %6549
  %v6551 = vsel %vm530, %v6521, 0.0
  %6552 = vadd.xlane.f32.xlu0 %v6551
  %v6553 = vpop.xlane.xlu0 %6552
  %v6554 = vmul.f32 %v6526, %v3239
  %v6555 = vmul.f32 %v6529, %v3239
  %v6556 = vmul.f32 %v6532, %v3239
  %v6557 = vmul.f32 %v6535, %v3239
  %v6558 = vmul.f32 %v6538, %v3239
  %v6559 = vmul.f32 %v6541, %v3239
  %v6560 = vmul.f32 %v6544, %v3239
  %v6561 = vmul.f32 %v6547, %v3239
  %v6562 = vmul.f32 %v6550, %v3239
  %v6563 = vmul.f32 %v6553, %v3239
  %v6564 = vsub.f32 %v6512, %v6554
  %v6565 = vsub.f32 %v6513, %v6555
  %v6566 = vsub.f32 %v6514, %v6556
  %v6567 = vsub.f32 %v6515, %v6557
  %v6568 = vsub.f32 %v6516, %v6558
  %v6569 = vsub.f32 %v6517, %v6559
  %v6570 = vsub.f32 %v6518, %v6560
  %v6571 = vsub.f32 %v6519, %v6561
  %v6572 = vsub.f32 %v6520, %v6562
  %v6573 = vsub.f32 %v6521, %v6563
  %v6574 = vmul.f32 %v6564, %v6564
  %v6575 = vmul.f32 %v6565, %v6565
  %v6576 = vmul.f32 %v6566, %v6566
  %v6577 = vmul.f32 %v6567, %v6567
  %v6578 = vmul.f32 %v6568, %v6568
  %v6579 = vmul.f32 %v6569, %v6569
  %v6580 = vmul.f32 %v6570, %v6570
  %v6581 = vmul.f32 %v6571, %v6571
  %v6582 = vmul.f32 %v6572, %v6572
  %v6583 = vmul.f32 %v6573, %v6573
  %v6584 = vsel %vm530, %v6574, 0.0
  %6585 = vadd.xlane.f32.xlu0 %v6584
  %v6586 = vpop.xlane.xlu0 %6585
  %v6587 = vsel %vm530, %v6575, 0.0
  %6588 = vadd.xlane.f32.xlu0 %v6587
  %v6589 = vpop.xlane.xlu0 %6588
  %v6590 = vsel %vm530, %v6576, 0.0
  %6591 = vadd.xlane.f32.xlu0 %v6590
  %v6592 = vpop.xlane.xlu0 %6591
  %v6593 = vsel %vm530, %v6577, 0.0
  %6594 = vadd.xlane.f32.xlu0 %v6593
  %v6595 = vpop.xlane.xlu0 %6594
  %v6596 = vsel %vm530, %v6578, 0.0
  %6597 = vadd.xlane.f32.xlu0 %v6596
  %v6598 = vpop.xlane.xlu0 %6597
  %v6599 = vsel %vm530, %v6579, 0.0
  %6600 = vadd.xlane.f32.xlu0 %v6599
  %v6601 = vpop.xlane.xlu0 %6600
  %v6602 = vsel %vm530, %v6580, 0.0
  %6603 = vadd.xlane.f32.xlu0 %v6602
  %v6604 = vpop.xlane.xlu0 %6603
  %v6605 = vsel %vm530, %v6581, 0.0
  %6606 = vadd.xlane.f32.xlu0 %v6605
  %v6607 = vpop.xlane.xlu0 %6606
  %v6608 = vsel %vm530, %v6582, 0.0
  %6609 = vadd.xlane.f32.xlu0 %v6608
  %v6610 = vpop.xlane.xlu0 %6609
  %v6611 = vsel %vm530, %v6583, 0.0
  %6612 = vadd.xlane.f32.xlu0 %v6611
  %v6613 = vpop.xlane.xlu0 %6612
  %v6614 = vmul.f32 %v6586, %v3239
  %v6615 = vmul.f32 %v6589, %v3239
  %v6616 = vmul.f32 %v6592, %v3239
  %v6617 = vmul.f32 %v6595, %v3239
  %v6618 = vmul.f32 %v6598, %v3239
  %v6619 = vmul.f32 %v6601, %v3239
  %v6620 = vmul.f32 %v6604, %v3239
  %v6621 = vmul.f32 %v6607, %v3239
  %v6622 = vmul.f32 %v6610, %v3239
  %v6623 = vmul.f32 %v6613, %v3239
  %v6624 = vadd.f32 %v6614, 1e-05
  %v6625 = vadd.f32 %v6615, 1e-05
  %v6626 = vadd.f32 %v6616, 1e-05
  %v6627 = vadd.f32 %v6617, 1e-05
  %v6628 = vadd.f32 %v6618, 1e-05
  %v6629 = vadd.f32 %v6619, 1e-05
  %v6630 = vadd.f32 %v6620, 1e-05
  %v6631 = vadd.f32 %v6621, 1e-05
  %v6632 = vadd.f32 %v6622, 1e-05
  %v6633 = vadd.f32 %v6623, 1e-05
  %v6634 = vrsqrt.pop %v6624
  %v6635 = vrsqrt.pop %v6625
  %v6636 = vrsqrt.pop %v6626
  %v6637 = vrsqrt.pop %v6627
  %v6638 = vrsqrt.pop %v6628
  %v6639 = vrsqrt.pop %v6629
  %v6640 = vrsqrt.pop %v6630
  %v6641 = vrsqrt.pop %v6631
  %v6642 = vrsqrt.pop %v6632
  %v6643 = vrsqrt.pop %v6633
  %v6644 = vmul.f32 %v6564, %v6634
  %v6645 = vmul.f32 %v6565, %v6635
  %v6646 = vmul.f32 %v6566, %v6636
  %v6647 = vmul.f32 %v6567, %v6637
  %v6648 = vmul.f32 %v6568, %v6638
  %v6649 = vmul.f32 %v6569, %v6639
  %v6650 = vmul.f32 %v6570, %v6640
  %v6651 = vmul.f32 %v6571, %v6641
  %v6652 = vmul.f32 %v6572, %v6642
  %v6653 = vmul.f32 %v6573, %v6643
  %v6654 = vmul.f32 %v6644, %v6522
  %v6655 = vmul.f32 %v6645, %v6522
  %v6656 = vmul.f32 %v6646, %v6522
  %v6657 = vmul.f32 %v6647, %v6522
  %v6658 = vmul.f32 %v6648, %v6522
  %v6659 = vmul.f32 %v6649, %v6522
  %v6660 = vmul.f32 %v6650, %v6522
  %v6661 = vmul.f32 %v6651, %v6522
  %v6662 = vmul.f32 %v6652, %v6522
  %v6663 = vmul.f32 %v6653, %v6522
  %v6664 = vadd.f32 %v6654, %v6523
  %v6665 = vadd.f32 %v6655, %v6523
  %v6666 = vadd.f32 %v6656, %v6523
  %v6667 = vadd.f32 %v6657, %v6523
  %v6668 = vadd.f32 %v6658, %v6523
  %v6669 = vadd.f32 %v6659, %v6523
  %v6670 = vadd.f32 %v6660, %v6523
  %v6671 = vadd.f32 %v6661, %v6523
  %v6672 = vadd.f32 %v6662, %v6523
  %v6673 = vadd.f32 %v6663, %v6523
  %v6674 = vld [vmem:[%s3818 + $0x100] sm:$0xff]
  %v6675 = vld [vmem:[%s3818 + $0x110] sm:$0xff]
  %v6676 = vld [vmem:[%s3818 + $0x120] sm:$0xff]
  %v6677 = vld [vmem:[%s3818 + $0x130] sm:$0xff]
  %v6678 = vld [vmem:[%s3818 + $0x140] sm:$0xff]
  %v6679 = vld [vmem:[%s3818 + $0x150] sm:$0xff]
  %v6680 = vld [vmem:[%s3818 + $0x160] sm:$0xff]
  %v6681 = vld [vmem:[%s3818 + $0x170] sm:$0xff]
  %v6682 = vld [vmem:[%s3818 + $0x180] sm:$0xff]
  %v6683 = vld [vmem:[%s3818 + $0x190] sm:$0xff]
  %v6684 = vld [vmem:[%s3818 + $0x1a0] sm:$0xff]
  %v6685 = vld [vmem:[%s3818 + $0x1b0] sm:$0xff]
  %v6686 = vld [vmem:[%s3818 + $0x1c0] sm:$0xff]
  %v6687 = vld [vmem:[%s3818 + $0x1d0] sm:$0xff]
  %v6688 = vld [vmem:[%s3818 + $0x1e0] sm:$0xff]
  %v6689 = vld [vmem:[%s3818 + $0x1f0] sm:$0xff]
  %v6690 = vld [vmem:[%s3818 + $0x200] sm:$0xff]
  %v6691 = vld [vmem:[%s3818 + $0x210] sm:$0xff]
  %v6692 = vld [vmem:[%s3818 + $0x220] sm:$0xff]
  %v6693 = vld [vmem:[%s3818 + $0x230] sm:$0xff]
  %v6694 = vld [vmem:[%s3818 + $0x240] sm:$0xff]
  %v6695 = vld [vmem:[%s3818 + $0x250] sm:$0xff]
  %v6696 = vld [vmem:[%s3818 + $0x260] sm:$0xff]
  %v6697 = vld [vmem:[%s3818 + $0x270] sm:$0xff]
  %v6698 = vld [vmem:[%s5 + $0x16] ss:$0 sm:$0xff]
  %v6700 = vsel %vm530, %v6664, 0
  %v6703 = vsel %vm530, %v6665, 0
  %v6706 = vsel %vm530, %v6666, 0
  %v6709 = vsel %vm530, %v6667, 0
  %v6712 = vsel %vm530, %v6668, 0
  %v6715 = vsel %vm530, %v6669, 0
  %v6718 = vsel %vm530, %v6670, 0
  %v6721 = vsel %vm530, %v6671, 0
  %v6724 = vsel %vm530, %v6672, 0
  %v6727 = vsel %vm530, %v6673, 0
  %6729 = vmatprep.subr.mxu0 0.0
  %6730 = vmatpush1.msra.mxu0 0.0
  %6731 = vmatprep.subr.mxu0 0.0
  %6732 = vmatpush1.msra.mxu0 0.0
  %6733 = vmatprep.subr.mxu0 0.0
  %6734 = vmatpush1.msra.mxu0 0.0
  %6735 = vmatprep.subr.mxu0 0.0
  %6736 = vmatpush1.msra.mxu0 0.0
  %6737 = vmatprep.subr.mxu0 0.0
  %6738 = vmatpush1.msra.mxu0 0.0
  %6739 = vmatprep.subr.mxu0 0.0
  %6740 = vmatpush1.msra.mxu0 0.0
  %6741 = vmatprep.subr.mxu0 0.0
  %6742 = vmatpush1.msra.mxu0 0.0
  %6743 = vmatprep.subr.mxu0 0.0
  %6744 = vmatpush1.msra.mxu0 0.0
  %6745 = vmatprep.subr.mxu0 0.0
  %6746 = vmatpush1.msra.mxu0 %v6681
  %6747 = vmatprep.subr.mxu0 0.0
  %6748 = vmatpush1.msra.mxu0 %v6680
  %6749 = vmatprep.subr.mxu0 0.0
  %6750 = vmatpush1.msra.mxu0 %v6679
  %6751 = vmatprep.subr.mxu0 0.0
  %6752 = vmatpush1.msra.mxu0 %v6678
  %6753 = vmatprep.subr.mxu0 0.0
  %6754 = vmatpush1.msra.mxu0 %v6677
  %6755 = vmatprep.subr.mxu0 0.0
  %6756 = vmatpush1.msra.mxu0 %v6676
  %6757 = vmatprep.subr.mxu0 0.0
  %6758 = vmatpush1.msra.mxu0 %v6675
  %6759 = vmatprep.subr.mxu0 0.0
  %6760 = vmatpush1.msra.mxu0 %v6674
  %6761 = vmatprep.subr.mxu0 0.0
  %6762 = vmatpush2.msra.mxu0 0.0
  %6763 = vmatprep.subr.mxu0 0.0
  %6764 = vmatpush2.msra.mxu0 0.0
  %6765 = vmatprep.subr.mxu0 0.0
  %6766 = vmatpush2.msra.mxu0 0.0
  %6767 = vmatprep.subr.mxu0 0.0
  %6768 = vmatpush2.msra.mxu0 0.0
  %6769 = vmatprep.subr.mxu0 0.0
  %6770 = vmatpush2.msra.mxu0 0.0
  %6771 = vmatprep.subr.mxu0 0.0
  %6772 = vmatpush2.msra.mxu0 0.0
  %6773 = vmatprep.subr.mxu0 0.0
  %6774 = vmatpush2.msra.mxu0 0.0
  %6775 = vmatprep.subr.mxu0 0.0
  %6776 = vmatpush2.msra.mxu0 0.0
  %6777 = vmatprep.subr.mxu0 0.0
  %6778 = vmatpush2.msra.mxu0 0.0
  %6779 = vmatprep.subr.mxu0 0.0
  %6780 = vmatpush2.msra.mxu0 0.0
  %6781 = vmatprep.subr.mxu0 0.0
  %6782 = vmatpush2.msra.mxu0 0.0
  %6783 = vmatprep.subr.mxu0 0.0
  %6784 = vmatpush2.msra.mxu0 0.0
  %6785 = vmatprep.subr.mxu0 0.0
  %6786 = vmatpush2.msra.mxu0 0.0
  %6787 = vmatprep.subr.mxu0 0.0
  %6788 = vmatpush2.msra.mxu0 0.0
  %6789 = vmatprep.subr.mxu0 0.0
  %6790 = vmatpush2.msra.mxu0 0.0
  %6791 = vmatprep.subr.mxu0 0.0
  %6792 = vmatpush2.msra.mxu0 0.0
  %6793 = vmatprep.mubr.f32.mxu0 0.0
  %6794 = vmatmul.mubr.f32.gmra.mxu0 %v6700
  %v6795 = vpop.f32.mrf.mxu0
  %v6796 = vadd.f32 %v6698, %v6795
  %v6797 = vpop.f32.mrf.mxu0
  %6798 = vmatprep.mubr.f32.mxu0 0.0
  %6799 = vmatmul.mubr.f32.gmra.mxu0 %v6703
  %v6800 = vpop.f32.mrf.mxu0
  %v6801 = vadd.f32 %v6698, %v6800
  %v6802 = vpop.f32.mrf.mxu0
  %6803 = vmatprep.mubr.f32.mxu0 0.0
  %6804 = vmatmul.mubr.f32.gmra.mxu0 %v6706
  %v6805 = vpop.f32.mrf.mxu0
  %v6806 = vadd.f32 %v6698, %v6805
  %v6807 = vpop.f32.mrf.mxu0
  %6808 = vmatprep.mubr.f32.mxu0 0.0
  %6809 = vmatmul.mubr.f32.gmra.mxu0 %v6709
  %v6810 = vpop.f32.mrf.mxu0
  %v6811 = vadd.f32 %v6698, %v6810
  %v6812 = vpop.f32.mrf.mxu0
  %6813 = vmatprep.mubr.f32.mxu0 0.0
  %6814 = vmatmul.mubr.f32.gmra.mxu0 %v6712
  %v6815 = vpop.f32.mrf.mxu0
  %v6816 = vadd.f32 %v6698, %v6815
  %v6817 = vpop.f32.mrf.mxu0
  %6818 = vmatprep.mubr.f32.mxu0 0.0
  %6819 = vmatmul.mubr.f32.gmra.mxu0 %v6715
  %v6820 = vpop.f32.mrf.mxu0
  %v6821 = vadd.f32 %v6698, %v6820
  %v6822 = vpop.f32.mrf.mxu0
  %6823 = vmatprep.mubr.f32.mxu0 0.0
  %6824 = vmatmul.mubr.f32.gmra.mxu0 %v6718
  %v6825 = vpop.f32.mrf.mxu0
  %v6826 = vadd.f32 %v6698, %v6825
  %v6827 = vpop.f32.mrf.mxu0
  %6828 = vmatprep.mubr.f32.mxu0 0.0
  %6829 = vmatmul.mubr.f32.gmra.mxu0 %v6721
  %v6830 = vpop.f32.mrf.mxu0
  %v6831 = vadd.f32 %v6698, %v6830
  %v6832 = vpop.f32.mrf.mxu0
  %6833 = vmatprep.mubr.f32.mxu0 0.0
  %6834 = vmatmul.mubr.f32.gmra.mxu0 %v6724
  %v6835 = vpop.f32.mrf.mxu0
  %v6836 = vadd.f32 %v6698, %v6835
  %v6837 = vpop.f32.mrf.mxu0
  %6838 = vmatprep.mubr.f32.mxu0 0.0
  %6839 = vmatmul.mubr.f32.gmra.mxu0 %v6727
  %v6840 = vpop.f32.mrf.mxu0
  %v6841 = vadd.f32 %v6698, %v6840
  %v6842 = vpop.f32.mrf.mxu0
  %6843 = vdwg.mxu0
  %v6844 = vmax.f32 %v6796, 0.0
  %v6845 = vmax.f32 %v6801, 0.0
  %v6846 = vmax.f32 %v6806, 0.0
  %v6847 = vmax.f32 %v6811, 0.0
  %v6848 = vmax.f32 %v6816, 0.0
  %v6849 = vmax.f32 %v6821, 0.0
  %v6850 = vmax.f32 %v6826, 0.0
  %v6851 = vmax.f32 %v6831, 0.0
  %v6852 = vmax.f32 %v6836, 0.0
  %v6853 = vmax.f32 %v6841, 0.0
  %v6854 = vld [vmem:[%s5 + $0x17] ss:$0 sm:$0xff]
  %6855 = vmatprep.subr.mxu0 0.0
  %6856 = vmatpush1.msra.mxu0 %v6697
  %6857 = vmatprep.subr.mxu0 0.0
  %6858 = vmatpush1.msra.mxu0 %v6696
  %6859 = vmatprep.subr.mxu0 0.0
  %6860 = vmatpush1.msra.mxu0 %v6695
  %6861 = vmatprep.subr.mxu0 0.0
  %6862 = vmatpush1.msra.mxu0 %v6694
  %6863 = vmatprep.subr.mxu0 0.0
  %6864 = vmatpush1.msra.mxu0 %v6693
  %6865 = vmatprep.subr.mxu0 0.0
  %6866 = vmatpush1.msra.mxu0 %v6692
  %6867 = vmatprep.subr.mxu0 0.0
  %6868 = vmatpush1.msra.mxu0 %v6691
  %6869 = vmatprep.subr.mxu0 0.0
  %6870 = vmatpush1.msra.mxu0 %v6690
  %6871 = vmatprep.subr.mxu0 0.0
  %6872 = vmatpush1.msra.mxu0 %v6689
  %6873 = vmatprep.subr.mxu0 0.0
  %6874 = vmatpush1.msra.mxu0 %v6688
  %6875 = vmatprep.subr.mxu0 0.0
  %6876 = vmatpush1.msra.mxu0 %v6687
  %6877 = vmatprep.subr.mxu0 0.0
  %6878 = vmatpush1.msra.mxu0 %v6686
  %6879 = vmatprep.subr.mxu0 0.0
  %6880 = vmatpush1.msra.mxu0 %v6685
  %6881 = vmatprep.subr.mxu0 0.0
  %6882 = vmatpush1.msra.mxu0 %v6684
  %6883 = vmatprep.subr.mxu0 0.0
  %6884 = vmatpush1.msra.mxu0 %v6683
  %6885 = vmatprep.subr.mxu0 0.0
  %6886 = vmatpush1.msra.mxu0 %v6682
  %6887 = vmatprep.subr.mxu0 0.0
  %6888 = vmatpush2.msra.mxu0 0.0
  %6889 = vmatprep.subr.mxu0 0.0
  %6890 = vmatpush2.msra.mxu0 0.0
  %6891 = vmatprep.subr.mxu0 0.0
  %6892 = vmatpush2.msra.mxu0 0.0
  %6893 = vmatprep.subr.mxu0 0.0
  %6894 = vmatpush2.msra.mxu0 0.0
  %6895 = vmatprep.subr.mxu0 0.0
  %6896 = vmatpush2.msra.mxu0 0.0
  %6897 = vmatprep.subr.mxu0 0.0
  %6898 = vmatpush2.msra.mxu0 0.0
  %6899 = vmatprep.subr.mxu0 0.0
  %6900 = vmatpush2.msra.mxu0 0.0
  %6901 = vmatprep.subr.mxu0 0.0
  %6902 = vmatpush2.msra.mxu0 0.0
  %6903 = vmatprep.subr.mxu0 0.0
  %6904 = vmatpush2.msra.mxu0 0.0
  %6905 = vmatprep.subr.mxu0 0.0
  %6906 = vmatpush2.msra.mxu0 0.0
  %6907 = vmatprep.subr.mxu0 0.0
  %6908 = vmatpush2.msra.mxu0 0.0
  %6909 = vmatprep.subr.mxu0 0.0
  %6910 = vmatpush2.msra.mxu0 0.0
  %6911 = vmatprep.subr.mxu0 0.0
  %6912 = vmatpush2.msra.mxu0 0.0
  %6913 = vmatprep.subr.mxu0 0.0
  %6914 = vmatpush2.msra.mxu0 0.0
  %6915 = vmatprep.subr.mxu0 0.0
  %6916 = vmatpush2.msra.mxu0 0.0
  %6917 = vmatprep.subr.mxu0 0.0
  %6918 = vmatpush2.msra.mxu0 0.0
  %6919 = vmatprep.mubr.f32.mxu0 0.0
  %6920 = vmatmul.mubr.f32.gmra.mxu0 %v6844
  %v6921 = vpop.f32.mrf.mxu0
  %v6922 = vadd.f32 %v6854, %v6921
  %v6923 = vpop.f32.mrf.mxu0
  %6924 = vmatprep.mubr.f32.mxu0 0.0
  %6925 = vmatmul.mubr.f32.gmra.mxu0 %v6845
  %v6926 = vpop.f32.mrf.mxu0
  %v6927 = vadd.f32 %v6854, %v6926
  %v6928 = vpop.f32.mrf.mxu0
  %6929 = vmatprep.mubr.f32.mxu0 0.0
  %6930 = vmatmul.mubr.f32.gmra.mxu0 %v6846
  %v6931 = vpop.f32.mrf.mxu0
  %v6932 = vadd.f32 %v6854, %v6931
  %v6933 = vpop.f32.mrf.mxu0
  %6934 = vmatprep.mubr.f32.mxu0 0.0
  %6935 = vmatmul.mubr.f32.gmra.mxu0 %v6847
  %v6936 = vpop.f32.mrf.mxu0
  %v6937 = vadd.f32 %v6854, %v6936
  %v6938 = vpop.f32.mrf.mxu0
  %6939 = vmatprep.mubr.f32.mxu0 0.0
  %6940 = vmatmul.mubr.f32.gmra.mxu0 %v6848
  %v6941 = vpop.f32.mrf.mxu0
  %v6942 = vadd.f32 %v6854, %v6941
  %v6943 = vpop.f32.mrf.mxu0
  %6944 = vmatprep.mubr.f32.mxu0 0.0
  %6945 = vmatmul.mubr.f32.gmra.mxu0 %v6849
  %v6946 = vpop.f32.mrf.mxu0
  %v6947 = vadd.f32 %v6854, %v6946
  %v6948 = vpop.f32.mrf.mxu0
  %6949 = vmatprep.mubr.f32.mxu0 0.0
  %6950 = vmatmul.mubr.f32.gmra.mxu0 %v6850
  %v6951 = vpop.f32.mrf.mxu0
  %v6952 = vadd.f32 %v6854, %v6951
  %v6953 = vpop.f32.mrf.mxu0
  %6954 = vmatprep.mubr.f32.mxu0 0.0
  %6955 = vmatmul.mubr.f32.gmra.mxu0 %v6851
  %v6956 = vpop.f32.mrf.mxu0
  %v6957 = vadd.f32 %v6854, %v6956
  %v6958 = vpop.f32.mrf.mxu0
  %6959 = vmatprep.mubr.f32.mxu0 0.0
  %6960 = vmatmul.mubr.f32.gmra.mxu0 %v6852
  %v6961 = vpop.f32.mrf.mxu0
  %v6962 = vadd.f32 %v6854, %v6961
  %v6963 = vpop.f32.mrf.mxu0
  %6964 = vmatprep.mubr.f32.mxu0 0.0
  %6965 = vmatmul.mubr.f32.gmra.mxu0 %v6853
  %v6966 = vpop.f32.mrf.mxu0
  %v6967 = vadd.f32 %v6854, %v6966
  %v6968 = vpop.f32.mrf.mxu0
  %6969 = vdwg.mxu0
  %v6970 = vadd.f32 %v6664, %v6922
  %v6971 = vadd.f32 %v6665, %v6927
  %v6972 = vadd.f32 %v6666, %v6932
  %v6973 = vadd.f32 %v6667, %v6937
  %v6974 = vadd.f32 %v6668, %v6942
  %v6975 = vadd.f32 %v6669, %v6947
  %v6976 = vadd.f32 %v6670, %v6952
  %v6977 = vadd.f32 %v6671, %v6957
  %v6978 = vadd.f32 %v6672, %v6962
  %v6979 = vadd.f32 %v6673, %v6967
  %v6980 = vld [vmem:[%s5 + $0x20] ss:$0 sm:$0xff]
  %v6981 = vld [vmem:[%s5 + $0x21] ss:$0 sm:$0xff]
  %v6982 = vsel %vm530, %v6970, 0.0
  %6983 = vadd.xlane.f32.xlu0 %v6982
  %v6984 = vpop.xlane.xlu0 %6983
  %v6985 = vsel %vm530, %v6971, 0.0
  %6986 = vadd.xlane.f32.xlu0 %v6985
  %v6987 = vpop.xlane.xlu0 %6986
  %v6988 = vsel %vm530, %v6972, 0.0
  %6989 = vadd.xlane.f32.xlu0 %v6988
  %v6990 = vpop.xlane.xlu0 %6989
  %v6991 = vsel %vm530, %v6973, 0.0
  %6992 = vadd.xlane.f32.xlu0 %v6991
  %v6993 = vpop.xlane.xlu0 %6992
  %v6994 = vsel %vm530, %v6974, 0.0
  %6995 = vadd.xlane.f32.xlu0 %v6994
  %v6996 = vpop.xlane.xlu0 %6995
  %v6997 = vsel %vm530, %v6975, 0.0
  %6998 = vadd.xlane.f32.xlu0 %v6997
  %v6999 = vpop.xlane.xlu0 %6998
  %v7000 = vsel %vm530, %v6976, 0.0
  %7001 = vadd.xlane.f32.xlu0 %v7000
  %v7002 = vpop.xlane.xlu0 %7001
  %v7003 = vsel %vm530, %v6977, 0.0
  %7004 = vadd.xlane.f32.xlu0 %v7003
  %v7005 = vpop.xlane.xlu0 %7004
  %v7006 = vsel %vm530, %v6978, 0.0
  %7007 = vadd.xlane.f32.xlu0 %v7006
  %v7008 = vpop.xlane.xlu0 %7007
  %v7009 = vsel %vm530, %v6979, 0.0
  %7010 = vadd.xlane.f32.xlu0 %v7009
  %v7011 = vpop.xlane.xlu0 %7010
  %v7012 = vmul.f32 %v6984, %v3239
  %v7013 = vmul.f32 %v6987, %v3239
  %v7014 = vmul.f32 %v6990, %v3239
  %v7015 = vmul.f32 %v6993, %v3239
  %v7016 = vmul.f32 %v6996, %v3239
  %v7017 = vmul.f32 %v6999, %v3239
  %v7018 = vmul.f32 %v7002, %v3239
  %v7019 = vmul.f32 %v7005, %v3239
  %v7020 = vmul.f32 %v7008, %v3239
  %v7021 = vmul.f32 %v7011, %v3239
  %v7022 = vsub.f32 %v6970, %v7012
  %v7023 = vsub.f32 %v6971, %v7013
  %v7024 = vsub.f32 %v6972, %v7014
  %v7025 = vsub.f32 %v6973, %v7015
  %v7026 = vsub.f32 %v6974, %v7016
  %v7027 = vsub.f32 %v6975, %v7017
  %v7028 = vsub.f32 %v6976, %v7018
  %v7029 = vsub.f32 %v6977, %v7019
  %v7030 = vsub.f32 %v6978, %v7020
  %v7031 = vsub.f32 %v6979, %v7021
  %v7032 = vmul.f32 %v7022, %v7022
  %v7033 = vmul.f32 %v7023, %v7023
  %v7034 = vmul.f32 %v7024, %v7024
  %v7035 = vmul.f32 %v7025, %v7025
  %v7036 = vmul.f32 %v7026, %v7026
  %v7037 = vmul.f32 %v7027, %v7027
  %v7038 = vmul.f32 %v7028, %v7028
  %v7039 = vmul.f32 %v7029, %v7029
  %v7040 = vmul.f32 %v7030, %v7030
  %v7041 = vmul.f32 %v7031, %v7031
  %v7042 = vsel %vm530, %v7032, 0.0
  %7043 = vadd.xlane.f32.xlu0 %v7042
  %v7044 = vpop.xlane.xlu0 %7043
  %v7045 = vsel %vm530, %v7033, 0.0
  %7046 = vadd.xlane.f32.xlu0 %v7045
  %v7047 = vpop.xlane.xlu0 %7046
  %v7048 = vsel %vm530, %v7034, 0.0
  %7049 = vadd.xlane.f32.xlu0 %v7048
  %v7050 = vpop.xlane.xlu0 %7049
  %v7051 = vsel %vm530, %v7035, 0.0
  %7052 = vadd.xlane.f32.xlu0 %v7051
  %v7053 = vpop.xlane.xlu0 %7052
  %v7054 = vsel %vm530, %v7036, 0.0
  %7055 = vadd.xlane.f32.xlu0 %v7054
  %v7056 = vpop.xlane.xlu0 %7055
  %v7057 = vsel %vm530, %v7037, 0.0
  %7058 = vadd.xlane.f32.xlu0 %v7057
  %v7059 = vpop.xlane.xlu0 %7058
  %v7060 = vsel %vm530, %v7038, 0.0
  %7061 = vadd.xlane.f32.xlu0 %v7060
  %v7062 = vpop.xlane.xlu0 %7061
  %v7063 = vsel %vm530, %v7039, 0.0
  %7064 = vadd.xlane.f32.xlu0 %v7063
  %v7065 = vpop.xlane.xlu0 %7064
  %v7066 = vsel %vm530, %v7040, 0.0
  %7067 = vadd.xlane.f32.xlu0 %v7066
  %v7068 = vpop.xlane.xlu0 %7067
  %v7069 = vsel %vm530, %v7041, 0.0
  %7070 = vadd.xlane.f32.xlu0 %v7069
  %v7071 = vpop.xlane.xlu0 %7070
  %v7072 = vmul.f32 %v7044, %v3239
  %v7073 = vmul.f32 %v7047, %v3239
  %v7074 = vmul.f32 %v7050, %v3239
  %v7075 = vmul.f32 %v7053, %v3239
  %v7076 = vmul.f32 %v7056, %v3239
  %v7077 = vmul.f32 %v7059, %v3239
  %v7078 = vmul.f32 %v7062, %v3239
  %v7079 = vmul.f32 %v7065, %v3239
  %v7080 = vmul.f32 %v7068, %v3239
  %v7081 = vmul.f32 %v7071, %v3239
  %v7082 = vadd.f32 %v7072, 1e-05
  %v7083 = vadd.f32 %v7073, 1e-05
  %v7084 = vadd.f32 %v7074, 1e-05
  %v7085 = vadd.f32 %v7075, 1e-05
  %v7086 = vadd.f32 %v7076, 1e-05
  %v7087 = vadd.f32 %v7077, 1e-05
  %v7088 = vadd.f32 %v7078, 1e-05
  %v7089 = vadd.f32 %v7079, 1e-05
  %v7090 = vadd.f32 %v7080, 1e-05
  %v7091 = vadd.f32 %v7081, 1e-05
  %v7092 = vrsqrt.pop %v7082
  %v7093 = vrsqrt.pop %v7083
  %v7094 = vrsqrt.pop %v7084
  %v7095 = vrsqrt.pop %v7085
  %v7096 = vrsqrt.pop %v7086
  %v7097 = vrsqrt.pop %v7087
  %v7098 = vrsqrt.pop %v7088
  %v7099 = vrsqrt.pop %v7089
  %v7100 = vrsqrt.pop %v7090
  %v7101 = vrsqrt.pop %v7091
  %v7102 = vmul.f32 %v7022, %v7092
  %v7103 = vmul.f32 %v7023, %v7093
  %v7104 = vmul.f32 %v7024, %v7094
  %v7105 = vmul.f32 %v7025, %v7095
  %v7106 = vmul.f32 %v7026, %v7096
  %v7107 = vmul.f32 %v7027, %v7097
  %v7108 = vmul.f32 %v7028, %v7098
  %v7109 = vmul.f32 %v7029, %v7099
  %v7110 = vmul.f32 %v7030, %v7100
  %v7111 = vmul.f32 %v7031, %v7101
  %v7112 = vmul.f32 %v7102, %v6980
  %v7113 = vmul.f32 %v7103, %v6980
  %v7114 = vmul.f32 %v7104, %v6980
  %v7115 = vmul.f32 %v7105, %v6980
  %v7116 = vmul.f32 %v7106, %v6980
  %v7117 = vmul.f32 %v7107, %v6980
  %v7118 = vmul.f32 %v7108, %v6980
  %v7119 = vmul.f32 %v7109, %v6980
  %v7120 = vmul.f32 %v7110, %v6980
  %v7121 = vmul.f32 %v7111, %v6980
  %v7122 = vadd.f32 %v7112, %v6981
  %v7123 = vadd.f32 %v7113, %v6981
  %v7124 = vadd.f32 %v7114, %v6981
  %v7125 = vadd.f32 %v7115, %v6981
  %v7126 = vadd.f32 %v7116, %v6981
  %v7127 = vadd.f32 %v7117, %v6981
  %v7128 = vadd.f32 %v7118, %v6981
  %v7129 = vadd.f32 %v7119, %v6981
  %v7130 = vadd.f32 %v7120, %v6981
  %v7131 = vadd.f32 %v7121, %v6981
  %7132 = vst.msk [vmem:[%s6] sm:$0xff] %vm530, %v7122
  %7133 = vst.msk [vmem:[%s6 + $0x8] sm:$0xff] %vm530, %v7123
  %7134 = vst.msk [vmem:[%s6 + $0x10] sm:$0xff] %vm530, %v7124
  %7135 = vst.msk [vmem:[%s6 + $0x18] sm:$0xff] %vm530, %v7125
  %7136 = vst.msk [vmem:[%s6 + $0x20] sm:$0xff] %vm530, %v7126
  %7137 = vst.msk [vmem:[%s6 + $0x28] sm:$0xff] %vm530, %v7127
  %7138 = vst.msk [vmem:[%s6 + $0x30] sm:$0xff] %vm530, %v7128
  %7139 = vst.msk [vmem:[%s6 + $0x38] sm:$0xff] %vm530, %v7129
  %7140 = vst.msk [vmem:[%s6 + $0x40] sm:$0xff] %vm530, %v7130
  %7141 = vst.msk [vmem:[%s6 + $0x48] sm:$0xff] %vm530, %v7131
  // Predicated region
  $region26: #{tpu_custom_call.1} parent=0 // pred_check
    _
  $region27: #{tpu_custom_call.1} parent=0 // pred_check_branch
    %7143 = sbr.rel (0) target = $region29
  $region28: #{tpu_custom_call.1} parent=0 // pred_region
    _
  $region29: #{tpu_custom_call.1} parent=0 // pred_fallthru
    _
  // Predicated region
  $region30: #{tpu_custom_call.1} parent=0 // pred_check
    _
  $region31: #{tpu_custom_call.1} parent=0 // pred_check_branch
    %7145 = sbr.rel (0) target = $region33
  $region32: #{tpu_custom_call.1} parent=0 // pred_region
    _
  $region33: #{tpu_custom_call.1} parent=0 // pred_fallthru
    _

</llo_original>
